<compile_context>
chip_gen: v7x
topology: tpu7x:2x2x1
jax: 0.10.0
libtpu: 0.0.40
codegen_flags: <defaults>
</compile_context>

<pallas_src>
import functools

import jax
import jax.numpy as jnp
from jax.experimental import pallas as pl
from jax.experimental.pallas import tpu as pltpu


# ----------------------------- Pallas kernels -----------------------------

def _matmul_bias_act_kernel(x_ref, w_ref, b_ref, o_ref, *, act):
    y = jnp.dot(x_ref[...], w_ref[...], preferred_element_type=jnp.float32)
    y = y + b_ref[...]                        # (1, N) broadcasts over rows
    if act == "swish":
        y = y * jax.nn.sigmoid(y)
    elif act == "sigmoid":
        y = jax.nn.sigmoid(y)
    o_ref[...] = y.astype(o_ref.dtype)


def matmul_bias_act(x, w, b, act=None):
    """(M,K) @ (K,N) + b, optional fused swish/sigmoid. M-tiled grid (parallel)."""
    M, K = x.shape
    K2, N = w.shape
    assert K == K2
    b2 = b.reshape(1, N)
    # M-tile: 256 matches the v6e/v7x 256x256 MXU and is 2x the v5e 128 tile.
    if M % 256 == 0:
        tm = 256
    elif M % 128 == 0:
        tm = 128
    else:
        tm = M
    kern = functools.partial(_matmul_bias_act_kernel, act=act)
    return pl.pallas_call(
        kern,
        out_shape=jax.ShapeDtypeStruct((M, N), jnp.float32),
        grid=(M // tm,),
        in_specs=[pl.BlockSpec((tm, K), lambda i: (i, 0)),
                  pl.BlockSpec((K, N), lambda i: (0, 0)),
                  pl.BlockSpec((1, N), lambda i: (0, 0))],
        out_specs=pl.BlockSpec((tm, N), lambda i: (i, 0)),
        compiler_params=pltpu.CompilerParams(dimension_semantics=("parallel",)),
    )(x, w, b2)


def _mbconv_core_kernel(*refs, stride, Ho, Wo):
    """dwconv3x3(+folded BN,+swish) -> SE(pool,squeeze,excite,scale) -> 1x1 project(+BN).

    For stride=1 a single padded-input phase is passed; for stride=2 the padded input is
    pre-split into 4 spatial phases so only the strided outputs are ever computed and all
    in-kernel slices are contiguous.
    """
    nphase = 1 if stride == 1 else 4
    phase_refs = refs[:nphase]
    (w9_ref, dws_ref, dwb_ref, se1w_ref, se1b_ref,
     se2w_ref, se2b_ref, pw_ref, pb_ref, o_ref) = refs[nphase:]
    C = w9_ref.shape[1]

    xs = [pr[0] for pr in phase_refs]            # load each phase tile once
    w9 = w9_ref[...]                             # (9, C) depthwise taps

    acc = jnp.zeros((Ho, Wo, C), jnp.float32)
    for kh in range(3):
        for kw in range(3):
            if stride == 1:
                tap = xs[0][kh:kh + Ho, kw:kw + Wo, :]
            else:
                tap = xs[(kh % 2) * 2 + (kw % 2)][kh // 2:kh // 2 + Ho,
                                                  kw // 2:kw // 2 + Wo, :]
            acc = acc + tap * w9[kh * 3 + kw, :]

    y = acc * dws_ref[0] + dwb_ref[0]            # folded BatchNorm
    y = y * jax.nn.sigmoid(y)                    # swish
    y2 = y.reshape(Ho * Wo, C)

    # Squeeze-and-Excitation (all tiny, stays in VMEM)
    pooled = jnp.mean(y2, axis=0, keepdims=True)                              # (1, C)
    s = jnp.dot(pooled, se1w_ref[...], preferred_element_type=jnp.float32) + se1b_ref[...]
    s = s * jax.nn.sigmoid(s)                                                  # swish
    s = jnp.dot(s, se2w_ref[...], preferred_element_type=jnp.float32) + se2b_ref[...]
    s = jax.nn.sigmoid(s)                                                      # (1, C)
    y2 = y2 * s                                                                # SE scale

    # 1x1 project conv + folded BN (no activation)
    out = jnp.dot(y2, pw_ref[...], preferred_element_type=jnp.float32) + pb_ref[...]
    o_ref[0] = out.astype(o_ref.dtype)


def mbconv_core(x, bp, stride):
    """Fused MBConv core (dwconv + SE + project), one pallas_call, grid over batch."""
    N, H, W, C = x.shape
    Ho, Wo = H // stride, W // stride
    Cout = bp["proj_w"].shape[1]
    xp = jnp.pad(x, ((0, 0), (1, 1), (1, 1), (0, 0)))
    if stride == 1:
        phases = [xp]
        phase_specs = [pl.BlockSpec((1, H + 2, W + 2, C), lambda n: (n, 0, 0, 0))]
    else:
        # 2x2 spatial phase decomposition: tap (kh,kw) of the strided conv reads
        # phase[kh%2, kw%2] at contiguous offset (kh//2, kw//2).
        phases = [xp[:, ph::2, pw::2, :] for ph in range(2) for pw in range(2)]
        Pp = Ho + 1
        phase_specs = [pl.BlockSpec((1, Pp, Pp, C), lambda n: (n, 0, 0, 0))
                       for _ in range(4)]

    weight_args = [bp["dw_w9"], bp["dw_s"], bp["dw_b"],
                   bp["se1_w"], bp["se1_b"], bp["se2_w"], bp["se2_b"],
                   bp["proj_w"], bp["proj_b"]]
    weight_specs = [pl.BlockSpec(a.shape, lambda n, nd=a.ndim: (0,) * nd)
                    for a in weight_args]

    kern = functools.partial(_mbconv_core_kernel, stride=stride, Ho=Ho, Wo=Wo)
    out = pl.pallas_call(
        kern,
        out_shape=jax.ShapeDtypeStruct((N, Ho * Wo, Cout), jnp.float32),
        grid=(N,),
        in_specs=phase_specs + weight_specs,
        out_specs=pl.BlockSpec((1, Ho * Wo, Cout), lambda n: (n, 0, 0)),
        compiler_params=pltpu.CompilerParams(dimension_semantics=("parallel",)),
    )(*phases, *weight_args)
    return out.reshape(N, Ho, Wo, Cout)


def _head_gap_cls_kernel(x_ref, wh_ref, bh_ref, wc_ref, bc_ref, o_ref):
    # head 1x1 conv (+folded BN) + swish
    h = jnp.dot(x_ref[0], wh_ref[...], preferred_element_type=jnp.float32) + bh_ref[...]
    h = h * jax.nn.sigmoid(h)
    # _avg_pooling (the hooked layer) ; dropout(eval) = identity
    pooled = jnp.mean(h, axis=0, keepdims=True)                               # (1, 1280)
    # folded fc + output_linear
    out = jnp.dot(pooled, wc_ref[...], preferred_element_type=jnp.float32) + bc_ref[...]
    o_ref[0] = out.astype(o_ref.dtype)


def head_gap_classifier(x, wh, bh, wc, bc):
    """Fused: head 1x1 conv + swish + global-avg-pool + (fc∘output_linear). Grid over batch."""
    N, HW, Cin = x.shape
    Chead = wh.shape[1]
    nc = wc.shape[1]
    out = pl.pallas_call(
        _head_gap_cls_kernel,
        out_shape=jax.ShapeDtypeStruct((N, 1, nc), jnp.float32),
        grid=(N,),
        in_specs=[pl.BlockSpec((1, HW, Cin), lambda n: (n, 0, 0)),
                  pl.BlockSpec((Cin, Chead), lambda n: (0, 0)),
                  pl.BlockSpec((1, Chead), lambda n: (0, 0)),
                  pl.BlockSpec((Chead, nc), lambda n: (0, 0)),
                  pl.BlockSpec((1, nc), lambda n: (0, 0))],
        out_specs=pl.BlockSpec((1, 1, nc), lambda n: (n, 0, 0)),
        compiler_params=pltpu.CompilerParams(dimension_semantics=("parallel",)),
    )(x, wh, bh, wc, bc)
    return out.reshape(N, nc)


# ----------------------------- JAX glue -----------------------------

def bn_fold(bn, eps=1e-3):   # EfficientNet BatchNorm uses eps=1e-3
    gamma, beta, mean, var = bn
    scale = gamma * jax.lax.rsqrt(var + eps)
    bias = beta - mean * scale
    return scale, bias


def im2col(x, kh, kw, stride, pad):
    # Stem-only helper; the stride is applied here, so no wasted compute. The expanded
    # patch tensor is ~55 KB at these shapes, so it is intentionally left in plain JAX.
    if pad > 0:
        x = jnp.pad(x, ((0, 0), (pad, pad), (pad, pad), (0, 0)))
    N, Hp, Wp, C = x.shape
    Ho = (Hp - kh) // stride + 1
    Wo = (Wp - kw) // stride + 1
    cols = []
    for i in range(kh):
        for j in range(kw):
            cols.append(x[:, i:i + Ho * stride:stride, j:j + Wo * stride:stride, :])
    return jnp.concatenate(cols, axis=-1), Ho, Wo        # (N, Ho, Wo, kh*kw*C)


# ----------------------------- parameters -----------------------------

def _bn_init(key, c):
    k1, k2, k3 = jax.random.split(key, 3)
    gamma = 1.0 + 0.1 * jax.random.normal(k1, (c,), jnp.float32)
    beta = 0.1 * jax.random.normal(k2, (c,), jnp.float32)
    mean = 0.1 * jax.random.normal(k3, (c,), jnp.float32)
    var = jnp.ones((c,), jnp.float32)
    return (gamma, beta, mean, var)


def init_params(key, num_classes=10):
    keys = iter(jax.random.split(key, 64))
    nrm = lambda shape, s=0.05: s * jax.random.normal(next(keys), shape, jnp.float32)
    p = {}
    # stem: 3x3 s2, 3 -> 32
    p["stem_w"], p["stem_bn"] = nrm((3, 3, 3, 32)), _bn_init(next(keys), 32)
    # MBConv1: dw 3x3 s1 on 32, SE(32->8->32), project 32 -> 16
    p["b1_dw_w"], p["b1_dw_bn"] = nrm((3, 3, 32)), _bn_init(next(keys), 32)
    p["b1_se_w1"], p["b1_se_b1"] = nrm((32, 8)), nrm((8,))
    p["b1_se_w2"], p["b1_se_b2"] = nrm((8, 32)), nrm((32,))
    p["b1_proj_w"], p["b1_proj_bn"] = nrm((1, 1, 32, 16)), _bn_init(next(keys), 16)
    # MBConv6: expand 16 -> 96, dw 3x3 s2, SE(96->4->96), project 96 -> 24
    p["b2_exp_w"], p["b2_exp_bn"] = nrm((1, 1, 16, 96)), _bn_init(next(keys), 96)
    p["b2_dw_w"], p["b2_dw_bn"] = nrm((3, 3, 96)), _bn_init(next(keys), 96)
    p["b2_se_w1"], p["b2_se_b1"] = nrm((96, 4)), nrm((4,))
    p["b2_se_w2"], p["b2_se_b2"] = nrm((4, 96)), nrm((96,))
    p["b2_proj_w"], p["b2_proj_bn"] = nrm((1, 1, 96, 24)), _bn_init(next(keys), 24)
    # head: 1x1 conv 24 -> 1280
    p["head_w"], p["head_bn"] = nrm((1, 1, 24, 1280)), _bn_init(next(keys), 1280)
    # classifier FC 1280 -> 1000 (EfficientNet._fc)
    p["fc_w"], p["fc_b"] = nrm((1280, 1000)), nrm((1000,))
    # Model.output_linear: 1000 -> num_classes
    if num_classes is not None:
        p["out_w"], p["out_b"] = nrm((1000, num_classes)), nrm((num_classes,))
    return p


def prepare_params(p, num_classes):
    """One-time (outside jit) folding: BN into conv weights, fc∘output_linear, reshapes."""
    pp = {}
    s, b = bn_fold(p["stem_bn"])
    pp["stem_w"] = (p["stem_w"] * s).reshape(27, 32)
    pp["stem_b"] = b

    def block_params(dw_w, dw_bn, se1w, se1b, se2w, se2b, proj_w, proj_bn):
        ds, db = bn_fold(dw_bn)
        C = dw_w.shape[-1]
        ps, pb = bn_fold(proj_bn)
        wproj = proj_w.reshape(proj_w.shape[-2], proj_w.shape[-1]) * ps
        return {
            "dw_w9": dw_w.reshape(9, C),
            "dw_s": ds.reshape(1, C), "dw_b": db.reshape(1, C),
            "se1_w": se1w, "se1_b": se1b.reshape(1, -1),
            "se2_w": se2w, "se2_b": se2b.reshape(1, -1),
            "proj_w": wproj, "proj_b": pb.reshape(1, -1),
        }

    pp["b1"] = block_params(p["b1_dw_w"], p["b1_dw_bn"], p["b1_se_w1"], p["b1_se_b1"],
                            p["b1_se_w2"], p["b1_se_b2"], p["b1_proj_w"], p["b1_proj_bn"])

    s, b = bn_fold(p["b2_exp_bn"])
    pp["b2_exp_w"] = (p["b2_exp_w"] * s).reshape(16, 96)
    pp["b2_exp_b"] = b
    pp["b2"] = block_params(p["b2_dw_w"], p["b2_dw_bn"], p["b2_se_w1"], p["b2_se_b1"],
                            p["b2_se_w2"], p["b2_se_b2"], p["b2_proj_w"], p["b2_proj_bn"])

    s, b = bn_fold(p["head_bn"])
    pp["head_w"] = (p["head_w"] * s).reshape(24, 1280)
    pp["head_b"] = b.reshape(1, 1280)

    # Fold fc (1280->1000) and output_linear (1000->nc): no nonlinearity in between and
    # the 1000-logit intermediate is unused in classification mode.
    if num_classes is None:
        pp["cls_w"], pp["cls_b"] = p["fc_w"], p["fc_b"].reshape(1, -1)   # Identity head
    else:
        pp["cls_w"] = p["fc_w"] @ p["out_w"]
        pp["cls_b"] = (p["fc_b"] @ p["out_w"] + p["out_b"]).reshape(1, -1)
    return pp


# ----------------------------- forward pass -----------------------------

def model_forward(x_nchw, pp):
    x = jnp.transpose(x_nchw, (0, 2, 3, 1))                       # NCHW -> NHWC
    N = x.shape[0]
    # stem: 3x3 s2 conv + folded BN + swish (im2col + M-tiled matmul)
    patches, Ho, Wo = im2col(x, 3, 3, 2, 1)
    y = matmul_bias_act(patches.reshape(N * Ho * Wo, -1), pp["stem_w"], pp["stem_b"],
                        act="swish")
    x = y.reshape(N, Ho, Wo, -1)                                  # (N, 16, 16, 32)
    # MBConv1: fused dwconv + SE + project
    x = mbconv_core(x, pp["b1"], stride=1)                        # (N, 16, 16, 16)
    # MBConv6: expand 1x1 + fused [dwconv s2 + SE + project]
    xN, xH, xW, xC = x.shape
    y = matmul_bias_act(x.reshape(xN * xH * xW, xC), pp["b2_exp_w"], pp["b2_exp_b"],
                        act="swish")
    x = y.reshape(xN, xH, xW, -1)                                 # (N, 16, 16, 96)
    x = mbconv_core(x, pp["b2"], stride=2)                        # (N, 8, 8, 24)
    # head conv + swish + _avg_pooling + dropout(eval) + fc + output_linear (fused)
    xN, xH, xW, xC = x.shape
    return head_gap_classifier(x.reshape(xN, xH * xW, xC),
                               pp["head_w"], pp["head_b"], pp["cls_w"], pp["cls_b"])


# ----------------------------- main -----------------------------

if __name__ == "__main__":
    key = jax.random.PRNGKey(0)
    k_params, k_x = jax.random.split(key)
    num_classes = 10
    params = init_params(k_params, num_classes=num_classes)
    prepped = prepare_params(params, num_classes)                 # one-time weight folding

    # Small input in the PyTorch NCHW convention: (batch=2, channels=3, 32, 32)
    x = jax.random.normal(k_x, (2, 3, 32, 32), jnp.float32)

    fwd = jax.jit(model_forward)
    out = fwd(x, prepped)
    out = jax.block_until_ready(out)

    assert out.shape == (2, num_classes), out.shape
    assert out.dtype == jnp.float32
    assert bool(jnp.all(jnp.isfinite(out)))
    print("KERNEL_OK")
</pallas_src>

<mosaic_0001>
module attributes {stable_mosaic.version = 11 : i64} {
  func.func @_matmul_bias_act_kernel(%arg0: i32, %arg1: memref<256x27xf32, #tpu.memory_space<vmem>>, %arg2: memref<27x32xf32, #tpu.memory_space<vmem>>, %arg3: memref<1x32xf32, #tpu.memory_space<vmem>>, %arg4: memref<256x32xf32, #tpu.memory_space<vmem>>) attributes {dimension_semantics = [#tpu.dimension_semantics<parallel>], iteration_bounds = array<i64: 2>, scalar_prefetch = 0 : i64, scratch_operands = 0 : i64, tpu.core_type = #tpu.core_type<tc>, window_params = [{transform_indices = @transform_0, window_bounds = array<i64: 256, 27>}, {pipeline_mode = #tpu.pipeline_mode<synchronous>, transform_indices = @transform_1, window_bounds = array<i64: 27, 32>}, {pipeline_mode = #tpu.pipeline_mode<synchronous>, transform_indices = @transform_2, window_bounds = array<i64: 1, 32>}, {transform_indices = @transform_3, window_bounds = array<i64: 256, 32>}]} {
    %c0 = arith.constant 0 : index
    %c0_0 = arith.constant 0 : index
    %0 = vector.load %arg1[%c0, %c0_0] : memref<256x27xf32, #tpu.memory_space<vmem>>, vector<256x27xf32>
    %c0_1 = arith.constant 0 : index
    %c0_2 = arith.constant 0 : index
    %1 = vector.load %arg2[%c0_1, %c0_2] : memref<27x32xf32, #tpu.memory_space<vmem>>, vector<27x32xf32>
    %cst = arith.constant dense<0.000000e+00> : vector<256x32xf32>
    %2 = tpu.matmul %0, %1, %cst {dimension_numbers = #tpu.dot_dimension_numbers<[1], [0], [0], [1], [0, 0, 1, 1], [], []>} : vector<256x27xf32>, vector<27x32xf32>, vector<256x32xf32> -> vector<256x32xf32>
    %c0_3 = arith.constant 0 : index
    %c0_4 = arith.constant 0 : index
    %3 = vector.load %arg3[%c0_3, %c0_4] : memref<1x32xf32, #tpu.memory_space<vmem>>, vector<1x32xf32>
    %4 = vector.broadcast %3 : vector<1x32xf32> to vector<256x32xf32>
    %5 = arith.addf %2, %4 : vector<256x32xf32>
    %6 = arith.negf %5 : vector<256x32xf32>
    %7 = math.exp %6 : vector<256x32xf32>
    %cst_5 = arith.constant 1.000000e+00 : f32
    %8 = vector.broadcast %cst_5 : f32 to vector<256x32xf32>
    %9 = arith.addf %8, %7 : vector<256x32xf32>
    %10 = arith.divf %8, %9 : vector<256x32xf32>
    %11 = arith.mulf %5, %10 : vector<256x32xf32>
    %c0_6 = arith.constant 0 : index
    %c0_7 = arith.constant 0 : index
    %12 = vector.load %arg4[%c0_6, %c0_7] : memref<256x32xf32, #tpu.memory_space<vmem>>, vector<256x32xf32>
    tpu.vector_store %arg4[%c0_6, %c0_7], %11 {strides = array<i32>} : memref<256x32xf32, #tpu.memory_space<vmem>>, vector<256x32xf32>,
    return
  }
  func.func @transform_0(%arg0: i32) -> (i32, i32) {
    %c0_i32 = arith.constant 0 : i32
    %c0_i32_0 = arith.constant 0 : i32
    return %arg0, %c0_i32 : i32, i32
  }
  func.func @transform_1(%arg0: i32) -> (i32, i32) {
    %c0_i32 = arith.constant 0 : i32
    %c0_i32_0 = arith.constant 0 : i32
    %c0_i32_1 = arith.constant 0 : i32
    return %c0_i32, %c0_i32_0 : i32, i32
  }
  func.func @transform_2(%arg0: i32) -> (i32, i32) {
    %c0_i32 = arith.constant 0 : i32
    %c0_i32_0 = arith.constant 0 : i32
    %c0_i32_1 = arith.constant 0 : i32
    return %c0_i32, %c0_i32_0 : i32, i32
  }
  func.func @transform_3(%arg0: i32) -> (i32, i32) {
    %c0_i32 = arith.constant 0 : i32
    %c0_i32_0 = arith.constant 0 : i32
    return %arg0, %c0_i32 : i32, i32
  }
}

module attributes {stable_mosaic.version = 11 : i64} {
  func.func @_mbconv_core_kernel(%arg0: i32, %arg1: memref<1x18x18x32xf32, #tpu.memory_space<vmem>>, %arg2: memref<9x32xf32, #tpu.memory_space<vmem>>, %arg3: memref<1x32xf32, #tpu.memory_space<vmem>>, %arg4: memref<1x32xf32, #tpu.memory_space<vmem>>, %arg5: memref<32x8xf32, #tpu.memory_space<vmem>>, %arg6: memref<1x8xf32, #tpu.memory_space<vmem>>, %arg7: memref<8x32xf32, #tpu.memory_space<vmem>>, %arg8: memref<1x32xf32, #tpu.memory_space<vmem>>, %arg9: memref<32x16xf32, #tpu.memory_space<vmem>>, %arg10: memref<1x16xf32, #tpu.memory_space<vmem>>, %arg11: memref<1x256x16xf32, #tpu.memory_space<vmem>>) attributes {dimension_semantics = [#tpu.dimension_semantics<parallel>], iteration_bounds = array<i64: 2>, scalar_prefetch = 0 : i64, scratch_operands = 0 : i64, tpu.core_type = #tpu.core_type<tc>, window_params = [{transform_indices = @transform_0, window_bounds = array<i64: 1, 18, 18, 32>}, {pipeline_mode = #tpu.pipeline_mode<synchronous>, transform_indices = @transform_1, window_bounds = array<i64: 9, 32>}, {pipeline_mode = #tpu.pipeline_mode<synchronous>, transform_indices = @transform_2, window_bounds = array<i64: 1, 32>}, {pipeline_mode = #tpu.pipeline_mode<synchronous>, transform_indices = @transform_3, window_bounds = array<i64: 1, 32>}, {pipeline_mode = #tpu.pipeline_mode<synchronous>, transform_indices = @transform_4, window_bounds = array<i64: 32, 8>}, {pipeline_mode = #tpu.pipeline_mode<synchronous>, transform_indices = @transform_5, window_bounds = array<i64: 1, 8>}, {pipeline_mode = #tpu.pipeline_mode<synchronous>, transform_indices = @transform_6, window_bounds = array<i64: 8, 32>}, {pipeline_mode = #tpu.pipeline_mode<synchronous>, transform_indices = @transform_7, window_bounds = array<i64: 1, 32>}, {pipeline_mode = #tpu.pipeline_mode<synchronous>, transform_indices = @transform_8, window_bounds = array<i64: 32, 16>}, {pipeline_mode = #tpu.pipeline_mode<synchronous>, transform_indices = @transform_9, window_bounds = array<i64: 1, 16>}, {transform_indices = @transform_10, window_bounds = array<i64: 1, 256, 16>}]} {
    %c0 = arith.constant 0 : index
    %c0_0 = arith.constant 0 : index
    %c0_1 = arith.constant 0 : index
    %c0_2 = arith.constant 0 : index
    %0 = vector.load %arg1[%c0, %c0_0, %c0_1, %c0_2] : memref<1x18x18x32xf32, #tpu.memory_space<vmem>>, vector<1x18x18x32xf32>
    %1 = vector.shape_cast %0 : vector<1x18x18x32xf32> to vector<18x18x32xf32>
    %c0_3 = arith.constant 0 : index
    %c0_4 = arith.constant 0 : index
    %2 = vector.load %arg2[%c0_3, %c0_4] : memref<9x32xf32, #tpu.memory_space<vmem>>, vector<9x32xf32>
    %cst = arith.constant 0.000000e+00 : f32
    %3 = vector.broadcast %cst : f32 to vector<16x16x32xf32>
    %4 = vector.extract_strided_slice %1 {offsets = [0, 0, 0], sizes = [16, 16, 32], strides = [1, 1, 1]} : vector<18x18x32xf32> to vector<16x16x32xf32>
    %5 = vector.extract_strided_slice %2 {offsets = [0, 0], sizes = [1, 32], strides = [1, 1]} : vector<9x32xf32> to vector<1x32xf32>
    %6 = vector.shape_cast %5 : vector<1x32xf32> to vector<32xf32>
    %7 = vector.shape_cast %6 : vector<32xf32> to vector<1x1x32xf32>
    %8 = vector.broadcast %7 : vector<1x1x32xf32> to vector<16x16x32xf32>
    %9 = arith.mulf %4, %8 : vector<16x16x32xf32>
    %10 = arith.addf %3, %9 : vector<16x16x32xf32>
    %11 = vector.extract_strided_slice %1 {offsets = [0, 1, 0], sizes = [16, 16, 32], strides = [1, 1, 1]} : vector<18x18x32xf32> to vector<16x16x32xf32>
    %12 = vector.extract_strided_slice %2 {offsets = [1, 0], sizes = [1, 32], strides = [1, 1]} : vector<9x32xf32> to vector<1x32xf32>
    %13 = vector.shape_cast %12 : vector<1x32xf32> to vector<32xf32>
    %14 = vector.shape_cast %13 : vector<32xf32> to vector<1x1x32xf32>
    %15 = vector.broadcast %14 : vector<1x1x32xf32> to vector<16x16x32xf32>
    %16 = arith.mulf %11, %15 : vector<16x16x32xf32>
    %17 = arith.addf %10, %16 : vector<16x16x32xf32>
    %18 = vector.extract_strided_slice %1 {offsets = [0, 2, 0], sizes = [16, 16, 32], strides = [1, 1, 1]} : vector<18x18x32xf32> to vector<16x16x32xf32>
    %19 = vector.extract_strided_slice %2 {offsets = [2, 0], sizes = [1, 32], strides = [1, 1]} : vector<9x32xf32> to vector<1x32xf32>
    %20 = vector.shape_cast %19 : vector<1x32xf32> to vector<32xf32>
    %21 = vector.shape_cast %20 : vector<32xf32> to vector<1x1x32xf32>
    %22 = vector.broadcast %21 : vector<1x1x32xf32> to vector<16x16x32xf32>
    %23 = arith.mulf %18, %22 : vector<16x16x32xf32>
    %24 = arith.addf %17, %23 : vector<16x16x32xf32>
    %25 = vector.extract_strided_slice %1 {offsets = [1, 0, 0], sizes = [16, 16, 32], strides = [1, 1, 1]} : vector<18x18x32xf32> to vector<16x16x32xf32>
    %26 = vector.extract_strided_slice %2 {offsets = [3, 0], sizes = [1, 32], strides = [1, 1]} : vector<9x32xf32> to vector<1x32xf32>
    %27 = vector.shape_cast %26 : vector<1x32xf32> to vector<32xf32>
    %28 = vector.shape_cast %27 : vector<32xf32> to vector<1x1x32xf32>
    %29 = vector.broadcast %28 : vector<1x1x32xf32> to vector<16x16x32xf32>
    %30 = arith.mulf %25, %29 : vector<16x16x32xf32>
    %31 = arith.addf %24, %30 : vector<16x16x32xf32>
    %32 = vector.extract_strided_slice %1 {offsets = [1, 1, 0], sizes = [16, 16, 32], strides = [1, 1, 1]} : vector<18x18x32xf32> to vector<16x16x32xf32>
    %33 = vector.extract_strided_slice %2 {offsets = [4, 0], sizes = [1, 32], strides = [1, 1]} : vector<9x32xf32> to vector<1x32xf32>
    %34 = vector.shape_cast %33 : vector<1x32xf32> to vector<32xf32>
    %35 = vector.shape_cast %34 : vector<32xf32> to vector<1x1x32xf32>
    %36 = vector.broadcast %35 : vector<1x1x32xf32> to vector<16x16x32xf32>
    %37 = arith.mulf %32, %36 : vector<16x16x32xf32>
    %38 = arith.addf %31, %37 : vector<16x16x32xf32>
    %39 = vector.extract_strided_slice %1 {offsets = [1, 2, 0], sizes = [16, 16, 32], strides = [1, 1, 1]} : vector<18x18x32xf32> to vector<16x16x32xf32>
    %40 = vector.extract_strided_slice %2 {offsets = [5, 0], sizes = [1, 32], strides = [1, 1]} : vector<9x32xf32> to vector<1x32xf32>
    %41 = vector.shape_cast %40 : vector<1x32xf32> to vector<32xf32>
    %42 = vector.shape_cast %41 : vector<32xf32> to vector<1x1x32xf32>
    %43 = vector.broadcast %42 : vector<1x1x32xf32> to vector<16x16x32xf32>
    %44 = arith.mulf %39, %43 : vector<16x16x32xf32>
    %45 = arith.addf %38, %44 : vector<16x16x32xf32>
    %46 = vector.extract_strided_slice %1 {offsets = [2, 0, 0], sizes = [16, 16, 32], strides = [1, 1, 1]} : vector<18x18x32xf32> to vector<16x16x32xf32>
    %47 = vector.extract_strided_slice %2 {offsets = [6, 0], sizes = [1, 32], strides = [1, 1]} : vector<9x32xf32> to vector<1x32xf32>
    %48 = vector.shape_cast %47 : vector<1x32xf32> to vector<32xf32>
    %49 = vector.shape_cast %48 : vector<32xf32> to vector<1x1x32xf32>
    %50 = vector.broadcast %49 : vector<1x1x32xf32> to vector<16x16x32xf32>
    %51 = arith.mulf %46, %50 : vector<16x16x32xf32>
    %52 = arith.addf %45, %51 : vector<16x16x32xf32>
    %53 = vector.extract_strided_slice %1 {offsets = [2, 1, 0], sizes = [16, 16, 32], strides = [1, 1, 1]} : vector<18x18x32xf32> to vector<16x16x32xf32>
    %54 = vector.extract_strided_slice %2 {offsets = [7, 0], sizes = [1, 32], strides = [1, 1]} : vector<9x32xf32> to vector<1x32xf32>
    %55 = vector.shape_cast %54 : vector<1x32xf32> to vector<32xf32>
    %56 = vector.shape_cast %55 : vector<32xf32> to vector<1x1x32xf32>
    %57 = vector.broadcast %56 : vector<1x1x32xf32> to vector<16x16x32xf32>
    %58 = arith.mulf %53, %57 : vector<16x16x32xf32>
    %59 = arith.addf %52, %58 : vector<16x16x32xf32>
    %60 = vector.extract_strided_slice %1 {offsets = [2, 2, 0], sizes = [16, 16, 32], strides = [1, 1, 1]} : vector<18x18x32xf32> to vector<16x16x32xf32>
    %61 = vector.extract_strided_slice %2 {offsets = [8, 0], sizes = [1, 32], strides = [1, 1]} : vector<9x32xf32> to vector<1x32xf32>
    %62 = vector.shape_cast %61 : vector<1x32xf32> to vector<32xf32>
    %63 = vector.shape_cast %62 : vector<32xf32> to vector<1x1x32xf32>
    %64 = vector.broadcast %63 : vector<1x1x32xf32> to vector<16x16x32xf32>
    %65 = arith.mulf %60, %64 : vector<16x16x32xf32>
    %66 = arith.addf %59, %65 : vector<16x16x32xf32>
    %c0_5 = arith.constant 0 : index
    %c0_6 = arith.constant 0 : index
    %67 = vector.load %arg3[%c0_5, %c0_6] : memref<1x32xf32, #tpu.memory_space<vmem>>, vector<1x32xf32>
    %68 = vector.shape_cast %67 : vector<1x32xf32> to vector<32xf32>
    %69 = vector.shape_cast %68 : vector<32xf32> to vector<1x1x32xf32>
    %70 = vector.broadcast %69 : vector<1x1x32xf32> to vector<16x16x32xf32>
    %71 = arith.mulf %66, %70 : vector<16x16x32xf32>
    %c0_7 = arith.constant 0 : index
    %c0_8 = arith.constant 0 : index
    %72 = vector.load %arg4[%c0_7, %c0_8] : memref<1x32xf32, #tpu.memory_space<vmem>>, vector<1x32xf32>
    %73 = vector.shape_cast %72 : vector<1x32xf32> to vector<32xf32>
    %74 = vector.shape_cast %73 : vector<32xf32> to vector<1x1x32xf32>
    %75 = vector.broadcast %74 : vector<1x1x32xf32> to vector<16x16x32xf32>
    %76 = arith.addf %71, %75 : vector<16x16x32xf32>
    %77 = arith.negf %76 : vector<16x16x32xf32>
    %78 = math.exp %77 : vector<16x16x32xf32>
    %cst_9 = arith.constant 1.000000e+00 : f32
    %79 = vector.broadcast %cst_9 : f32 to vector<16x16x32xf32>
    %80 = arith.addf %79, %78 : vector<16x16x32xf32>
    %81 = arith.divf %79, %80 : vector<16x16x32xf32>
    %82 = arith.mulf %76, %81 : vector<16x16x32xf32>
    %83 = vector.shape_cast %82 : vector<16x16x32xf32> to vector<256x32xf32>
    %cst_10 = arith.constant dense<0.000000e+00> : vector<32xf32>
    %84 = vector.multi_reduction <add>, %83, %cst_10 [0] : vector<256x32xf32> to vector<32xf32>
    %85 = vector.shape_cast %84 : vector<32xf32> to vector<1x32xf32>
    %cst_11 = arith.constant 2.560000e+02 : f32
    %86 = vector.broadcast %cst_11 : f32 to vector<1x32xf32>
    %87 = arith.divf %85, %86 : vector<1x32xf32>
    %c0_12 = arith.constant 0 : index
    %c0_13 = arith.constant 0 : index
    %88 = vector.load %arg5[%c0_12, %c0_13] : memref<32x8xf32, #tpu.memory_space<vmem>>, vector<32x8xf32>
    %cst_14 = arith.constant dense<0.000000e+00> : vector<1x8xf32>
    %89 = tpu.matmul %87, %88, %cst_14 {dimension_numbers = #tpu.dot_dimension_numbers<[1], [0], [0], [1], [0, 0, 1, 1], [], []>} : vector<1x32xf32>, vector<32x8xf32>, vector<1x8xf32> -> vector<1x8xf32>
    %c0_15 = arith.constant 0 : index
    %c0_16 = arith.constant 0 : index
    %90 = vector.load %arg6[%c0_15, %c0_16] : memref<1x8xf32, #tpu.memory_space<vmem>>, vector<1x8xf32>
    %91 = arith.addf %89, %90 : vector<1x8xf32>
    %92 = arith.negf %91 : vector<1x8xf32>
    %93 = math.exp %92 : vector<1x8xf32>
    %cst_17 = arith.constant 1.000000e+00 : f32
    %94 = vector.broadcast %cst_17 : f32 to vector<1x8xf32>
    %95 = arith.addf %94, %93 : vector<1x8xf32>
    %96 = arith.divf %94, %95 : vector<1x8xf32>
    %97 = arith.mulf %91, %96 : vector<1x8xf32>
    %c0_18 = arith.constant 0 : index
    %c0_19 = arith.constant 0 : index
    %98 = vector.load %arg7[%c0_18, %c0_19] : memref<8x32xf32, #tpu.memory_space<vmem>>, vector<8x32xf32>
    %cst_20 = arith.constant dense<0.000000e+00> : vector<1x32xf32>
    %99 = tpu.matmul %97, %98, %cst_20 {dimension_numbers = #tpu.dot_dimension_numbers<[1], [0], [0], [1], [0, 0, 1, 1], [], []>} : vector<1x8xf32>, vector<8x32xf32>, vector<1x32xf32> -> vector<1x32xf32>
    %c0_21 = arith.constant 0 : index
    %c0_22 = arith.constant 0 : index
    %100 = vector.load %arg8[%c0_21, %c0_22] : memref<1x32xf32, #tpu.memory_space<vmem>>, vector<1x32xf32>
    %101 = arith.addf %99, %100 : vector<1x32xf32>
    %102 = arith.negf %101 : vector<1x32xf32>
    %103 = math.exp %102 : vector<1x32xf32>
    %cst_23 = arith.constant 1.000000e+00 : f32
    %104 = vector.broadcast %cst_23 : f32 to vector<1x32xf32>
    %105 = arith.addf %104, %103 : vector<1x32xf32>
    %106 = arith.divf %104, %105 : vector<1x32xf32>
    %107 = vector.broadcast %106 : vector<1x32xf32> to vector<256x32xf32>
    %108 = arith.mulf %83, %107 : vector<256x32xf32>
    %c0_24 = arith.constant 0 : index
    %c0_25 = arith.constant 0 : index
    %109 = vector.load %arg9[%c0_24, %c0_25] : memref<32x16xf32, #tpu.memory_space<vmem>>, vector<32x16xf32>
    %cst_26 = arith.constant dense<0.000000e+00> : vector<256x16xf32>
    %110 = tpu.matmul %108, %109, %cst_26 {dimension_numbers = #tpu.dot_dimension_numbers<[1], [0], [0], [1], [0, 0, 1, 1], [], []>} : vector<256x32xf32>, vector<32x16xf32>, vector<256x16xf32> -> vector<256x16xf32>
    %c0_27 = arith.constant 0 : index
    %c0_28 = arith.constant 0 : index
    %111 = vector.load %arg10[%c0_27, %c0_28] : memref<1x16xf32, #tpu.memory_space<vmem>>, vector<1x16xf32>
    %112 = vector.broadcast %111 : vector<1x16xf32> to vector<256x16xf32>
    %113 = arith.addf %110, %112 : vector<256x16xf32>
    %c0_29 = arith.constant 0 : index
    %c0_30 = arith.constant 0 : index
    %c0_31 = arith.constant 0 : index
    %114 = vector.load %arg11[%c0_29, %c0_30, %c0_31] : memref<1x256x16xf32, #tpu.memory_space<vmem>>, vector<1x256x16xf32>
    %115 = vector.shape_cast %114 : vector<1x256x16xf32> to vector<256x16xf32>
    %116 = vector.shape_cast %113 : vector<256x16xf32> to vector<1x256x16xf32>
    tpu.vector_store %arg11[%c0_29, %c0_30, %c0_31], %116 {strides = array<i32>} : memref<1x256x16xf32, #tpu.memory_space<vmem>>, vector<1x256x16xf32>,
    return
  }
  func.func @transform_0(%arg0: i32) -> (i32, i32, i32, i32) {
    %c0_i32 = arith.constant 0 : i32
    %c0_i32_0 = arith.constant 0 : i32
    %c0_i32_1 = arith.constant 0 : i32
    %c0_i32_2 = arith.constant 0 : i32
    return %arg0, %c0_i32, %c0_i32_0, %c0_i32_1 : i32, i32, i32, i32
  }
  func.func @transform_1(%arg0: i32) -> (i32, i32) {
    %c0_i32 = arith.constant 0 : i32
    %c0_i32_0 = arith.constant 0 : i32
    %c0_i32_1 = arith.constant 0 : i32
    return %c0_i32, %c0_i32_0 : i32, i32
  }
  func.func @transform_2(%arg0: i32) -> (i32, i32) {
    %c0_i32 = arith.constant 0 : i32
    %c0_i32_0 = arith.constant 0 : i32
    %c0_i32_1 = arith.constant 0 : i32
    return %c0_i32, %c0_i32_0 : i32, i32
  }
  func.func @transform_3(%arg0: i32) -> (i32, i32) {
    %c0_i32 = arith.constant 0 : i32
    %c0_i32_0 = arith.constant 0 : i32
    %c0_i32_1 = arith.constant 0 : i32
    return %c0_i32, %c0_i32_0 : i32, i32
  }
  func.func @transform_4(%arg0: i32) -> (i32, i32) {
    %c0_i32 = arith.constant 0 : i32
    %c0_i32_0 = arith.constant 0 : i32
    %c0_i32_1 = arith.constant 0 : i32
    return %c0_i32, %c0_i32_0 : i32, i32
  }
  func.func @transform_5(%arg0: i32) -> (i32, i32) {
    %c0_i32 = arith.constant 0 : i32
    %c0_i32_0 = arith.constant 0 : i32
    %c0_i32_1 = arith.constant 0 : i32
    return %c0_i32, %c0_i32_0 : i32, i32
  }
  func.func @transform_6(%arg0: i32) -> (i32, i32) {
    %c0_i32 = arith.constant 0 : i32
    %c0_i32_0 = arith.constant 0 : i32
    %c0_i32_1 = arith.constant 0 : i32
    return %c0_i32, %c0_i32_0 : i32, i32
  }
  func.func @transform_7(%arg0: i32) -> (i32, i32) {
    %c0_i32 = arith.constant 0 : i32
    %c0_i32_0 = arith.constant 0 : i32
    %c0_i32_1 = arith.constant 0 : i32
    return %c0_i32, %c0_i32_0 : i32, i32
  }
  func.func @transform_8(%arg0: i32) -> (i32, i32) {
    %c0_i32 = arith.constant 0 : i32
    %c0_i32_0 = arith.constant 0 : i32
    %c0_i32_1 = arith.constant 0 : i32
    return %c0_i32, %c0_i32_0 : i32, i32
  }
  func.func @transform_9(%arg0: i32) -> (i32, i32) {
    %c0_i32 = arith.constant 0 : i32
    %c0_i32_0 = arith.constant 0 : i32
    %c0_i32_1 = arith.constant 0 : i32
    return %c0_i32, %c0_i32_0 : i32, i32
  }
  func.func @transform_10(%arg0: i32) -> (i32, i32, i32) {
    %c0_i32 = arith.constant 0 : i32
    %c0_i32_0 = arith.constant 0 : i32
    %c0_i32_1 = arith.constant 0 : i32
    return %arg0, %c0_i32, %c0_i32_0 : i32, i32, i32
  }
}

module attributes {stable_mosaic.version = 11 : i64} {
  func.func @_matmul_bias_act_kernel(%arg0: i32, %arg1: memref<256x16xf32, #tpu.memory_space<vmem>>, %arg2: memref<16x96xf32, #tpu.memory_space<vmem>>, %arg3: memref<1x96xf32, #tpu.memory_space<vmem>>, %arg4: memref<256x96xf32, #tpu.memory_space<vmem>>) attributes {dimension_semantics = [#tpu.dimension_semantics<parallel>], iteration_bounds = array<i64: 2>, scalar_prefetch = 0 : i64, scratch_operands = 0 : i64, tpu.core_type = #tpu.core_type<tc>, window_params = [{transform_indices = @transform_0, window_bounds = array<i64: 256, 16>}, {pipeline_mode = #tpu.pipeline_mode<synchronous>, transform_indices = @transform_1, window_bounds = array<i64: 16, 96>}, {pipeline_mode = #tpu.pipeline_mode<synchronous>, transform_indices = @transform_2, window_bounds = array<i64: 1, 96>}, {transform_indices = @transform_3, window_bounds = array<i64: 256, 96>}]} {
    %c0 = arith.constant 0 : index
    %c0_0 = arith.constant 0 : index
    %0 = vector.load %arg1[%c0, %c0_0] : memref<256x16xf32, #tpu.memory_space<vmem>>, vector<256x16xf32>
    %c0_1 = arith.constant 0 : index
    %c0_2 = arith.constant 0 : index
    %1 = vector.load %arg2[%c0_1, %c0_2] : memref<16x96xf32, #tpu.memory_space<vmem>>, vector<16x96xf32>
    %cst = arith.constant dense<0.000000e+00> : vector<256x96xf32>
    %2 = tpu.matmul %0, %1, %cst {dimension_numbers = #tpu.dot_dimension_numbers<[1], [0], [0], [1], [0, 0, 1, 1], [], []>} : vector<256x16xf32>, vector<16x96xf32>, vector<256x96xf32> -> vector<256x96xf32>
    %c0_3 = arith.constant 0 : index
    %c0_4 = arith.constant 0 : index
    %3 = vector.load %arg3[%c0_3, %c0_4] : memref<1x96xf32, #tpu.memory_space<vmem>>, vector<1x96xf32>
    %4 = vector.broadcast %3 : vector<1x96xf32> to vector<256x96xf32>
    %5 = arith.addf %2, %4 : vector<256x96xf32>
    %6 = arith.negf %5 : vector<256x96xf32>
    %7 = math.exp %6 : vector<256x96xf32>
    %cst_5 = arith.constant 1.000000e+00 : f32
    %8 = vector.broadcast %cst_5 : f32 to vector<256x96xf32>
    %9 = arith.addf %8, %7 : vector<256x96xf32>
    %10 = arith.divf %8, %9 : vector<256x96xf32>
    %11 = arith.mulf %5, %10 : vector<256x96xf32>
    %c0_6 = arith.constant 0 : index
    %c0_7 = arith.constant 0 : index
    %12 = vector.load %arg4[%c0_6, %c0_7] : memref<256x96xf32, #tpu.memory_space<vmem>>, vector<256x96xf32>
    tpu.vector_store %arg4[%c0_6, %c0_7], %11 {strides = array<i32>} : memref<256x96xf32, #tpu.memory_space<vmem>>, vector<256x96xf32>,
    return
  }
  func.func @transform_0(%arg0: i32) -> (i32, i32) {
    %c0_i32 = arith.constant 0 : i32
    %c0_i32_0 = arith.constant 0 : i32
    return %arg0, %c0_i32 : i32, i32
  }
  func.func @transform_1(%arg0: i32) -> (i32, i32) {
    %c0_i32 = arith.constant 0 : i32
    %c0_i32_0 = arith.constant 0 : i32
    %c0_i32_1 = arith.constant 0 : i32
    return %c0_i32, %c0_i32_0 : i32, i32
  }
  func.func @transform_2(%arg0: i32) -> (i32, i32) {
    %c0_i32 = arith.constant 0 : i32
    %c0_i32_0 = arith.constant 0 : i32
    %c0_i32_1 = arith.constant 0 : i32
    return %c0_i32, %c0_i32_0 : i32, i32
  }
  func.func @transform_3(%arg0: i32) -> (i32, i32) {
    %c0_i32 = arith.constant 0 : i32
    %c0_i32_0 = arith.constant 0 : i32
    return %arg0, %c0_i32 : i32, i32
  }
}

module attributes {stable_mosaic.version = 11 : i64} {
  func.func @_mbconv_core_kernel(%arg0: i32, %arg1: memref<1x9x9x96xf32, #tpu.memory_space<vmem>>, %arg2: memref<1x9x9x96xf32, #tpu.memory_space<vmem>>, %arg3: memref<1x9x9x96xf32, #tpu.memory_space<vmem>>, %arg4: memref<1x9x9x96xf32, #tpu.memory_space<vmem>>, %arg5: memref<9x96xf32, #tpu.memory_space<vmem>>, %arg6: memref<1x96xf32, #tpu.memory_space<vmem>>, %arg7: memref<1x96xf32, #tpu.memory_space<vmem>>, %arg8: memref<96x4xf32, #tpu.memory_space<vmem>>, %arg9: memref<1x4xf32, #tpu.memory_space<vmem>>, %arg10: memref<4x96xf32, #tpu.memory_space<vmem>>, %arg11: memref<1x96xf32, #tpu.memory_space<vmem>>, %arg12: memref<96x24xf32, #tpu.memory_space<vmem>>, %arg13: memref<1x24xf32, #tpu.memory_space<vmem>>, %arg14: memref<1x64x24xf32, #tpu.memory_space<vmem>>) attributes {dimension_semantics = [#tpu.dimension_semantics<parallel>], iteration_bounds = array<i64: 2>, scalar_prefetch = 0 : i64, scratch_operands = 0 : i64, tpu.core_type = #tpu.core_type<tc>, window_params = [{transform_indices = @transform_0, window_bounds = array<i64: 1, 9, 9, 96>}, {transform_indices = @transform_1, window_bounds = array<i64: 1, 9, 9, 96>}, {transform_indices = @transform_2, window_bounds = array<i64: 1, 9, 9, 96>}, {transform_indices = @transform_3, window_bounds = array<i64: 1, 9, 9, 96>}, {pipeline_mode = #tpu.pipeline_mode<synchronous>, transform_indices = @transform_4, window_bounds = array<i64: 9, 96>}, {pipeline_mode = #tpu.pipeline_mode<synchronous>, transform_indices = @transform_5, window_bounds = array<i64: 1, 96>}, {pipeline_mode = #tpu.pipeline_mode<synchronous>, transform_indices = @transform_6, window_bounds = array<i64: 1, 96>}, {pipeline_mode = #tpu.pipeline_mode<synchronous>, transform_indices = @transform_7, window_bounds = array<i64: 96, 4>}, {pipeline_mode = #tpu.pipeline_mode<synchronous>, transform_indices = @transform_8, window_bounds = array<i64: 1, 4>}, {pipeline_mode = #tpu.pipeline_mode<synchronous>, transform_indices = @transform_9, window_bounds = array<i64: 4, 96>}, {pipeline_mode = #tpu.pipeline_mode<synchronous>, transform_indices = @transform_10, window_bounds = array<i64: 1, 96>}, {pipeline_mode = #tpu.pipeline_mode<synchronous>, transform_indices = @transform_11, window_bounds = array<i64: 96, 24>}, {pipeline_mode = #tpu.pipeline_mode<synchronous>, transform_indices = @transform_12, window_bounds = array<i64: 1, 24>}, {transform_indices = @transform_13, window_bounds = array<i64: 1, 64, 24>}]} {
    %c0 = arith.constant 0 : index
    %c0_0 = arith.constant 0 : index
    %c0_1 = arith.constant 0 : index
    %c0_2 = arith.constant 0 : index
    %0 = vector.load %arg1[%c0, %c0_0, %c0_1, %c0_2] : memref<1x9x9x96xf32, #tpu.memory_space<vmem>>, vector<1x9x9x96xf32>
    %1 = vector.shape_cast %0 : vector<1x9x9x96xf32> to vector<9x9x96xf32>
    %c0_3 = arith.constant 0 : index
    %c0_4 = arith.constant 0 : index
    %c0_5 = arith.constant 0 : index
    %c0_6 = arith.constant 0 : index
    %2 = vector.load %arg2[%c0_3, %c0_4, %c0_5, %c0_6] : memref<1x9x9x96xf32, #tpu.memory_space<vmem>>, vector<1x9x9x96xf32>
    %3 = vector.shape_cast %2 : vector<1x9x9x96xf32> to vector<9x9x96xf32>
    %c0_7 = arith.constant 0 : index
    %c0_8 = arith.constant 0 : index
    %c0_9 = arith.constant 0 : index
    %c0_10 = arith.constant 0 : index
    %4 = vector.load %arg3[%c0_7, %c0_8, %c0_9, %c0_10] : memref<1x9x9x96xf32, #tpu.memory_space<vmem>>, vector<1x9x9x96xf32>
    %5 = vector.shape_cast %4 : vector<1x9x9x96xf32> to vector<9x9x96xf32>
    %c0_11 = arith.constant 0 : index
    %c0_12 = arith.constant 0 : index
    %c0_13 = arith.constant 0 : index
    %c0_14 = arith.constant 0 : index
    %6 = vector.load %arg4[%c0_11, %c0_12, %c0_13, %c0_14] : memref<1x9x9x96xf32, #tpu.memory_space<vmem>>, vector<1x9x9x96xf32>
    %7 = vector.shape_cast %6 : vector<1x9x9x96xf32> to vector<9x9x96xf32>
    %c0_15 = arith.constant 0 : index
    %c0_16 = arith.constant 0 : index
    %8 = vector.load %arg5[%c0_15, %c0_16] : memref<9x96xf32, #tpu.memory_space<vmem>>, vector<9x96xf32>
    %cst = arith.constant 0.000000e+00 : f32
    %9 = vector.broadcast %cst : f32 to vector<8x8x96xf32>
    %10 = vector.extract_strided_slice %1 {offsets = [0, 0, 0], sizes = [8, 8, 96], strides = [1, 1, 1]} : vector<9x9x96xf32> to vector<8x8x96xf32>
    %11 = vector.extract_strided_slice %8 {offsets = [0, 0], sizes = [1, 96], strides = [1, 1]} : vector<9x96xf32> to vector<1x96xf32>
    %12 = vector.shape_cast %11 : vector<1x96xf32> to vector<96xf32>
    %13 = vector.shape_cast %12 : vector<96xf32> to vector<1x1x96xf32>
    %14 = vector.broadcast %13 : vector<1x1x96xf32> to vector<8x8x96xf32>
    %15 = arith.mulf %10, %14 : vector<8x8x96xf32>
    %16 = arith.addf %9, %15 : vector<8x8x96xf32>
    %17 = vector.extract_strided_slice %3 {offsets = [0, 0, 0], sizes = [8, 8, 96], strides = [1, 1, 1]} : vector<9x9x96xf32> to vector<8x8x96xf32>
    %18 = vector.extract_strided_slice %8 {offsets = [1, 0], sizes = [1, 96], strides = [1, 1]} : vector<9x96xf32> to vector<1x96xf32>
    %19 = vector.shape_cast %18 : vector<1x96xf32> to vector<96xf32>
    %20 = vector.shape_cast %19 : vector<96xf32> to vector<1x1x96xf32>
    %21 = vector.broadcast %20 : vector<1x1x96xf32> to vector<8x8x96xf32>
    %22 = arith.mulf %17, %21 : vector<8x8x96xf32>
    %23 = arith.addf %16, %22 : vector<8x8x96xf32>
    %24 = vector.extract_strided_slice %1 {offsets = [0, 1, 0], sizes = [8, 8, 96], strides = [1, 1, 1]} : vector<9x9x96xf32> to vector<8x8x96xf32>
    %25 = vector.extract_strided_slice %8 {offsets = [2, 0], sizes = [1, 96], strides = [1, 1]} : vector<9x96xf32> to vector<1x96xf32>
    %26 = vector.shape_cast %25 : vector<1x96xf32> to vector<96xf32>
    %27 = vector.shape_cast %26 : vector<96xf32> to vector<1x1x96xf32>
    %28 = vector.broadcast %27 : vector<1x1x96xf32> to vector<8x8x96xf32>
    %29 = arith.mulf %24, %28 : vector<8x8x96xf32>
    %30 = arith.addf %23, %29 : vector<8x8x96xf32>
    %31 = vector.extract_strided_slice %5 {offsets = [0, 0, 0], sizes = [8, 8, 96], strides = [1, 1, 1]} : vector<9x9x96xf32> to vector<8x8x96xf32>
    %32 = vector.extract_strided_slice %8 {offsets = [3, 0], sizes = [1, 96], strides = [1, 1]} : vector<9x96xf32> to vector<1x96xf32>
    %33 = vector.shape_cast %32 : vector<1x96xf32> to vector<96xf32>
    %34 = vector.shape_cast %33 : vector<96xf32> to vector<1x1x96xf32>
    %35 = vector.broadcast %34 : vector<1x1x96xf32> to vector<8x8x96xf32>
    %36 = arith.mulf %31, %35 : vector<8x8x96xf32>
    %37 = arith.addf %30, %36 : vector<8x8x96xf32>
    %38 = vector.extract_strided_slice %7 {offsets = [0, 0, 0], sizes = [8, 8, 96], strides = [1, 1, 1]} : vector<9x9x96xf32> to vector<8x8x96xf32>
    %39 = vector.extract_strided_slice %8 {offsets = [4, 0], sizes = [1, 96], strides = [1, 1]} : vector<9x96xf32> to vector<1x96xf32>
    %40 = vector.shape_cast %39 : vector<1x96xf32> to vector<96xf32>
    %41 = vector.shape_cast %40 : vector<96xf32> to vector<1x1x96xf32>
    %42 = vector.broadcast %41 : vector<1x1x96xf32> to vector<8x8x96xf32>
    %43 = arith.mulf %38, %42 : vector<8x8x96xf32>
    %44 = arith.addf %37, %43 : vector<8x8x96xf32>
    %45 = vector.extract_strided_slice %5 {offsets = [0, 1, 0], sizes = [8, 8, 96], strides = [1, 1, 1]} : vector<9x9x96xf32> to vector<8x8x96xf32>
    %46 = vector.extract_strided_slice %8 {offsets = [5, 0], sizes = [1, 96], strides = [1, 1]} : vector<9x96xf32> to vector<1x96xf32>
    %47 = vector.shape_cast %46 : vector<1x96xf32> to vector<96xf32>
    %48 = vector.shape_cast %47 : vector<96xf32> to vector<1x1x96xf32>
    %49 = vector.broadcast %48 : vector<1x1x96xf32> to vector<8x8x96xf32>
    %50 = arith.mulf %45, %49 : vector<8x8x96xf32>
    %51 = arith.addf %44, %50 : vector<8x8x96xf32>
    %52 = vector.extract_strided_slice %1 {offsets = [1, 0, 0], sizes = [8, 8, 96], strides = [1, 1, 1]} : vector<9x9x96xf32> to vector<8x8x96xf32>
    %53 = vector.extract_strided_slice %8 {offsets = [6, 0], sizes = [1, 96], strides = [1, 1]} : vector<9x96xf32> to vector<1x96xf32>
    %54 = vector.shape_cast %53 : vector<1x96xf32> to vector<96xf32>
    %55 = vector.shape_cast %54 : vector<96xf32> to vector<1x1x96xf32>
    %56 = vector.broadcast %55 : vector<1x1x96xf32> to vector<8x8x96xf32>
    %57 = arith.mulf %52, %56 : vector<8x8x96xf32>
    %58 = arith.addf %51, %57 : vector<8x8x96xf32>
    %59 = vector.extract_strided_slice %3 {offsets = [1, 0, 0], sizes = [8, 8, 96], strides = [1, 1, 1]} : vector<9x9x96xf32> to vector<8x8x96xf32>
    %60 = vector.extract_strided_slice %8 {offsets = [7, 0], sizes = [1, 96], strides = [1, 1]} : vector<9x96xf32> to vector<1x96xf32>
    %61 = vector.shape_cast %60 : vector<1x96xf32> to vector<96xf32>
    %62 = vector.shape_cast %61 : vector<96xf32> to vector<1x1x96xf32>
    %63 = vector.broadcast %62 : vector<1x1x96xf32> to vector<8x8x96xf32>
    %64 = arith.mulf %59, %63 : vector<8x8x96xf32>
    %65 = arith.addf %58, %64 : vector<8x8x96xf32>
    %66 = vector.extract_strided_slice %1 {offsets = [1, 1, 0], sizes = [8, 8, 96], strides = [1, 1, 1]} : vector<9x9x96xf32> to vector<8x8x96xf32>
    %67 = vector.extract_strided_slice %8 {offsets = [8, 0], sizes = [1, 96], strides = [1, 1]} : vector<9x96xf32> to vector<1x96xf32>
    %68 = vector.shape_cast %67 : vector<1x96xf32> to vector<96xf32>
    %69 = vector.shape_cast %68 : vector<96xf32> to vector<1x1x96xf32>
    %70 = vector.broadcast %69 : vector<1x1x96xf32> to vector<8x8x96xf32>
    %71 = arith.mulf %66, %70 : vector<8x8x96xf32>
    %72 = arith.addf %65, %71 : vector<8x8x96xf32>
    %c0_17 = arith.constant 0 : index
    %c0_18 = arith.constant 0 : index
    %73 = vector.load %arg6[%c0_17, %c0_18] : memref<1x96xf32, #tpu.memory_space<vmem>>, vector<1x96xf32>
    %74 = vector.shape_cast %73 : vector<1x96xf32> to vector<96xf32>
    %75 = vector.shape_cast %74 : vector<96xf32> to vector<1x1x96xf32>
    %76 = vector.broadcast %75 : vector<1x1x96xf32> to vector<8x8x96xf32>
    %77 = arith.mulf %72, %76 : vector<8x8x96xf32>
    %c0_19 = arith.constant 0 : index
    %c0_20 = arith.constant 0 : index
    %78 = vector.load %arg7[%c0_19, %c0_20] : memref<1x96xf32, #tpu.memory_space<vmem>>, vector<1x96xf32>
    %79 = vector.shape_cast %78 : vector<1x96xf32> to vector<96xf32>
    %80 = vector.shape_cast %79 : vector<96xf32> to vector<1x1x96xf32>
    %81 = vector.broadcast %80 : vector<1x1x96xf32> to vector<8x8x96xf32>
    %82 = arith.addf %77, %81 : vector<8x8x96xf32>
    %83 = arith.negf %82 : vector<8x8x96xf32>
    %84 = math.exp %83 : vector<8x8x96xf32>
    %cst_21 = arith.constant 1.000000e+00 : f32
    %85 = vector.broadcast %cst_21 : f32 to vector<8x8x96xf32>
    %86 = arith.addf %85, %84 : vector<8x8x96xf32>
    %87 = arith.divf %85, %86 : vector<8x8x96xf32>
    %88 = arith.mulf %82, %87 : vector<8x8x96xf32>
    %89 = vector.shape_cast %88 : vector<8x8x96xf32> to vector<64x96xf32>
    %cst_22 = arith.constant dense<0.000000e+00> : vector<96xf32>
    %90 = vector.multi_reduction <add>, %89, %cst_22 [0] : vector<64x96xf32> to vector<96xf32>
    %91 = vector.shape_cast %90 : vector<96xf32> to vector<1x96xf32>
    %cst_23 = arith.constant 6.400000e+01 : f32
    %92 = vector.broadcast %cst_23 : f32 to vector<1x96xf32>
    %93 = arith.divf %91, %92 : vector<1x96xf32>
    %c0_24 = arith.constant 0 : index
    %c0_25 = arith.constant 0 : index
    %94 = vector.load %arg8[%c0_24, %c0_25] : memref<96x4xf32, #tpu.memory_space<vmem>>, vector<96x4xf32>
    %cst_26 = arith.constant dense<0.000000e+00> : vector<1x4xf32>
    %95 = tpu.matmul %93, %94, %cst_26 {dimension_numbers = #tpu.dot_dimension_numbers<[1], [0], [0], [1], [0, 0, 1, 1], [], []>} : vector<1x96xf32>, vector<96x4xf32>, vector<1x4xf32> -> vector<1x4xf32>
    %c0_27 = arith.constant 0 : index
    %c0_28 = arith.constant 0 : index
    %96 = vector.load %arg9[%c0_27, %c0_28] : memref<1x4xf32, #tpu.memory_space<vmem>>, vector<1x4xf32>
    %97 = arith.addf %95, %96 : vector<1x4xf32>
    %98 = arith.negf %97 : vector<1x4xf32>
    %99 = math.exp %98 : vector<1x4xf32>
    %cst_29 = arith.constant 1.000000e+00 : f32
    %100 = vector.broadcast %cst_29 : f32 to vector<1x4xf32>
    %101 = arith.addf %100, %99 : vector<1x4xf32>
    %102 = arith.divf %100, %101 : vector<1x4xf32>
    %103 = arith.mulf %97, %102 : vector<1x4xf32>
    %c0_30 = arith.constant 0 : index
    %c0_31 = arith.constant 0 : index
    %104 = vector.load %arg10[%c0_30, %c0_31] : memref<4x96xf32, #tpu.memory_space<vmem>>, vector<4x96xf32>
    %cst_32 = arith.constant dense<0.000000e+00> : vector<1x96xf32>
    %105 = tpu.matmul %103, %104, %cst_32 {dimension_numbers = #tpu.dot_dimension_numbers<[1], [0], [0], [1], [0, 0, 1, 1], [], []>} : vector<1x4xf32>, vector<4x96xf32>, vector<1x96xf32> -> vector<1x96xf32>
    %c0_33 = arith.constant 0 : index
    %c0_34 = arith.constant 0 : index
    %106 = vector.load %arg11[%c0_33, %c0_34] : memref<1x96xf32, #tpu.memory_space<vmem>>, vector<1x96xf32>
    %107 = arith.addf %105, %106 : vector<1x96xf32>
    %108 = arith.negf %107 : vector<1x96xf32>
    %109 = math.exp %108 : vector<1x96xf32>
    %cst_35 = arith.constant 1.000000e+00 : f32
    %110 = vector.broadcast %cst_35 : f32 to vector<1x96xf32>
    %111 = arith.addf %110, %109 : vector<1x96xf32>
    %112 = arith.divf %110, %111 : vector<1x96xf32>
    %113 = vector.broadcast %112 : vector<1x96xf32> to vector<64x96xf32>
    %114 = arith.mulf %89, %113 : vector<64x96xf32>
    %c0_36 = arith.constant 0 : index
    %c0_37 = arith.constant 0 : index
    %115 = vector.load %arg12[%c0_36, %c0_37] : memref<96x24xf32, #tpu.memory_space<vmem>>, vector<96x24xf32>
    %cst_38 = arith.constant dense<0.000000e+00> : vector<64x24xf32>
    %116 = tpu.matmul %114, %115, %cst_38 {dimension_numbers = #tpu.dot_dimension_numbers<[1], [0], [0], [1], [0, 0, 1, 1], [], []>} : vector<64x96xf32>, vector<96x24xf32>, vector<64x24xf32> -> vector<64x24xf32>
    %c0_39 = arith.constant 0 : index
    %c0_40 = arith.constant 0 : index
    %117 = vector.load %arg13[%c0_39, %c0_40] : memref<1x24xf32, #tpu.memory_space<vmem>>, vector<1x24xf32>
    %118 = vector.broadcast %117 : vector<1x24xf32> to vector<64x24xf32>
    %119 = arith.addf %116, %118 : vector<64x24xf32>
    %c0_41 = arith.constant 0 : index
    %c0_42 = arith.constant 0 : index
    %c0_43 = arith.constant 0 : index
    %120 = vector.load %arg14[%c0_41, %c0_42, %c0_43] : memref<1x64x24xf32, #tpu.memory_space<vmem>>, vector<1x64x24xf32>
    %121 = vector.shape_cast %120 : vector<1x64x24xf32> to vector<64x24xf32>
    %122 = vector.shape_cast %119 : vector<64x24xf32> to vector<1x64x24xf32>
    tpu.vector_store %arg14[%c0_41, %c0_42, %c0_43], %122 {strides = array<i32>} : memref<1x64x24xf32, #tpu.memory_space<vmem>>, vector<1x64x24xf32>,
    return
  }
  func.func @transform_0(%arg0: i32) -> (i32, i32, i32, i32) {
    %c0_i32 = arith.constant 0 : i32
    %c0_i32_0 = arith.constant 0 : i32
    %c0_i32_1 = arith.constant 0 : i32
    %c0_i32_2 = arith.constant 0 : i32
    return %arg0, %c0_i32, %c0_i32_0, %c0_i32_1 : i32, i32, i32, i32
  }
  func.func @transform_1(%arg0: i32) -> (i32, i32, i32, i32) {
    %c0_i32 = arith.constant 0 : i32
    %c0_i32_0 = arith.constant 0 : i32
    %c0_i32_1 = arith.constant 0 : i32
    %c0_i32_2 = arith.constant 0 : i32
    return %arg0, %c0_i32, %c0_i32_0, %c0_i32_1 : i32, i32, i32, i32
  }
  func.func @transform_2(%arg0: i32) -> (i32, i32, i32, i32) {
    %c0_i32 = arith.constant 0 : i32
    %c0_i32_0 = arith.constant 0 : i32
    %c0_i32_1 = arith.constant 0 : i32
    %c0_i32_2 = arith.constant 0 : i32
    return %arg0, %c0_i32, %c0_i32_0, %c0_i32_1 : i32, i32, i32, i32
  }
  func.func @transform_3(%arg0: i32) -> (i32, i32, i32, i32) {
    %c0_i32 = arith.constant 0 : i32
    %c0_i32_0 = arith.constant 0 : i32
    %c0_i32_1 = arith.constant 0 : i32
    %c0_i32_2 = arith.constant 0 : i32
    return %arg0, %c0_i32, %c0_i32_0, %c0_i32_1 : i32, i32, i32, i32
  }
  func.func @transform_4(%arg0: i32) -> (i32, i32) {
    %c0_i32 = arith.constant 0 : i32
    %c0_i32_0 = arith.constant 0 : i32
    %c0_i32_1 = arith.constant 0 : i32
    return %c0_i32, %c0_i32_0 : i32, i32
  }
  func.func @transform_5(%arg0: i32) -> (i32, i32) {
    %c0_i32 = arith.constant 0 : i32
    %c0_i32_0 = arith.constant 0 : i32
    %c0_i32_1 = arith.constant 0 : i32
    return %c0_i32, %c0_i32_0 : i32, i32
  }
  func.func @transform_6(%arg0: i32) -> (i32, i32) {
    %c0_i32 = arith.constant 0 : i32
    %c0_i32_0 = arith.constant 0 : i32
    %c0_i32_1 = arith.constant 0 : i32
    return %c0_i32, %c0_i32_0 : i32, i32
  }
  func.func @transform_7(%arg0: i32) -> (i32, i32) {
    %c0_i32 = arith.constant 0 : i32
    %c0_i32_0 = arith.constant 0 : i32
    %c0_i32_1 = arith.constant 0 : i32
    return %c0_i32, %c0_i32_0 : i32, i32
  }
  func.func @transform_8(%arg0: i32) -> (i32, i32) {
    %c0_i32 = arith.constant 0 : i32
    %c0_i32_0 = arith.constant 0 : i32
    %c0_i32_1 = arith.constant 0 : i32
    return %c0_i32, %c0_i32_0 : i32, i32
  }
  func.func @transform_9(%arg0: i32) -> (i32, i32) {
    %c0_i32 = arith.constant 0 : i32
    %c0_i32_0 = arith.constant 0 : i32
    %c0_i32_1 = arith.constant 0 : i32
    return %c0_i32, %c0_i32_0 : i32, i32
  }
  func.func @transform_10(%arg0: i32) -> (i32, i32) {
    %c0_i32 = arith.constant 0 : i32
    %c0_i32_0 = arith.constant 0 : i32
    %c0_i32_1 = arith.constant 0 : i32
    return %c0_i32, %c0_i32_0 : i32, i32
  }
  func.func @transform_11(%arg0: i32) -> (i32, i32) {
    %c0_i32 = arith.constant 0 : i32
    %c0_i32_0 = arith.constant 0 : i32
    %c0_i32_1 = arith.constant 0 : i32
    return %c0_i32, %c0_i32_0 : i32, i32
  }
  func.func @transform_12(%arg0: i32) -> (i32, i32) {
    %c0_i32 = arith.constant 0 : i32
    %c0_i32_0 = arith.constant 0 : i32
    %c0_i32_1 = arith.constant 0 : i32
    return %c0_i32, %c0_i32_0 : i32, i32
  }
  func.func @transform_13(%arg0: i32) -> (i32, i32, i32) {
    %c0_i32 = arith.constant 0 : i32
    %c0_i32_0 = arith.constant 0 : i32
    %c0_i32_1 = arith.constant 0 : i32
    return %arg0, %c0_i32, %c0_i32_0 : i32, i32, i32
  }
}

module attributes {stable_mosaic.version = 11 : i64} {
  func.func @_head_gap_cls_kernel(%arg0: i32, %arg1: memref<1x64x24xf32, #tpu.memory_space<vmem>>, %arg2: memref<24x1280xf32, #tpu.memory_space<vmem>>, %arg3: memref<1x1280xf32, #tpu.memory_space<vmem>>, %arg4: memref<1280x10xf32, #tpu.memory_space<vmem>>, %arg5: memref<1x10xf32, #tpu.memory_space<vmem>>, %arg6: memref<1x1x10xf32, #tpu.memory_space<vmem>>) attributes {dimension_semantics = [#tpu.dimension_semantics<parallel>], iteration_bounds = array<i64: 2>, scalar_prefetch = 0 : i64, scratch_operands = 0 : i64, tpu.core_type = #tpu.core_type<tc>, window_params = [{transform_indices = @transform_0, window_bounds = array<i64: 1, 64, 24>}, {pipeline_mode = #tpu.pipeline_mode<synchronous>, transform_indices = @transform_1, window_bounds = array<i64: 24, 1280>}, {pipeline_mode = #tpu.pipeline_mode<synchronous>, transform_indices = @transform_2, window_bounds = array<i64: 1, 1280>}, {pipeline_mode = #tpu.pipeline_mode<synchronous>, transform_indices = @transform_3, window_bounds = array<i64: 1280, 10>}, {pipeline_mode = #tpu.pipeline_mode<synchronous>, transform_indices = @transform_4, window_bounds = array<i64: 1, 10>}, {transform_indices = @transform_5, window_bounds = array<i64: 1, 1, 10>}]} {
    %c0 = arith.constant 0 : index
    %c0_0 = arith.constant 0 : index
    %c0_1 = arith.constant 0 : index
    %0 = vector.load %arg1[%c0, %c0_0, %c0_1] : memref<1x64x24xf32, #tpu.memory_space<vmem>>, vector<1x64x24xf32>
    %1 = vector.shape_cast %0 : vector<1x64x24xf32> to vector<64x24xf32>
    %c0_2 = arith.constant 0 : index
    %c0_3 = arith.constant 0 : index
    %2 = vector.load %arg2[%c0_2, %c0_3] : memref<24x1280xf32, #tpu.memory_space<vmem>>, vector<24x1280xf32>
    %cst = arith.constant dense<0.000000e+00> : vector<64x1280xf32>
    %3 = tpu.matmul %1, %2, %cst {dimension_numbers = #tpu.dot_dimension_numbers<[1], [0], [0], [1], [0, 0, 1, 1], [], []>} : vector<64x24xf32>, vector<24x1280xf32>, vector<64x1280xf32> -> vector<64x1280xf32>
    %c0_4 = arith.constant 0 : index
    %c0_5 = arith.constant 0 : index
    %4 = vector.load %arg3[%c0_4, %c0_5] : memref<1x1280xf32, #tpu.memory_space<vmem>>, vector<1x1280xf32>
    %5 = vector.broadcast %4 : vector<1x1280xf32> to vector<64x1280xf32>
    %6 = arith.addf %3, %5 : vector<64x1280xf32>
    %7 = arith.negf %6 : vector<64x1280xf32>
    %8 = math.exp %7 : vector<64x1280xf32>
    %cst_6 = arith.constant 1.000000e+00 : f32
    %9 = vector.broadcast %cst_6 : f32 to vector<64x1280xf32>
    %10 = arith.addf %9, %8 : vector<64x1280xf32>
    %11 = arith.divf %9, %10 : vector<64x1280xf32>
    %12 = arith.mulf %6, %11 : vector<64x1280xf32>
    %cst_7 = arith.constant dense<0.000000e+00> : vector<1280xf32>
    %13 = vector.multi_reduction <add>, %12, %cst_7 [0] : vector<64x1280xf32> to vector<1280xf32>
    %14 = vector.shape_cast %13 : vector<1280xf32> to vector<1x1280xf32>
    %cst_8 = arith.constant 6.400000e+01 : f32
    %15 = vector.broadcast %cst_8 : f32 to vector<1x1280xf32>
    %16 = arith.divf %14, %15 : vector<1x1280xf32>
    %c0_9 = arith.constant 0 : index
    %c0_10 = arith.constant 0 : index
    %17 = vector.load %arg4[%c0_9, %c0_10] : memref<1280x10xf32, #tpu.memory_space<vmem>>, vector<1280x10xf32>
    %cst_11 = arith.constant dense<0.000000e+00> : vector<1x10xf32>
    %18 = tpu.matmul %16, %17, %cst_11 {dimension_numbers = #tpu.dot_dimension_numbers<[1], [0], [0], [1], [0, 0, 1, 1], [], []>} : vector<1x1280xf32>, vector<1280x10xf32>, vector<1x10xf32> -> vector<1x10xf32>
    %c0_12 = arith.constant 0 : index
    %c0_13 = arith.constant 0 : index
    %19 = vector.load %arg5[%c0_12, %c0_13] : memref<1x10xf32, #tpu.memory_space<vmem>>, vector<1x10xf32>
    %20 = arith.addf %18, %19 : vector<1x10xf32>
    %c0_14 = arith.constant 0 : index
    %c0_15 = arith.constant 0 : index
    %c0_16 = arith.constant 0 : index
    %21 = vector.load %arg6[%c0_14, %c0_15, %c0_16] : memref<1x1x10xf32, #tpu.memory_space<vmem>>, vector<1x1x10xf32>
    %22 = vector.shape_cast %21 : vector<1x1x10xf32> to vector<1x10xf32>
    %23 = vector.shape_cast %20 : vector<1x10xf32> to vector<1x1x10xf32>
    tpu.vector_store %arg6[%c0_14, %c0_15, %c0_16], %23 {strides = array<i32>} : memref<1x1x10xf32, #tpu.memory_space<vmem>>, vector<1x1x10xf32>,
    return
  }
  func.func @transform_0(%arg0: i32) -> (i32, i32, i32) {
    %c0_i32 = arith.constant 0 : i32
    %c0_i32_0 = arith.constant 0 : i32
    %c0_i32_1 = arith.constant 0 : i32
    return %arg0, %c0_i32, %c0_i32_0 : i32, i32, i32
  }
  func.func @transform_1(%arg0: i32) -> (i32, i32) {
    %c0_i32 = arith.constant 0 : i32
    %c0_i32_0 = arith.constant 0 : i32
    %c0_i32_1 = arith.constant 0 : i32
    return %c0_i32, %c0_i32_0 : i32, i32
  }
  func.func @transform_2(%arg0: i32) -> (i32, i32) {
    %c0_i32 = arith.constant 0 : i32
    %c0_i32_0 = arith.constant 0 : i32
    %c0_i32_1 = arith.constant 0 : i32
    return %c0_i32, %c0_i32_0 : i32, i32
  }
  func.func @transform_3(%arg0: i32) -> (i32, i32) {
    %c0_i32 = arith.constant 0 : i32
    %c0_i32_0 = arith.constant 0 : i32
    %c0_i32_1 = arith.constant 0 : i32
    return %c0_i32, %c0_i32_0 : i32, i32
  }
  func.func @transform_4(%arg0: i32) -> (i32, i32) {
    %c0_i32 = arith.constant 0 : i32
    %c0_i32_0 = arith.constant 0 : i32
    %c0_i32_1 = arith.constant 0 : i32
    return %c0_i32, %c0_i32_0 : i32, i32
  }
  func.func @transform_5(%arg0: i32) -> (i32, i32, i32) {
    %c0_i32 = arith.constant 0 : i32
    %c0_i32_0 = arith.constant 0 : i32
    %c0_i32_1 = arith.constant 0 : i32
    return %arg0, %c0_i32, %c0_i32_0 : i32, i32, i32
  }
}

</mosaic_0001>

<llo_original>
// kernel: model_forward.5
$region0: #{model_forward.5}
  #allocation0 [shape = 'u32[]', space=smem, size = 0x4, offset = 0x4, fixed_abs, tag = 'smem constant byte address 0x4 - core index']
  #allocation1 [shape = 'u32[144,128]{1,0:T(1,128)}', space=vmem, size = 0x12000, scoped, tag = 'internal scratch']
  %s0 = inlined_call_operand.vmem [shape: f32[512,27], index: 0, kind: input, shape index: {}]
  %s1 = inlined_call_operand.vmem [shape: f32[27,32], index: 1, kind: input, shape index: {}]
  %s2 = inlined_call_operand.vmem [shape: f32[1,32], index: 2, kind: input, shape index: {}]
  %s3 = inlined_call_operand.vmem [shape: f32[512,32], index: 3, kind: output, shape index: {}]
  %s4 = sld [smem:[#allocation0]]
  $region45: #{model_forward.5} parent=0
    _
  %s6 = ssub.s32 1, %s4
  %s7 = scalar_select 0, %s6, %s4
  loop: start=0, step=1, limit=4
  $region2: #{model_forward.5} parent=0 // loop_pre_header
    _
  $region3: #{model_forward.5} parent=0 // loop_header
    %s9 = sphi 0, %s13
    %p10 = scmp.ge.s32.totalorder %s9, 4
    %s19 = sphi 0, %s21
    %s22 = sphi 0, %s19
    %s23 = sphi 0, %s22
    %s39 = sphi 0, %s23
    %s43 = sphi 0, %s43
    %s45 = sphi 0, %s43
    %s46 = sphi 0, %s45
    %s60 = sphi 0, %s46
    %s64 = sphi 0, %s64
    %s66 = sphi 0, %s64
    %s67 = sphi 0, %s66
    %s81 = sphi 0, %s67
    %s87 = sphi 0, %s89
    %s90 = sphi 0, %s87
    %s91 = sphi 0, %s90
    %s107 = sphi 0, %s91
  $region4: #{model_forward.5} parent=0 // loop_header_branch
    %12 = sbr.rel (%p10) target = $region8
  $region5: #{model_forward.5} parent=0 // loop_body
    %s14 = ssub.s32 %s9, 1
    %s15 = ssub.s32 %s9, 2
    %s16 = sadd.s32 %s9, 1
    %s17 = ssub.s32 %s9, %s16
    %p18 = scmp.eq.s32.totalorder %s17, 0
    %s20 = sadd.s32 %s19, 1
    %s21 = scalar_select %p18, %s19, %s20
    %p24 = pneg %p18
    %p25 = scmp.eq.s32.totalorder %s9, 1
    %p26 = por %p24, %p25
    %p27 = scmp.ne.s32.totalorder %s19, %s22
    %p28 = scmp.eq.s32.totalorder %s9, 0
    %p29 = por %p27, %p28
    %p30 = scmp.ne.s32.totalorder %s19, %s22
    %p31 = scmp.eq.s32.totalorder %s14, 1
    %p32 = por %p30, %p31
    %p33 = scmp.ne.s32.totalorder %s22, %s23
    %p34 = scmp.eq.s32.totalorder %s14, 0
    %p35 = por %p33, %p34
    %p36 = scmp.ne.s32.totalorder %s22, %s23
    %p37 = scmp.eq.s32.totalorder %s15, 1
    %p38 = por %p36, %p37
    %p40 = scmp.ne.s32.totalorder %s23, %s39
    %p41 = scmp.eq.s32.totalorder %s15, 0
    %p42 = por %p40, %p41
    %s44 = sadd.s32 %s43, 1
    %p47 = scmp.eq.s32.totalorder %s9, 1
    %p48 = scmp.ne.s32.totalorder %s43, %s45
    %p49 = scmp.eq.s32.totalorder %s9, 0
    %p50 = por %p48, %p49
    %p51 = scmp.ne.s32.totalorder %s43, %s45
    %p52 = scmp.eq.s32.totalorder %s14, 1
    %p53 = por %p51, %p52
    %p54 = scmp.ne.s32.totalorder %s45, %s46
    %p55 = scmp.eq.s32.totalorder %s14, 0
    %p56 = por %p54, %p55
    %p57 = scmp.ne.s32.totalorder %s45, %s46
    %p58 = scmp.eq.s32.totalorder %s15, 1
    %p59 = por %p57, %p58
    %p61 = scmp.ne.s32.totalorder %s46, %s60
    %p62 = scmp.eq.s32.totalorder %s15, 0
    %p63 = por %p61, %p62
    %s65 = sadd.s32 %s64, 1
    %p68 = scmp.eq.s32.totalorder %s9, 1
    %p69 = scmp.ne.s32.totalorder %s64, %s66
    %p70 = scmp.eq.s32.totalorder %s9, 0
    %p71 = por %p69, %p70
    %p72 = scmp.ne.s32.totalorder %s64, %s66
    %p73 = scmp.eq.s32.totalorder %s14, 1
    %p74 = por %p72, %p73
    %p75 = scmp.ne.s32.totalorder %s66, %s67
    %p76 = scmp.eq.s32.totalorder %s14, 0
    %p77 = por %p75, %p76
    %p78 = scmp.ne.s32.totalorder %s66, %s67
    %p79 = scmp.eq.s32.totalorder %s15, 1
    %p80 = por %p78, %p79
    %p82 = scmp.ne.s32.totalorder %s67, %s81
    %p83 = scmp.eq.s32.totalorder %s15, 0
    %p84 = por %p82, %p83
    %s85 = ssub.s32 %s9, %s16
    %p86 = scmp.eq.s32.totalorder %s85, 0
    %s88 = sadd.s32 %s87, 1
    %s89 = scalar_select %p86, %s87, %s88
    %p92 = pneg %p86
    %p93 = scmp.eq.s32.totalorder %s9, 1
    %p94 = por %p92, %p93
    %p95 = scmp.ne.s32.totalorder %s87, %s90
    %p96 = scmp.eq.s32.totalorder %s9, 0
    %p97 = por %p95, %p96
    %p98 = scmp.ne.s32.totalorder %s87, %s90
    %p99 = scmp.eq.s32.totalorder %s14, 1
    %p100 = por %p98, %p99
    %p101 = scmp.ne.s32.totalorder %s90, %s91
    %p102 = scmp.eq.s32.totalorder %s14, 0
    %p103 = por %p101, %p102
    %p104 = scmp.ne.s32.totalorder %s90, %s91
    %p105 = scmp.eq.s32.totalorder %s15, 1
    %p106 = por %p104, %p105
    %p108 = scmp.ne.s32.totalorder %s91, %s107
    %p109 = scmp.eq.s32.totalorder %s15, 0
    %p110 = por %p108, %p109
    %p111 = scmp.le.s32.totalorder 1, %s9
    %p112 = scmp.lt.s32.totalorder %s9, 3
    %p113 = pnand %p111, %p112
    %p114 = pneg %p113
    // Predicated region
    $region9: #{model_forward.5} parent=5 // pred_check
      _
    $region10: #{model_forward.5} parent=5 // pred_check_branch
      %116 = sbr.rel (%p113) target = $region12
    $region11: #{model_forward.5} parent=5 // pred_region
      %s117 = ssub.s32 %s9, 1
      // Predicated region
      $region13: #{model_forward.5} parent=11 // pred_check
        %p118 = pneg %p56
      $region14: #{model_forward.5} parent=11 // pred_check_branch
        %120 = sbr.rel (%p118) target = $region16
      $region15: #{model_forward.5} parent=11 // pred_region
        _
      $region16: #{model_forward.5} parent=11 // pred_fallthru
        _
      // Predicated region
      $region17: #{model_forward.5} parent=11 // pred_check
        %p121 = pneg %p77
      $region18: #{model_forward.5} parent=11 // pred_check_branch
        %123 = sbr.rel (%p121) target = $region20
      $region19: #{model_forward.5} parent=11 // pred_region
        _
      $region20: #{model_forward.5} parent=11 // pred_fallthru
        _
    $region12: #{model_forward.5} parent=5 // pred_fallthru
      _
    %p124 = scmp.lt.s32.totalorder %s9, 2
    // Predicated region
    $region21: #{model_forward.5} parent=5 // pred_check
      %p125 = pneg %p124
    $region22: #{model_forward.5} parent=5 // pred_check_branch
      %127 = sbr.rel (%p125) target = $region24
    $region23: #{model_forward.5} parent=5 // pred_region
      // Predicated region
      $region25: #{model_forward.5} parent=23 // pred_check
        %p128 = pneg %p29
      $region26: #{model_forward.5} parent=23 // pred_check_branch
        %130 = sbr.rel (%p128) target = $region28
      $region27: #{model_forward.5} parent=23 // pred_region
        %s131 = smul.u32 32, %s9
        %p132 = scmp.lt.s32.totalorder %s131, 63
        %s133 = scalar_select %p132, %s131, 63
        %s134 = smul.addr %s133, 8
        %s135 = scalar_lea.vmem %s0, %s134
        %s136 = smul.u32 32, %s9
      $region28: #{model_forward.5} parent=23 // pred_fallthru
        _
    $region24: #{model_forward.5} parent=5 // pred_fallthru
      _
    %p137 = scmp.le.s32.totalorder 1, %s9
    %p138 = scmp.lt.s32.totalorder %s9, 3
    %p139 = pnand %p137, %p138
    %p140 = pneg %p139
    // Predicated region
    $region29: #{model_forward.5} parent=5 // pred_check
      _
    $region30: #{model_forward.5} parent=5 // pred_check_branch
      %142 = sbr.rel (%p139) target = $region32
    $region31: #{model_forward.5} parent=5 // pred_region
      %s143 = ssub.s32 %s9, 1
      %s144 = smul.u32 32, %s14
      %p145 = scmp.lt.s32.totalorder %s144, 63
      %s146 = scalar_select %p145, %s144, 63
      %s147 = smul.addr %s146, 8
      %s148 = scalar_lea.vmem %s0, %s147
      %p149 = pneg %p35
      %p150 = pneg %p32
      %p151 = pneg %p56
      %p152 = pneg %p53
      %p153 = pneg %p77
      %p154 = pneg %p74
      %p155 = pneg %p103
      %p156 = pneg %p100
      %s157 = smul.u32 32, %s14
      %p158 = scmp.lt.s32.totalorder %s157, 63
      %s159 = scalar_select %p158, %s157, 63
      %s160 = smul.addr %s159, 8
      %s161 = scalar_lea.vmem %s3, %s160
      %s162 = smul.u32 32, %s14
      %p163 = scmp.lt.s32.totalorder %s162, 63
      %s164 = scalar_select %p163, %s162, 63
      %s165 = smul.addr %s164, 8
      %s166 = scalar_lea.vmem %s0, %s165
      %s167 = smul.u32 32, %s14
      %s168 = smul.u32 32, %s14
      %p169 = scmp.lt.s32.totalorder %s168, 63
      %s170 = scalar_select %p169, %s168, 63
      %s171 = smul.addr %s170, 8
      %s172 = scalar_lea.vmem %s3, %s171
      %s173 = smul.u32 32, %s14
      %v174 = vld [vmem:[%s166] sm:$0xff]
      %v175 = vld [vmem:[%s166 + $0x8] sm:$0xff]
      %v176 = vld [vmem:[%s166 + $0x10] sm:$0xff]
      %v177 = vld [vmem:[%s166 + $0x18] sm:$0xff]
      %v178 = vld [vmem:[%s166 + $0x20] sm:$0xff]
      %v179 = vld [vmem:[%s166 + $0x28] sm:$0xff]
      %v180 = vld [vmem:[%s166 + $0x30] sm:$0xff]
      %v181 = vld [vmem:[%s166 + $0x38] sm:$0xff]
      %v182 = vld [vmem:[%s166 + $0x40] sm:$0xff]
      %v183 = vld [vmem:[%s166 + $0x48] sm:$0xff]
      %v184 = vld [vmem:[%s166 + $0x50] sm:$0xff]
      %v185 = vld [vmem:[%s166 + $0x58] sm:$0xff]
      %v186 = vld [vmem:[%s166 + $0x60] sm:$0xff]
      %v187 = vld [vmem:[%s166 + $0x68] sm:$0xff]
      %v188 = vld [vmem:[%s166 + $0x70] sm:$0xff]
      %v189 = vld [vmem:[%s166 + $0x78] sm:$0xff]
      %v190 = vld [vmem:[%s166 + $0x80] sm:$0xff]
      %v191 = vld [vmem:[%s166 + $0x88] sm:$0xff]
      %v192 = vld [vmem:[%s166 + $0x90] sm:$0xff]
      %v193 = vld [vmem:[%s166 + $0x98] sm:$0xff]
      %v194 = vld [vmem:[%s166 + $0xa0] sm:$0xff]
      %v195 = vld [vmem:[%s166 + $0xa8] sm:$0xff]
      %v196 = vld [vmem:[%s166 + $0xb0] sm:$0xff]
      %v197 = vld [vmem:[%s166 + $0xb8] sm:$0xff]
      %v198 = vld [vmem:[%s166 + $0xc0] sm:$0xff]
      %v199 = vld [vmem:[%s166 + $0xc8] sm:$0xff]
      %v200 = vld [vmem:[%s166 + $0xd0] sm:$0xff]
      %v201 = vld [vmem:[%s166 + $0xd8] sm:$0xff]
      %v202 = vld [vmem:[%s166 + $0xe0] sm:$0xff]
      %v203 = vld [vmem:[%s166 + $0xe8] sm:$0xff]
      %v204 = vld [vmem:[%s166 + $0xf0] sm:$0xff]
      %v205 = vld [vmem:[%s166 + $0xf8] sm:$0xff]
      %v206 = vld [vmem:[%s1] sm:$0xff]
      %v207 = vld [vmem:[%s1 + $0x8] sm:$0xff]
      %v208 = vld [vmem:[%s1 + $0x10] sm:$0xff]
      %v209 = vld [vmem:[%s1 + $0x18] sm:$0x7]
      %v210 = vld [vmem:[%s2] sm:$0x1]
      %v212 = vlaneseq
      %v213 = vshrl.u32 %v212, 7
      %v214 = vsub.s32 0, %v213
      %v215 = vrot.slane %v210, %v214
      %vm217 = vcmask 220160
      %v219 = vsel %vm217, %v174, 0
      %v222 = vsel %vm217, %v175, 0
      %v225 = vsel %vm217, %v176, 0
      %v228 = vsel %vm217, %v177, 0
      %v231 = vsel %vm217, %v178, 0
      %v234 = vsel %vm217, %v179, 0
      %v237 = vsel %vm217, %v180, 0
      %v240 = vsel %vm217, %v181, 0
      %v243 = vsel %vm217, %v182, 0
      %v246 = vsel %vm217, %v183, 0
      %v249 = vsel %vm217, %v184, 0
      %v252 = vsel %vm217, %v185, 0
      %v255 = vsel %vm217, %v186, 0
      %v258 = vsel %vm217, %v187, 0
      %v261 = vsel %vm217, %v188, 0
      %v264 = vsel %vm217, %v189, 0
      %v267 = vsel %vm217, %v190, 0
      %v270 = vsel %vm217, %v191, 0
      %v273 = vsel %vm217, %v192, 0
      %v276 = vsel %vm217, %v193, 0
      %v279 = vsel %vm217, %v194, 0
      %v282 = vsel %vm217, %v195, 0
      %v285 = vsel %vm217, %v196, 0
      %v288 = vsel %vm217, %v197, 0
      %v291 = vsel %vm217, %v198, 0
      %v294 = vsel %vm217, %v199, 0
      %v297 = vsel %vm217, %v200, 0
      %v300 = vsel %vm217, %v201, 0
      %v303 = vsel %vm217, %v202, 0
      %v306 = vsel %vm217, %v203, 0
      %v309 = vsel %vm217, %v204, 0
      %v312 = vsel %vm217, %v205, 0
      %vm314 = vcmask 1042432
      %v316 = vsel %vm314, %v209, 0
      %318 = vmatprep.subr.mxu0 0.0
      %319 = vmatpush1.msra.mxu0 %v206
      %320 = vmatprep.subr.mxu0 0.0
      %321 = vmatpush1.msra.mxu0 %v207
      %322 = vmatprep.subr.mxu0 0.0
      %323 = vmatpush1.msra.mxu0 %v208
      %324 = vmatprep.subr.mxu0 0.0
      %325 = vmatpush1.msra.mxu0 %v316
      %326 = vmatprep.subr.mxu0 0.0
      %327 = vmatpush1.msra.mxu0 0.0
      %328 = vmatprep.subr.mxu0 0.0
      %329 = vmatpush1.msra.mxu0 0.0
      %330 = vmatprep.subr.mxu0 0.0
      %331 = vmatpush1.msra.mxu0 0.0
      %332 = vmatprep.subr.mxu0 0.0
      %333 = vmatpush1.msra.mxu0 0.0
      %334 = vmatprep.subr.mxu0 0.0
      %335 = vmatpush1.msra.mxu0 0.0
      %336 = vmatprep.subr.mxu0 0.0
      %337 = vmatpush1.msra.mxu0 0.0
      %338 = vmatprep.subr.mxu0 0.0
      %339 = vmatpush1.msra.mxu0 0.0
      %340 = vmatprep.subr.mxu0 0.0
      %341 = vmatpush1.msra.mxu0 0.0
      %342 = vmatprep.subr.mxu0 0.0
      %343 = vmatpush1.msra.mxu0 0.0
      %344 = vmatprep.subr.mxu0 0.0
      %345 = vmatpush1.msra.mxu0 0.0
      %346 = vmatprep.subr.mxu0 0.0
      %347 = vmatpush1.msra.mxu0 0.0
      %348 = vmatprep.subr.mxu0 0.0
      %349 = vmatpush1.msra.mxu0 0.0
      %350 = vmatprep.subr.mxu0 0.0
      %351 = vmatpush1.msra.mxu0 0.0
      %352 = vmatprep.subr.mxu0 0.0
      %353 = vmatpush1.msra.mxu0 0.0
      %354 = vmatprep.subr.mxu0 0.0
      %355 = vmatpush1.msra.mxu0 0.0
      %356 = vmatprep.subr.mxu0 0.0
      %357 = vmatpush1.msra.mxu0 0.0
      %358 = vmatprep.subr.mxu0 0.0
      %359 = vmatpush1.msra.mxu0 0.0
      %360 = vmatprep.subr.mxu0 0.0
      %361 = vmatpush1.msra.mxu0 0.0
      %362 = vmatprep.subr.mxu0 0.0
      %363 = vmatpush1.msra.mxu0 0.0
      %364 = vmatprep.subr.mxu0 0.0
      %365 = vmatpush1.msra.mxu0 0.0
      %366 = vmatprep.subr.mxu0 0.0
      %367 = vmatpush1.msra.mxu0 0.0
      %368 = vmatprep.subr.mxu0 0.0
      %369 = vmatpush1.msra.mxu0 0.0
      %370 = vmatprep.subr.mxu0 0.0
      %371 = vmatpush1.msra.mxu0 0.0
      %372 = vmatprep.subr.mxu0 0.0
      %373 = vmatpush1.msra.mxu0 0.0
      %374 = vmatprep.subr.mxu0 0.0
      %375 = vmatpush1.msra.mxu0 0.0
      %376 = vmatprep.subr.mxu0 0.0
      %377 = vmatpush1.msra.mxu0 0.0
      %378 = vmatprep.subr.mxu0 0.0
      %379 = vmatpush1.msra.mxu0 0.0
      %380 = vmatprep.subr.mxu0 0.0
      %381 = vmatpush1.msra.mxu0 0.0
      %382 = vmatprep.mubr.f32.mxu0 0.0
      %383 = vmatmul.mubr.f32.gmra.mrb[0].mxu0 %v219
      %v384 = vpop.f32.mrb[0].mxu0
      %v385 = vadd.f32 %v215, %v384
      %v386 = vpop.f32.mrb[0].mxu0
      %387 = vmatprep.mubr.f32.mxu0 0.0
      %388 = vmatmul.mubr.f32.gmra.mrb[0].mxu0 %v222
      %v389 = vpop.f32.mrb[0].mxu0
      %v390 = vadd.f32 %v215, %v389
      %v391 = vpop.f32.mrb[0].mxu0
      %392 = vmatprep.mubr.f32.mxu0 0.0
      %393 = vmatmul.mubr.f32.gmra.mrb[0].mxu0 %v225
      %v394 = vpop.f32.mrb[0].mxu0
      %v395 = vadd.f32 %v215, %v394
      %v396 = vpop.f32.mrb[0].mxu0
      %397 = vmatprep.mubr.f32.mxu0 0.0
      %398 = vmatmul.mubr.f32.gmra.mrb[0].mxu0 %v228
      %v399 = vpop.f32.mrb[0].mxu0
      %v400 = vadd.f32 %v215, %v399
      %v401 = vpop.f32.mrb[0].mxu0
      %402 = vmatprep.mubr.f32.mxu0 0.0
      %403 = vmatmul.mubr.f32.gmra.mrb[0].mxu0 %v231
      %v404 = vpop.f32.mrb[0].mxu0
      %v405 = vadd.f32 %v215, %v404
      %v406 = vpop.f32.mrb[0].mxu0
      %407 = vmatprep.mubr.f32.mxu0 0.0
      %408 = vmatmul.mubr.f32.gmra.mrb[0].mxu0 %v234
      %v409 = vpop.f32.mrb[0].mxu0
      %v410 = vadd.f32 %v215, %v409
      %v411 = vpop.f32.mrb[0].mxu0
      %412 = vmatprep.mubr.f32.mxu0 0.0
      %413 = vmatmul.mubr.f32.gmra.mrb[0].mxu0 %v237
      %v414 = vpop.f32.mrb[0].mxu0
      %v415 = vadd.f32 %v215, %v414
      %v416 = vpop.f32.mrb[0].mxu0
      %417 = vmatprep.mubr.f32.mxu0 0.0
      %418 = vmatmul.mubr.f32.gmra.mrb[0].mxu0 %v240
      %v419 = vpop.f32.mrb[0].mxu0
      %v420 = vadd.f32 %v215, %v419
      %v421 = vpop.f32.mrb[0].mxu0
      %422 = vmatprep.mubr.f32.mxu0 0.0
      %423 = vmatmul.mubr.f32.gmra.mrb[0].mxu0 %v243
      %v424 = vpop.f32.mrb[0].mxu0
      %v425 = vadd.f32 %v215, %v424
      %v426 = vpop.f32.mrb[0].mxu0
      %427 = vmatprep.mubr.f32.mxu0 0.0
      %428 = vmatmul.mubr.f32.gmra.mrb[0].mxu0 %v246
      %v429 = vpop.f32.mrb[0].mxu0
      %v430 = vadd.f32 %v215, %v429
      %v431 = vpop.f32.mrb[0].mxu0
      %432 = vmatprep.mubr.f32.mxu0 0.0
      %433 = vmatmul.mubr.f32.gmra.mrb[0].mxu0 %v249
      %v434 = vpop.f32.mrb[0].mxu0
      %v435 = vadd.f32 %v215, %v434
      %v436 = vpop.f32.mrb[0].mxu0
      %437 = vmatprep.mubr.f32.mxu0 0.0
      %438 = vmatmul.mubr.f32.gmra.mrb[0].mxu0 %v252
      %v439 = vpop.f32.mrb[0].mxu0
      %v440 = vadd.f32 %v215, %v439
      %v441 = vpop.f32.mrb[0].mxu0
      %442 = vmatprep.mubr.f32.mxu0 0.0
      %443 = vmatmul.mubr.f32.gmra.mrb[0].mxu0 %v255
      %v444 = vpop.f32.mrb[0].mxu0
      %v445 = vadd.f32 %v215, %v444
      %v446 = vpop.f32.mrb[0].mxu0
      %447 = vmatprep.mubr.f32.mxu0 0.0
      %448 = vmatmul.mubr.f32.gmra.mrb[0].mxu0 %v258
      %v449 = vpop.f32.mrb[0].mxu0
      %v450 = vadd.f32 %v215, %v449
      %v451 = vpop.f32.mrb[0].mxu0
      %452 = vmatprep.mubr.f32.mxu0 0.0
      %453 = vmatmul.mubr.f32.gmra.mrb[0].mxu0 %v261
      %v454 = vpop.f32.mrb[0].mxu0
      %v455 = vadd.f32 %v215, %v454
      %v456 = vpop.f32.mrb[0].mxu0
      %457 = vmatprep.mubr.f32.mxu0 0.0
      %458 = vmatmul.mubr.f32.gmra.mrb[0].mxu0 %v264
      %v459 = vpop.f32.mrb[0].mxu0
      %v460 = vadd.f32 %v215, %v459
      %v461 = vpop.f32.mrb[0].mxu0
      %462 = vmatprep.mubr.f32.mxu0 0.0
      %463 = vmatmul.mubr.f32.gmra.mrb[0].mxu0 %v267
      %v464 = vpop.f32.mrb[0].mxu0
      %v465 = vadd.f32 %v215, %v464
      %v466 = vpop.f32.mrb[0].mxu0
      %467 = vmatprep.mubr.f32.mxu0 0.0
      %468 = vmatmul.mubr.f32.gmra.mrb[0].mxu0 %v270
      %v469 = vpop.f32.mrb[0].mxu0
      %v470 = vadd.f32 %v215, %v469
      %v471 = vpop.f32.mrb[0].mxu0
      %472 = vmatprep.mubr.f32.mxu0 0.0
      %473 = vmatmul.mubr.f32.gmra.mrb[0].mxu0 %v273
      %v474 = vpop.f32.mrb[0].mxu0
      %v475 = vadd.f32 %v215, %v474
      %v476 = vpop.f32.mrb[0].mxu0
      %477 = vmatprep.mubr.f32.mxu0 0.0
      %478 = vmatmul.mubr.f32.gmra.mrb[0].mxu0 %v276
      %v479 = vpop.f32.mrb[0].mxu0
      %v480 = vadd.f32 %v215, %v479
      %v481 = vpop.f32.mrb[0].mxu0
      %482 = vmatprep.mubr.f32.mxu0 0.0
      %483 = vmatmul.mubr.f32.gmra.mrb[0].mxu0 %v279
      %v484 = vpop.f32.mrb[0].mxu0
      %v485 = vadd.f32 %v215, %v484
      %v486 = vpop.f32.mrb[0].mxu0
      %487 = vmatprep.mubr.f32.mxu0 0.0
      %488 = vmatmul.mubr.f32.gmra.mrb[0].mxu0 %v282
      %v489 = vpop.f32.mrb[0].mxu0
      %v490 = vadd.f32 %v215, %v489
      %v491 = vpop.f32.mrb[0].mxu0
      %492 = vmatprep.mubr.f32.mxu0 0.0
      %493 = vmatmul.mubr.f32.gmra.mrb[0].mxu0 %v285
      %v494 = vpop.f32.mrb[0].mxu0
      %v495 = vadd.f32 %v215, %v494
      %v496 = vpop.f32.mrb[0].mxu0
      %497 = vmatprep.mubr.f32.mxu0 0.0
      %498 = vmatmul.mubr.f32.gmra.mrb[0].mxu0 %v288
      %v499 = vpop.f32.mrb[0].mxu0
      %v500 = vadd.f32 %v215, %v499
      %v501 = vpop.f32.mrb[0].mxu0
      %502 = vmatprep.mubr.f32.mxu0 0.0
      %503 = vmatmul.mubr.f32.gmra.mrb[0].mxu0 %v291
      %v504 = vpop.f32.mrb[0].mxu0
      %v505 = vadd.f32 %v215, %v504
      %v506 = vpop.f32.mrb[0].mxu0
      %507 = vmatprep.mubr.f32.mxu0 0.0
      %508 = vmatmul.mubr.f32.gmra.mrb[0].mxu0 %v294
      %v509 = vpop.f32.mrb[0].mxu0
      %v510 = vadd.f32 %v215, %v509
      %v511 = vpop.f32.mrb[0].mxu0
      %512 = vmatprep.mubr.f32.mxu0 0.0
      %513 = vmatmul.mubr.f32.gmra.mrb[0].mxu0 %v297
      %v514 = vpop.f32.mrb[0].mxu0
      %v515 = vadd.f32 %v215, %v514
      %v516 = vpop.f32.mrb[0].mxu0
      %517 = vmatprep.mubr.f32.mxu0 0.0
      %518 = vmatmul.mubr.f32.gmra.mrb[0].mxu0 %v300
      %v519 = vpop.f32.mrb[0].mxu0
      %v520 = vadd.f32 %v215, %v519
      %v521 = vpop.f32.mrb[0].mxu0
      %522 = vmatprep.mubr.f32.mxu0 0.0
      %523 = vmatmul.mubr.f32.gmra.mrb[0].mxu0 %v303
      %v524 = vpop.f32.mrb[0].mxu0
      %v525 = vadd.f32 %v215, %v524
      %v526 = vpop.f32.mrb[0].mxu0
      %527 = vmatprep.mubr.f32.mxu0 0.0
      %528 = vmatmul.mubr.f32.gmra.mrb[0].mxu0 %v306
      %v529 = vpop.f32.mrb[0].mxu0
      %v530 = vadd.f32 %v215, %v529
      %v531 = vpop.f32.mrb[0].mxu0
      %532 = vmatprep.mubr.f32.mxu0 0.0
      %533 = vmatmul.mubr.f32.gmra.mrb[0].mxu0 %v309
      %v534 = vpop.f32.mrb[0].mxu0
      %v535 = vadd.f32 %v215, %v534
      %v536 = vpop.f32.mrb[0].mxu0
      %537 = vmatprep.mubr.f32.mxu0 0.0
      %538 = vmatmul.mubr.f32.gmra.mrb[0].mxu0 %v312
      %v539 = vpop.f32.mrb[0].mxu0
      %v540 = vadd.f32 %v215, %v539
      %v541 = vpop.f32.mrb[0].mxu0
      %542 = vdwg.mxu0
      %v543 = vxor.u32 %v385, 2147483648
      %v544 = vxor.u32 %v390, 2147483648
      %v545 = vxor.u32 %v395, 2147483648
      %v546 = vxor.u32 %v400, 2147483648
      %v547 = vxor.u32 %v405, 2147483648
      %v548 = vxor.u32 %v410, 2147483648
      %v549 = vxor.u32 %v415, 2147483648
      %v550 = vxor.u32 %v420, 2147483648
      %v551 = vxor.u32 %v425, 2147483648
      %v552 = vxor.u32 %v430, 2147483648
      %v553 = vxor.u32 %v435, 2147483648
      %v554 = vxor.u32 %v440, 2147483648
      %v555 = vxor.u32 %v445, 2147483648
      %v556 = vxor.u32 %v450, 2147483648
      %v557 = vxor.u32 %v455, 2147483648
      %v558 = vxor.u32 %v460, 2147483648
      %v559 = vxor.u32 %v465, 2147483648
      %v560 = vxor.u32 %v470, 2147483648
      %v561 = vxor.u32 %v475, 2147483648
      %v562 = vxor.u32 %v480, 2147483648
      %v563 = vxor.u32 %v485, 2147483648
      %v564 = vxor.u32 %v490, 2147483648
      %v565 = vxor.u32 %v495, 2147483648
      %v566 = vxor.u32 %v500, 2147483648
      %v567 = vxor.u32 %v505, 2147483648
      %v568 = vxor.u32 %v510, 2147483648
      %v569 = vxor.u32 %v515, 2147483648
      %v570 = vxor.u32 %v520, 2147483648
      %v571 = vxor.u32 %v525, 2147483648
      %v572 = vxor.u32 %v530, 2147483648
      %v573 = vxor.u32 %v535, 2147483648
      %v574 = vxor.u32 %v540, 2147483648
      %v575 = vmul.f32 %v543, 1.442695
      %v576 = vpow.pop %v575
      %v577 = vmul.f32 %v544, 1.442695
      %v578 = vpow.pop %v577
      %v579 = vmul.f32 %v545, 1.442695
      %v580 = vpow.pop %v579
      %v581 = vmul.f32 %v546, 1.442695
      %v582 = vpow.pop %v581
      %v583 = vmul.f32 %v547, 1.442695
      %v584 = vpow.pop %v583
      %v585 = vmul.f32 %v548, 1.442695
      %v586 = vpow.pop %v585
      %v587 = vmul.f32 %v549, 1.442695
      %v588 = vpow.pop %v587
      %v589 = vmul.f32 %v550, 1.442695
      %v590 = vpow.pop %v589
      %v591 = vmul.f32 %v551, 1.442695
      %v592 = vpow.pop %v591
      %v593 = vmul.f32 %v552, 1.442695
      %v594 = vpow.pop %v593
      %v595 = vmul.f32 %v553, 1.442695
      %v596 = vpow.pop %v595
      %v597 = vmul.f32 %v554, 1.442695
      %v598 = vpow.pop %v597
      %v599 = vmul.f32 %v555, 1.442695
      %v600 = vpow.pop %v599
      %v601 = vmul.f32 %v556, 1.442695
      %v602 = vpow.pop %v601
      %v603 = vmul.f32 %v557, 1.442695
      %v604 = vpow.pop %v603
      %v605 = vmul.f32 %v558, 1.442695
      %v606 = vpow.pop %v605
      %v607 = vmul.f32 %v559, 1.442695
      %v608 = vpow.pop %v607
      %v609 = vmul.f32 %v560, 1.442695
      %v610 = vpow.pop %v609
      %v611 = vmul.f32 %v561, 1.442695
      %v612 = vpow.pop %v611
      %v613 = vmul.f32 %v562, 1.442695
      %v614 = vpow.pop %v613
      %v615 = vmul.f32 %v563, 1.442695
      %v616 = vpow.pop %v615
      %v617 = vmul.f32 %v564, 1.442695
      %v618 = vpow.pop %v617
      %v619 = vmul.f32 %v565, 1.442695
      %v620 = vpow.pop %v619
      %v621 = vmul.f32 %v566, 1.442695
      %v622 = vpow.pop %v621
      %v623 = vmul.f32 %v567, 1.442695
      %v624 = vpow.pop %v623
      %v625 = vmul.f32 %v568, 1.442695
      %v626 = vpow.pop %v625
      %v627 = vmul.f32 %v569, 1.442695
      %v628 = vpow.pop %v627
      %v629 = vmul.f32 %v570, 1.442695
      %v630 = vpow.pop %v629
      %v631 = vmul.f32 %v571, 1.442695
      %v632 = vpow.pop %v631
      %v633 = vmul.f32 %v572, 1.442695
      %v634 = vpow.pop %v633
      %v635 = vmul.f32 %v573, 1.442695
      %v636 = vpow.pop %v635
      %v637 = vmul.f32 %v574, 1.442695
      %v638 = vpow.pop %v637
      %v639 = vadd.f32 %v576, 1.0
      %v640 = vadd.f32 %v578, 1.0
      %v641 = vadd.f32 %v580, 1.0
      %v642 = vadd.f32 %v582, 1.0
      %v643 = vadd.f32 %v584, 1.0
      %v644 = vadd.f32 %v586, 1.0
      %v645 = vadd.f32 %v588, 1.0
      %v646 = vadd.f32 %v590, 1.0
      %v647 = vadd.f32 %v592, 1.0
      %v648 = vadd.f32 %v594, 1.0
      %v649 = vadd.f32 %v596, 1.0
      %v650 = vadd.f32 %v598, 1.0
      %v651 = vadd.f32 %v600, 1.0
      %v652 = vadd.f32 %v602, 1.0
      %v653 = vadd.f32 %v604, 1.0
      %v654 = vadd.f32 %v606, 1.0
      %v655 = vadd.f32 %v608, 1.0
      %v656 = vadd.f32 %v610, 1.0
      %v657 = vadd.f32 %v612, 1.0
      %v658 = vadd.f32 %v614, 1.0
      %v659 = vadd.f32 %v616, 1.0
      %v660 = vadd.f32 %v618, 1.0
      %v661 = vadd.f32 %v620, 1.0
      %v662 = vadd.f32 %v622, 1.0
      %v663 = vadd.f32 %v624, 1.0
      %v664 = vadd.f32 %v626, 1.0
      %v665 = vadd.f32 %v628, 1.0
      %v666 = vadd.f32 %v630, 1.0
      %v667 = vadd.f32 %v632, 1.0
      %v668 = vadd.f32 %v634, 1.0
      %v669 = vadd.f32 %v636, 1.0
      %v670 = vadd.f32 %v638, 1.0
      %v671 = vrcp.pop %v639
      %v672 = vmul.f32 1.0, %v671
      %v673 = vrcp.pop %v640
      %v674 = vmul.f32 1.0, %v673
      %v675 = vrcp.pop %v641
      %v676 = vmul.f32 1.0, %v675
      %v677 = vrcp.pop %v642
      %v678 = vmul.f32 1.0, %v677
      %v679 = vrcp.pop %v643
      %v680 = vmul.f32 1.0, %v679
      %v681 = vrcp.pop %v644
      %v682 = vmul.f32 1.0, %v681
      %v683 = vrcp.pop %v645
      %v684 = vmul.f32 1.0, %v683
      %v685 = vrcp.pop %v646
      %v686 = vmul.f32 1.0, %v685
      %v687 = vrcp.pop %v647
      %v688 = vmul.f32 1.0, %v687
      %v689 = vrcp.pop %v648
      %v690 = vmul.f32 1.0, %v689
      %v691 = vrcp.pop %v649
      %v692 = vmul.f32 1.0, %v691
      %v693 = vrcp.pop %v650
      %v694 = vmul.f32 1.0, %v693
      %v695 = vrcp.pop %v651
      %v696 = vmul.f32 1.0, %v695
      %v697 = vrcp.pop %v652
      %v698 = vmul.f32 1.0, %v697
      %v699 = vrcp.pop %v653
      %v700 = vmul.f32 1.0, %v699
      %v701 = vrcp.pop %v654
      %v702 = vmul.f32 1.0, %v701
      %v703 = vrcp.pop %v655
      %v704 = vmul.f32 1.0, %v703
      %v705 = vrcp.pop %v656
      %v706 = vmul.f32 1.0, %v705
      %v707 = vrcp.pop %v657
      %v708 = vmul.f32 1.0, %v707
      %v709 = vrcp.pop %v658
      %v710 = vmul.f32 1.0, %v709
      %v711 = vrcp.pop %v659
      %v712 = vmul.f32 1.0, %v711
      %v713 = vrcp.pop %v660
      %v714 = vmul.f32 1.0, %v713
      %v715 = vrcp.pop %v661
      %v716 = vmul.f32 1.0, %v715
      %v717 = vrcp.pop %v662
      %v718 = vmul.f32 1.0, %v717
      %v719 = vrcp.pop %v663
      %v720 = vmul.f32 1.0, %v719
      %v721 = vrcp.pop %v664
      %v722 = vmul.f32 1.0, %v721
      %v723 = vrcp.pop %v665
      %v724 = vmul.f32 1.0, %v723
      %v725 = vrcp.pop %v666
      %v726 = vmul.f32 1.0, %v725
      %v727 = vrcp.pop %v667
      %v728 = vmul.f32 1.0, %v727
      %v729 = vrcp.pop %v668
      %v730 = vmul.f32 1.0, %v729
      %v731 = vrcp.pop %v669
      %v732 = vmul.f32 1.0, %v731
      %v733 = vrcp.pop %v670
      %v734 = vmul.f32 1.0, %v733
      %v735 = vmul.f32 %v385, %v672
      %v736 = vmul.f32 %v390, %v674
      %v737 = vmul.f32 %v395, %v676
      %v738 = vmul.f32 %v400, %v678
      %v739 = vmul.f32 %v405, %v680
      %v740 = vmul.f32 %v410, %v682
      %v741 = vmul.f32 %v415, %v684
      %v742 = vmul.f32 %v420, %v686
      %v743 = vmul.f32 %v425, %v688
      %v744 = vmul.f32 %v430, %v690
      %v745 = vmul.f32 %v435, %v692
      %v746 = vmul.f32 %v440, %v694
      %v747 = vmul.f32 %v445, %v696
      %v748 = vmul.f32 %v450, %v698
      %v749 = vmul.f32 %v455, %v700
      %v750 = vmul.f32 %v460, %v702
      %v751 = vmul.f32 %v465, %v704
      %v752 = vmul.f32 %v470, %v706
      %v753 = vmul.f32 %v475, %v708
      %v754 = vmul.f32 %v480, %v710
      %v755 = vmul.f32 %v485, %v712
      %v756 = vmul.f32 %v490, %v714
      %v757 = vmul.f32 %v495, %v716
      %v758 = vmul.f32 %v500, %v718
      %v759 = vmul.f32 %v505, %v720
      %v760 = vmul.f32 %v510, %v722
      %v761 = vmul.f32 %v515, %v724
      %v762 = vmul.f32 %v520, %v726
      %v763 = vmul.f32 %v525, %v728
      %v764 = vmul.f32 %v530, %v730
      %v765 = vmul.f32 %v535, %v732
      %v766 = vmul.f32 %v540, %v734
      %vm767 = vcmask 261120
      %768 = vst.msk [vmem:[%s172] sm:$0xff] %vm767, %v735
      %769 = vst.msk [vmem:[%s172 + $0x8] sm:$0xff] %vm767, %v736
      %770 = vst.msk [vmem:[%s172 + $0x10] sm:$0xff] %vm767, %v737
      %771 = vst.msk [vmem:[%s172 + $0x18] sm:$0xff] %vm767, %v738
      %772 = vst.msk [vmem:[%s172 + $0x20] sm:$0xff] %vm767, %v739
      %773 = vst.msk [vmem:[%s172 + $0x28] sm:$0xff] %vm767, %v740
      %774 = vst.msk [vmem:[%s172 + $0x30] sm:$0xff] %vm767, %v741
      %775 = vst.msk [vmem:[%s172 + $0x38] sm:$0xff] %vm767, %v742
      %776 = vst.msk [vmem:[%s172 + $0x40] sm:$0xff] %vm767, %v743
      %777 = vst.msk [vmem:[%s172 + $0x48] sm:$0xff] %vm767, %v744
      %778 = vst.msk [vmem:[%s172 + $0x50] sm:$0xff] %vm767, %v745
      %779 = vst.msk [vmem:[%s172 + $0x58] sm:$0xff] %vm767, %v746
      %780 = vst.msk [vmem:[%s172 + $0x60] sm:$0xff] %vm767, %v747
      %781 = vst.msk [vmem:[%s172 + $0x68] sm:$0xff] %vm767, %v748
      %782 = vst.msk [vmem:[%s172 + $0x70] sm:$0xff] %vm767, %v749
      %783 = vst.msk [vmem:[%s172 + $0x78] sm:$0xff] %vm767, %v750
      %784 = vst.msk [vmem:[%s172 + $0x80] sm:$0xff] %vm767, %v751
      %785 = vst.msk [vmem:[%s172 + $0x88] sm:$0xff] %vm767, %v752
      %786 = vst.msk [vmem:[%s172 + $0x90] sm:$0xff] %vm767, %v753
      %787 = vst.msk [vmem:[%s172 + $0x98] sm:$0xff] %vm767, %v754
      %788 = vst.msk [vmem:[%s172 + $0xa0] sm:$0xff] %vm767, %v755
      %789 = vst.msk [vmem:[%s172 + $0xa8] sm:$0xff] %vm767, %v756
      %790 = vst.msk [vmem:[%s172 + $0xb0] sm:$0xff] %vm767, %v757
      %791 = vst.msk [vmem:[%s172 + $0xb8] sm:$0xff] %vm767, %v758
      %792 = vst.msk [vmem:[%s172 + $0xc0] sm:$0xff] %vm767, %v759
      %793 = vst.msk [vmem:[%s172 + $0xc8] sm:$0xff] %vm767, %v760
      %794 = vst.msk [vmem:[%s172 + $0xd0] sm:$0xff] %vm767, %v761
      %795 = vst.msk [vmem:[%s172 + $0xd8] sm:$0xff] %vm767, %v762
      %796 = vst.msk [vmem:[%s172 + $0xe0] sm:$0xff] %vm767, %v763
      %797 = vst.msk [vmem:[%s172 + $0xe8] sm:$0xff] %vm767, %v764
      %798 = vst.msk [vmem:[%s172 + $0xf0] sm:$0xff] %vm767, %v765
      %799 = vst.msk [vmem:[%s172 + $0xf8] sm:$0xff] %vm767, %v766
      %s800 = smul.u32 32, %s14
      %p801 = scmp.lt.s32.totalorder %s800, 63
      %s802 = scalar_select %p801, %s800, 63
      %s803 = smul.addr %s802, 8
      %s804 = scalar_lea.vmem %s3, %s803
      // Predicated region
      $region33: #{model_forward.5} parent=31 // pred_check
        %p805 = pneg %p100
      $region34: #{model_forward.5} parent=31 // pred_check_branch
        %807 = sbr.rel (%p805) target = $region36
      $region35: #{model_forward.5} parent=31 // pred_region
        %s808 = smul.u32 32, %s14
      $region36: #{model_forward.5} parent=31 // pred_fallthru
        _
    $region32: #{model_forward.5} parent=5 // pred_fallthru
      _
    %p809 = scmp.le.s32.totalorder 2, %s9
    // Predicated region
    $region37: #{model_forward.5} parent=5 // pred_check
      %p810 = pneg %p809
    $region38: #{model_forward.5} parent=5 // pred_check_branch
      %812 = sbr.rel (%p810) target = $region40
    $region39: #{model_forward.5} parent=5 // pred_region
      %s813 = ssub.s32 %s9, 2
      // Predicated region
      $region41: #{model_forward.5} parent=39 // pred_check
        %p814 = pneg %p106
      $region42: #{model_forward.5} parent=39 // pred_check_branch
        %816 = sbr.rel (%p814) target = $region44
      $region43: #{model_forward.5} parent=39 // pred_region
        %s817 = smul.u32 32, %s15
        %p818 = scmp.lt.s32.totalorder %s817, 63
        %s819 = scalar_select %p818, %s817, 63
        %s820 = smul.addr %s819, 8
        %s821 = scalar_lea.vmem %s3, %s820
      $region44: #{model_forward.5} parent=39 // pred_fallthru
        _
    $region40: #{model_forward.5} parent=5 // pred_fallthru
      _
  $region6: #{model_forward.5} parent=0 // loop_footer
    %s13 = sadd.s32 1, %s9
  $region7: #{model_forward.5} parent=0 // loop_footer_branch
    %8 = sbr.rel target = $region3
  $region8: #{model_forward.5} parent=0 // loop_exit
    _

// kernel: model_forward.7
$region0: #{model_forward.7}
  #allocation0 [shape = 'u32[]', space=smem, size = 0x4, offset = 0x4, fixed_abs, tag = 'smem constant byte address 0x4 - core index']
  #allocation1 [shape = 'u32[144,128]{1,0:T(1,128)}', space=vmem, size = 0x12000, scoped, tag = 'internal scratch']
  %s0 = inlined_call_operand.vmem [shape: f32[512,16], index: 0, kind: input, shape index: {}]
  %s1 = inlined_call_operand.vmem [shape: f32[16,96], index: 1, kind: input, shape index: {}]
  %s2 = inlined_call_operand.vmem [shape: f32[1,96], index: 2, kind: input, shape index: {}]
  %s3 = inlined_call_operand.vmem [shape: f32[512,96], index: 3, kind: output, shape index: {}]
  %s4 = sld [smem:[#allocation0]]
  $region45: #{model_forward.7} parent=0
    _
  %s6 = ssub.s32 1, %s4
  %s7 = scalar_select 0, %s6, %s4
  loop: start=0, step=1, limit=4
  $region2: #{model_forward.7} parent=0 // loop_pre_header
    _
  $region3: #{model_forward.7} parent=0 // loop_header
    %s9 = sphi 0, %s13
    %p10 = scmp.ge.s32.totalorder %s9, 4
    %s19 = sphi 0, %s21
    %s22 = sphi 0, %s19
    %s23 = sphi 0, %s22
    %s39 = sphi 0, %s23
    %s43 = sphi 0, %s43
    %s45 = sphi 0, %s43
    %s46 = sphi 0, %s45
    %s60 = sphi 0, %s46
    %s64 = sphi 0, %s64
    %s66 = sphi 0, %s64
    %s67 = sphi 0, %s66
    %s81 = sphi 0, %s67
    %s87 = sphi 0, %s89
    %s90 = sphi 0, %s87
    %s91 = sphi 0, %s90
    %s107 = sphi 0, %s91
  $region4: #{model_forward.7} parent=0 // loop_header_branch
    %12 = sbr.rel (%p10) target = $region8
  $region5: #{model_forward.7} parent=0 // loop_body
    %s14 = ssub.s32 %s9, 1
    %s15 = ssub.s32 %s9, 2
    %s16 = sadd.s32 %s9, 1
    %s17 = ssub.s32 %s9, %s16
    %p18 = scmp.eq.s32.totalorder %s17, 0
    %s20 = sadd.s32 %s19, 1
    %s21 = scalar_select %p18, %s19, %s20
    %p24 = pneg %p18
    %p25 = scmp.eq.s32.totalorder %s9, 1
    %p26 = por %p24, %p25
    %p27 = scmp.ne.s32.totalorder %s19, %s22
    %p28 = scmp.eq.s32.totalorder %s9, 0
    %p29 = por %p27, %p28
    %p30 = scmp.ne.s32.totalorder %s19, %s22
    %p31 = scmp.eq.s32.totalorder %s14, 1
    %p32 = por %p30, %p31
    %p33 = scmp.ne.s32.totalorder %s22, %s23
    %p34 = scmp.eq.s32.totalorder %s14, 0
    %p35 = por %p33, %p34
    %p36 = scmp.ne.s32.totalorder %s22, %s23
    %p37 = scmp.eq.s32.totalorder %s15, 1
    %p38 = por %p36, %p37
    %p40 = scmp.ne.s32.totalorder %s23, %s39
    %p41 = scmp.eq.s32.totalorder %s15, 0
    %p42 = por %p40, %p41
    %s44 = sadd.s32 %s43, 1
    %p47 = scmp.eq.s32.totalorder %s9, 1
    %p48 = scmp.ne.s32.totalorder %s43, %s45
    %p49 = scmp.eq.s32.totalorder %s9, 0
    %p50 = por %p48, %p49
    %p51 = scmp.ne.s32.totalorder %s43, %s45
    %p52 = scmp.eq.s32.totalorder %s14, 1
    %p53 = por %p51, %p52
    %p54 = scmp.ne.s32.totalorder %s45, %s46
    %p55 = scmp.eq.s32.totalorder %s14, 0
    %p56 = por %p54, %p55
    %p57 = scmp.ne.s32.totalorder %s45, %s46
    %p58 = scmp.eq.s32.totalorder %s15, 1
    %p59 = por %p57, %p58
    %p61 = scmp.ne.s32.totalorder %s46, %s60
    %p62 = scmp.eq.s32.totalorder %s15, 0
    %p63 = por %p61, %p62
    %s65 = sadd.s32 %s64, 1
    %p68 = scmp.eq.s32.totalorder %s9, 1
    %p69 = scmp.ne.s32.totalorder %s64, %s66
    %p70 = scmp.eq.s32.totalorder %s9, 0
    %p71 = por %p69, %p70
    %p72 = scmp.ne.s32.totalorder %s64, %s66
    %p73 = scmp.eq.s32.totalorder %s14, 1
    %p74 = por %p72, %p73
    %p75 = scmp.ne.s32.totalorder %s66, %s67
    %p76 = scmp.eq.s32.totalorder %s14, 0
    %p77 = por %p75, %p76
    %p78 = scmp.ne.s32.totalorder %s66, %s67
    %p79 = scmp.eq.s32.totalorder %s15, 1
    %p80 = por %p78, %p79
    %p82 = scmp.ne.s32.totalorder %s67, %s81
    %p83 = scmp.eq.s32.totalorder %s15, 0
    %p84 = por %p82, %p83
    %s85 = ssub.s32 %s9, %s16
    %p86 = scmp.eq.s32.totalorder %s85, 0
    %s88 = sadd.s32 %s87, 1
    %s89 = scalar_select %p86, %s87, %s88
    %p92 = pneg %p86
    %p93 = scmp.eq.s32.totalorder %s9, 1
    %p94 = por %p92, %p93
    %p95 = scmp.ne.s32.totalorder %s87, %s90
    %p96 = scmp.eq.s32.totalorder %s9, 0
    %p97 = por %p95, %p96
    %p98 = scmp.ne.s32.totalorder %s87, %s90
    %p99 = scmp.eq.s32.totalorder %s14, 1
    %p100 = por %p98, %p99
    %p101 = scmp.ne.s32.totalorder %s90, %s91
    %p102 = scmp.eq.s32.totalorder %s14, 0
    %p103 = por %p101, %p102
    %p104 = scmp.ne.s32.totalorder %s90, %s91
    %p105 = scmp.eq.s32.totalorder %s15, 1
    %p106 = por %p104, %p105
    %p108 = scmp.ne.s32.totalorder %s91, %s107
    %p109 = scmp.eq.s32.totalorder %s15, 0
    %p110 = por %p108, %p109
    %p111 = scmp.le.s32.totalorder 1, %s9
    %p112 = scmp.lt.s32.totalorder %s9, 3
    %p113 = pnand %p111, %p112
    %p114 = pneg %p113
    // Predicated region
    $region9: #{model_forward.7} parent=5 // pred_check
      _
    $region10: #{model_forward.7} parent=5 // pred_check_branch
      %116 = sbr.rel (%p113) target = $region12
    $region11: #{model_forward.7} parent=5 // pred_region
      %s117 = ssub.s32 %s9, 1
      // Predicated region
      $region13: #{model_forward.7} parent=11 // pred_check
        %p118 = pneg %p56
      $region14: #{model_forward.7} parent=11 // pred_check_branch
        %120 = sbr.rel (%p118) target = $region16
      $region15: #{model_forward.7} parent=11 // pred_region
        _
      $region16: #{model_forward.7} parent=11 // pred_fallthru
        _
      // Predicated region
      $region17: #{model_forward.7} parent=11 // pred_check
        %p121 = pneg %p77
      $region18: #{model_forward.7} parent=11 // pred_check_branch
        %123 = sbr.rel (%p121) target = $region20
      $region19: #{model_forward.7} parent=11 // pred_region
        _
      $region20: #{model_forward.7} parent=11 // pred_fallthru
        _
    $region12: #{model_forward.7} parent=5 // pred_fallthru
      _
    %p124 = scmp.lt.s32.totalorder %s9, 2
    // Predicated region
    $region21: #{model_forward.7} parent=5 // pred_check
      %p125 = pneg %p124
    $region22: #{model_forward.7} parent=5 // pred_check_branch
      %127 = sbr.rel (%p125) target = $region24
    $region23: #{model_forward.7} parent=5 // pred_region
      // Predicated region
      $region25: #{model_forward.7} parent=23 // pred_check
        %p128 = pneg %p29
      $region26: #{model_forward.7} parent=23 // pred_check_branch
        %130 = sbr.rel (%p128) target = $region28
      $region27: #{model_forward.7} parent=23 // pred_region
        %s131 = smul.u32 32, %s9
        %p132 = scmp.lt.s32.totalorder %s131, 63
        %s133 = scalar_select %p132, %s131, 63
        %s134 = smul.addr %s133, 8
        %s135 = scalar_lea.vmem %s0, %s134
        %s136 = smul.u32 32, %s9
      $region28: #{model_forward.7} parent=23 // pred_fallthru
        _
    $region24: #{model_forward.7} parent=5 // pred_fallthru
      _
    %p137 = scmp.le.s32.totalorder 1, %s9
    %p138 = scmp.lt.s32.totalorder %s9, 3
    %p139 = pnand %p137, %p138
    %p140 = pneg %p139
    // Predicated region
    $region29: #{model_forward.7} parent=5 // pred_check
      _
    $region30: #{model_forward.7} parent=5 // pred_check_branch
      %142 = sbr.rel (%p139) target = $region32
    $region31: #{model_forward.7} parent=5 // pred_region
      %s143 = ssub.s32 %s9, 1
      %s144 = smul.u32 32, %s14
      %p145 = scmp.lt.s32.totalorder %s144, 63
      %s146 = scalar_select %p145, %s144, 63
      %s147 = smul.addr %s146, 8
      %s148 = scalar_lea.vmem %s0, %s147
      %p149 = pneg %p35
      %p150 = pneg %p32
      %p151 = pneg %p56
      %p152 = pneg %p53
      %p153 = pneg %p77
      %p154 = pneg %p74
      %p155 = pneg %p103
      %p156 = pneg %p100
      %s157 = smul.u32 32, %s14
      %p158 = scmp.lt.s32.totalorder %s157, 63
      %s159 = scalar_select %p158, %s157, 63
      %s160 = smul.addr %s159, 8
      %s161 = scalar_lea.vmem %s3, %s160
      %s162 = smul.u32 32, %s14
      %p163 = scmp.lt.s32.totalorder %s162, 63
      %s164 = scalar_select %p163, %s162, 63
      %s165 = smul.addr %s164, 8
      %s166 = scalar_lea.vmem %s0, %s165
      %s167 = smul.u32 32, %s14
      %s168 = smul.u32 32, %s14
      %p169 = scmp.lt.s32.totalorder %s168, 63
      %s170 = scalar_select %p169, %s168, 63
      %s171 = smul.addr %s170, 8
      %s172 = scalar_lea.vmem %s3, %s171
      %s173 = smul.u32 32, %s14
      %v174 = vld [vmem:[%s166] sm:$0xff]
      %v175 = vld [vmem:[%s166 + $0x8] sm:$0xff]
      %v176 = vld [vmem:[%s166 + $0x10] sm:$0xff]
      %v177 = vld [vmem:[%s166 + $0x18] sm:$0xff]
      %v178 = vld [vmem:[%s166 + $0x20] sm:$0xff]
      %v179 = vld [vmem:[%s166 + $0x28] sm:$0xff]
      %v180 = vld [vmem:[%s166 + $0x30] sm:$0xff]
      %v181 = vld [vmem:[%s166 + $0x38] sm:$0xff]
      %v182 = vld [vmem:[%s166 + $0x40] sm:$0xff]
      %v183 = vld [vmem:[%s166 + $0x48] sm:$0xff]
      %v184 = vld [vmem:[%s166 + $0x50] sm:$0xff]
      %v185 = vld [vmem:[%s166 + $0x58] sm:$0xff]
      %v186 = vld [vmem:[%s166 + $0x60] sm:$0xff]
      %v187 = vld [vmem:[%s166 + $0x68] sm:$0xff]
      %v188 = vld [vmem:[%s166 + $0x70] sm:$0xff]
      %v189 = vld [vmem:[%s166 + $0x78] sm:$0xff]
      %v190 = vld [vmem:[%s166 + $0x80] sm:$0xff]
      %v191 = vld [vmem:[%s166 + $0x88] sm:$0xff]
      %v192 = vld [vmem:[%s166 + $0x90] sm:$0xff]
      %v193 = vld [vmem:[%s166 + $0x98] sm:$0xff]
      %v194 = vld [vmem:[%s166 + $0xa0] sm:$0xff]
      %v195 = vld [vmem:[%s166 + $0xa8] sm:$0xff]
      %v196 = vld [vmem:[%s166 + $0xb0] sm:$0xff]
      %v197 = vld [vmem:[%s166 + $0xb8] sm:$0xff]
      %v198 = vld [vmem:[%s166 + $0xc0] sm:$0xff]
      %v199 = vld [vmem:[%s166 + $0xc8] sm:$0xff]
      %v200 = vld [vmem:[%s166 + $0xd0] sm:$0xff]
      %v201 = vld [vmem:[%s166 + $0xd8] sm:$0xff]
      %v202 = vld [vmem:[%s166 + $0xe0] sm:$0xff]
      %v203 = vld [vmem:[%s166 + $0xe8] sm:$0xff]
      %v204 = vld [vmem:[%s166 + $0xf0] sm:$0xff]
      %v205 = vld [vmem:[%s166 + $0xf8] sm:$0xff]
      %v206 = vld [vmem:[%s1] sm:$0xff]
      %v207 = vld [vmem:[%s1 + $0x8] sm:$0xff]
      %v208 = vld [vmem:[%s2] sm:$0x1]
      %v210 = vlaneseq
      %v211 = vshrl.u32 %v210, 7
      %v212 = vsub.s32 0, %v211
      %v213 = vrot.slane %v208, %v212
      %vm215 = vcmask 130048
      %v217 = vsel %vm215, %v174, 0
      %v220 = vsel %vm215, %v175, 0
      %v223 = vsel %vm215, %v176, 0
      %v226 = vsel %vm215, %v177, 0
      %v229 = vsel %vm215, %v178, 0
      %v232 = vsel %vm215, %v179, 0
      %v235 = vsel %vm215, %v180, 0
      %v238 = vsel %vm215, %v181, 0
      %v241 = vsel %vm215, %v182, 0
      %v244 = vsel %vm215, %v183, 0
      %v247 = vsel %vm215, %v184, 0
      %v250 = vsel %vm215, %v185, 0
      %v253 = vsel %vm215, %v186, 0
      %v256 = vsel %vm215, %v187, 0
      %v259 = vsel %vm215, %v188, 0
      %v262 = vsel %vm215, %v189, 0
      %v265 = vsel %vm215, %v190, 0
      %v268 = vsel %vm215, %v191, 0
      %v271 = vsel %vm215, %v192, 0
      %v274 = vsel %vm215, %v193, 0
      %v277 = vsel %vm215, %v194, 0
      %v280 = vsel %vm215, %v195, 0
      %v283 = vsel %vm215, %v196, 0
      %v286 = vsel %vm215, %v197, 0
      %v289 = vsel %vm215, %v198, 0
      %v292 = vsel %vm215, %v199, 0
      %v295 = vsel %vm215, %v200, 0
      %v298 = vsel %vm215, %v201, 0
      %v301 = vsel %vm215, %v202, 0
      %v304 = vsel %vm215, %v203, 0
      %v307 = vsel %vm215, %v204, 0
      %v310 = vsel %vm215, %v205, 0
      %312 = vmatprep.subr.mxu0 0.0
      %313 = vmatpush1.msra.mxu0 %v206
      %314 = vmatprep.subr.mxu0 0.0
      %315 = vmatpush1.msra.mxu0 %v207
      %316 = vmatprep.subr.mxu0 0.0
      %317 = vmatpush1.msra.mxu0 0.0
      %318 = vmatprep.subr.mxu0 0.0
      %319 = vmatpush1.msra.mxu0 0.0
      %320 = vmatprep.subr.mxu0 0.0
      %321 = vmatpush1.msra.mxu0 0.0
      %322 = vmatprep.subr.mxu0 0.0
      %323 = vmatpush1.msra.mxu0 0.0
      %324 = vmatprep.subr.mxu0 0.0
      %325 = vmatpush1.msra.mxu0 0.0
      %326 = vmatprep.subr.mxu0 0.0
      %327 = vmatpush1.msra.mxu0 0.0
      %328 = vmatprep.subr.mxu0 0.0
      %329 = vmatpush1.msra.mxu0 0.0
      %330 = vmatprep.subr.mxu0 0.0
      %331 = vmatpush1.msra.mxu0 0.0
      %332 = vmatprep.subr.mxu0 0.0
      %333 = vmatpush1.msra.mxu0 0.0
      %334 = vmatprep.subr.mxu0 0.0
      %335 = vmatpush1.msra.mxu0 0.0
      %336 = vmatprep.subr.mxu0 0.0
      %337 = vmatpush1.msra.mxu0 0.0
      %338 = vmatprep.subr.mxu0 0.0
      %339 = vmatpush1.msra.mxu0 0.0
      %340 = vmatprep.subr.mxu0 0.0
      %341 = vmatpush1.msra.mxu0 0.0
      %342 = vmatprep.subr.mxu0 0.0
      %343 = vmatpush1.msra.mxu0 0.0
      %344 = vmatprep.subr.mxu0 0.0
      %345 = vmatpush1.msra.mxu0 0.0
      %346 = vmatprep.subr.mxu0 0.0
      %347 = vmatpush1.msra.mxu0 0.0
      %348 = vmatprep.subr.mxu0 0.0
      %349 = vmatpush1.msra.mxu0 0.0
      %350 = vmatprep.subr.mxu0 0.0
      %351 = vmatpush1.msra.mxu0 0.0
      %352 = vmatprep.subr.mxu0 0.0
      %353 = vmatpush1.msra.mxu0 0.0
      %354 = vmatprep.subr.mxu0 0.0
      %355 = vmatpush1.msra.mxu0 0.0
      %356 = vmatprep.subr.mxu0 0.0
      %357 = vmatpush1.msra.mxu0 0.0
      %358 = vmatprep.subr.mxu0 0.0
      %359 = vmatpush1.msra.mxu0 0.0
      %360 = vmatprep.subr.mxu0 0.0
      %361 = vmatpush1.msra.mxu0 0.0
      %362 = vmatprep.subr.mxu0 0.0
      %363 = vmatpush1.msra.mxu0 0.0
      %364 = vmatprep.subr.mxu0 0.0
      %365 = vmatpush1.msra.mxu0 0.0
      %366 = vmatprep.subr.mxu0 0.0
      %367 = vmatpush1.msra.mxu0 0.0
      %368 = vmatprep.subr.mxu0 0.0
      %369 = vmatpush1.msra.mxu0 0.0
      %370 = vmatprep.subr.mxu0 0.0
      %371 = vmatpush1.msra.mxu0 0.0
      %372 = vmatprep.subr.mxu0 0.0
      %373 = vmatpush1.msra.mxu0 0.0
      %374 = vmatprep.subr.mxu0 0.0
      %375 = vmatpush1.msra.mxu0 0.0
      %376 = vmatprep.mubr.f32.mxu0 0.0
      %377 = vmatmul.mubr.f32.gmra.mrb[0].mxu0 %v217
      %v378 = vpop.f32.mrb[0].mxu0
      %v379 = vadd.f32 %v213, %v378
      %v380 = vpop.f32.mrb[0].mxu0
      %381 = vmatprep.mubr.f32.mxu0 0.0
      %382 = vmatmul.mubr.f32.gmra.mrb[0].mxu0 %v220
      %v383 = vpop.f32.mrb[0].mxu0
      %v384 = vadd.f32 %v213, %v383
      %v385 = vpop.f32.mrb[0].mxu0
      %386 = vmatprep.mubr.f32.mxu0 0.0
      %387 = vmatmul.mubr.f32.gmra.mrb[0].mxu0 %v223
      %v388 = vpop.f32.mrb[0].mxu0
      %v389 = vadd.f32 %v213, %v388
      %v390 = vpop.f32.mrb[0].mxu0
      %391 = vmatprep.mubr.f32.mxu0 0.0
      %392 = vmatmul.mubr.f32.gmra.mrb[0].mxu0 %v226
      %v393 = vpop.f32.mrb[0].mxu0
      %v394 = vadd.f32 %v213, %v393
      %v395 = vpop.f32.mrb[0].mxu0
      %396 = vmatprep.mubr.f32.mxu0 0.0
      %397 = vmatmul.mubr.f32.gmra.mrb[0].mxu0 %v229
      %v398 = vpop.f32.mrb[0].mxu0
      %v399 = vadd.f32 %v213, %v398
      %v400 = vpop.f32.mrb[0].mxu0
      %401 = vmatprep.mubr.f32.mxu0 0.0
      %402 = vmatmul.mubr.f32.gmra.mrb[0].mxu0 %v232
      %v403 = vpop.f32.mrb[0].mxu0
      %v404 = vadd.f32 %v213, %v403
      %v405 = vpop.f32.mrb[0].mxu0
      %406 = vmatprep.mubr.f32.mxu0 0.0
      %407 = vmatmul.mubr.f32.gmra.mrb[0].mxu0 %v235
      %v408 = vpop.f32.mrb[0].mxu0
      %v409 = vadd.f32 %v213, %v408
      %v410 = vpop.f32.mrb[0].mxu0
      %411 = vmatprep.mubr.f32.mxu0 0.0
      %412 = vmatmul.mubr.f32.gmra.mrb[0].mxu0 %v238
      %v413 = vpop.f32.mrb[0].mxu0
      %v414 = vadd.f32 %v213, %v413
      %v415 = vpop.f32.mrb[0].mxu0
      %416 = vmatprep.mubr.f32.mxu0 0.0
      %417 = vmatmul.mubr.f32.gmra.mrb[0].mxu0 %v241
      %v418 = vpop.f32.mrb[0].mxu0
      %v419 = vadd.f32 %v213, %v418
      %v420 = vpop.f32.mrb[0].mxu0
      %421 = vmatprep.mubr.f32.mxu0 0.0
      %422 = vmatmul.mubr.f32.gmra.mrb[0].mxu0 %v244
      %v423 = vpop.f32.mrb[0].mxu0
      %v424 = vadd.f32 %v213, %v423
      %v425 = vpop.f32.mrb[0].mxu0
      %426 = vmatprep.mubr.f32.mxu0 0.0
      %427 = vmatmul.mubr.f32.gmra.mrb[0].mxu0 %v247
      %v428 = vpop.f32.mrb[0].mxu0
      %v429 = vadd.f32 %v213, %v428
      %v430 = vpop.f32.mrb[0].mxu0
      %431 = vmatprep.mubr.f32.mxu0 0.0
      %432 = vmatmul.mubr.f32.gmra.mrb[0].mxu0 %v250
      %v433 = vpop.f32.mrb[0].mxu0
      %v434 = vadd.f32 %v213, %v433
      %v435 = vpop.f32.mrb[0].mxu0
      %436 = vmatprep.mubr.f32.mxu0 0.0
      %437 = vmatmul.mubr.f32.gmra.mrb[0].mxu0 %v253
      %v438 = vpop.f32.mrb[0].mxu0
      %v439 = vadd.f32 %v213, %v438
      %v440 = vpop.f32.mrb[0].mxu0
      %441 = vmatprep.mubr.f32.mxu0 0.0
      %442 = vmatmul.mubr.f32.gmra.mrb[0].mxu0 %v256
      %v443 = vpop.f32.mrb[0].mxu0
      %v444 = vadd.f32 %v213, %v443
      %v445 = vpop.f32.mrb[0].mxu0
      %446 = vmatprep.mubr.f32.mxu0 0.0
      %447 = vmatmul.mubr.f32.gmra.mrb[0].mxu0 %v259
      %v448 = vpop.f32.mrb[0].mxu0
      %v449 = vadd.f32 %v213, %v448
      %v450 = vpop.f32.mrb[0].mxu0
      %451 = vmatprep.mubr.f32.mxu0 0.0
      %452 = vmatmul.mubr.f32.gmra.mrb[0].mxu0 %v262
      %v453 = vpop.f32.mrb[0].mxu0
      %v454 = vadd.f32 %v213, %v453
      %v455 = vpop.f32.mrb[0].mxu0
      %456 = vmatprep.mubr.f32.mxu0 0.0
      %457 = vmatmul.mubr.f32.gmra.mrb[0].mxu0 %v265
      %v458 = vpop.f32.mrb[0].mxu0
      %v459 = vadd.f32 %v213, %v458
      %v460 = vpop.f32.mrb[0].mxu0
      %461 = vmatprep.mubr.f32.mxu0 0.0
      %462 = vmatmul.mubr.f32.gmra.mrb[0].mxu0 %v268
      %v463 = vpop.f32.mrb[0].mxu0
      %v464 = vadd.f32 %v213, %v463
      %v465 = vpop.f32.mrb[0].mxu0
      %466 = vmatprep.mubr.f32.mxu0 0.0
      %467 = vmatmul.mubr.f32.gmra.mrb[0].mxu0 %v271
      %v468 = vpop.f32.mrb[0].mxu0
      %v469 = vadd.f32 %v213, %v468
      %v470 = vpop.f32.mrb[0].mxu0
      %471 = vmatprep.mubr.f32.mxu0 0.0
      %472 = vmatmul.mubr.f32.gmra.mrb[0].mxu0 %v274
      %v473 = vpop.f32.mrb[0].mxu0
      %v474 = vadd.f32 %v213, %v473
      %v475 = vpop.f32.mrb[0].mxu0
      %476 = vmatprep.mubr.f32.mxu0 0.0
      %477 = vmatmul.mubr.f32.gmra.mrb[0].mxu0 %v277
      %v478 = vpop.f32.mrb[0].mxu0
      %v479 = vadd.f32 %v213, %v478
      %v480 = vpop.f32.mrb[0].mxu0
      %481 = vmatprep.mubr.f32.mxu0 0.0
      %482 = vmatmul.mubr.f32.gmra.mrb[0].mxu0 %v280
      %v483 = vpop.f32.mrb[0].mxu0
      %v484 = vadd.f32 %v213, %v483
      %v485 = vpop.f32.mrb[0].mxu0
      %486 = vmatprep.mubr.f32.mxu0 0.0
      %487 = vmatmul.mubr.f32.gmra.mrb[0].mxu0 %v283
      %v488 = vpop.f32.mrb[0].mxu0
      %v489 = vadd.f32 %v213, %v488
      %v490 = vpop.f32.mrb[0].mxu0
      %491 = vmatprep.mubr.f32.mxu0 0.0
      %492 = vmatmul.mubr.f32.gmra.mrb[0].mxu0 %v286
      %v493 = vpop.f32.mrb[0].mxu0
      %v494 = vadd.f32 %v213, %v493
      %v495 = vpop.f32.mrb[0].mxu0
      %496 = vmatprep.mubr.f32.mxu0 0.0
      %497 = vmatmul.mubr.f32.gmra.mrb[0].mxu0 %v289
      %v498 = vpop.f32.mrb[0].mxu0
      %v499 = vadd.f32 %v213, %v498
      %v500 = vpop.f32.mrb[0].mxu0
      %501 = vmatprep.mubr.f32.mxu0 0.0
      %502 = vmatmul.mubr.f32.gmra.mrb[0].mxu0 %v292
      %v503 = vpop.f32.mrb[0].mxu0
      %v504 = vadd.f32 %v213, %v503
      %v505 = vpop.f32.mrb[0].mxu0
      %506 = vmatprep.mubr.f32.mxu0 0.0
      %507 = vmatmul.mubr.f32.gmra.mrb[0].mxu0 %v295
      %v508 = vpop.f32.mrb[0].mxu0
      %v509 = vadd.f32 %v213, %v508
      %v510 = vpop.f32.mrb[0].mxu0
      %511 = vmatprep.mubr.f32.mxu0 0.0
      %512 = vmatmul.mubr.f32.gmra.mrb[0].mxu0 %v298
      %v513 = vpop.f32.mrb[0].mxu0
      %v514 = vadd.f32 %v213, %v513
      %v515 = vpop.f32.mrb[0].mxu0
      %516 = vmatprep.mubr.f32.mxu0 0.0
      %517 = vmatmul.mubr.f32.gmra.mrb[0].mxu0 %v301
      %v518 = vpop.f32.mrb[0].mxu0
      %v519 = vadd.f32 %v213, %v518
      %v520 = vpop.f32.mrb[0].mxu0
      %521 = vmatprep.mubr.f32.mxu0 0.0
      %522 = vmatmul.mubr.f32.gmra.mrb[0].mxu0 %v304
      %v523 = vpop.f32.mrb[0].mxu0
      %v524 = vadd.f32 %v213, %v523
      %v525 = vpop.f32.mrb[0].mxu0
      %526 = vmatprep.mubr.f32.mxu0 0.0
      %527 = vmatmul.mubr.f32.gmra.mrb[0].mxu0 %v307
      %v528 = vpop.f32.mrb[0].mxu0
      %v529 = vadd.f32 %v213, %v528
      %v530 = vpop.f32.mrb[0].mxu0
      %531 = vmatprep.mubr.f32.mxu0 0.0
      %532 = vmatmul.mubr.f32.gmra.mrb[0].mxu0 %v310
      %v533 = vpop.f32.mrb[0].mxu0
      %v534 = vadd.f32 %v213, %v533
      %v535 = vpop.f32.mrb[0].mxu0
      %536 = vdwg.mxu0
      %v537 = vxor.u32 %v379, 2147483648
      %v538 = vxor.u32 %v384, 2147483648
      %v539 = vxor.u32 %v389, 2147483648
      %v540 = vxor.u32 %v394, 2147483648
      %v541 = vxor.u32 %v399, 2147483648
      %v542 = vxor.u32 %v404, 2147483648
      %v543 = vxor.u32 %v409, 2147483648
      %v544 = vxor.u32 %v414, 2147483648
      %v545 = vxor.u32 %v419, 2147483648
      %v546 = vxor.u32 %v424, 2147483648
      %v547 = vxor.u32 %v429, 2147483648
      %v548 = vxor.u32 %v434, 2147483648
      %v549 = vxor.u32 %v439, 2147483648
      %v550 = vxor.u32 %v444, 2147483648
      %v551 = vxor.u32 %v449, 2147483648
      %v552 = vxor.u32 %v454, 2147483648
      %v553 = vxor.u32 %v459, 2147483648
      %v554 = vxor.u32 %v464, 2147483648
      %v555 = vxor.u32 %v469, 2147483648
      %v556 = vxor.u32 %v474, 2147483648
      %v557 = vxor.u32 %v479, 2147483648
      %v558 = vxor.u32 %v484, 2147483648
      %v559 = vxor.u32 %v489, 2147483648
      %v560 = vxor.u32 %v494, 2147483648
      %v561 = vxor.u32 %v499, 2147483648
      %v562 = vxor.u32 %v504, 2147483648
      %v563 = vxor.u32 %v509, 2147483648
      %v564 = vxor.u32 %v514, 2147483648
      %v565 = vxor.u32 %v519, 2147483648
      %v566 = vxor.u32 %v524, 2147483648
      %v567 = vxor.u32 %v529, 2147483648
      %v568 = vxor.u32 %v534, 2147483648
      %v569 = vmul.f32 %v537, 1.442695
      %v570 = vpow.pop %v569
      %v571 = vmul.f32 %v538, 1.442695
      %v572 = vpow.pop %v571
      %v573 = vmul.f32 %v539, 1.442695
      %v574 = vpow.pop %v573
      %v575 = vmul.f32 %v540, 1.442695
      %v576 = vpow.pop %v575
      %v577 = vmul.f32 %v541, 1.442695
      %v578 = vpow.pop %v577
      %v579 = vmul.f32 %v542, 1.442695
      %v580 = vpow.pop %v579
      %v581 = vmul.f32 %v543, 1.442695
      %v582 = vpow.pop %v581
      %v583 = vmul.f32 %v544, 1.442695
      %v584 = vpow.pop %v583
      %v585 = vmul.f32 %v545, 1.442695
      %v586 = vpow.pop %v585
      %v587 = vmul.f32 %v546, 1.442695
      %v588 = vpow.pop %v587
      %v589 = vmul.f32 %v547, 1.442695
      %v590 = vpow.pop %v589
      %v591 = vmul.f32 %v548, 1.442695
      %v592 = vpow.pop %v591
      %v593 = vmul.f32 %v549, 1.442695
      %v594 = vpow.pop %v593
      %v595 = vmul.f32 %v550, 1.442695
      %v596 = vpow.pop %v595
      %v597 = vmul.f32 %v551, 1.442695
      %v598 = vpow.pop %v597
      %v599 = vmul.f32 %v552, 1.442695
      %v600 = vpow.pop %v599
      %v601 = vmul.f32 %v553, 1.442695
      %v602 = vpow.pop %v601
      %v603 = vmul.f32 %v554, 1.442695
      %v604 = vpow.pop %v603
      %v605 = vmul.f32 %v555, 1.442695
      %v606 = vpow.pop %v605
      %v607 = vmul.f32 %v556, 1.442695
      %v608 = vpow.pop %v607
      %v609 = vmul.f32 %v557, 1.442695
      %v610 = vpow.pop %v609
      %v611 = vmul.f32 %v558, 1.442695
      %v612 = vpow.pop %v611
      %v613 = vmul.f32 %v559, 1.442695
      %v614 = vpow.pop %v613
      %v615 = vmul.f32 %v560, 1.442695
      %v616 = vpow.pop %v615
      %v617 = vmul.f32 %v561, 1.442695
      %v618 = vpow.pop %v617
      %v619 = vmul.f32 %v562, 1.442695
      %v620 = vpow.pop %v619
      %v621 = vmul.f32 %v563, 1.442695
      %v622 = vpow.pop %v621
      %v623 = vmul.f32 %v564, 1.442695
      %v624 = vpow.pop %v623
      %v625 = vmul.f32 %v565, 1.442695
      %v626 = vpow.pop %v625
      %v627 = vmul.f32 %v566, 1.442695
      %v628 = vpow.pop %v627
      %v629 = vmul.f32 %v567, 1.442695
      %v630 = vpow.pop %v629
      %v631 = vmul.f32 %v568, 1.442695
      %v632 = vpow.pop %v631
      %v633 = vadd.f32 %v570, 1.0
      %v634 = vadd.f32 %v572, 1.0
      %v635 = vadd.f32 %v574, 1.0
      %v636 = vadd.f32 %v576, 1.0
      %v637 = vadd.f32 %v578, 1.0
      %v638 = vadd.f32 %v580, 1.0
      %v639 = vadd.f32 %v582, 1.0
      %v640 = vadd.f32 %v584, 1.0
      %v641 = vadd.f32 %v586, 1.0
      %v642 = vadd.f32 %v588, 1.0
      %v643 = vadd.f32 %v590, 1.0
      %v644 = vadd.f32 %v592, 1.0
      %v645 = vadd.f32 %v594, 1.0
      %v646 = vadd.f32 %v596, 1.0
      %v647 = vadd.f32 %v598, 1.0
      %v648 = vadd.f32 %v600, 1.0
      %v649 = vadd.f32 %v602, 1.0
      %v650 = vadd.f32 %v604, 1.0
      %v651 = vadd.f32 %v606, 1.0
      %v652 = vadd.f32 %v608, 1.0
      %v653 = vadd.f32 %v610, 1.0
      %v654 = vadd.f32 %v612, 1.0
      %v655 = vadd.f32 %v614, 1.0
      %v656 = vadd.f32 %v616, 1.0
      %v657 = vadd.f32 %v618, 1.0
      %v658 = vadd.f32 %v620, 1.0
      %v659 = vadd.f32 %v622, 1.0
      %v660 = vadd.f32 %v624, 1.0
      %v661 = vadd.f32 %v626, 1.0
      %v662 = vadd.f32 %v628, 1.0
      %v663 = vadd.f32 %v630, 1.0
      %v664 = vadd.f32 %v632, 1.0
      %v665 = vrcp.pop %v633
      %v666 = vmul.f32 1.0, %v665
      %v667 = vrcp.pop %v634
      %v668 = vmul.f32 1.0, %v667
      %v669 = vrcp.pop %v635
      %v670 = vmul.f32 1.0, %v669
      %v671 = vrcp.pop %v636
      %v672 = vmul.f32 1.0, %v671
      %v673 = vrcp.pop %v637
      %v674 = vmul.f32 1.0, %v673
      %v675 = vrcp.pop %v638
      %v676 = vmul.f32 1.0, %v675
      %v677 = vrcp.pop %v639
      %v678 = vmul.f32 1.0, %v677
      %v679 = vrcp.pop %v640
      %v680 = vmul.f32 1.0, %v679
      %v681 = vrcp.pop %v641
      %v682 = vmul.f32 1.0, %v681
      %v683 = vrcp.pop %v642
      %v684 = vmul.f32 1.0, %v683
      %v685 = vrcp.pop %v643
      %v686 = vmul.f32 1.0, %v685
      %v687 = vrcp.pop %v644
      %v688 = vmul.f32 1.0, %v687
      %v689 = vrcp.pop %v645
      %v690 = vmul.f32 1.0, %v689
      %v691 = vrcp.pop %v646
      %v692 = vmul.f32 1.0, %v691
      %v693 = vrcp.pop %v647
      %v694 = vmul.f32 1.0, %v693
      %v695 = vrcp.pop %v648
      %v696 = vmul.f32 1.0, %v695
      %v697 = vrcp.pop %v649
      %v698 = vmul.f32 1.0, %v697
      %v699 = vrcp.pop %v650
      %v700 = vmul.f32 1.0, %v699
      %v701 = vrcp.pop %v651
      %v702 = vmul.f32 1.0, %v701
      %v703 = vrcp.pop %v652
      %v704 = vmul.f32 1.0, %v703
      %v705 = vrcp.pop %v653
      %v706 = vmul.f32 1.0, %v705
      %v707 = vrcp.pop %v654
      %v708 = vmul.f32 1.0, %v707
      %v709 = vrcp.pop %v655
      %v710 = vmul.f32 1.0, %v709
      %v711 = vrcp.pop %v656
      %v712 = vmul.f32 1.0, %v711
      %v713 = vrcp.pop %v657
      %v714 = vmul.f32 1.0, %v713
      %v715 = vrcp.pop %v658
      %v716 = vmul.f32 1.0, %v715
      %v717 = vrcp.pop %v659
      %v718 = vmul.f32 1.0, %v717
      %v719 = vrcp.pop %v660
      %v720 = vmul.f32 1.0, %v719
      %v721 = vrcp.pop %v661
      %v722 = vmul.f32 1.0, %v721
      %v723 = vrcp.pop %v662
      %v724 = vmul.f32 1.0, %v723
      %v725 = vrcp.pop %v663
      %v726 = vmul.f32 1.0, %v725
      %v727 = vrcp.pop %v664
      %v728 = vmul.f32 1.0, %v727
      %v729 = vmul.f32 %v379, %v666
      %v730 = vmul.f32 %v384, %v668
      %v731 = vmul.f32 %v389, %v670
      %v732 = vmul.f32 %v394, %v672
      %v733 = vmul.f32 %v399, %v674
      %v734 = vmul.f32 %v404, %v676
      %v735 = vmul.f32 %v409, %v678
      %v736 = vmul.f32 %v414, %v680
      %v737 = vmul.f32 %v419, %v682
      %v738 = vmul.f32 %v424, %v684
      %v739 = vmul.f32 %v429, %v686
      %v740 = vmul.f32 %v434, %v688
      %v741 = vmul.f32 %v439, %v690
      %v742 = vmul.f32 %v444, %v692
      %v743 = vmul.f32 %v449, %v694
      %v744 = vmul.f32 %v454, %v696
      %v745 = vmul.f32 %v459, %v698
      %v746 = vmul.f32 %v464, %v700
      %v747 = vmul.f32 %v469, %v702
      %v748 = vmul.f32 %v474, %v704
      %v749 = vmul.f32 %v479, %v706
      %v750 = vmul.f32 %v484, %v708
      %v751 = vmul.f32 %v489, %v710
      %v752 = vmul.f32 %v494, %v712
      %v753 = vmul.f32 %v499, %v714
      %v754 = vmul.f32 %v504, %v716
      %v755 = vmul.f32 %v509, %v718
      %v756 = vmul.f32 %v514, %v720
      %v757 = vmul.f32 %v519, %v722
      %v758 = vmul.f32 %v524, %v724
      %v759 = vmul.f32 %v529, %v726
      %v760 = vmul.f32 %v534, %v728
      %vm761 = vcmask 785408
      %762 = vst.msk [vmem:[%s172] sm:$0xff] %vm761, %v729
      %763 = vst.msk [vmem:[%s172 + $0x8] sm:$0xff] %vm761, %v730
      %764 = vst.msk [vmem:[%s172 + $0x10] sm:$0xff] %vm761, %v731
      %765 = vst.msk [vmem:[%s172 + $0x18] sm:$0xff] %vm761, %v732
      %766 = vst.msk [vmem:[%s172 + $0x20] sm:$0xff] %vm761, %v733
      %767 = vst.msk [vmem:[%s172 + $0x28] sm:$0xff] %vm761, %v734
      %768 = vst.msk [vmem:[%s172 + $0x30] sm:$0xff] %vm761, %v735
      %769 = vst.msk [vmem:[%s172 + $0x38] sm:$0xff] %vm761, %v736
      %770 = vst.msk [vmem:[%s172 + $0x40] sm:$0xff] %vm761, %v737
      %771 = vst.msk [vmem:[%s172 + $0x48] sm:$0xff] %vm761, %v738
      %772 = vst.msk [vmem:[%s172 + $0x50] sm:$0xff] %vm761, %v739
      %773 = vst.msk [vmem:[%s172 + $0x58] sm:$0xff] %vm761, %v740
      %774 = vst.msk [vmem:[%s172 + $0x60] sm:$0xff] %vm761, %v741
      %775 = vst.msk [vmem:[%s172 + $0x68] sm:$0xff] %vm761, %v742
      %776 = vst.msk [vmem:[%s172 + $0x70] sm:$0xff] %vm761, %v743
      %777 = vst.msk [vmem:[%s172 + $0x78] sm:$0xff] %vm761, %v744
      %778 = vst.msk [vmem:[%s172 + $0x80] sm:$0xff] %vm761, %v745
      %779 = vst.msk [vmem:[%s172 + $0x88] sm:$0xff] %vm761, %v746
      %780 = vst.msk [vmem:[%s172 + $0x90] sm:$0xff] %vm761, %v747
      %781 = vst.msk [vmem:[%s172 + $0x98] sm:$0xff] %vm761, %v748
      %782 = vst.msk [vmem:[%s172 + $0xa0] sm:$0xff] %vm761, %v749
      %783 = vst.msk [vmem:[%s172 + $0xa8] sm:$0xff] %vm761, %v750
      %784 = vst.msk [vmem:[%s172 + $0xb0] sm:$0xff] %vm761, %v751
      %785 = vst.msk [vmem:[%s172 + $0xb8] sm:$0xff] %vm761, %v752
      %786 = vst.msk [vmem:[%s172 + $0xc0] sm:$0xff] %vm761, %v753
      %787 = vst.msk [vmem:[%s172 + $0xc8] sm:$0xff] %vm761, %v754
      %788 = vst.msk [vmem:[%s172 + $0xd0] sm:$0xff] %vm761, %v755
      %789 = vst.msk [vmem:[%s172 + $0xd8] sm:$0xff] %vm761, %v756
      %790 = vst.msk [vmem:[%s172 + $0xe0] sm:$0xff] %vm761, %v757
      %791 = vst.msk [vmem:[%s172 + $0xe8] sm:$0xff] %vm761, %v758
      %792 = vst.msk [vmem:[%s172 + $0xf0] sm:$0xff] %vm761, %v759
      %793 = vst.msk [vmem:[%s172 + $0xf8] sm:$0xff] %vm761, %v760
      %s794 = smul.u32 32, %s14
      %p795 = scmp.lt.s32.totalorder %s794, 63
      %s796 = scalar_select %p795, %s794, 63
      %s797 = smul.addr %s796, 8
      %s798 = scalar_lea.vmem %s3, %s797
      // Predicated region
      $region33: #{model_forward.7} parent=31 // pred_check
        %p799 = pneg %p100
      $region34: #{model_forward.7} parent=31 // pred_check_branch
        %801 = sbr.rel (%p799) target = $region36
      $region35: #{model_forward.7} parent=31 // pred_region
        %s802 = smul.u32 32, %s14
      $region36: #{model_forward.7} parent=31 // pred_fallthru
        _
    $region32: #{model_forward.7} parent=5 // pred_fallthru
      _
    %p803 = scmp.le.s32.totalorder 2, %s9
    // Predicated region
    $region37: #{model_forward.7} parent=5 // pred_check
      %p804 = pneg %p803
    $region38: #{model_forward.7} parent=5 // pred_check_branch
      %806 = sbr.rel (%p804) target = $region40
    $region39: #{model_forward.7} parent=5 // pred_region
      %s807 = ssub.s32 %s9, 2
      // Predicated region
      $region41: #{model_forward.7} parent=39 // pred_check
        %p808 = pneg %p106
      $region42: #{model_forward.7} parent=39 // pred_check_branch
        %810 = sbr.rel (%p808) target = $region44
      $region43: #{model_forward.7} parent=39 // pred_region
        %s811 = smul.u32 32, %s15
        %p812 = scmp.lt.s32.totalorder %s811, 63
        %s813 = scalar_select %p812, %s811, 63
        %s814 = smul.addr %s813, 8
        %s815 = scalar_lea.vmem %s3, %s814
      $region44: #{model_forward.7} parent=39 // pred_fallthru
        _
    $region40: #{model_forward.7} parent=5 // pred_fallthru
      _
  $region6: #{model_forward.7} parent=0 // loop_footer
    %s13 = sadd.s32 1, %s9
  $region7: #{model_forward.7} parent=0 // loop_footer_branch
    %8 = sbr.rel target = $region3
  $region8: #{model_forward.7} parent=0 // loop_exit
    _

// kernel: model_forward.6
$region0: #{model_forward.6}
  #allocation0 [shape = 'u32[]', space=smem, size = 0x4, offset = 0x4, fixed_abs, tag = 'smem constant byte address 0x4 - core index']
  #allocation1 [shape = 'u32[144,128]{1,0:T(1,128)}', space=vmem, size = 0x12000, scoped, tag = 'internal scratch']
  %s0 = inlined_call_operand.vmem [shape: f32[2,18,18,32], index: 0, kind: input, shape index: {}]
  %s1 = inlined_call_operand.vmem [shape: f32[9,32], index: 1, kind: input, shape index: {}]
  %s2 = inlined_call_operand.vmem [shape: f32[1,32], index: 2, kind: input, shape index: {}]
  %s3 = inlined_call_operand.vmem [shape: f32[1,32], index: 3, kind: input, shape index: {}]
  %s4 = inlined_call_operand.vmem [shape: f32[32,8], index: 4, kind: input, shape index: {}]
  %s5 = inlined_call_operand.vmem [shape: f32[1,8], index: 5, kind: input, shape index: {}]
  %s6 = inlined_call_operand.vmem [shape: f32[8,32], index: 6, kind: input, shape index: {}]
  %s7 = inlined_call_operand.vmem [shape: f32[1,32], index: 7, kind: input, shape index: {}]
  %s8 = inlined_call_operand.vmem [shape: f32[32,16], index: 8, kind: input, shape index: {}]
  %s9 = inlined_call_operand.vmem [shape: f32[1,16], index: 9, kind: input, shape index: {}]
  %s10 = inlined_call_operand.vmem [shape: f32[2,256,16], index: 10, kind: output, shape index: {}]
  %s11 = sld [smem:[#allocation0]]
  $region73: #{model_forward.6} parent=0
    _
  %s13 = ssub.s32 1, %s11
  %s14 = scalar_select 0, %s13, %s11
  loop: start=0, step=1, limit=4
  $region2: #{model_forward.6} parent=0 // loop_pre_header
    _
  $region3: #{model_forward.6} parent=0 // loop_header
    %s16 = sphi 0, %s20
    %p17 = scmp.ge.s32.totalorder %s16, 4
    %s26 = sphi 0, %s28
    %s29 = sphi 0, %s26
    %s30 = sphi 0, %s29
    %s46 = sphi 0, %s30
    %s50 = sphi 0, %s50
    %s52 = sphi 0, %s50
    %s53 = sphi 0, %s52
    %s67 = sphi 0, %s53
    %s71 = sphi 0, %s71
    %s73 = sphi 0, %s71
    %s74 = sphi 0, %s73
    %s88 = sphi 0, %s74
    %s92 = sphi 0, %s92
    %s94 = sphi 0, %s92
    %s95 = sphi 0, %s94
    %s109 = sphi 0, %s95
    %s113 = sphi 0, %s113
    %s115 = sphi 0, %s113
    %s116 = sphi 0, %s115
    %s130 = sphi 0, %s116
    %s134 = sphi 0, %s134
    %s136 = sphi 0, %s134
    %s137 = sphi 0, %s136
    %s151 = sphi 0, %s137
    %s155 = sphi 0, %s155
    %s157 = sphi 0, %s155
    %s158 = sphi 0, %s157
    %s172 = sphi 0, %s158
    %s176 = sphi 0, %s176
    %s178 = sphi 0, %s176
    %s179 = sphi 0, %s178
    %s193 = sphi 0, %s179
    %s197 = sphi 0, %s197
    %s199 = sphi 0, %s197
    %s200 = sphi 0, %s199
    %s214 = sphi 0, %s200
    %s218 = sphi 0, %s218
    %s220 = sphi 0, %s218
    %s221 = sphi 0, %s220
    %s235 = sphi 0, %s221
    %s241 = sphi 0, %s243
    %s244 = sphi 0, %s241
    %s245 = sphi 0, %s244
    %s261 = sphi 0, %s245
  $region4: #{model_forward.6} parent=0 // loop_header_branch
    %19 = sbr.rel (%p17) target = $region8
  $region5: #{model_forward.6} parent=0 // loop_body
    %s21 = ssub.s32 %s16, 1
    %s22 = ssub.s32 %s16, 2
    %s23 = sadd.s32 %s16, 1
    %s24 = ssub.s32 %s16, %s23
    %p25 = scmp.eq.s32.totalorder %s24, 0
    %s27 = sadd.s32 %s26, 1
    %s28 = scalar_select %p25, %s26, %s27
    %p31 = pneg %p25
    %p32 = scmp.eq.s32.totalorder %s16, 1
    %p33 = por %p31, %p32
    %p34 = scmp.ne.s32.totalorder %s26, %s29
    %p35 = scmp.eq.s32.totalorder %s16, 0
    %p36 = por %p34, %p35
    %p37 = scmp.ne.s32.totalorder %s26, %s29
    %p38 = scmp.eq.s32.totalorder %s21, 1
    %p39 = por %p37, %p38
    %p40 = scmp.ne.s32.totalorder %s29, %s30
    %p41 = scmp.eq.s32.totalorder %s21, 0
    %p42 = por %p40, %p41
    %p43 = scmp.ne.s32.totalorder %s29, %s30
    %p44 = scmp.eq.s32.totalorder %s22, 1
    %p45 = por %p43, %p44
    %p47 = scmp.ne.s32.totalorder %s30, %s46
    %p48 = scmp.eq.s32.totalorder %s22, 0
    %p49 = por %p47, %p48
    %s51 = sadd.s32 %s50, 1
    %p54 = scmp.eq.s32.totalorder %s16, 1
    %p55 = scmp.ne.s32.totalorder %s50, %s52
    %p56 = scmp.eq.s32.totalorder %s16, 0
    %p57 = por %p55, %p56
    %p58 = scmp.ne.s32.totalorder %s50, %s52
    %p59 = scmp.eq.s32.totalorder %s21, 1
    %p60 = por %p58, %p59
    %p61 = scmp.ne.s32.totalorder %s52, %s53
    %p62 = scmp.eq.s32.totalorder %s21, 0
    %p63 = por %p61, %p62
    %p64 = scmp.ne.s32.totalorder %s52, %s53
    %p65 = scmp.eq.s32.totalorder %s22, 1
    %p66 = por %p64, %p65
    %p68 = scmp.ne.s32.totalorder %s53, %s67
    %p69 = scmp.eq.s32.totalorder %s22, 0
    %p70 = por %p68, %p69
    %s72 = sadd.s32 %s71, 1
    %p75 = scmp.eq.s32.totalorder %s16, 1
    %p76 = scmp.ne.s32.totalorder %s71, %s73
    %p77 = scmp.eq.s32.totalorder %s16, 0
    %p78 = por %p76, %p77
    %p79 = scmp.ne.s32.totalorder %s71, %s73
    %p80 = scmp.eq.s32.totalorder %s21, 1
    %p81 = por %p79, %p80
    %p82 = scmp.ne.s32.totalorder %s73, %s74
    %p83 = scmp.eq.s32.totalorder %s21, 0
    %p84 = por %p82, %p83
    %p85 = scmp.ne.s32.totalorder %s73, %s74
    %p86 = scmp.eq.s32.totalorder %s22, 1
    %p87 = por %p85, %p86
    %p89 = scmp.ne.s32.totalorder %s74, %s88
    %p90 = scmp.eq.s32.totalorder %s22, 0
    %p91 = por %p89, %p90
    %s93 = sadd.s32 %s92, 1
    %p96 = scmp.eq.s32.totalorder %s16, 1
    %p97 = scmp.ne.s32.totalorder %s92, %s94
    %p98 = scmp.eq.s32.totalorder %s16, 0
    %p99 = por %p97, %p98
    %p100 = scmp.ne.s32.totalorder %s92, %s94
    %p101 = scmp.eq.s32.totalorder %s21, 1
    %p102 = por %p100, %p101
    %p103 = scmp.ne.s32.totalorder %s94, %s95
    %p104 = scmp.eq.s32.totalorder %s21, 0
    %p105 = por %p103, %p104
    %p106 = scmp.ne.s32.totalorder %s94, %s95
    %p107 = scmp.eq.s32.totalorder %s22, 1
    %p108 = por %p106, %p107
    %p110 = scmp.ne.s32.totalorder %s95, %s109
    %p111 = scmp.eq.s32.totalorder %s22, 0
    %p112 = por %p110, %p111
    %s114 = sadd.s32 %s113, 1
    %p117 = scmp.eq.s32.totalorder %s16, 1
    %p118 = scmp.ne.s32.totalorder %s113, %s115
    %p119 = scmp.eq.s32.totalorder %s16, 0
    %p120 = por %p118, %p119
    %p121 = scmp.ne.s32.totalorder %s113, %s115
    %p122 = scmp.eq.s32.totalorder %s21, 1
    %p123 = por %p121, %p122
    %p124 = scmp.ne.s32.totalorder %s115, %s116
    %p125 = scmp.eq.s32.totalorder %s21, 0
    %p126 = por %p124, %p125
    %p127 = scmp.ne.s32.totalorder %s115, %s116
    %p128 = scmp.eq.s32.totalorder %s22, 1
    %p129 = por %p127, %p128
    %p131 = scmp.ne.s32.totalorder %s116, %s130
    %p132 = scmp.eq.s32.totalorder %s22, 0
    %p133 = por %p131, %p132
    %s135 = sadd.s32 %s134, 1
    %p138 = scmp.eq.s32.totalorder %s16, 1
    %p139 = scmp.ne.s32.totalorder %s134, %s136
    %p140 = scmp.eq.s32.totalorder %s16, 0
    %p141 = por %p139, %p140
    %p142 = scmp.ne.s32.totalorder %s134, %s136
    %p143 = scmp.eq.s32.totalorder %s21, 1
    %p144 = por %p142, %p143
    %p145 = scmp.ne.s32.totalorder %s136, %s137
    %p146 = scmp.eq.s32.totalorder %s21, 0
    %p147 = por %p145, %p146
    %p148 = scmp.ne.s32.totalorder %s136, %s137
    %p149 = scmp.eq.s32.totalorder %s22, 1
    %p150 = por %p148, %p149
    %p152 = scmp.ne.s32.totalorder %s137, %s151
    %p153 = scmp.eq.s32.totalorder %s22, 0
    %p154 = por %p152, %p153
    %s156 = sadd.s32 %s155, 1
    %p159 = scmp.eq.s32.totalorder %s16, 1
    %p160 = scmp.ne.s32.totalorder %s155, %s157
    %p161 = scmp.eq.s32.totalorder %s16, 0
    %p162 = por %p160, %p161
    %p163 = scmp.ne.s32.totalorder %s155, %s157
    %p164 = scmp.eq.s32.totalorder %s21, 1
    %p165 = por %p163, %p164
    %p166 = scmp.ne.s32.totalorder %s157, %s158
    %p167 = scmp.eq.s32.totalorder %s21, 0
    %p168 = por %p166, %p167
    %p169 = scmp.ne.s32.totalorder %s157, %s158
    %p170 = scmp.eq.s32.totalorder %s22, 1
    %p171 = por %p169, %p170
    %p173 = scmp.ne.s32.totalorder %s158, %s172
    %p174 = scmp.eq.s32.totalorder %s22, 0
    %p175 = por %p173, %p174
    %s177 = sadd.s32 %s176, 1
    %p180 = scmp.eq.s32.totalorder %s16, 1
    %p181 = scmp.ne.s32.totalorder %s176, %s178
    %p182 = scmp.eq.s32.totalorder %s16, 0
    %p183 = por %p181, %p182
    %p184 = scmp.ne.s32.totalorder %s176, %s178
    %p185 = scmp.eq.s32.totalorder %s21, 1
    %p186 = por %p184, %p185
    %p187 = scmp.ne.s32.totalorder %s178, %s179
    %p188 = scmp.eq.s32.totalorder %s21, 0
    %p189 = por %p187, %p188
    %p190 = scmp.ne.s32.totalorder %s178, %s179
    %p191 = scmp.eq.s32.totalorder %s22, 1
    %p192 = por %p190, %p191
    %p194 = scmp.ne.s32.totalorder %s179, %s193
    %p195 = scmp.eq.s32.totalorder %s22, 0
    %p196 = por %p194, %p195
    %s198 = sadd.s32 %s197, 1
    %p201 = scmp.eq.s32.totalorder %s16, 1
    %p202 = scmp.ne.s32.totalorder %s197, %s199
    %p203 = scmp.eq.s32.totalorder %s16, 0
    %p204 = por %p202, %p203
    %p205 = scmp.ne.s32.totalorder %s197, %s199
    %p206 = scmp.eq.s32.totalorder %s21, 1
    %p207 = por %p205, %p206
    %p208 = scmp.ne.s32.totalorder %s199, %s200
    %p209 = scmp.eq.s32.totalorder %s21, 0
    %p210 = por %p208, %p209
    %p211 = scmp.ne.s32.totalorder %s199, %s200
    %p212 = scmp.eq.s32.totalorder %s22, 1
    %p213 = por %p211, %p212
    %p215 = scmp.ne.s32.totalorder %s200, %s214
    %p216 = scmp.eq.s32.totalorder %s22, 0
    %p217 = por %p215, %p216
    %s219 = sadd.s32 %s218, 1
    %p222 = scmp.eq.s32.totalorder %s16, 1
    %p223 = scmp.ne.s32.totalorder %s218, %s220
    %p224 = scmp.eq.s32.totalorder %s16, 0
    %p225 = por %p223, %p224
    %p226 = scmp.ne.s32.totalorder %s218, %s220
    %p227 = scmp.eq.s32.totalorder %s21, 1
    %p228 = por %p226, %p227
    %p229 = scmp.ne.s32.totalorder %s220, %s221
    %p230 = scmp.eq.s32.totalorder %s21, 0
    %p231 = por %p229, %p230
    %p232 = scmp.ne.s32.totalorder %s220, %s221
    %p233 = scmp.eq.s32.totalorder %s22, 1
    %p234 = por %p232, %p233
    %p236 = scmp.ne.s32.totalorder %s221, %s235
    %p237 = scmp.eq.s32.totalorder %s22, 0
    %p238 = por %p236, %p237
    %s239 = ssub.s32 %s16, %s23
    %p240 = scmp.eq.s32.totalorder %s239, 0
    %s242 = sadd.s32 %s241, 1
    %s243 = scalar_select %p240, %s241, %s242
    %p246 = pneg %p240
    %p247 = scmp.eq.s32.totalorder %s16, 1
    %p248 = por %p246, %p247
    %p249 = scmp.ne.s32.totalorder %s241, %s244
    %p250 = scmp.eq.s32.totalorder %s16, 0
    %p251 = por %p249, %p250
    %p252 = scmp.ne.s32.totalorder %s241, %s244
    %p253 = scmp.eq.s32.totalorder %s21, 1
    %p254 = por %p252, %p253
    %p255 = scmp.ne.s32.totalorder %s244, %s245
    %p256 = scmp.eq.s32.totalorder %s21, 0
    %p257 = por %p255, %p256
    %p258 = scmp.ne.s32.totalorder %s244, %s245
    %p259 = scmp.eq.s32.totalorder %s22, 1
    %p260 = por %p258, %p259
    %p262 = scmp.ne.s32.totalorder %s245, %s261
    %p263 = scmp.eq.s32.totalorder %s22, 0
    %p264 = por %p262, %p263
    %p265 = scmp.le.s32.totalorder 1, %s16
    %p266 = scmp.lt.s32.totalorder %s16, 3
    %p267 = pnand %p265, %p266
    %p268 = pneg %p267
    // Predicated region
    $region9: #{model_forward.6} parent=5 // pred_check
      _
    $region10: #{model_forward.6} parent=5 // pred_check_branch
      %270 = sbr.rel (%p267) target = $region12
    $region11: #{model_forward.6} parent=5 // pred_region
      %s271 = ssub.s32 %s16, 1
      // Predicated region
      $region13: #{model_forward.6} parent=11 // pred_check
        %p272 = pneg %p63
      $region14: #{model_forward.6} parent=11 // pred_check_branch
        %274 = sbr.rel (%p272) target = $region16
      $region15: #{model_forward.6} parent=11 // pred_region
        _
      $region16: #{model_forward.6} parent=11 // pred_fallthru
        _
      // Predicated region
      $region17: #{model_forward.6} parent=11 // pred_check
        %p275 = pneg %p84
      $region18: #{model_forward.6} parent=11 // pred_check_branch
        %277 = sbr.rel (%p275) target = $region20
      $region19: #{model_forward.6} parent=11 // pred_region
        _
      $region20: #{model_forward.6} parent=11 // pred_fallthru
        _
      // Predicated region
      $region21: #{model_forward.6} parent=11 // pred_check
        %p278 = pneg %p105
      $region22: #{model_forward.6} parent=11 // pred_check_branch
        %280 = sbr.rel (%p278) target = $region24
      $region23: #{model_forward.6} parent=11 // pred_region
        _
      $region24: #{model_forward.6} parent=11 // pred_fallthru
        _
      // Predicated region
      $region25: #{model_forward.6} parent=11 // pred_check
        %p281 = pneg %p126
      $region26: #{model_forward.6} parent=11 // pred_check_branch
        %283 = sbr.rel (%p281) target = $region28
      $region27: #{model_forward.6} parent=11 // pred_region
        _
      $region28: #{model_forward.6} parent=11 // pred_fallthru
        _
      // Predicated region
      $region29: #{model_forward.6} parent=11 // pred_check
        %p284 = pneg %p147
      $region30: #{model_forward.6} parent=11 // pred_check_branch
        %286 = sbr.rel (%p284) target = $region32
      $region31: #{model_forward.6} parent=11 // pred_region
        _
      $region32: #{model_forward.6} parent=11 // pred_fallthru
        _
      // Predicated region
      $region33: #{model_forward.6} parent=11 // pred_check
        %p287 = pneg %p168
      $region34: #{model_forward.6} parent=11 // pred_check_branch
        %289 = sbr.rel (%p287) target = $region36
      $region35: #{model_forward.6} parent=11 // pred_region
        _
      $region36: #{model_forward.6} parent=11 // pred_fallthru
        _
      // Predicated region
      $region37: #{model_forward.6} parent=11 // pred_check
        %p290 = pneg %p189
      $region38: #{model_forward.6} parent=11 // pred_check_branch
        %292 = sbr.rel (%p290) target = $region40
      $region39: #{model_forward.6} parent=11 // pred_region
        _
      $region40: #{model_forward.6} parent=11 // pred_fallthru
        _
      // Predicated region
      $region41: #{model_forward.6} parent=11 // pred_check
        %p293 = pneg %p210
      $region42: #{model_forward.6} parent=11 // pred_check_branch
        %295 = sbr.rel (%p293) target = $region44
      $region43: #{model_forward.6} parent=11 // pred_region
        _
      $region44: #{model_forward.6} parent=11 // pred_fallthru
        _
      // Predicated region
      $region45: #{model_forward.6} parent=11 // pred_check
        %p296 = pneg %p231
      $region46: #{model_forward.6} parent=11 // pred_check_branch
        %298 = sbr.rel (%p296) target = $region48
      $region47: #{model_forward.6} parent=11 // pred_region
        _
      $region48: #{model_forward.6} parent=11 // pred_fallthru
        _
    $region12: #{model_forward.6} parent=5 // pred_fallthru
      _
    %p299 = scmp.lt.s32.totalorder %s16, 2
    // Predicated region
    $region49: #{model_forward.6} parent=5 // pred_check
      %p300 = pneg %p299
    $region50: #{model_forward.6} parent=5 // pred_check_branch
      %302 = sbr.rel (%p300) target = $region52
    $region51: #{model_forward.6} parent=5 // pred_region
      // Predicated region
      $region53: #{model_forward.6} parent=51 // pred_check
        %p303 = pneg %p36
      $region54: #{model_forward.6} parent=51 // pred_check_branch
        %305 = sbr.rel (%p303) target = $region56
      $region55: #{model_forward.6} parent=51 // pred_region
        %p306 = scmp.lt.s32.totalorder %s16, 1
        %s307 = scalar_select %p306, %s16, 1
        %s308 = smul.addr %s307, 54
        %s309 = smul.addr %s308, 8
        %s310 = scalar_lea.vmem %s0, %s309
      $region56: #{model_forward.6} parent=51 // pred_fallthru
        _
    $region52: #{model_forward.6} parent=5 // pred_fallthru
      _
    %p311 = scmp.le.s32.totalorder 1, %s16
    %p312 = scmp.lt.s32.totalorder %s16, 3
    %p313 = pnand %p311, %p312
    %p314 = pneg %p313
    // Predicated region
    $region57: #{model_forward.6} parent=5 // pred_check
      _
    $region58: #{model_forward.6} parent=5 // pred_check_branch
      %316 = sbr.rel (%p313) target = $region60
    $region59: #{model_forward.6} parent=5 // pred_region
      %s317 = ssub.s32 %s16, 1
      %p318 = scmp.lt.s32.totalorder %s21, 1
      %s319 = scalar_select %p318, %s21, 1
      %s320 = smul.addr %s319, 54
      %s321 = smul.addr %s320, 8
      %s322 = scalar_lea.vmem %s0, %s321
      %p323 = pneg %p42
      %p324 = pneg %p39
      %p325 = pneg %p63
      %p326 = pneg %p60
      %p327 = pneg %p84
      %p328 = pneg %p81
      %p329 = pneg %p105
      %p330 = pneg %p102
      %p331 = pneg %p126
      %p332 = pneg %p123
      %p333 = pneg %p147
      %p334 = pneg %p144
      %p335 = pneg %p168
      %p336 = pneg %p165
      %p337 = pneg %p189
      %p338 = pneg %p186
      %p339 = pneg %p210
      %p340 = pneg %p207
      %p341 = pneg %p231
      %p342 = pneg %p228
      %p343 = pneg %p257
      %p344 = pneg %p254
      %p345 = scmp.lt.s32.totalorder %s21, 1
      %s346 = scalar_select %p345, %s21, 1
      %s347 = smul.addr %s346, 32
      %s348 = smul.addr %s347, 8
      %s349 = scalar_lea.vmem %s10, %s348
      %p350 = scmp.lt.s32.totalorder %s21, 1
      %s351 = scalar_select %p350, %s21, 1
      %s352 = smul.addr %s351, 54
      %s353 = smul.addr %s352, 8
      %s354 = scalar_lea.vmem %s0, %s353
      %p355 = scmp.lt.s32.totalorder %s21, 1
      %s356 = scalar_select %p355, %s21, 1
      %s357 = smul.addr %s356, 32
      %s358 = smul.addr %s357, 8
      %s359 = scalar_lea.vmem %s10, %s358
      %v360 = vld [vmem:[%s354] sm:$0xff]
      %v361 = vld [vmem:[%s354 + $0x8] sm:$0xff]
      %v362 = vld [vmem:[%s354 + $0x10] sm:$0x3]
      %v363 = vld [vmem:[%s354 + $0x18] sm:$0xff]
      %v364 = vld [vmem:[%s354 + $0x20] sm:$0xff]
      %v365 = vld [vmem:[%s354 + $0x28] sm:$0x3]
      %v366 = vld [vmem:[%s354 + $0x30] sm:$0xff]
      %v367 = vld [vmem:[%s354 + $0x38] sm:$0xff]
      %v368 = vld [vmem:[%s354 + $0x40] sm:$0x3]
      %v369 = vld [vmem:[%s354 + $0x48] sm:$0xff]
      %v370 = vld [vmem:[%s354 + $0x50] sm:$0xff]
      %v371 = vld [vmem:[%s354 + $0x58] sm:$0x3]
      %v372 = vld [vmem:[%s354 + $0x60] sm:$0xff]
      %v373 = vld [vmem:[%s354 + $0x68] sm:$0xff]
      %v374 = vld [vmem:[%s354 + $0x70] sm:$0x3]
      %v375 = vld [vmem:[%s354 + $0x78] sm:$0xff]
      %v376 = vld [vmem:[%s354 + $0x80] sm:$0xff]
      %v377 = vld [vmem:[%s354 + $0x88] sm:$0x3]
      %v378 = vld [vmem:[%s354 + $0x90] sm:$0xff]
      %v379 = vld [vmem:[%s354 + $0x98] sm:$0xff]
      %v380 = vld [vmem:[%s354 + $0xa0] sm:$0x3]
      %v381 = vld [vmem:[%s354 + $0xa8] sm:$0xff]
      %v382 = vld [vmem:[%s354 + $0xb0] sm:$0xff]
      %v383 = vld [vmem:[%s354 + $0xb8] sm:$0x3]
      %v384 = vld [vmem:[%s354 + $0xc0] sm:$0xff]
      %v385 = vld [vmem:[%s354 + $0xc8] sm:$0xff]
      %v386 = vld [vmem:[%s354 + $0xd0] sm:$0x3]
      %v387 = vld [vmem:[%s354 + $0xd8] sm:$0xff]
      %v388 = vld [vmem:[%s354 + $0xe0] sm:$0xff]
      %v389 = vld [vmem:[%s354 + $0xe8] sm:$0x3]
      %v390 = vld [vmem:[%s354 + $0xf0] sm:$0xff]
      %v391 = vld [vmem:[%s354 + $0xf8] sm:$0xff]
      %v392 = vld [vmem:[%s354 + $0x100] sm:$0x3]
      %v393 = vld [vmem:[%s354 + $0x108] sm:$0xff]
      %v394 = vld [vmem:[%s354 + $0x110] sm:$0xff]
      %v395 = vld [vmem:[%s354 + $0x118] sm:$0x3]
      %v396 = vld [vmem:[%s354 + $0x120] sm:$0xff]
      %v397 = vld [vmem:[%s354 + $0x128] sm:$0xff]
      %v398 = vld [vmem:[%s354 + $0x130] sm:$0x3]
      %v399 = vld [vmem:[%s354 + $0x138] sm:$0xff]
      %v400 = vld [vmem:[%s354 + $0x140] sm:$0xff]
      %v401 = vld [vmem:[%s354 + $0x148] sm:$0x3]
      %v402 = vld [vmem:[%s354 + $0x150] sm:$0xff]
      %v403 = vld [vmem:[%s354 + $0x158] sm:$0xff]
      %v404 = vld [vmem:[%s354 + $0x160] sm:$0x3]
      %v405 = vld [vmem:[%s354 + $0x168] sm:$0xff]
      %v406 = vld [vmem:[%s354 + $0x170] sm:$0xff]
      %v407 = vld [vmem:[%s354 + $0x178] sm:$0x3]
      %v408 = vld [vmem:[%s354 + $0x180] sm:$0xff]
      %v409 = vld [vmem:[%s354 + $0x188] sm:$0xff]
      %v410 = vld [vmem:[%s354 + $0x190] sm:$0x3]
      %v411 = vld [vmem:[%s354 + $0x198] sm:$0xff]
      %v412 = vld [vmem:[%s354 + $0x1a0] sm:$0xff]
      %v413 = vld [vmem:[%s354 + $0x1a8] sm:$0x3]
      %v414 = vld [vmem:[%s1] sm:$0xff]
      %v415 = vld [vmem:[%s1 + $0x8] sm:$0x1]
      %v416 = vlaneseq
      %v417 = vshrl.u32 %v416, 7
      %v418 = vsub.s32 0, %v417
      %v419 = vrot.slane %v414, %v418
      %v420 = vmul.f32 %v360, %v419
      %v421 = vmul.f32 %v361, %v419
      %v422 = vmul.f32 %v363, %v419
      %v423 = vmul.f32 %v364, %v419
      %v424 = vmul.f32 %v366, %v419
      %v425 = vmul.f32 %v367, %v419
      %v426 = vmul.f32 %v369, %v419
      %v427 = vmul.f32 %v370, %v419
      %v428 = vmul.f32 %v372, %v419
      %v429 = vmul.f32 %v373, %v419
      %v430 = vmul.f32 %v375, %v419
      %v431 = vmul.f32 %v376, %v419
      %v432 = vmul.f32 %v378, %v419
      %v433 = vmul.f32 %v379, %v419
      %v434 = vmul.f32 %v381, %v419
      %v435 = vmul.f32 %v382, %v419
      %v436 = vmul.f32 %v384, %v419
      %v437 = vmul.f32 %v385, %v419
      %v438 = vmul.f32 %v387, %v419
      %v439 = vmul.f32 %v388, %v419
      %v440 = vmul.f32 %v390, %v419
      %v441 = vmul.f32 %v391, %v419
      %v442 = vmul.f32 %v393, %v419
      %v443 = vmul.f32 %v394, %v419
      %v444 = vmul.f32 %v396, %v419
      %v445 = vmul.f32 %v397, %v419
      %v446 = vmul.f32 %v399, %v419
      %v447 = vmul.f32 %v400, %v419
      %v448 = vmul.f32 %v402, %v419
      %v449 = vmul.f32 %v403, %v419
      %v450 = vmul.f32 %v405, %v419
      %v451 = vmul.f32 %v406, %v419
      %v452 = vadd.f32 %v420, 0.0
      %v453 = vadd.f32 %v421, 0.0
      %v454 = vadd.f32 %v422, 0.0
      %v455 = vadd.f32 %v423, 0.0
      %v456 = vadd.f32 %v424, 0.0
      %v457 = vadd.f32 %v425, 0.0
      %v458 = vadd.f32 %v426, 0.0
      %v459 = vadd.f32 %v427, 0.0
      %v460 = vadd.f32 %v428, 0.0
      %v461 = vadd.f32 %v429, 0.0
      %v462 = vadd.f32 %v430, 0.0
      %v463 = vadd.f32 %v431, 0.0
      %v464 = vadd.f32 %v432, 0.0
      %v465 = vadd.f32 %v433, 0.0
      %v466 = vadd.f32 %v434, 0.0
      %v467 = vadd.f32 %v435, 0.0
      %v468 = vadd.f32 %v436, 0.0
      %v469 = vadd.f32 %v437, 0.0
      %v470 = vadd.f32 %v438, 0.0
      %v471 = vadd.f32 %v439, 0.0
      %v472 = vadd.f32 %v440, 0.0
      %v473 = vadd.f32 %v441, 0.0
      %v474 = vadd.f32 %v442, 0.0
      %v475 = vadd.f32 %v443, 0.0
      %v476 = vadd.f32 %v444, 0.0
      %v477 = vadd.f32 %v445, 0.0
      %v478 = vadd.f32 %v446, 0.0
      %v479 = vadd.f32 %v447, 0.0
      %v480 = vadd.f32 %v448, 0.0
      %v481 = vadd.f32 %v449, 0.0
      %v482 = vadd.f32 %v450, 0.0
      %v483 = vadd.f32 %v451, 0.0
      %v484 = vlaneseq
      %v485 = vshrl.u32 %v484, 7
      %v486 = vsub.s32 1, %v485
      %v487 = vrot.slane %v414, %v486
      %v488 = vmul.f32 %v360, %v487
      %v489 = vmul.f32 %v361, %v487
      %v490 = vmul.f32 %v362, %v487
      %v491 = vmul.f32 %v363, %v487
      %v492 = vmul.f32 %v364, %v487
      %v493 = vmul.f32 %v365, %v487
      %v494 = vmul.f32 %v366, %v487
      %v495 = vmul.f32 %v367, %v487
      %v496 = vmul.f32 %v368, %v487
      %v497 = vmul.f32 %v369, %v487
      %v498 = vmul.f32 %v370, %v487
      %v499 = vmul.f32 %v371, %v487
      %v500 = vmul.f32 %v372, %v487
      %v501 = vmul.f32 %v373, %v487
      %v502 = vmul.f32 %v374, %v487
      %v503 = vmul.f32 %v375, %v487
      %v504 = vmul.f32 %v376, %v487
      %v505 = vmul.f32 %v377, %v487
      %v506 = vmul.f32 %v378, %v487
      %v507 = vmul.f32 %v379, %v487
      %v508 = vmul.f32 %v380, %v487
      %v509 = vmul.f32 %v381, %v487
      %v510 = vmul.f32 %v382, %v487
      %v511 = vmul.f32 %v383, %v487
      %v512 = vmul.f32 %v384, %v487
      %v513 = vmul.f32 %v385, %v487
      %v514 = vmul.f32 %v386, %v487
      %v515 = vmul.f32 %v387, %v487
      %v516 = vmul.f32 %v388, %v487
      %v517 = vmul.f32 %v389, %v487
      %v518 = vmul.f32 %v390, %v487
      %v519 = vmul.f32 %v391, %v487
      %v520 = vmul.f32 %v392, %v487
      %v521 = vmul.f32 %v393, %v487
      %v522 = vmul.f32 %v394, %v487
      %v523 = vmul.f32 %v395, %v487
      %v524 = vmul.f32 %v396, %v487
      %v525 = vmul.f32 %v397, %v487
      %v526 = vmul.f32 %v398, %v487
      %v527 = vmul.f32 %v399, %v487
      %v528 = vmul.f32 %v400, %v487
      %v529 = vmul.f32 %v401, %v487
      %v530 = vmul.f32 %v402, %v487
      %v531 = vmul.f32 %v403, %v487
      %v532 = vmul.f32 %v404, %v487
      %v533 = vmul.f32 %v405, %v487
      %v534 = vmul.f32 %v406, %v487
      %v535 = vmul.f32 %v407, %v487
      %vm584 = vcmask 1046528
      %v585 = vrot.slane %v488, 1
      %v586 = vrot.slane %v489, 1
      %v587 = vsel %vm584, %v585, %v586
      %v588 = vrot.slane %v490, 1
      %v589 = vsel %vm584, %v586, %v588
      %v590 = vrot.slane %v491, 1
      %v591 = vrot.slane %v492, 1
      %v592 = vsel %vm584, %v590, %v591
      %v593 = vrot.slane %v493, 1
      %v594 = vsel %vm584, %v591, %v593
      %v595 = vrot.slane %v494, 1
      %v596 = vrot.slane %v495, 1
      %v597 = vsel %vm584, %v595, %v596
      %v598 = vrot.slane %v496, 1
      %v599 = vsel %vm584, %v596, %v598
      %v600 = vrot.slane %v497, 1
      %v601 = vrot.slane %v498, 1
      %v602 = vsel %vm584, %v600, %v601
      %v603 = vrot.slane %v499, 1
      %v604 = vsel %vm584, %v601, %v603
      %v605 = vrot.slane %v500, 1
      %v606 = vrot.slane %v501, 1
      %v607 = vsel %vm584, %v605, %v606
      %v608 = vrot.slane %v502, 1
      %v609 = vsel %vm584, %v606, %v608
      %v610 = vrot.slane %v503, 1
      %v611 = vrot.slane %v504, 1
      %v612 = vsel %vm584, %v610, %v611
      %v613 = vrot.slane %v505, 1
      %v614 = vsel %vm584, %v611, %v613
      %v615 = vrot.slane %v506, 1
      %v616 = vrot.slane %v507, 1
      %v617 = vsel %vm584, %v615, %v616
      %v618 = vrot.slane %v508, 1
      %v619 = vsel %vm584, %v616, %v618
      %v620 = vrot.slane %v509, 1
      %v621 = vrot.slane %v510, 1
      %v622 = vsel %vm584, %v620, %v621
      %v623 = vrot.slane %v511, 1
      %v624 = vsel %vm584, %v621, %v623
      %v625 = vrot.slane %v512, 1
      %v626 = vrot.slane %v513, 1
      %v627 = vsel %vm584, %v625, %v626
      %v628 = vrot.slane %v514, 1
      %v629 = vsel %vm584, %v626, %v628
      %v630 = vrot.slane %v515, 1
      %v631 = vrot.slane %v516, 1
      %v632 = vsel %vm584, %v630, %v631
      %v633 = vrot.slane %v517, 1
      %v634 = vsel %vm584, %v631, %v633
      %v635 = vrot.slane %v518, 1
      %v636 = vrot.slane %v519, 1
      %v637 = vsel %vm584, %v635, %v636
      %v638 = vrot.slane %v520, 1
      %v639 = vsel %vm584, %v636, %v638
      %v640 = vrot.slane %v521, 1
      %v641 = vrot.slane %v522, 1
      %v642 = vsel %vm584, %v640, %v641
      %v643 = vrot.slane %v523, 1
      %v644 = vsel %vm584, %v641, %v643
      %v645 = vrot.slane %v524, 1
      %v646 = vrot.slane %v525, 1
      %v647 = vsel %vm584, %v645, %v646
      %v648 = vrot.slane %v526, 1
      %v649 = vsel %vm584, %v646, %v648
      %v650 = vrot.slane %v527, 1
      %v651 = vrot.slane %v528, 1
      %v652 = vsel %vm584, %v650, %v651
      %v653 = vrot.slane %v529, 1
      %v654 = vsel %vm584, %v651, %v653
      %v655 = vrot.slane %v530, 1
      %v656 = vrot.slane %v531, 1
      %v657 = vsel %vm584, %v655, %v656
      %v658 = vrot.slane %v532, 1
      %v659 = vsel %vm584, %v656, %v658
      %v660 = vrot.slane %v533, 1
      %v661 = vrot.slane %v534, 1
      %v662 = vsel %vm584, %v660, %v661
      %v663 = vrot.slane %v535, 1
      %v664 = vsel %vm584, %v661, %v663
      %v697 = vadd.f32 %v452, %v587
      %v698 = vadd.f32 %v453, %v589
      %v699 = vadd.f32 %v454, %v592
      %v700 = vadd.f32 %v455, %v594
      %v701 = vadd.f32 %v456, %v597
      %v702 = vadd.f32 %v457, %v599
      %v703 = vadd.f32 %v458, %v602
      %v704 = vadd.f32 %v459, %v604
      %v705 = vadd.f32 %v460, %v607
      %v706 = vadd.f32 %v461, %v609
      %v707 = vadd.f32 %v462, %v612
      %v708 = vadd.f32 %v463, %v614
      %v709 = vadd.f32 %v464, %v617
      %v710 = vadd.f32 %v465, %v619
      %v711 = vadd.f32 %v466, %v622
      %v712 = vadd.f32 %v467, %v624
      %v713 = vadd.f32 %v468, %v627
      %v714 = vadd.f32 %v469, %v629
      %v715 = vadd.f32 %v470, %v632
      %v716 = vadd.f32 %v471, %v634
      %v717 = vadd.f32 %v472, %v637
      %v718 = vadd.f32 %v473, %v639
      %v719 = vadd.f32 %v474, %v642
      %v720 = vadd.f32 %v475, %v644
      %v721 = vadd.f32 %v476, %v647
      %v722 = vadd.f32 %v477, %v649
      %v723 = vadd.f32 %v478, %v652
      %v724 = vadd.f32 %v479, %v654
      %v725 = vadd.f32 %v480, %v657
      %v726 = vadd.f32 %v481, %v659
      %v727 = vadd.f32 %v482, %v662
      %v728 = vadd.f32 %v483, %v664
      %v729 = vlaneseq
      %v730 = vshrl.u32 %v729, 7
      %v731 = vsub.s32 2, %v730
      %v732 = vrot.slane %v414, %v731
      %v733 = vmul.f32 %v360, %v732
      %v734 = vmul.f32 %v361, %v732
      %v735 = vmul.f32 %v362, %v732
      %v736 = vmul.f32 %v363, %v732
      %v737 = vmul.f32 %v364, %v732
      %v738 = vmul.f32 %v365, %v732
      %v739 = vmul.f32 %v366, %v732
      %v740 = vmul.f32 %v367, %v732
      %v741 = vmul.f32 %v368, %v732
      %v742 = vmul.f32 %v369, %v732
      %v743 = vmul.f32 %v370, %v732
      %v744 = vmul.f32 %v371, %v732
      %v745 = vmul.f32 %v372, %v732
      %v746 = vmul.f32 %v373, %v732
      %v747 = vmul.f32 %v374, %v732
      %v748 = vmul.f32 %v375, %v732
      %v749 = vmul.f32 %v376, %v732
      %v750 = vmul.f32 %v377, %v732
      %v751 = vmul.f32 %v378, %v732
      %v752 = vmul.f32 %v379, %v732
      %v753 = vmul.f32 %v380, %v732
      %v754 = vmul.f32 %v381, %v732
      %v755 = vmul.f32 %v382, %v732
      %v756 = vmul.f32 %v383, %v732
      %v757 = vmul.f32 %v384, %v732
      %v758 = vmul.f32 %v385, %v732
      %v759 = vmul.f32 %v386, %v732
      %v760 = vmul.f32 %v387, %v732
      %v761 = vmul.f32 %v388, %v732
      %v762 = vmul.f32 %v389, %v732
      %v763 = vmul.f32 %v390, %v732
      %v764 = vmul.f32 %v391, %v732
      %v765 = vmul.f32 %v392, %v732
      %v766 = vmul.f32 %v393, %v732
      %v767 = vmul.f32 %v394, %v732
      %v768 = vmul.f32 %v395, %v732
      %v769 = vmul.f32 %v396, %v732
      %v770 = vmul.f32 %v397, %v732
      %v771 = vmul.f32 %v398, %v732
      %v772 = vmul.f32 %v399, %v732
      %v773 = vmul.f32 %v400, %v732
      %v774 = vmul.f32 %v401, %v732
      %v775 = vmul.f32 %v402, %v732
      %v776 = vmul.f32 %v403, %v732
      %v777 = vmul.f32 %v404, %v732
      %v778 = vmul.f32 %v405, %v732
      %v779 = vmul.f32 %v406, %v732
      %v780 = vmul.f32 %v407, %v732
      %vm829 = vcmask 1045504
      %v830 = vrot.slane %v733, 2
      %v831 = vrot.slane %v734, 2
      %v832 = vsel %vm829, %v830, %v831
      %v833 = vrot.slane %v735, 2
      %v834 = vsel %vm829, %v831, %v833
      %v835 = vrot.slane %v736, 2
      %v836 = vrot.slane %v737, 2
      %v837 = vsel %vm829, %v835, %v836
      %v838 = vrot.slane %v738, 2
      %v839 = vsel %vm829, %v836, %v838
      %v840 = vrot.slane %v739, 2
      %v841 = vrot.slane %v740, 2
      %v842 = vsel %vm829, %v840, %v841
      %v843 = vrot.slane %v741, 2
      %v844 = vsel %vm829, %v841, %v843
      %v845 = vrot.slane %v742, 2
      %v846 = vrot.slane %v743, 2
      %v847 = vsel %vm829, %v845, %v846
      %v848 = vrot.slane %v744, 2
      %v849 = vsel %vm829, %v846, %v848
      %v850 = vrot.slane %v745, 2
      %v851 = vrot.slane %v746, 2
      %v852 = vsel %vm829, %v850, %v851
      %v853 = vrot.slane %v747, 2
      %v854 = vsel %vm829, %v851, %v853
      %v855 = vrot.slane %v748, 2
      %v856 = vrot.slane %v749, 2
      %v857 = vsel %vm829, %v855, %v856
      %v858 = vrot.slane %v750, 2
      %v859 = vsel %vm829, %v856, %v858
      %v860 = vrot.slane %v751, 2
      %v861 = vrot.slane %v752, 2
      %v862 = vsel %vm829, %v860, %v861
      %v863 = vrot.slane %v753, 2
      %v864 = vsel %vm829, %v861, %v863
      %v865 = vrot.slane %v754, 2
      %v866 = vrot.slane %v755, 2
      %v867 = vsel %vm829, %v865, %v866
      %v868 = vrot.slane %v756, 2
      %v869 = vsel %vm829, %v866, %v868
      %v870 = vrot.slane %v757, 2
      %v871 = vrot.slane %v758, 2
      %v872 = vsel %vm829, %v870, %v871
      %v873 = vrot.slane %v759, 2
      %v874 = vsel %vm829, %v871, %v873
      %v875 = vrot.slane %v760, 2
      %v876 = vrot.slane %v761, 2
      %v877 = vsel %vm829, %v875, %v876
      %v878 = vrot.slane %v762, 2
      %v879 = vsel %vm829, %v876, %v878
      %v880 = vrot.slane %v763, 2
      %v881 = vrot.slane %v764, 2
      %v882 = vsel %vm829, %v880, %v881
      %v883 = vrot.slane %v765, 2
      %v884 = vsel %vm829, %v881, %v883
      %v885 = vrot.slane %v766, 2
      %v886 = vrot.slane %v767, 2
      %v887 = vsel %vm829, %v885, %v886
      %v888 = vrot.slane %v768, 2
      %v889 = vsel %vm829, %v886, %v888
      %v890 = vrot.slane %v769, 2
      %v891 = vrot.slane %v770, 2
      %v892 = vsel %vm829, %v890, %v891
      %v893 = vrot.slane %v771, 2
      %v894 = vsel %vm829, %v891, %v893
      %v895 = vrot.slane %v772, 2
      %v896 = vrot.slane %v773, 2
      %v897 = vsel %vm829, %v895, %v896
      %v898 = vrot.slane %v774, 2
      %v899 = vsel %vm829, %v896, %v898
      %v900 = vrot.slane %v775, 2
      %v901 = vrot.slane %v776, 2
      %v902 = vsel %vm829, %v900, %v901
      %v903 = vrot.slane %v777, 2
      %v904 = vsel %vm829, %v901, %v903
      %v905 = vrot.slane %v778, 2
      %v906 = vrot.slane %v779, 2
      %v907 = vsel %vm829, %v905, %v906
      %v908 = vrot.slane %v780, 2
      %v909 = vsel %vm829, %v906, %v908
      %v942 = vadd.f32 %v697, %v832
      %v943 = vadd.f32 %v698, %v834
      %v944 = vadd.f32 %v699, %v837
      %v945 = vadd.f32 %v700, %v839
      %v946 = vadd.f32 %v701, %v842
      %v947 = vadd.f32 %v702, %v844
      %v948 = vadd.f32 %v703, %v847
      %v949 = vadd.f32 %v704, %v849
      %v950 = vadd.f32 %v705, %v852
      %v951 = vadd.f32 %v706, %v854
      %v952 = vadd.f32 %v707, %v857
      %v953 = vadd.f32 %v708, %v859
      %v954 = vadd.f32 %v709, %v862
      %v955 = vadd.f32 %v710, %v864
      %v956 = vadd.f32 %v711, %v867
      %v957 = vadd.f32 %v712, %v869
      %v958 = vadd.f32 %v713, %v872
      %v959 = vadd.f32 %v714, %v874
      %v960 = vadd.f32 %v715, %v877
      %v961 = vadd.f32 %v716, %v879
      %v962 = vadd.f32 %v717, %v882
      %v963 = vadd.f32 %v718, %v884
      %v964 = vadd.f32 %v719, %v887
      %v965 = vadd.f32 %v720, %v889
      %v966 = vadd.f32 %v721, %v892
      %v967 = vadd.f32 %v722, %v894
      %v968 = vadd.f32 %v723, %v897
      %v969 = vadd.f32 %v724, %v899
      %v970 = vadd.f32 %v725, %v902
      %v971 = vadd.f32 %v726, %v904
      %v972 = vadd.f32 %v727, %v907
      %v973 = vadd.f32 %v728, %v909
      %v974 = vlaneseq
      %v975 = vshrl.u32 %v974, 7
      %v976 = vsub.s32 3, %v975
      %v977 = vrot.slane %v414, %v976
      %v978 = vmul.f32 %v363, %v977
      %v979 = vmul.f32 %v364, %v977
      %v980 = vmul.f32 %v366, %v977
      %v981 = vmul.f32 %v367, %v977
      %v982 = vmul.f32 %v369, %v977
      %v983 = vmul.f32 %v370, %v977
      %v984 = vmul.f32 %v372, %v977
      %v985 = vmul.f32 %v373, %v977
      %v986 = vmul.f32 %v375, %v977
      %v987 = vmul.f32 %v376, %v977
      %v988 = vmul.f32 %v378, %v977
      %v989 = vmul.f32 %v379, %v977
      %v990 = vmul.f32 %v381, %v977
      %v991 = vmul.f32 %v382, %v977
      %v992 = vmul.f32 %v384, %v977
      %v993 = vmul.f32 %v385, %v977
      %v994 = vmul.f32 %v387, %v977
      %v995 = vmul.f32 %v388, %v977
      %v996 = vmul.f32 %v390, %v977
      %v997 = vmul.f32 %v391, %v977
      %v998 = vmul.f32 %v393, %v977
      %v999 = vmul.f32 %v394, %v977
      %v1000 = vmul.f32 %v396, %v977
      %v1001 = vmul.f32 %v397, %v977
      %v1002 = vmul.f32 %v399, %v977
      %v1003 = vmul.f32 %v400, %v977
      %v1004 = vmul.f32 %v402, %v977
      %v1005 = vmul.f32 %v403, %v977
      %v1006 = vmul.f32 %v405, %v977
      %v1007 = vmul.f32 %v406, %v977
      %v1008 = vmul.f32 %v408, %v977
      %v1009 = vmul.f32 %v409, %v977
      %v1010 = vadd.f32 %v942, %v978
      %v1011 = vadd.f32 %v943, %v979
      %v1012 = vadd.f32 %v944, %v980
      %v1013 = vadd.f32 %v945, %v981
      %v1014 = vadd.f32 %v946, %v982
      %v1015 = vadd.f32 %v947, %v983
      %v1016 = vadd.f32 %v948, %v984
      %v1017 = vadd.f32 %v949, %v985
      %v1018 = vadd.f32 %v950, %v986
      %v1019 = vadd.f32 %v951, %v987
      %v1020 = vadd.f32 %v952, %v988
      %v1021 = vadd.f32 %v953, %v989
      %v1022 = vadd.f32 %v954, %v990
      %v1023 = vadd.f32 %v955, %v991
      %v1024 = vadd.f32 %v956, %v992
      %v1025 = vadd.f32 %v957, %v993
      %v1026 = vadd.f32 %v958, %v994
      %v1027 = vadd.f32 %v959, %v995
      %v1028 = vadd.f32 %v960, %v996
      %v1029 = vadd.f32 %v961, %v997
      %v1030 = vadd.f32 %v962, %v998
      %v1031 = vadd.f32 %v963, %v999
      %v1032 = vadd.f32 %v964, %v1000
      %v1033 = vadd.f32 %v965, %v1001
      %v1034 = vadd.f32 %v966, %v1002
      %v1035 = vadd.f32 %v967, %v1003
      %v1036 = vadd.f32 %v968, %v1004
      %v1037 = vadd.f32 %v969, %v1005
      %v1038 = vadd.f32 %v970, %v1006
      %v1039 = vadd.f32 %v971, %v1007
      %v1040 = vadd.f32 %v972, %v1008
      %v1041 = vadd.f32 %v973, %v1009
      %v1042 = vlaneseq
      %v1043 = vshrl.u32 %v1042, 7
      %v1044 = vsub.s32 4, %v1043
      %v1045 = vrot.slane %v414, %v1044
      %v1046 = vmul.f32 %v363, %v1045
      %v1047 = vmul.f32 %v364, %v1045
      %v1048 = vmul.f32 %v365, %v1045
      %v1049 = vmul.f32 %v366, %v1045
      %v1050 = vmul.f32 %v367, %v1045
      %v1051 = vmul.f32 %v368, %v1045
      %v1052 = vmul.f32 %v369, %v1045
      %v1053 = vmul.f32 %v370, %v1045
      %v1054 = vmul.f32 %v371, %v1045
      %v1055 = vmul.f32 %v372, %v1045
      %v1056 = vmul.f32 %v373, %v1045
      %v1057 = vmul.f32 %v374, %v1045
      %v1058 = vmul.f32 %v375, %v1045
      %v1059 = vmul.f32 %v376, %v1045
      %v1060 = vmul.f32 %v377, %v1045
      %v1061 = vmul.f32 %v378, %v1045
      %v1062 = vmul.f32 %v379, %v1045
      %v1063 = vmul.f32 %v380, %v1045
      %v1064 = vmul.f32 %v381, %v1045
      %v1065 = vmul.f32 %v382, %v1045
      %v1066 = vmul.f32 %v383, %v1045
      %v1067 = vmul.f32 %v384, %v1045
      %v1068 = vmul.f32 %v385, %v1045
      %v1069 = vmul.f32 %v386, %v1045
      %v1070 = vmul.f32 %v387, %v1045
      %v1071 = vmul.f32 %v388, %v1045
      %v1072 = vmul.f32 %v389, %v1045
      %v1073 = vmul.f32 %v390, %v1045
      %v1074 = vmul.f32 %v391, %v1045
      %v1075 = vmul.f32 %v392, %v1045
      %v1076 = vmul.f32 %v393, %v1045
      %v1077 = vmul.f32 %v394, %v1045
      %v1078 = vmul.f32 %v395, %v1045
      %v1079 = vmul.f32 %v396, %v1045
      %v1080 = vmul.f32 %v397, %v1045
      %v1081 = vmul.f32 %v398, %v1045
      %v1082 = vmul.f32 %v399, %v1045
      %v1083 = vmul.f32 %v400, %v1045
      %v1084 = vmul.f32 %v401, %v1045
      %v1085 = vmul.f32 %v402, %v1045
      %v1086 = vmul.f32 %v403, %v1045
      %v1087 = vmul.f32 %v404, %v1045
      %v1088 = vmul.f32 %v405, %v1045
      %v1089 = vmul.f32 %v406, %v1045
      %v1090 = vmul.f32 %v407, %v1045
      %v1091 = vmul.f32 %v408, %v1045
      %v1092 = vmul.f32 %v409, %v1045
      %v1093 = vmul.f32 %v410, %v1045
      %v1142 = vrot.slane %v1046, 1
      %v1143 = vrot.slane %v1047, 1
      %v1144 = vsel %vm584, %v1142, %v1143
      %v1145 = vrot.slane %v1048, 1
      %v1146 = vsel %vm584, %v1143, %v1145
      %v1147 = vrot.slane %v1049, 1
      %v1148 = vrot.slane %v1050, 1
      %v1149 = vsel %vm584, %v1147, %v1148
      %v1150 = vrot.slane %v1051, 1
      %v1151 = vsel %vm584, %v1148, %v1150
      %v1152 = vrot.slane %v1052, 1
      %v1153 = vrot.slane %v1053, 1
      %v1154 = vsel %vm584, %v1152, %v1153
      %v1155 = vrot.slane %v1054, 1
      %v1156 = vsel %vm584, %v1153, %v1155
      %v1157 = vrot.slane %v1055, 1
      %v1158 = vrot.slane %v1056, 1
      %v1159 = vsel %vm584, %v1157, %v1158
      %v1160 = vrot.slane %v1057, 1
      %v1161 = vsel %vm584, %v1158, %v1160
      %v1162 = vrot.slane %v1058, 1
      %v1163 = vrot.slane %v1059, 1
      %v1164 = vsel %vm584, %v1162, %v1163
      %v1165 = vrot.slane %v1060, 1
      %v1166 = vsel %vm584, %v1163, %v1165
      %v1167 = vrot.slane %v1061, 1
      %v1168 = vrot.slane %v1062, 1
      %v1169 = vsel %vm584, %v1167, %v1168
      %v1170 = vrot.slane %v1063, 1
      %v1171 = vsel %vm584, %v1168, %v1170
      %v1172 = vrot.slane %v1064, 1
      %v1173 = vrot.slane %v1065, 1
      %v1174 = vsel %vm584, %v1172, %v1173
      %v1175 = vrot.slane %v1066, 1
      %v1176 = vsel %vm584, %v1173, %v1175
      %v1177 = vrot.slane %v1067, 1
      %v1178 = vrot.slane %v1068, 1
      %v1179 = vsel %vm584, %v1177, %v1178
      %v1180 = vrot.slane %v1069, 1
      %v1181 = vsel %vm584, %v1178, %v1180
      %v1182 = vrot.slane %v1070, 1
      %v1183 = vrot.slane %v1071, 1
      %v1184 = vsel %vm584, %v1182, %v1183
      %v1185 = vrot.slane %v1072, 1
      %v1186 = vsel %vm584, %v1183, %v1185
      %v1187 = vrot.slane %v1073, 1
      %v1188 = vrot.slane %v1074, 1
      %v1189 = vsel %vm584, %v1187, %v1188
      %v1190 = vrot.slane %v1075, 1
      %v1191 = vsel %vm584, %v1188, %v1190
      %v1192 = vrot.slane %v1076, 1
      %v1193 = vrot.slane %v1077, 1
      %v1194 = vsel %vm584, %v1192, %v1193
      %v1195 = vrot.slane %v1078, 1
      %v1196 = vsel %vm584, %v1193, %v1195
      %v1197 = vrot.slane %v1079, 1
      %v1198 = vrot.slane %v1080, 1
      %v1199 = vsel %vm584, %v1197, %v1198
      %v1200 = vrot.slane %v1081, 1
      %v1201 = vsel %vm584, %v1198, %v1200
      %v1202 = vrot.slane %v1082, 1
      %v1203 = vrot.slane %v1083, 1
      %v1204 = vsel %vm584, %v1202, %v1203
      %v1205 = vrot.slane %v1084, 1
      %v1206 = vsel %vm584, %v1203, %v1205
      %v1207 = vrot.slane %v1085, 1
      %v1208 = vrot.slane %v1086, 1
      %v1209 = vsel %vm584, %v1207, %v1208
      %v1210 = vrot.slane %v1087, 1
      %v1211 = vsel %vm584, %v1208, %v1210
      %v1212 = vrot.slane %v1088, 1
      %v1213 = vrot.slane %v1089, 1
      %v1214 = vsel %vm584, %v1212, %v1213
      %v1215 = vrot.slane %v1090, 1
      %v1216 = vsel %vm584, %v1213, %v1215
      %v1217 = vrot.slane %v1091, 1
      %v1218 = vrot.slane %v1092, 1
      %v1219 = vsel %vm584, %v1217, %v1218
      %v1220 = vrot.slane %v1093, 1
      %v1221 = vsel %vm584, %v1218, %v1220
      %v1254 = vadd.f32 %v1010, %v1144
      %v1255 = vadd.f32 %v1011, %v1146
      %v1256 = vadd.f32 %v1012, %v1149
      %v1257 = vadd.f32 %v1013, %v1151
      %v1258 = vadd.f32 %v1014, %v1154
      %v1259 = vadd.f32 %v1015, %v1156
      %v1260 = vadd.f32 %v1016, %v1159
      %v1261 = vadd.f32 %v1017, %v1161
      %v1262 = vadd.f32 %v1018, %v1164
      %v1263 = vadd.f32 %v1019, %v1166
      %v1264 = vadd.f32 %v1020, %v1169
      %v1265 = vadd.f32 %v1021, %v1171
      %v1266 = vadd.f32 %v1022, %v1174
      %v1267 = vadd.f32 %v1023, %v1176
      %v1268 = vadd.f32 %v1024, %v1179
      %v1269 = vadd.f32 %v1025, %v1181
      %v1270 = vadd.f32 %v1026, %v1184
      %v1271 = vadd.f32 %v1027, %v1186
      %v1272 = vadd.f32 %v1028, %v1189
      %v1273 = vadd.f32 %v1029, %v1191
      %v1274 = vadd.f32 %v1030, %v1194
      %v1275 = vadd.f32 %v1031, %v1196
      %v1276 = vadd.f32 %v1032, %v1199
      %v1277 = vadd.f32 %v1033, %v1201
      %v1278 = vadd.f32 %v1034, %v1204
      %v1279 = vadd.f32 %v1035, %v1206
      %v1280 = vadd.f32 %v1036, %v1209
      %v1281 = vadd.f32 %v1037, %v1211
      %v1282 = vadd.f32 %v1038, %v1214
      %v1283 = vadd.f32 %v1039, %v1216
      %v1284 = vadd.f32 %v1040, %v1219
      %v1285 = vadd.f32 %v1041, %v1221
      %v1286 = vlaneseq
      %v1287 = vshrl.u32 %v1286, 7
      %v1288 = vsub.s32 5, %v1287
      %v1289 = vrot.slane %v414, %v1288
      %v1290 = vmul.f32 %v363, %v1289
      %v1291 = vmul.f32 %v364, %v1289
      %v1292 = vmul.f32 %v365, %v1289
      %v1293 = vmul.f32 %v366, %v1289
      %v1294 = vmul.f32 %v367, %v1289
      %v1295 = vmul.f32 %v368, %v1289
      %v1296 = vmul.f32 %v369, %v1289
      %v1297 = vmul.f32 %v370, %v1289
      %v1298 = vmul.f32 %v371, %v1289
      %v1299 = vmul.f32 %v372, %v1289
      %v1300 = vmul.f32 %v373, %v1289
      %v1301 = vmul.f32 %v374, %v1289
      %v1302 = vmul.f32 %v375, %v1289
      %v1303 = vmul.f32 %v376, %v1289
      %v1304 = vmul.f32 %v377, %v1289
      %v1305 = vmul.f32 %v378, %v1289
      %v1306 = vmul.f32 %v379, %v1289
      %v1307 = vmul.f32 %v380, %v1289
      %v1308 = vmul.f32 %v381, %v1289
      %v1309 = vmul.f32 %v382, %v1289
      %v1310 = vmul.f32 %v383, %v1289
      %v1311 = vmul.f32 %v384, %v1289
      %v1312 = vmul.f32 %v385, %v1289
      %v1313 = vmul.f32 %v386, %v1289
      %v1314 = vmul.f32 %v387, %v1289
      %v1315 = vmul.f32 %v388, %v1289
      %v1316 = vmul.f32 %v389, %v1289
      %v1317 = vmul.f32 %v390, %v1289
      %v1318 = vmul.f32 %v391, %v1289
      %v1319 = vmul.f32 %v392, %v1289
      %v1320 = vmul.f32 %v393, %v1289
      %v1321 = vmul.f32 %v394, %v1289
      %v1322 = vmul.f32 %v395, %v1289
      %v1323 = vmul.f32 %v396, %v1289
      %v1324 = vmul.f32 %v397, %v1289
      %v1325 = vmul.f32 %v398, %v1289
      %v1326 = vmul.f32 %v399, %v1289
      %v1327 = vmul.f32 %v400, %v1289
      %v1328 = vmul.f32 %v401, %v1289
      %v1329 = vmul.f32 %v402, %v1289
      %v1330 = vmul.f32 %v403, %v1289
      %v1331 = vmul.f32 %v404, %v1289
      %v1332 = vmul.f32 %v405, %v1289
      %v1333 = vmul.f32 %v406, %v1289
      %v1334 = vmul.f32 %v407, %v1289
      %v1335 = vmul.f32 %v408, %v1289
      %v1336 = vmul.f32 %v409, %v1289
      %v1337 = vmul.f32 %v410, %v1289
      %v1386 = vrot.slane %v1290, 2
      %v1387 = vrot.slane %v1291, 2
      %v1388 = vsel %vm829, %v1386, %v1387
      %v1389 = vrot.slane %v1292, 2
      %v1390 = vsel %vm829, %v1387, %v1389
      %v1391 = vrot.slane %v1293, 2
      %v1392 = vrot.slane %v1294, 2
      %v1393 = vsel %vm829, %v1391, %v1392
      %v1394 = vrot.slane %v1295, 2
      %v1395 = vsel %vm829, %v1392, %v1394
      %v1396 = vrot.slane %v1296, 2
      %v1397 = vrot.slane %v1297, 2
      %v1398 = vsel %vm829, %v1396, %v1397
      %v1399 = vrot.slane %v1298, 2
      %v1400 = vsel %vm829, %v1397, %v1399
      %v1401 = vrot.slane %v1299, 2
      %v1402 = vrot.slane %v1300, 2
      %v1403 = vsel %vm829, %v1401, %v1402
      %v1404 = vrot.slane %v1301, 2
      %v1405 = vsel %vm829, %v1402, %v1404
      %v1406 = vrot.slane %v1302, 2
      %v1407 = vrot.slane %v1303, 2
      %v1408 = vsel %vm829, %v1406, %v1407
      %v1409 = vrot.slane %v1304, 2
      %v1410 = vsel %vm829, %v1407, %v1409
      %v1411 = vrot.slane %v1305, 2
      %v1412 = vrot.slane %v1306, 2
      %v1413 = vsel %vm829, %v1411, %v1412
      %v1414 = vrot.slane %v1307, 2
      %v1415 = vsel %vm829, %v1412, %v1414
      %v1416 = vrot.slane %v1308, 2
      %v1417 = vrot.slane %v1309, 2
      %v1418 = vsel %vm829, %v1416, %v1417
      %v1419 = vrot.slane %v1310, 2
      %v1420 = vsel %vm829, %v1417, %v1419
      %v1421 = vrot.slane %v1311, 2
      %v1422 = vrot.slane %v1312, 2
      %v1423 = vsel %vm829, %v1421, %v1422
      %v1424 = vrot.slane %v1313, 2
      %v1425 = vsel %vm829, %v1422, %v1424
      %v1426 = vrot.slane %v1314, 2
      %v1427 = vrot.slane %v1315, 2
      %v1428 = vsel %vm829, %v1426, %v1427
      %v1429 = vrot.slane %v1316, 2
      %v1430 = vsel %vm829, %v1427, %v1429
      %v1431 = vrot.slane %v1317, 2
      %v1432 = vrot.slane %v1318, 2
      %v1433 = vsel %vm829, %v1431, %v1432
      %v1434 = vrot.slane %v1319, 2
      %v1435 = vsel %vm829, %v1432, %v1434
      %v1436 = vrot.slane %v1320, 2
      %v1437 = vrot.slane %v1321, 2
      %v1438 = vsel %vm829, %v1436, %v1437
      %v1439 = vrot.slane %v1322, 2
      %v1440 = vsel %vm829, %v1437, %v1439
      %v1441 = vrot.slane %v1323, 2
      %v1442 = vrot.slane %v1324, 2
      %v1443 = vsel %vm829, %v1441, %v1442
      %v1444 = vrot.slane %v1325, 2
      %v1445 = vsel %vm829, %v1442, %v1444
      %v1446 = vrot.slane %v1326, 2
      %v1447 = vrot.slane %v1327, 2
      %v1448 = vsel %vm829, %v1446, %v1447
      %v1449 = vrot.slane %v1328, 2
      %v1450 = vsel %vm829, %v1447, %v1449
      %v1451 = vrot.slane %v1329, 2
      %v1452 = vrot.slane %v1330, 2
      %v1453 = vsel %vm829, %v1451, %v1452
      %v1454 = vrot.slane %v1331, 2
      %v1455 = vsel %vm829, %v1452, %v1454
      %v1456 = vrot.slane %v1332, 2
      %v1457 = vrot.slane %v1333, 2
      %v1458 = vsel %vm829, %v1456, %v1457
      %v1459 = vrot.slane %v1334, 2
      %v1460 = vsel %vm829, %v1457, %v1459
      %v1461 = vrot.slane %v1335, 2
      %v1462 = vrot.slane %v1336, 2
      %v1463 = vsel %vm829, %v1461, %v1462
      %v1464 = vrot.slane %v1337, 2
      %v1465 = vsel %vm829, %v1462, %v1464
      %v1498 = vadd.f32 %v1254, %v1388
      %v1499 = vadd.f32 %v1255, %v1390
      %v1500 = vadd.f32 %v1256, %v1393
      %v1501 = vadd.f32 %v1257, %v1395
      %v1502 = vadd.f32 %v1258, %v1398
      %v1503 = vadd.f32 %v1259, %v1400
      %v1504 = vadd.f32 %v1260, %v1403
      %v1505 = vadd.f32 %v1261, %v1405
      %v1506 = vadd.f32 %v1262, %v1408
      %v1507 = vadd.f32 %v1263, %v1410
      %v1508 = vadd.f32 %v1264, %v1413
      %v1509 = vadd.f32 %v1265, %v1415
      %v1510 = vadd.f32 %v1266, %v1418
      %v1511 = vadd.f32 %v1267, %v1420
      %v1512 = vadd.f32 %v1268, %v1423
      %v1513 = vadd.f32 %v1269, %v1425
      %v1514 = vadd.f32 %v1270, %v1428
      %v1515 = vadd.f32 %v1271, %v1430
      %v1516 = vadd.f32 %v1272, %v1433
      %v1517 = vadd.f32 %v1273, %v1435
      %v1518 = vadd.f32 %v1274, %v1438
      %v1519 = vadd.f32 %v1275, %v1440
      %v1520 = vadd.f32 %v1276, %v1443
      %v1521 = vadd.f32 %v1277, %v1445
      %v1522 = vadd.f32 %v1278, %v1448
      %v1523 = vadd.f32 %v1279, %v1450
      %v1524 = vadd.f32 %v1280, %v1453
      %v1525 = vadd.f32 %v1281, %v1455
      %v1526 = vadd.f32 %v1282, %v1458
      %v1527 = vadd.f32 %v1283, %v1460
      %v1528 = vadd.f32 %v1284, %v1463
      %v1529 = vadd.f32 %v1285, %v1465
      %v1530 = vlaneseq
      %v1531 = vshrl.u32 %v1530, 7
      %v1532 = vsub.s32 6, %v1531
      %v1533 = vrot.slane %v414, %v1532
      %v1534 = vmul.f32 %v366, %v1533
      %v1535 = vmul.f32 %v367, %v1533
      %v1536 = vmul.f32 %v369, %v1533
      %v1537 = vmul.f32 %v370, %v1533
      %v1538 = vmul.f32 %v372, %v1533
      %v1539 = vmul.f32 %v373, %v1533
      %v1540 = vmul.f32 %v375, %v1533
      %v1541 = vmul.f32 %v376, %v1533
      %v1542 = vmul.f32 %v378, %v1533
      %v1543 = vmul.f32 %v379, %v1533
      %v1544 = vmul.f32 %v381, %v1533
      %v1545 = vmul.f32 %v382, %v1533
      %v1546 = vmul.f32 %v384, %v1533
      %v1547 = vmul.f32 %v385, %v1533
      %v1548 = vmul.f32 %v387, %v1533
      %v1549 = vmul.f32 %v388, %v1533
      %v1550 = vmul.f32 %v390, %v1533
      %v1551 = vmul.f32 %v391, %v1533
      %v1552 = vmul.f32 %v393, %v1533
      %v1553 = vmul.f32 %v394, %v1533
      %v1554 = vmul.f32 %v396, %v1533
      %v1555 = vmul.f32 %v397, %v1533
      %v1556 = vmul.f32 %v399, %v1533
      %v1557 = vmul.f32 %v400, %v1533
      %v1558 = vmul.f32 %v402, %v1533
      %v1559 = vmul.f32 %v403, %v1533
      %v1560 = vmul.f32 %v405, %v1533
      %v1561 = vmul.f32 %v406, %v1533
      %v1562 = vmul.f32 %v408, %v1533
      %v1563 = vmul.f32 %v409, %v1533
      %v1564 = vmul.f32 %v411, %v1533
      %v1565 = vmul.f32 %v412, %v1533
      %v1566 = vadd.f32 %v1498, %v1534
      %v1567 = vadd.f32 %v1499, %v1535
      %v1568 = vadd.f32 %v1500, %v1536
      %v1569 = vadd.f32 %v1501, %v1537
      %v1570 = vadd.f32 %v1502, %v1538
      %v1571 = vadd.f32 %v1503, %v1539
      %v1572 = vadd.f32 %v1504, %v1540
      %v1573 = vadd.f32 %v1505, %v1541
      %v1574 = vadd.f32 %v1506, %v1542
      %v1575 = vadd.f32 %v1507, %v1543
      %v1576 = vadd.f32 %v1508, %v1544
      %v1577 = vadd.f32 %v1509, %v1545
      %v1578 = vadd.f32 %v1510, %v1546
      %v1579 = vadd.f32 %v1511, %v1547
      %v1580 = vadd.f32 %v1512, %v1548
      %v1581 = vadd.f32 %v1513, %v1549
      %v1582 = vadd.f32 %v1514, %v1550
      %v1583 = vadd.f32 %v1515, %v1551
      %v1584 = vadd.f32 %v1516, %v1552
      %v1585 = vadd.f32 %v1517, %v1553
      %v1586 = vadd.f32 %v1518, %v1554
      %v1587 = vadd.f32 %v1519, %v1555
      %v1588 = vadd.f32 %v1520, %v1556
      %v1589 = vadd.f32 %v1521, %v1557
      %v1590 = vadd.f32 %v1522, %v1558
      %v1591 = vadd.f32 %v1523, %v1559
      %v1592 = vadd.f32 %v1524, %v1560
      %v1593 = vadd.f32 %v1525, %v1561
      %v1594 = vadd.f32 %v1526, %v1562
      %v1595 = vadd.f32 %v1527, %v1563
      %v1596 = vadd.f32 %v1528, %v1564
      %v1597 = vadd.f32 %v1529, %v1565
      %v1598 = vlaneseq
      %v1599 = vshrl.u32 %v1598, 7
      %v1600 = vsub.s32 7, %v1599
      %v1601 = vrot.slane %v414, %v1600
      %v1602 = vmul.f32 %v366, %v1601
      %v1603 = vmul.f32 %v367, %v1601
      %v1604 = vmul.f32 %v368, %v1601
      %v1605 = vmul.f32 %v369, %v1601
      %v1606 = vmul.f32 %v370, %v1601
      %v1607 = vmul.f32 %v371, %v1601
      %v1608 = vmul.f32 %v372, %v1601
      %v1609 = vmul.f32 %v373, %v1601
      %v1610 = vmul.f32 %v374, %v1601
      %v1611 = vmul.f32 %v375, %v1601
      %v1612 = vmul.f32 %v376, %v1601
      %v1613 = vmul.f32 %v377, %v1601
      %v1614 = vmul.f32 %v378, %v1601
      %v1615 = vmul.f32 %v379, %v1601
      %v1616 = vmul.f32 %v380, %v1601
      %v1617 = vmul.f32 %v381, %v1601
      %v1618 = vmul.f32 %v382, %v1601
      %v1619 = vmul.f32 %v383, %v1601
      %v1620 = vmul.f32 %v384, %v1601
      %v1621 = vmul.f32 %v385, %v1601
      %v1622 = vmul.f32 %v386, %v1601
      %v1623 = vmul.f32 %v387, %v1601
      %v1624 = vmul.f32 %v388, %v1601
      %v1625 = vmul.f32 %v389, %v1601
      %v1626 = vmul.f32 %v390, %v1601
      %v1627 = vmul.f32 %v391, %v1601
      %v1628 = vmul.f32 %v392, %v1601
      %v1629 = vmul.f32 %v393, %v1601
      %v1630 = vmul.f32 %v394, %v1601
      %v1631 = vmul.f32 %v395, %v1601
      %v1632 = vmul.f32 %v396, %v1601
      %v1633 = vmul.f32 %v397, %v1601
      %v1634 = vmul.f32 %v398, %v1601
      %v1635 = vmul.f32 %v399, %v1601
      %v1636 = vmul.f32 %v400, %v1601
      %v1637 = vmul.f32 %v401, %v1601
      %v1638 = vmul.f32 %v402, %v1601
      %v1639 = vmul.f32 %v403, %v1601
      %v1640 = vmul.f32 %v404, %v1601
      %v1641 = vmul.f32 %v405, %v1601
      %v1642 = vmul.f32 %v406, %v1601
      %v1643 = vmul.f32 %v407, %v1601
      %v1644 = vmul.f32 %v408, %v1601
      %v1645 = vmul.f32 %v409, %v1601
      %v1646 = vmul.f32 %v410, %v1601
      %v1647 = vmul.f32 %v411, %v1601
      %v1648 = vmul.f32 %v412, %v1601
      %v1649 = vmul.f32 %v413, %v1601
      %v1698 = vrot.slane %v1602, 1
      %v1699 = vrot.slane %v1603, 1
      %v1700 = vsel %vm584, %v1698, %v1699
      %v1701 = vrot.slane %v1604, 1
      %v1702 = vsel %vm584, %v1699, %v1701
      %v1703 = vrot.slane %v1605, 1
      %v1704 = vrot.slane %v1606, 1
      %v1705 = vsel %vm584, %v1703, %v1704
      %v1706 = vrot.slane %v1607, 1
      %v1707 = vsel %vm584, %v1704, %v1706
      %v1708 = vrot.slane %v1608, 1
      %v1709 = vrot.slane %v1609, 1
      %v1710 = vsel %vm584, %v1708, %v1709
      %v1711 = vrot.slane %v1610, 1
      %v1712 = vsel %vm584, %v1709, %v1711
      %v1713 = vrot.slane %v1611, 1
      %v1714 = vrot.slane %v1612, 1
      %v1715 = vsel %vm584, %v1713, %v1714
      %v1716 = vrot.slane %v1613, 1
      %v1717 = vsel %vm584, %v1714, %v1716
      %v1718 = vrot.slane %v1614, 1
      %v1719 = vrot.slane %v1615, 1
      %v1720 = vsel %vm584, %v1718, %v1719
      %v1721 = vrot.slane %v1616, 1
      %v1722 = vsel %vm584, %v1719, %v1721
      %v1723 = vrot.slane %v1617, 1
      %v1724 = vrot.slane %v1618, 1
      %v1725 = vsel %vm584, %v1723, %v1724
      %v1726 = vrot.slane %v1619, 1
      %v1727 = vsel %vm584, %v1724, %v1726
      %v1728 = vrot.slane %v1620, 1
      %v1729 = vrot.slane %v1621, 1
      %v1730 = vsel %vm584, %v1728, %v1729
      %v1731 = vrot.slane %v1622, 1
      %v1732 = vsel %vm584, %v1729, %v1731
      %v1733 = vrot.slane %v1623, 1
      %v1734 = vrot.slane %v1624, 1
      %v1735 = vsel %vm584, %v1733, %v1734
      %v1736 = vrot.slane %v1625, 1
      %v1737 = vsel %vm584, %v1734, %v1736
      %v1738 = vrot.slane %v1626, 1
      %v1739 = vrot.slane %v1627, 1
      %v1740 = vsel %vm584, %v1738, %v1739
      %v1741 = vrot.slane %v1628, 1
      %v1742 = vsel %vm584, %v1739, %v1741
      %v1743 = vrot.slane %v1629, 1
      %v1744 = vrot.slane %v1630, 1
      %v1745 = vsel %vm584, %v1743, %v1744
      %v1746 = vrot.slane %v1631, 1
      %v1747 = vsel %vm584, %v1744, %v1746
      %v1748 = vrot.slane %v1632, 1
      %v1749 = vrot.slane %v1633, 1
      %v1750 = vsel %vm584, %v1748, %v1749
      %v1751 = vrot.slane %v1634, 1
      %v1752 = vsel %vm584, %v1749, %v1751
      %v1753 = vrot.slane %v1635, 1
      %v1754 = vrot.slane %v1636, 1
      %v1755 = vsel %vm584, %v1753, %v1754
      %v1756 = vrot.slane %v1637, 1
      %v1757 = vsel %vm584, %v1754, %v1756
      %v1758 = vrot.slane %v1638, 1
      %v1759 = vrot.slane %v1639, 1
      %v1760 = vsel %vm584, %v1758, %v1759
      %v1761 = vrot.slane %v1640, 1
      %v1762 = vsel %vm584, %v1759, %v1761
      %v1763 = vrot.slane %v1641, 1
      %v1764 = vrot.slane %v1642, 1
      %v1765 = vsel %vm584, %v1763, %v1764
      %v1766 = vrot.slane %v1643, 1
      %v1767 = vsel %vm584, %v1764, %v1766
      %v1768 = vrot.slane %v1644, 1
      %v1769 = vrot.slane %v1645, 1
      %v1770 = vsel %vm584, %v1768, %v1769
      %v1771 = vrot.slane %v1646, 1
      %v1772 = vsel %vm584, %v1769, %v1771
      %v1773 = vrot.slane %v1647, 1
      %v1774 = vrot.slane %v1648, 1
      %v1775 = vsel %vm584, %v1773, %v1774
      %v1776 = vrot.slane %v1649, 1
      %v1777 = vsel %vm584, %v1774, %v1776
      %v1810 = vadd.f32 %v1566, %v1700
      %v1811 = vadd.f32 %v1567, %v1702
      %v1812 = vadd.f32 %v1568, %v1705
      %v1813 = vadd.f32 %v1569, %v1707
      %v1814 = vadd.f32 %v1570, %v1710
      %v1815 = vadd.f32 %v1571, %v1712
      %v1816 = vadd.f32 %v1572, %v1715
      %v1817 = vadd.f32 %v1573, %v1717
      %v1818 = vadd.f32 %v1574, %v1720
      %v1819 = vadd.f32 %v1575, %v1722
      %v1820 = vadd.f32 %v1576, %v1725
      %v1821 = vadd.f32 %v1577, %v1727
      %v1822 = vadd.f32 %v1578, %v1730
      %v1823 = vadd.f32 %v1579, %v1732
      %v1824 = vadd.f32 %v1580, %v1735
      %v1825 = vadd.f32 %v1581, %v1737
      %v1826 = vadd.f32 %v1582, %v1740
      %v1827 = vadd.f32 %v1583, %v1742
      %v1828 = vadd.f32 %v1584, %v1745
      %v1829 = vadd.f32 %v1585, %v1747
      %v1830 = vadd.f32 %v1586, %v1750
      %v1831 = vadd.f32 %v1587, %v1752
      %v1832 = vadd.f32 %v1588, %v1755
      %v1833 = vadd.f32 %v1589, %v1757
      %v1834 = vadd.f32 %v1590, %v1760
      %v1835 = vadd.f32 %v1591, %v1762
      %v1836 = vadd.f32 %v1592, %v1765
      %v1837 = vadd.f32 %v1593, %v1767
      %v1838 = vadd.f32 %v1594, %v1770
      %v1839 = vadd.f32 %v1595, %v1772
      %v1840 = vadd.f32 %v1596, %v1775
      %v1841 = vadd.f32 %v1597, %v1777
      %v1842 = vlaneseq
      %v1843 = vshrl.u32 %v1842, 7
      %v1844 = vsub.s32 0, %v1843
      %v1845 = vrot.slane %v415, %v1844
      %v1846 = vmul.f32 %v366, %v1845
      %v1847 = vmul.f32 %v367, %v1845
      %v1848 = vmul.f32 %v368, %v1845
      %v1849 = vmul.f32 %v369, %v1845
      %v1850 = vmul.f32 %v370, %v1845
      %v1851 = vmul.f32 %v371, %v1845
      %v1852 = vmul.f32 %v372, %v1845
      %v1853 = vmul.f32 %v373, %v1845
      %v1854 = vmul.f32 %v374, %v1845
      %v1855 = vmul.f32 %v375, %v1845
      %v1856 = vmul.f32 %v376, %v1845
      %v1857 = vmul.f32 %v377, %v1845
      %v1858 = vmul.f32 %v378, %v1845
      %v1859 = vmul.f32 %v379, %v1845
      %v1860 = vmul.f32 %v380, %v1845
      %v1861 = vmul.f32 %v381, %v1845
      %v1862 = vmul.f32 %v382, %v1845
      %v1863 = vmul.f32 %v383, %v1845
      %v1864 = vmul.f32 %v384, %v1845
      %v1865 = vmul.f32 %v385, %v1845
      %v1866 = vmul.f32 %v386, %v1845
      %v1867 = vmul.f32 %v387, %v1845
      %v1868 = vmul.f32 %v388, %v1845
      %v1869 = vmul.f32 %v389, %v1845
      %v1870 = vmul.f32 %v390, %v1845
      %v1871 = vmul.f32 %v391, %v1845
      %v1872 = vmul.f32 %v392, %v1845
      %v1873 = vmul.f32 %v393, %v1845
      %v1874 = vmul.f32 %v394, %v1845
      %v1875 = vmul.f32 %v395, %v1845
      %v1876 = vmul.f32 %v396, %v1845
      %v1877 = vmul.f32 %v397, %v1845
      %v1878 = vmul.f32 %v398, %v1845
      %v1879 = vmul.f32 %v399, %v1845
      %v1880 = vmul.f32 %v400, %v1845
      %v1881 = vmul.f32 %v401, %v1845
      %v1882 = vmul.f32 %v402, %v1845
      %v1883 = vmul.f32 %v403, %v1845
      %v1884 = vmul.f32 %v404, %v1845
      %v1885 = vmul.f32 %v405, %v1845
      %v1886 = vmul.f32 %v406, %v1845
      %v1887 = vmul.f32 %v407, %v1845
      %v1888 = vmul.f32 %v408, %v1845
      %v1889 = vmul.f32 %v409, %v1845
      %v1890 = vmul.f32 %v410, %v1845
      %v1891 = vmul.f32 %v411, %v1845
      %v1892 = vmul.f32 %v412, %v1845
      %v1893 = vmul.f32 %v413, %v1845
      %v1942 = vrot.slane %v1846, 2
      %v1943 = vrot.slane %v1847, 2
      %v1944 = vsel %vm829, %v1942, %v1943
      %v1945 = vrot.slane %v1848, 2
      %v1946 = vsel %vm829, %v1943, %v1945
      %v1947 = vrot.slane %v1849, 2
      %v1948 = vrot.slane %v1850, 2
      %v1949 = vsel %vm829, %v1947, %v1948
      %v1950 = vrot.slane %v1851, 2
      %v1951 = vsel %vm829, %v1948, %v1950
      %v1952 = vrot.slane %v1852, 2
      %v1953 = vrot.slane %v1853, 2
      %v1954 = vsel %vm829, %v1952, %v1953
      %v1955 = vrot.slane %v1854, 2
      %v1956 = vsel %vm829, %v1953, %v1955
      %v1957 = vrot.slane %v1855, 2
      %v1958 = vrot.slane %v1856, 2
      %v1959 = vsel %vm829, %v1957, %v1958
      %v1960 = vrot.slane %v1857, 2
      %v1961 = vsel %vm829, %v1958, %v1960
      %v1962 = vrot.slane %v1858, 2
      %v1963 = vrot.slane %v1859, 2
      %v1964 = vsel %vm829, %v1962, %v1963
      %v1965 = vrot.slane %v1860, 2
      %v1966 = vsel %vm829, %v1963, %v1965
      %v1967 = vrot.slane %v1861, 2
      %v1968 = vrot.slane %v1862, 2
      %v1969 = vsel %vm829, %v1967, %v1968
      %v1970 = vrot.slane %v1863, 2
      %v1971 = vsel %vm829, %v1968, %v1970
      %v1972 = vrot.slane %v1864, 2
      %v1973 = vrot.slane %v1865, 2
      %v1974 = vsel %vm829, %v1972, %v1973
      %v1975 = vrot.slane %v1866, 2
      %v1976 = vsel %vm829, %v1973, %v1975
      %v1977 = vrot.slane %v1867, 2
      %v1978 = vrot.slane %v1868, 2
      %v1979 = vsel %vm829, %v1977, %v1978
      %v1980 = vrot.slane %v1869, 2
      %v1981 = vsel %vm829, %v1978, %v1980
      %v1982 = vrot.slane %v1870, 2
      %v1983 = vrot.slane %v1871, 2
      %v1984 = vsel %vm829, %v1982, %v1983
      %v1985 = vrot.slane %v1872, 2
      %v1986 = vsel %vm829, %v1983, %v1985
      %v1987 = vrot.slane %v1873, 2
      %v1988 = vrot.slane %v1874, 2
      %v1989 = vsel %vm829, %v1987, %v1988
      %v1990 = vrot.slane %v1875, 2
      %v1991 = vsel %vm829, %v1988, %v1990
      %v1992 = vrot.slane %v1876, 2
      %v1993 = vrot.slane %v1877, 2
      %v1994 = vsel %vm829, %v1992, %v1993
      %v1995 = vrot.slane %v1878, 2
      %v1996 = vsel %vm829, %v1993, %v1995
      %v1997 = vrot.slane %v1879, 2
      %v1998 = vrot.slane %v1880, 2
      %v1999 = vsel %vm829, %v1997, %v1998
      %v2000 = vrot.slane %v1881, 2
      %v2001 = vsel %vm829, %v1998, %v2000
      %v2002 = vrot.slane %v1882, 2
      %v2003 = vrot.slane %v1883, 2
      %v2004 = vsel %vm829, %v2002, %v2003
      %v2005 = vrot.slane %v1884, 2
      %v2006 = vsel %vm829, %v2003, %v2005
      %v2007 = vrot.slane %v1885, 2
      %v2008 = vrot.slane %v1886, 2
      %v2009 = vsel %vm829, %v2007, %v2008
      %v2010 = vrot.slane %v1887, 2
      %v2011 = vsel %vm829, %v2008, %v2010
      %v2012 = vrot.slane %v1888, 2
      %v2013 = vrot.slane %v1889, 2
      %v2014 = vsel %vm829, %v2012, %v2013
      %v2015 = vrot.slane %v1890, 2
      %v2016 = vsel %vm829, %v2013, %v2015
      %v2017 = vrot.slane %v1891, 2
      %v2018 = vrot.slane %v1892, 2
      %v2019 = vsel %vm829, %v2017, %v2018
      %v2020 = vrot.slane %v1893, 2
      %v2021 = vsel %vm829, %v2018, %v2020
      %v2054 = vadd.f32 %v1810, %v1944
      %v2055 = vadd.f32 %v1811, %v1946
      %v2056 = vadd.f32 %v1812, %v1949
      %v2057 = vadd.f32 %v1813, %v1951
      %v2058 = vadd.f32 %v1814, %v1954
      %v2059 = vadd.f32 %v1815, %v1956
      %v2060 = vadd.f32 %v1816, %v1959
      %v2061 = vadd.f32 %v1817, %v1961
      %v2062 = vadd.f32 %v1818, %v1964
      %v2063 = vadd.f32 %v1819, %v1966
      %v2064 = vadd.f32 %v1820, %v1969
      %v2065 = vadd.f32 %v1821, %v1971
      %v2066 = vadd.f32 %v1822, %v1974
      %v2067 = vadd.f32 %v1823, %v1976
      %v2068 = vadd.f32 %v1824, %v1979
      %v2069 = vadd.f32 %v1825, %v1981
      %v2070 = vadd.f32 %v1826, %v1984
      %v2071 = vadd.f32 %v1827, %v1986
      %v2072 = vadd.f32 %v1828, %v1989
      %v2073 = vadd.f32 %v1829, %v1991
      %v2074 = vadd.f32 %v1830, %v1994
      %v2075 = vadd.f32 %v1831, %v1996
      %v2076 = vadd.f32 %v1832, %v1999
      %v2077 = vadd.f32 %v1833, %v2001
      %v2078 = vadd.f32 %v1834, %v2004
      %v2079 = vadd.f32 %v1835, %v2006
      %v2080 = vadd.f32 %v1836, %v2009
      %v2081 = vadd.f32 %v1837, %v2011
      %v2082 = vadd.f32 %v1838, %v2014
      %v2083 = vadd.f32 %v1839, %v2016
      %v2084 = vadd.f32 %v1840, %v2019
      %v2085 = vadd.f32 %v1841, %v2021
      %v2086 = vld [vmem:[%s2] sm:$0x1]
      %v2088 = vlaneseq
      %v2089 = vshrl.u32 %v2088, 7
      %v2090 = vsub.s32 0, %v2089
      %v2091 = vrot.slane %v2086, %v2090
      %v2093 = vmul.f32 %v2054, %v2091
      %v2094 = vmul.f32 %v2055, %v2091
      %v2095 = vmul.f32 %v2056, %v2091
      %v2096 = vmul.f32 %v2057, %v2091
      %v2097 = vmul.f32 %v2058, %v2091
      %v2098 = vmul.f32 %v2059, %v2091
      %v2099 = vmul.f32 %v2060, %v2091
      %v2100 = vmul.f32 %v2061, %v2091
      %v2101 = vmul.f32 %v2062, %v2091
      %v2102 = vmul.f32 %v2063, %v2091
      %v2103 = vmul.f32 %v2064, %v2091
      %v2104 = vmul.f32 %v2065, %v2091
      %v2105 = vmul.f32 %v2066, %v2091
      %v2106 = vmul.f32 %v2067, %v2091
      %v2107 = vmul.f32 %v2068, %v2091
      %v2108 = vmul.f32 %v2069, %v2091
      %v2109 = vmul.f32 %v2070, %v2091
      %v2110 = vmul.f32 %v2071, %v2091
      %v2111 = vmul.f32 %v2072, %v2091
      %v2112 = vmul.f32 %v2073, %v2091
      %v2113 = vmul.f32 %v2074, %v2091
      %v2114 = vmul.f32 %v2075, %v2091
      %v2115 = vmul.f32 %v2076, %v2091
      %v2116 = vmul.f32 %v2077, %v2091
      %v2117 = vmul.f32 %v2078, %v2091
      %v2118 = vmul.f32 %v2079, %v2091
      %v2119 = vmul.f32 %v2080, %v2091
      %v2120 = vmul.f32 %v2081, %v2091
      %v2121 = vmul.f32 %v2082, %v2091
      %v2122 = vmul.f32 %v2083, %v2091
      %v2123 = vmul.f32 %v2084, %v2091
      %v2124 = vmul.f32 %v2085, %v2091
      %v2125 = vld [vmem:[%s3] sm:$0x1]
      %v2127 = vlaneseq
      %v2128 = vshrl.u32 %v2127, 7
      %v2129 = vsub.s32 0, %v2128
      %v2130 = vrot.slane %v2125, %v2129
      %v2132 = vadd.f32 %v2093, %v2130
      %v2133 = vadd.f32 %v2094, %v2130
      %v2134 = vadd.f32 %v2095, %v2130
      %v2135 = vadd.f32 %v2096, %v2130
      %v2136 = vadd.f32 %v2097, %v2130
      %v2137 = vadd.f32 %v2098, %v2130
      %v2138 = vadd.f32 %v2099, %v2130
      %v2139 = vadd.f32 %v2100, %v2130
      %v2140 = vadd.f32 %v2101, %v2130
      %v2141 = vadd.f32 %v2102, %v2130
      %v2142 = vadd.f32 %v2103, %v2130
      %v2143 = vadd.f32 %v2104, %v2130
      %v2144 = vadd.f32 %v2105, %v2130
      %v2145 = vadd.f32 %v2106, %v2130
      %v2146 = vadd.f32 %v2107, %v2130
      %v2147 = vadd.f32 %v2108, %v2130
      %v2148 = vadd.f32 %v2109, %v2130
      %v2149 = vadd.f32 %v2110, %v2130
      %v2150 = vadd.f32 %v2111, %v2130
      %v2151 = vadd.f32 %v2112, %v2130
      %v2152 = vadd.f32 %v2113, %v2130
      %v2153 = vadd.f32 %v2114, %v2130
      %v2154 = vadd.f32 %v2115, %v2130
      %v2155 = vadd.f32 %v2116, %v2130
      %v2156 = vadd.f32 %v2117, %v2130
      %v2157 = vadd.f32 %v2118, %v2130
      %v2158 = vadd.f32 %v2119, %v2130
      %v2159 = vadd.f32 %v2120, %v2130
      %v2160 = vadd.f32 %v2121, %v2130
      %v2161 = vadd.f32 %v2122, %v2130
      %v2162 = vadd.f32 %v2123, %v2130
      %v2163 = vadd.f32 %v2124, %v2130
      %v2164 = vxor.u32 %v2132, 2147483648
      %v2165 = vxor.u32 %v2133, 2147483648
      %v2166 = vxor.u32 %v2134, 2147483648
      %v2167 = vxor.u32 %v2135, 2147483648
      %v2168 = vxor.u32 %v2136, 2147483648
      %v2169 = vxor.u32 %v2137, 2147483648
      %v2170 = vxor.u32 %v2138, 2147483648
      %v2171 = vxor.u32 %v2139, 2147483648
      %v2172 = vxor.u32 %v2140, 2147483648
      %v2173 = vxor.u32 %v2141, 2147483648
      %v2174 = vxor.u32 %v2142, 2147483648
      %v2175 = vxor.u32 %v2143, 2147483648
      %v2176 = vxor.u32 %v2144, 2147483648
      %v2177 = vxor.u32 %v2145, 2147483648
      %v2178 = vxor.u32 %v2146, 2147483648
      %v2179 = vxor.u32 %v2147, 2147483648
      %v2180 = vxor.u32 %v2148, 2147483648
      %v2181 = vxor.u32 %v2149, 2147483648
      %v2182 = vxor.u32 %v2150, 2147483648
      %v2183 = vxor.u32 %v2151, 2147483648
      %v2184 = vxor.u32 %v2152, 2147483648
      %v2185 = vxor.u32 %v2153, 2147483648
      %v2186 = vxor.u32 %v2154, 2147483648
      %v2187 = vxor.u32 %v2155, 2147483648
      %v2188 = vxor.u32 %v2156, 2147483648
      %v2189 = vxor.u32 %v2157, 2147483648
      %v2190 = vxor.u32 %v2158, 2147483648
      %v2191 = vxor.u32 %v2159, 2147483648
      %v2192 = vxor.u32 %v2160, 2147483648
      %v2193 = vxor.u32 %v2161, 2147483648
      %v2194 = vxor.u32 %v2162, 2147483648
      %v2195 = vxor.u32 %v2163, 2147483648
      %v2196 = vmul.f32 %v2164, 1.442695
      %v2197 = vpow.pop %v2196
      %v2198 = vmul.f32 %v2165, 1.442695
      %v2199 = vpow.pop %v2198
      %v2200 = vmul.f32 %v2166, 1.442695
      %v2201 = vpow.pop %v2200
      %v2202 = vmul.f32 %v2167, 1.442695
      %v2203 = vpow.pop %v2202
      %v2204 = vmul.f32 %v2168, 1.442695
      %v2205 = vpow.pop %v2204
      %v2206 = vmul.f32 %v2169, 1.442695
      %v2207 = vpow.pop %v2206
      %v2208 = vmul.f32 %v2170, 1.442695
      %v2209 = vpow.pop %v2208
      %v2210 = vmul.f32 %v2171, 1.442695
      %v2211 = vpow.pop %v2210
      %v2212 = vmul.f32 %v2172, 1.442695
      %v2213 = vpow.pop %v2212
      %v2214 = vmul.f32 %v2173, 1.442695
      %v2215 = vpow.pop %v2214
      %v2216 = vmul.f32 %v2174, 1.442695
      %v2217 = vpow.pop %v2216
      %v2218 = vmul.f32 %v2175, 1.442695
      %v2219 = vpow.pop %v2218
      %v2220 = vmul.f32 %v2176, 1.442695
      %v2221 = vpow.pop %v2220
      %v2222 = vmul.f32 %v2177, 1.442695
      %v2223 = vpow.pop %v2222
      %v2224 = vmul.f32 %v2178, 1.442695
      %v2225 = vpow.pop %v2224
      %v2226 = vmul.f32 %v2179, 1.442695
      %v2227 = vpow.pop %v2226
      %v2228 = vmul.f32 %v2180, 1.442695
      %v2229 = vpow.pop %v2228
      %v2230 = vmul.f32 %v2181, 1.442695
      %v2231 = vpow.pop %v2230
      %v2232 = vmul.f32 %v2182, 1.442695
      %v2233 = vpow.pop %v2232
      %v2234 = vmul.f32 %v2183, 1.442695
      %v2235 = vpow.pop %v2234
      %v2236 = vmul.f32 %v2184, 1.442695
      %v2237 = vpow.pop %v2236
      %v2238 = vmul.f32 %v2185, 1.442695
      %v2239 = vpow.pop %v2238
      %v2240 = vmul.f32 %v2186, 1.442695
      %v2241 = vpow.pop %v2240
      %v2242 = vmul.f32 %v2187, 1.442695
      %v2243 = vpow.pop %v2242
      %v2244 = vmul.f32 %v2188, 1.442695
      %v2245 = vpow.pop %v2244
      %v2246 = vmul.f32 %v2189, 1.442695
      %v2247 = vpow.pop %v2246
      %v2248 = vmul.f32 %v2190, 1.442695
      %v2249 = vpow.pop %v2248
      %v2250 = vmul.f32 %v2191, 1.442695
      %v2251 = vpow.pop %v2250
      %v2252 = vmul.f32 %v2192, 1.442695
      %v2253 = vpow.pop %v2252
      %v2254 = vmul.f32 %v2193, 1.442695
      %v2255 = vpow.pop %v2254
      %v2256 = vmul.f32 %v2194, 1.442695
      %v2257 = vpow.pop %v2256
      %v2258 = vmul.f32 %v2195, 1.442695
      %v2259 = vpow.pop %v2258
      %v2260 = vadd.f32 %v2197, 1.0
      %v2261 = vadd.f32 %v2199, 1.0
      %v2262 = vadd.f32 %v2201, 1.0
      %v2263 = vadd.f32 %v2203, 1.0
      %v2264 = vadd.f32 %v2205, 1.0
      %v2265 = vadd.f32 %v2207, 1.0
      %v2266 = vadd.f32 %v2209, 1.0
      %v2267 = vadd.f32 %v2211, 1.0
      %v2268 = vadd.f32 %v2213, 1.0
      %v2269 = vadd.f32 %v2215, 1.0
      %v2270 = vadd.f32 %v2217, 1.0
      %v2271 = vadd.f32 %v2219, 1.0
      %v2272 = vadd.f32 %v2221, 1.0
      %v2273 = vadd.f32 %v2223, 1.0
      %v2274 = vadd.f32 %v2225, 1.0
      %v2275 = vadd.f32 %v2227, 1.0
      %v2276 = vadd.f32 %v2229, 1.0
      %v2277 = vadd.f32 %v2231, 1.0
      %v2278 = vadd.f32 %v2233, 1.0
      %v2279 = vadd.f32 %v2235, 1.0
      %v2280 = vadd.f32 %v2237, 1.0
      %v2281 = vadd.f32 %v2239, 1.0
      %v2282 = vadd.f32 %v2241, 1.0
      %v2283 = vadd.f32 %v2243, 1.0
      %v2284 = vadd.f32 %v2245, 1.0
      %v2285 = vadd.f32 %v2247, 1.0
      %v2286 = vadd.f32 %v2249, 1.0
      %v2287 = vadd.f32 %v2251, 1.0
      %v2288 = vadd.f32 %v2253, 1.0
      %v2289 = vadd.f32 %v2255, 1.0
      %v2290 = vadd.f32 %v2257, 1.0
      %v2291 = vadd.f32 %v2259, 1.0
      %v2292 = vrcp.pop %v2260
      %v2293 = vmul.f32 1.0, %v2292
      %v2294 = vrcp.pop %v2261
      %v2295 = vmul.f32 1.0, %v2294
      %v2296 = vrcp.pop %v2262
      %v2297 = vmul.f32 1.0, %v2296
      %v2298 = vrcp.pop %v2263
      %v2299 = vmul.f32 1.0, %v2298
      %v2300 = vrcp.pop %v2264
      %v2301 = vmul.f32 1.0, %v2300
      %v2302 = vrcp.pop %v2265
      %v2303 = vmul.f32 1.0, %v2302
      %v2304 = vrcp.pop %v2266
      %v2305 = vmul.f32 1.0, %v2304
      %v2306 = vrcp.pop %v2267
      %v2307 = vmul.f32 1.0, %v2306
      %v2308 = vrcp.pop %v2268
      %v2309 = vmul.f32 1.0, %v2308
      %v2310 = vrcp.pop %v2269
      %v2311 = vmul.f32 1.0, %v2310
      %v2312 = vrcp.pop %v2270
      %v2313 = vmul.f32 1.0, %v2312
      %v2314 = vrcp.pop %v2271
      %v2315 = vmul.f32 1.0, %v2314
      %v2316 = vrcp.pop %v2272
      %v2317 = vmul.f32 1.0, %v2316
      %v2318 = vrcp.pop %v2273
      %v2319 = vmul.f32 1.0, %v2318
      %v2320 = vrcp.pop %v2274
      %v2321 = vmul.f32 1.0, %v2320
      %v2322 = vrcp.pop %v2275
      %v2323 = vmul.f32 1.0, %v2322
      %v2324 = vrcp.pop %v2276
      %v2325 = vmul.f32 1.0, %v2324
      %v2326 = vrcp.pop %v2277
      %v2327 = vmul.f32 1.0, %v2326
      %v2328 = vrcp.pop %v2278
      %v2329 = vmul.f32 1.0, %v2328
      %v2330 = vrcp.pop %v2279
      %v2331 = vmul.f32 1.0, %v2330
      %v2332 = vrcp.pop %v2280
      %v2333 = vmul.f32 1.0, %v2332
      %v2334 = vrcp.pop %v2281
      %v2335 = vmul.f32 1.0, %v2334
      %v2336 = vrcp.pop %v2282
      %v2337 = vmul.f32 1.0, %v2336
      %v2338 = vrcp.pop %v2283
      %v2339 = vmul.f32 1.0, %v2338
      %v2340 = vrcp.pop %v2284
      %v2341 = vmul.f32 1.0, %v2340
      %v2342 = vrcp.pop %v2285
      %v2343 = vmul.f32 1.0, %v2342
      %v2344 = vrcp.pop %v2286
      %v2345 = vmul.f32 1.0, %v2344
      %v2346 = vrcp.pop %v2287
      %v2347 = vmul.f32 1.0, %v2346
      %v2348 = vrcp.pop %v2288
      %v2349 = vmul.f32 1.0, %v2348
      %v2350 = vrcp.pop %v2289
      %v2351 = vmul.f32 1.0, %v2350
      %v2352 = vrcp.pop %v2290
      %v2353 = vmul.f32 1.0, %v2352
      %v2354 = vrcp.pop %v2291
      %v2355 = vmul.f32 1.0, %v2354
      %v2356 = vmul.f32 %v2132, %v2293
      %v2357 = vmul.f32 %v2133, %v2295
      %v2358 = vmul.f32 %v2134, %v2297
      %v2359 = vmul.f32 %v2135, %v2299
      %v2360 = vmul.f32 %v2136, %v2301
      %v2361 = vmul.f32 %v2137, %v2303
      %v2362 = vmul.f32 %v2138, %v2305
      %v2363 = vmul.f32 %v2139, %v2307
      %v2364 = vmul.f32 %v2140, %v2309
      %v2365 = vmul.f32 %v2141, %v2311
      %v2366 = vmul.f32 %v2142, %v2313
      %v2367 = vmul.f32 %v2143, %v2315
      %v2368 = vmul.f32 %v2144, %v2317
      %v2369 = vmul.f32 %v2145, %v2319
      %v2370 = vmul.f32 %v2146, %v2321
      %v2371 = vmul.f32 %v2147, %v2323
      %v2372 = vmul.f32 %v2148, %v2325
      %v2373 = vmul.f32 %v2149, %v2327
      %v2374 = vmul.f32 %v2150, %v2329
      %v2375 = vmul.f32 %v2151, %v2331
      %v2376 = vmul.f32 %v2152, %v2333
      %v2377 = vmul.f32 %v2153, %v2335
      %v2378 = vmul.f32 %v2154, %v2337
      %v2379 = vmul.f32 %v2155, %v2339
      %v2380 = vmul.f32 %v2156, %v2341
      %v2381 = vmul.f32 %v2157, %v2343
      %v2382 = vmul.f32 %v2158, %v2345
      %v2383 = vmul.f32 %v2159, %v2347
      %v2384 = vmul.f32 %v2160, %v2349
      %v2385 = vmul.f32 %v2161, %v2351
      %v2386 = vmul.f32 %v2162, %v2353
      %v2387 = vmul.f32 %v2163, %v2355
      %vm2388 = vcmask 261120
      %v2389 = vsel %vm2388, %v2356, 0.0
      %v2390 = vsel %vm2388, %v2357, 0.0
      %v2391 = vadd.f32 %v2389, %v2390
      %v2392 = vsel %vm2388, %v2358, 0.0
      %v2393 = vadd.f32 %v2391, %v2392
      %v2394 = vsel %vm2388, %v2359, 0.0
      %v2395 = vadd.f32 %v2393, %v2394
      %v2396 = vsel %vm2388, %v2360, 0.0
      %v2397 = vadd.f32 %v2395, %v2396
      %v2398 = vsel %vm2388, %v2361, 0.0
      %v2399 = vadd.f32 %v2397, %v2398
      %v2400 = vsel %vm2388, %v2362, 0.0
      %v2401 = vadd.f32 %v2399, %v2400
      %v2402 = vsel %vm2388, %v2363, 0.0
      %v2403 = vadd.f32 %v2401, %v2402
      %v2404 = vsel %vm2388, %v2364, 0.0
      %v2405 = vadd.f32 %v2403, %v2404
      %v2406 = vsel %vm2388, %v2365, 0.0
      %v2407 = vadd.f32 %v2405, %v2406
      %v2408 = vsel %vm2388, %v2366, 0.0
      %v2409 = vadd.f32 %v2407, %v2408
      %v2410 = vsel %vm2388, %v2367, 0.0
      %v2411 = vadd.f32 %v2409, %v2410
      %v2412 = vsel %vm2388, %v2368, 0.0
      %v2413 = vadd.f32 %v2411, %v2412
      %v2414 = vsel %vm2388, %v2369, 0.0
      %v2415 = vadd.f32 %v2413, %v2414
      %v2416 = vsel %vm2388, %v2370, 0.0
      %v2417 = vadd.f32 %v2415, %v2416
      %v2418 = vsel %vm2388, %v2371, 0.0
      %v2419 = vadd.f32 %v2417, %v2418
      %v2420 = vsel %vm2388, %v2372, 0.0
      %v2421 = vadd.f32 %v2419, %v2420
      %v2422 = vsel %vm2388, %v2373, 0.0
      %v2423 = vadd.f32 %v2421, %v2422
      %v2424 = vsel %vm2388, %v2374, 0.0
      %v2425 = vadd.f32 %v2423, %v2424
      %v2426 = vsel %vm2388, %v2375, 0.0
      %v2427 = vadd.f32 %v2425, %v2426
      %v2428 = vsel %vm2388, %v2376, 0.0
      %v2429 = vadd.f32 %v2427, %v2428
      %v2430 = vsel %vm2388, %v2377, 0.0
      %v2431 = vadd.f32 %v2429, %v2430
      %v2432 = vsel %vm2388, %v2378, 0.0
      %v2433 = vadd.f32 %v2431, %v2432
      %v2434 = vsel %vm2388, %v2379, 0.0
      %v2435 = vadd.f32 %v2433, %v2434
      %v2436 = vsel %vm2388, %v2380, 0.0
      %v2437 = vadd.f32 %v2435, %v2436
      %v2438 = vsel %vm2388, %v2381, 0.0
      %v2439 = vadd.f32 %v2437, %v2438
      %v2440 = vsel %vm2388, %v2382, 0.0
      %v2441 = vadd.f32 %v2439, %v2440
      %v2442 = vsel %vm2388, %v2383, 0.0
      %v2443 = vadd.f32 %v2441, %v2442
      %v2444 = vsel %vm2388, %v2384, 0.0
      %v2445 = vadd.f32 %v2443, %v2444
      %v2446 = vsel %vm2388, %v2385, 0.0
      %v2447 = vadd.f32 %v2445, %v2446
      %v2448 = vsel %vm2388, %v2386, 0.0
      %v2449 = vadd.f32 %v2447, %v2448
      %v2450 = vsel %vm2388, %v2387, 0.0
      %v2451 = vadd.f32 %v2449, %v2450
      %v2452 = vrot.slane %v2451, 4
      %v2453 = vadd.f32 %v2451, %v2452
      %v2454 = vrot.slane %v2453, 2
      %v2455 = vadd.f32 %v2453, %v2454
      %v2456 = vrot.slane %v2455, 1
      %v2457 = vadd.f32 %v2455, %v2456
      %v2458 = vrcp.pop 256.0
      %v2459 = vmul.f32 %v2457, %v2458
      %v2460 = vld [vmem:[%s4] sm:$0xff]
      %v2461 = vld [vmem:[%s4 + $0x8] sm:$0xff]
      %v2462 = vld [vmem:[%s4 + $0x10] sm:$0xff]
      %v2463 = vld [vmem:[%s4 + $0x18] sm:$0xff]
      %v2464 = vld [vmem:[%s5] sm:$0x1]
      %v2466 = vsel %vm2388, %v2459, 0
      %2468 = vmatprep.subr.mxu0 0.0
      %2469 = vmatpush1.msra.mxu0 %v2460
      %2470 = vmatprep.subr.mxu0 0.0
      %2471 = vmatpush1.msra.mxu0 %v2461
      %2472 = vmatprep.subr.mxu0 0.0
      %2473 = vmatpush1.msra.mxu0 %v2462
      %2474 = vmatprep.subr.mxu0 0.0
      %2475 = vmatpush1.msra.mxu0 %v2463
      %2476 = vmatprep.subr.mxu0 0.0
      %2477 = vmatpush1.msra.mxu0 0.0
      %2478 = vmatprep.subr.mxu0 0.0
      %2479 = vmatpush1.msra.mxu0 0.0
      %2480 = vmatprep.subr.mxu0 0.0
      %2481 = vmatpush1.msra.mxu0 0.0
      %2482 = vmatprep.subr.mxu0 0.0
      %2483 = vmatpush1.msra.mxu0 0.0
      %2484 = vmatprep.subr.mxu0 0.0
      %2485 = vmatpush1.msra.mxu0 0.0
      %2486 = vmatprep.subr.mxu0 0.0
      %2487 = vmatpush1.msra.mxu0 0.0
      %2488 = vmatprep.subr.mxu0 0.0
      %2489 = vmatpush1.msra.mxu0 0.0
      %2490 = vmatprep.subr.mxu0 0.0
      %2491 = vmatpush1.msra.mxu0 0.0
      %2492 = vmatprep.subr.mxu0 0.0
      %2493 = vmatpush1.msra.mxu0 0.0
      %2494 = vmatprep.subr.mxu0 0.0
      %2495 = vmatpush1.msra.mxu0 0.0
      %2496 = vmatprep.subr.mxu0 0.0
      %2497 = vmatpush1.msra.mxu0 0.0
      %2498 = vmatprep.subr.mxu0 0.0
      %2499 = vmatpush1.msra.mxu0 0.0
      %2500 = vmatprep.subr.mxu0 0.0
      %2501 = vmatpush1.msra.mxu0 0.0
      %2502 = vmatprep.subr.mxu0 0.0
      %2503 = vmatpush1.msra.mxu0 0.0
      %2504 = vmatprep.subr.mxu0 0.0
      %2505 = vmatpush1.msra.mxu0 0.0
      %2506 = vmatprep.subr.mxu0 0.0
      %2507 = vmatpush1.msra.mxu0 0.0
      %2508 = vmatprep.subr.mxu0 0.0
      %2509 = vmatpush1.msra.mxu0 0.0
      %2510 = vmatprep.subr.mxu0 0.0
      %2511 = vmatpush1.msra.mxu0 0.0
      %2512 = vmatprep.subr.mxu0 0.0
      %2513 = vmatpush1.msra.mxu0 0.0
      %2514 = vmatprep.subr.mxu0 0.0
      %2515 = vmatpush1.msra.mxu0 0.0
      %2516 = vmatprep.subr.mxu0 0.0
      %2517 = vmatpush1.msra.mxu0 0.0
      %2518 = vmatprep.subr.mxu0 0.0
      %2519 = vmatpush1.msra.mxu0 0.0
      %2520 = vmatprep.subr.mxu0 0.0
      %2521 = vmatpush1.msra.mxu0 0.0
      %2522 = vmatprep.subr.mxu0 0.0
      %2523 = vmatpush1.msra.mxu0 0.0
      %2524 = vmatprep.subr.mxu0 0.0
      %2525 = vmatpush1.msra.mxu0 0.0
      %2526 = vmatprep.subr.mxu0 0.0
      %2527 = vmatpush1.msra.mxu0 0.0
      %2528 = vmatprep.subr.mxu0 0.0
      %2529 = vmatpush1.msra.mxu0 0.0
      %2530 = vmatprep.subr.mxu0 0.0
      %2531 = vmatpush1.msra.mxu0 0.0
      %2532 = vmatprep.mubr.f32.mxu0 0.0
      %2533 = vmatmul.mubr.f32.gmra.mrb[0].mxu0 %v2466
      %v2534 = vpop.f32.mrb[0].mxu0
      %v2535 = vadd.f32 %v2464, %v2534
      %v2536 = vpop.f32.mrb[0].mxu0
      %2537 = vdwg.mxu0
      %v2538 = vxor.u32 %v2535, 2147483648
      %v2539 = vmul.f32 %v2538, 1.442695
      %v2540 = vpow.pop %v2539
      %v2541 = vadd.f32 %v2540, 1.0
      %v2542 = vrcp.pop %v2541
      %v2543 = vmul.f32 1.0, %v2542
      %v2544 = vmul.f32 %v2535, %v2543
      %v2545 = vld [vmem:[%s6] sm:$0xff]
      %v2546 = vld [vmem:[%s7] sm:$0x1]
      %vm2547 = vcmask 64512
      %v2549 = vsel %vm2547, %v2544, 0
      %2551 = vmatprep.subr.mxu0 0.0
      %2552 = vmatpush1.msra.mxu0 %v2545
      %2553 = vmatprep.subr.mxu0 0.0
      %2554 = vmatpush1.msra.mxu0 0.0
      %2555 = vmatprep.subr.mxu0 0.0
      %2556 = vmatpush1.msra.mxu0 0.0
      %2557 = vmatprep.subr.mxu0 0.0
      %2558 = vmatpush1.msra.mxu0 0.0
      %2559 = vmatprep.subr.mxu0 0.0
      %2560 = vmatpush1.msra.mxu0 0.0
      %2561 = vmatprep.subr.mxu0 0.0
      %2562 = vmatpush1.msra.mxu0 0.0
      %2563 = vmatprep.subr.mxu0 0.0
      %2564 = vmatpush1.msra.mxu0 0.0
      %2565 = vmatprep.subr.mxu0 0.0
      %2566 = vmatpush1.msra.mxu0 0.0
      %2567 = vmatprep.subr.mxu0 0.0
      %2568 = vmatpush1.msra.mxu0 0.0
      %2569 = vmatprep.subr.mxu0 0.0
      %2570 = vmatpush1.msra.mxu0 0.0
      %2571 = vmatprep.subr.mxu0 0.0
      %2572 = vmatpush1.msra.mxu0 0.0
      %2573 = vmatprep.subr.mxu0 0.0
      %2574 = vmatpush1.msra.mxu0 0.0
      %2575 = vmatprep.subr.mxu0 0.0
      %2576 = vmatpush1.msra.mxu0 0.0
      %2577 = vmatprep.subr.mxu0 0.0
      %2578 = vmatpush1.msra.mxu0 0.0
      %2579 = vmatprep.subr.mxu0 0.0
      %2580 = vmatpush1.msra.mxu0 0.0
      %2581 = vmatprep.subr.mxu0 0.0
      %2582 = vmatpush1.msra.mxu0 0.0
      %2583 = vmatprep.subr.mxu0 0.0
      %2584 = vmatpush1.msra.mxu0 0.0
      %2585 = vmatprep.subr.mxu0 0.0
      %2586 = vmatpush1.msra.mxu0 0.0
      %2587 = vmatprep.subr.mxu0 0.0
      %2588 = vmatpush1.msra.mxu0 0.0
      %2589 = vmatprep.subr.mxu0 0.0
      %2590 = vmatpush1.msra.mxu0 0.0
      %2591 = vmatprep.subr.mxu0 0.0
      %2592 = vmatpush1.msra.mxu0 0.0
      %2593 = vmatprep.subr.mxu0 0.0
      %2594 = vmatpush1.msra.mxu0 0.0
      %2595 = vmatprep.subr.mxu0 0.0
      %2596 = vmatpush1.msra.mxu0 0.0
      %2597 = vmatprep.subr.mxu0 0.0
      %2598 = vmatpush1.msra.mxu0 0.0
      %2599 = vmatprep.subr.mxu0 0.0
      %2600 = vmatpush1.msra.mxu0 0.0
      %2601 = vmatprep.subr.mxu0 0.0
      %2602 = vmatpush1.msra.mxu0 0.0
      %2603 = vmatprep.subr.mxu0 0.0
      %2604 = vmatpush1.msra.mxu0 0.0
      %2605 = vmatprep.subr.mxu0 0.0
      %2606 = vmatpush1.msra.mxu0 0.0
      %2607 = vmatprep.subr.mxu0 0.0
      %2608 = vmatpush1.msra.mxu0 0.0
      %2609 = vmatprep.subr.mxu0 0.0
      %2610 = vmatpush1.msra.mxu0 0.0
      %2611 = vmatprep.subr.mxu0 0.0
      %2612 = vmatpush1.msra.mxu0 0.0
      %2613 = vmatprep.subr.mxu0 0.0
      %2614 = vmatpush1.msra.mxu0 0.0
      %2615 = vmatprep.mubr.f32.mxu0 0.0
      %2616 = vmatmul.mubr.f32.gmra.mrb[0].mxu0 %v2549
      %v2617 = vpop.f32.mrb[0].mxu0
      %v2618 = vadd.f32 %v2546, %v2617
      %v2619 = vpop.f32.mrb[0].mxu0
      %2620 = vdwg.mxu0
      %v2621 = vxor.u32 %v2618, 2147483648
      %v2622 = vmul.f32 %v2621, 1.442695
      %v2623 = vpow.pop %v2622
      %v2624 = vadd.f32 %v2623, 1.0
      %v2625 = vrcp.pop %v2624
      %v2626 = vmul.f32 1.0, %v2625
      %v2627 = vlaneseq
      %v2628 = vshrl.u32 %v2627, 7
      %v2629 = vsub.s32 0, %v2628
      %v2630 = vrot.slane %v2626, %v2629
      %v2631 = vmul.f32 %v2356, %v2630
      %v2632 = vmul.f32 %v2357, %v2630
      %v2633 = vmul.f32 %v2358, %v2630
      %v2634 = vmul.f32 %v2359, %v2630
      %v2635 = vmul.f32 %v2360, %v2630
      %v2636 = vmul.f32 %v2361, %v2630
      %v2637 = vmul.f32 %v2362, %v2630
      %v2638 = vmul.f32 %v2363, %v2630
      %v2639 = vmul.f32 %v2364, %v2630
      %v2640 = vmul.f32 %v2365, %v2630
      %v2641 = vmul.f32 %v2366, %v2630
      %v2642 = vmul.f32 %v2367, %v2630
      %v2643 = vmul.f32 %v2368, %v2630
      %v2644 = vmul.f32 %v2369, %v2630
      %v2645 = vmul.f32 %v2370, %v2630
      %v2646 = vmul.f32 %v2371, %v2630
      %v2647 = vmul.f32 %v2372, %v2630
      %v2648 = vmul.f32 %v2373, %v2630
      %v2649 = vmul.f32 %v2374, %v2630
      %v2650 = vmul.f32 %v2375, %v2630
      %v2651 = vmul.f32 %v2376, %v2630
      %v2652 = vmul.f32 %v2377, %v2630
      %v2653 = vmul.f32 %v2378, %v2630
      %v2654 = vmul.f32 %v2379, %v2630
      %v2655 = vmul.f32 %v2380, %v2630
      %v2656 = vmul.f32 %v2381, %v2630
      %v2657 = vmul.f32 %v2382, %v2630
      %v2658 = vmul.f32 %v2383, %v2630
      %v2659 = vmul.f32 %v2384, %v2630
      %v2660 = vmul.f32 %v2385, %v2630
      %v2661 = vmul.f32 %v2386, %v2630
      %v2662 = vmul.f32 %v2387, %v2630
      %v2663 = vld [vmem:[%s8] sm:$0xff]
      %v2664 = vld [vmem:[%s8 + $0x8] sm:$0xff]
      %v2665 = vld [vmem:[%s8 + $0x10] sm:$0xff]
      %v2666 = vld [vmem:[%s8 + $0x18] sm:$0xff]
      %v2667 = vld [vmem:[%s9] sm:$0x1]
      %v2669 = vlaneseq
      %v2670 = vshrl.u32 %v2669, 7
      %v2671 = vsub.s32 0, %v2670
      %v2672 = vrot.slane %v2667, %v2671
      %v2675 = vsel %vm2388, %v2631, 0
      %v2678 = vsel %vm2388, %v2632, 0
      %v2681 = vsel %vm2388, %v2633, 0
      %v2684 = vsel %vm2388, %v2634, 0
      %v2687 = vsel %vm2388, %v2635, 0
      %v2690 = vsel %vm2388, %v2636, 0
      %v2693 = vsel %vm2388, %v2637, 0
      %v2696 = vsel %vm2388, %v2638, 0
      %v2699 = vsel %vm2388, %v2639, 0
      %v2702 = vsel %vm2388, %v2640, 0
      %v2705 = vsel %vm2388, %v2641, 0
      %v2708 = vsel %vm2388, %v2642, 0
      %v2711 = vsel %vm2388, %v2643, 0
      %v2714 = vsel %vm2388, %v2644, 0
      %v2717 = vsel %vm2388, %v2645, 0
      %v2720 = vsel %vm2388, %v2646, 0
      %v2723 = vsel %vm2388, %v2647, 0
      %v2726 = vsel %vm2388, %v2648, 0
      %v2729 = vsel %vm2388, %v2649, 0
      %v2732 = vsel %vm2388, %v2650, 0
      %v2735 = vsel %vm2388, %v2651, 0
      %v2738 = vsel %vm2388, %v2652, 0
      %v2741 = vsel %vm2388, %v2653, 0
      %v2744 = vsel %vm2388, %v2654, 0
      %v2747 = vsel %vm2388, %v2655, 0
      %v2750 = vsel %vm2388, %v2656, 0
      %v2753 = vsel %vm2388, %v2657, 0
      %v2756 = vsel %vm2388, %v2658, 0
      %v2759 = vsel %vm2388, %v2659, 0
      %v2762 = vsel %vm2388, %v2660, 0
      %v2765 = vsel %vm2388, %v2661, 0
      %v2768 = vsel %vm2388, %v2662, 0
      %2770 = vmatprep.subr.mxu0 0.0
      %2771 = vmatpush1.msra.mxu0 %v2663
      %2772 = vmatprep.subr.mxu0 0.0
      %2773 = vmatpush1.msra.mxu0 %v2664
      %2774 = vmatprep.subr.mxu0 0.0
      %2775 = vmatpush1.msra.mxu0 %v2665
      %2776 = vmatprep.subr.mxu0 0.0
      %2777 = vmatpush1.msra.mxu0 %v2666
      %2778 = vmatprep.subr.mxu0 0.0
      %2779 = vmatpush1.msra.mxu0 0.0
      %2780 = vmatprep.subr.mxu0 0.0
      %2781 = vmatpush1.msra.mxu0 0.0
      %2782 = vmatprep.subr.mxu0 0.0
      %2783 = vmatpush1.msra.mxu0 0.0
      %2784 = vmatprep.subr.mxu0 0.0
      %2785 = vmatpush1.msra.mxu0 0.0
      %2786 = vmatprep.subr.mxu0 0.0
      %2787 = vmatpush1.msra.mxu0 0.0
      %2788 = vmatprep.subr.mxu0 0.0
      %2789 = vmatpush1.msra.mxu0 0.0
      %2790 = vmatprep.subr.mxu0 0.0
      %2791 = vmatpush1.msra.mxu0 0.0
      %2792 = vmatprep.subr.mxu0 0.0
      %2793 = vmatpush1.msra.mxu0 0.0
      %2794 = vmatprep.subr.mxu0 0.0
      %2795 = vmatpush1.msra.mxu0 0.0
      %2796 = vmatprep.subr.mxu0 0.0
      %2797 = vmatpush1.msra.mxu0 0.0
      %2798 = vmatprep.subr.mxu0 0.0
      %2799 = vmatpush1.msra.mxu0 0.0
      %2800 = vmatprep.subr.mxu0 0.0
      %2801 = vmatpush1.msra.mxu0 0.0
      %2802 = vmatprep.subr.mxu0 0.0
      %2803 = vmatpush1.msra.mxu0 0.0
      %2804 = vmatprep.subr.mxu0 0.0
      %2805 = vmatpush1.msra.mxu0 0.0
      %2806 = vmatprep.subr.mxu0 0.0
      %2807 = vmatpush1.msra.mxu0 0.0
      %2808 = vmatprep.subr.mxu0 0.0
      %2809 = vmatpush1.msra.mxu0 0.0
      %2810 = vmatprep.subr.mxu0 0.0
      %2811 = vmatpush1.msra.mxu0 0.0
      %2812 = vmatprep.subr.mxu0 0.0
      %2813 = vmatpush1.msra.mxu0 0.0
      %2814 = vmatprep.subr.mxu0 0.0
      %2815 = vmatpush1.msra.mxu0 0.0
      %2816 = vmatprep.subr.mxu0 0.0
      %2817 = vmatpush1.msra.mxu0 0.0
      %2818 = vmatprep.subr.mxu0 0.0
      %2819 = vmatpush1.msra.mxu0 0.0
      %2820 = vmatprep.subr.mxu0 0.0
      %2821 = vmatpush1.msra.mxu0 0.0
      %2822 = vmatprep.subr.mxu0 0.0
      %2823 = vmatpush1.msra.mxu0 0.0
      %2824 = vmatprep.subr.mxu0 0.0
      %2825 = vmatpush1.msra.mxu0 0.0
      %2826 = vmatprep.subr.mxu0 0.0
      %2827 = vmatpush1.msra.mxu0 0.0
      %2828 = vmatprep.subr.mxu0 0.0
      %2829 = vmatpush1.msra.mxu0 0.0
      %2830 = vmatprep.subr.mxu0 0.0
      %2831 = vmatpush1.msra.mxu0 0.0
      %2832 = vmatprep.subr.mxu0 0.0
      %2833 = vmatpush1.msra.mxu0 0.0
      %2834 = vmatprep.mubr.f32.mxu0 0.0
      %2835 = vmatmul.mubr.f32.gmra.mrb[0].mxu0 %v2675
      %v2836 = vpop.f32.mrb[0].mxu0
      %v2837 = vadd.f32 %v2672, %v2836
      %v2838 = vpop.f32.mrb[0].mxu0
      %2839 = vmatprep.mubr.f32.mxu0 0.0
      %2840 = vmatmul.mubr.f32.gmra.mrb[0].mxu0 %v2678
      %v2841 = vpop.f32.mrb[0].mxu0
      %v2842 = vadd.f32 %v2672, %v2841
      %v2843 = vpop.f32.mrb[0].mxu0
      %2844 = vmatprep.mubr.f32.mxu0 0.0
      %2845 = vmatmul.mubr.f32.gmra.mrb[0].mxu0 %v2681
      %v2846 = vpop.f32.mrb[0].mxu0
      %v2847 = vadd.f32 %v2672, %v2846
      %v2848 = vpop.f32.mrb[0].mxu0
      %2849 = vmatprep.mubr.f32.mxu0 0.0
      %2850 = vmatmul.mubr.f32.gmra.mrb[0].mxu0 %v2684
      %v2851 = vpop.f32.mrb[0].mxu0
      %v2852 = vadd.f32 %v2672, %v2851
      %v2853 = vpop.f32.mrb[0].mxu0
      %2854 = vmatprep.mubr.f32.mxu0 0.0
      %2855 = vmatmul.mubr.f32.gmra.mrb[0].mxu0 %v2687
      %v2856 = vpop.f32.mrb[0].mxu0
      %v2857 = vadd.f32 %v2672, %v2856
      %v2858 = vpop.f32.mrb[0].mxu0
      %2859 = vmatprep.mubr.f32.mxu0 0.0
      %2860 = vmatmul.mubr.f32.gmra.mrb[0].mxu0 %v2690
      %v2861 = vpop.f32.mrb[0].mxu0
      %v2862 = vadd.f32 %v2672, %v2861
      %v2863 = vpop.f32.mrb[0].mxu0
      %2864 = vmatprep.mubr.f32.mxu0 0.0
      %2865 = vmatmul.mubr.f32.gmra.mrb[0].mxu0 %v2693
      %v2866 = vpop.f32.mrb[0].mxu0
      %v2867 = vadd.f32 %v2672, %v2866
      %v2868 = vpop.f32.mrb[0].mxu0
      %2869 = vmatprep.mubr.f32.mxu0 0.0
      %2870 = vmatmul.mubr.f32.gmra.mrb[0].mxu0 %v2696
      %v2871 = vpop.f32.mrb[0].mxu0
      %v2872 = vadd.f32 %v2672, %v2871
      %v2873 = vpop.f32.mrb[0].mxu0
      %2874 = vmatprep.mubr.f32.mxu0 0.0
      %2875 = vmatmul.mubr.f32.gmra.mrb[0].mxu0 %v2699
      %v2876 = vpop.f32.mrb[0].mxu0
      %v2877 = vadd.f32 %v2672, %v2876
      %v2878 = vpop.f32.mrb[0].mxu0
      %2879 = vmatprep.mubr.f32.mxu0 0.0
      %2880 = vmatmul.mubr.f32.gmra.mrb[0].mxu0 %v2702
      %v2881 = vpop.f32.mrb[0].mxu0
      %v2882 = vadd.f32 %v2672, %v2881
      %v2883 = vpop.f32.mrb[0].mxu0
      %2884 = vmatprep.mubr.f32.mxu0 0.0
      %2885 = vmatmul.mubr.f32.gmra.mrb[0].mxu0 %v2705
      %v2886 = vpop.f32.mrb[0].mxu0
      %v2887 = vadd.f32 %v2672, %v2886
      %v2888 = vpop.f32.mrb[0].mxu0
      %2889 = vmatprep.mubr.f32.mxu0 0.0
      %2890 = vmatmul.mubr.f32.gmra.mrb[0].mxu0 %v2708
      %v2891 = vpop.f32.mrb[0].mxu0
      %v2892 = vadd.f32 %v2672, %v2891
      %v2893 = vpop.f32.mrb[0].mxu0
      %2894 = vmatprep.mubr.f32.mxu0 0.0
      %2895 = vmatmul.mubr.f32.gmra.mrb[0].mxu0 %v2711
      %v2896 = vpop.f32.mrb[0].mxu0
      %v2897 = vadd.f32 %v2672, %v2896
      %v2898 = vpop.f32.mrb[0].mxu0
      %2899 = vmatprep.mubr.f32.mxu0 0.0
      %2900 = vmatmul.mubr.f32.gmra.mrb[0].mxu0 %v2714
      %v2901 = vpop.f32.mrb[0].mxu0
      %v2902 = vadd.f32 %v2672, %v2901
      %v2903 = vpop.f32.mrb[0].mxu0
      %2904 = vmatprep.mubr.f32.mxu0 0.0
      %2905 = vmatmul.mubr.f32.gmra.mrb[0].mxu0 %v2717
      %v2906 = vpop.f32.mrb[0].mxu0
      %v2907 = vadd.f32 %v2672, %v2906
      %v2908 = vpop.f32.mrb[0].mxu0
      %2909 = vmatprep.mubr.f32.mxu0 0.0
      %2910 = vmatmul.mubr.f32.gmra.mrb[0].mxu0 %v2720
      %v2911 = vpop.f32.mrb[0].mxu0
      %v2912 = vadd.f32 %v2672, %v2911
      %v2913 = vpop.f32.mrb[0].mxu0
      %2914 = vmatprep.mubr.f32.mxu0 0.0
      %2915 = vmatmul.mubr.f32.gmra.mrb[0].mxu0 %v2723
      %v2916 = vpop.f32.mrb[0].mxu0
      %v2917 = vadd.f32 %v2672, %v2916
      %v2918 = vpop.f32.mrb[0].mxu0
      %2919 = vmatprep.mubr.f32.mxu0 0.0
      %2920 = vmatmul.mubr.f32.gmra.mrb[0].mxu0 %v2726
      %v2921 = vpop.f32.mrb[0].mxu0
      %v2922 = vadd.f32 %v2672, %v2921
      %v2923 = vpop.f32.mrb[0].mxu0
      %2924 = vmatprep.mubr.f32.mxu0 0.0
      %2925 = vmatmul.mubr.f32.gmra.mrb[0].mxu0 %v2729
      %v2926 = vpop.f32.mrb[0].mxu0
      %v2927 = vadd.f32 %v2672, %v2926
      %v2928 = vpop.f32.mrb[0].mxu0
      %2929 = vmatprep.mubr.f32.mxu0 0.0
      %2930 = vmatmul.mubr.f32.gmra.mrb[0].mxu0 %v2732
      %v2931 = vpop.f32.mrb[0].mxu0
      %v2932 = vadd.f32 %v2672, %v2931
      %v2933 = vpop.f32.mrb[0].mxu0
      %2934 = vmatprep.mubr.f32.mxu0 0.0
      %2935 = vmatmul.mubr.f32.gmra.mrb[0].mxu0 %v2735
      %v2936 = vpop.f32.mrb[0].mxu0
      %v2937 = vadd.f32 %v2672, %v2936
      %v2938 = vpop.f32.mrb[0].mxu0
      %2939 = vmatprep.mubr.f32.mxu0 0.0
      %2940 = vmatmul.mubr.f32.gmra.mrb[0].mxu0 %v2738
      %v2941 = vpop.f32.mrb[0].mxu0
      %v2942 = vadd.f32 %v2672, %v2941
      %v2943 = vpop.f32.mrb[0].mxu0
      %2944 = vmatprep.mubr.f32.mxu0 0.0
      %2945 = vmatmul.mubr.f32.gmra.mrb[0].mxu0 %v2741
      %v2946 = vpop.f32.mrb[0].mxu0
      %v2947 = vadd.f32 %v2672, %v2946
      %v2948 = vpop.f32.mrb[0].mxu0
      %2949 = vmatprep.mubr.f32.mxu0 0.0
      %2950 = vmatmul.mubr.f32.gmra.mrb[0].mxu0 %v2744
      %v2951 = vpop.f32.mrb[0].mxu0
      %v2952 = vadd.f32 %v2672, %v2951
      %v2953 = vpop.f32.mrb[0].mxu0
      %2954 = vmatprep.mubr.f32.mxu0 0.0
      %2955 = vmatmul.mubr.f32.gmra.mrb[0].mxu0 %v2747
      %v2956 = vpop.f32.mrb[0].mxu0
      %v2957 = vadd.f32 %v2672, %v2956
      %v2958 = vpop.f32.mrb[0].mxu0
      %2959 = vmatprep.mubr.f32.mxu0 0.0
      %2960 = vmatmul.mubr.f32.gmra.mrb[0].mxu0 %v2750
      %v2961 = vpop.f32.mrb[0].mxu0
      %v2962 = vadd.f32 %v2672, %v2961
      %v2963 = vpop.f32.mrb[0].mxu0
      %2964 = vmatprep.mubr.f32.mxu0 0.0
      %2965 = vmatmul.mubr.f32.gmra.mrb[0].mxu0 %v2753
      %v2966 = vpop.f32.mrb[0].mxu0
      %v2967 = vadd.f32 %v2672, %v2966
      %v2968 = vpop.f32.mrb[0].mxu0
      %2969 = vmatprep.mubr.f32.mxu0 0.0
      %2970 = vmatmul.mubr.f32.gmra.mrb[0].mxu0 %v2756
      %v2971 = vpop.f32.mrb[0].mxu0
      %v2972 = vadd.f32 %v2672, %v2971
      %v2973 = vpop.f32.mrb[0].mxu0
      %2974 = vmatprep.mubr.f32.mxu0 0.0
      %2975 = vmatmul.mubr.f32.gmra.mrb[0].mxu0 %v2759
      %v2976 = vpop.f32.mrb[0].mxu0
      %v2977 = vadd.f32 %v2672, %v2976
      %v2978 = vpop.f32.mrb[0].mxu0
      %2979 = vmatprep.mubr.f32.mxu0 0.0
      %2980 = vmatmul.mubr.f32.gmra.mrb[0].mxu0 %v2762
      %v2981 = vpop.f32.mrb[0].mxu0
      %v2982 = vadd.f32 %v2672, %v2981
      %v2983 = vpop.f32.mrb[0].mxu0
      %2984 = vmatprep.mubr.f32.mxu0 0.0
      %2985 = vmatmul.mubr.f32.gmra.mrb[0].mxu0 %v2765
      %v2986 = vpop.f32.mrb[0].mxu0
      %v2987 = vadd.f32 %v2672, %v2986
      %v2988 = vpop.f32.mrb[0].mxu0
      %2989 = vmatprep.mubr.f32.mxu0 0.0
      %2990 = vmatmul.mubr.f32.gmra.mrb[0].mxu0 %v2768
      %v2991 = vpop.f32.mrb[0].mxu0
      %v2992 = vadd.f32 %v2672, %v2991
      %v2993 = vpop.f32.mrb[0].mxu0
      %2994 = vdwg.mxu0
      %vm2995 = vcmask 130048
      %2996 = vst.msk [vmem:[%s359] sm:$0xff] %vm2995, %v2837
      %2997 = vst.msk [vmem:[%s359 + $0x8] sm:$0xff] %vm2995, %v2842
      %2998 = vst.msk [vmem:[%s359 + $0x10] sm:$0xff] %vm2995, %v2847
      %2999 = vst.msk [vmem:[%s359 + $0x18] sm:$0xff] %vm2995, %v2852
      %3000 = vst.msk [vmem:[%s359 + $0x20] sm:$0xff] %vm2995, %v2857
      %3001 = vst.msk [vmem:[%s359 + $0x28] sm:$0xff] %vm2995, %v2862
      %3002 = vst.msk [vmem:[%s359 + $0x30] sm:$0xff] %vm2995, %v2867
      %3003 = vst.msk [vmem:[%s359 + $0x38] sm:$0xff] %vm2995, %v2872
      %3004 = vst.msk [vmem:[%s359 + $0x40] sm:$0xff] %vm2995, %v2877
      %3005 = vst.msk [vmem:[%s359 + $0x48] sm:$0xff] %vm2995, %v2882
      %3006 = vst.msk [vmem:[%s359 + $0x50] sm:$0xff] %vm2995, %v2887
      %3007 = vst.msk [vmem:[%s359 + $0x58] sm:$0xff] %vm2995, %v2892
      %3008 = vst.msk [vmem:[%s359 + $0x60] sm:$0xff] %vm2995, %v2897
      %3009 = vst.msk [vmem:[%s359 + $0x68] sm:$0xff] %vm2995, %v2902
      %3010 = vst.msk [vmem:[%s359 + $0x70] sm:$0xff] %vm2995, %v2907
      %3011 = vst.msk [vmem:[%s359 + $0x78] sm:$0xff] %vm2995, %v2912
      %3012 = vst.msk [vmem:[%s359 + $0x80] sm:$0xff] %vm2995, %v2917
      %3013 = vst.msk [vmem:[%s359 + $0x88] sm:$0xff] %vm2995, %v2922
      %3014 = vst.msk [vmem:[%s359 + $0x90] sm:$0xff] %vm2995, %v2927
      %3015 = vst.msk [vmem:[%s359 + $0x98] sm:$0xff] %vm2995, %v2932
      %3016 = vst.msk [vmem:[%s359 + $0xa0] sm:$0xff] %vm2995, %v2937
      %3017 = vst.msk [vmem:[%s359 + $0xa8] sm:$0xff] %vm2995, %v2942
      %3018 = vst.msk [vmem:[%s359 + $0xb0] sm:$0xff] %vm2995, %v2947
      %3019 = vst.msk [vmem:[%s359 + $0xb8] sm:$0xff] %vm2995, %v2952
      %3020 = vst.msk [vmem:[%s359 + $0xc0] sm:$0xff] %vm2995, %v2957
      %3021 = vst.msk [vmem:[%s359 + $0xc8] sm:$0xff] %vm2995, %v2962
      %3022 = vst.msk [vmem:[%s359 + $0xd0] sm:$0xff] %vm2995, %v2967
      %3023 = vst.msk [vmem:[%s359 + $0xd8] sm:$0xff] %vm2995, %v2972
      %3024 = vst.msk [vmem:[%s359 + $0xe0] sm:$0xff] %vm2995, %v2977
      %3025 = vst.msk [vmem:[%s359 + $0xe8] sm:$0xff] %vm2995, %v2982
      %3026 = vst.msk [vmem:[%s359 + $0xf0] sm:$0xff] %vm2995, %v2987
      %3027 = vst.msk [vmem:[%s359 + $0xf8] sm:$0xff] %vm2995, %v2992
      %p3028 = scmp.lt.s32.totalorder %s21, 1
      %s3029 = scalar_select %p3028, %s21, 1
      %s3030 = smul.addr %s3029, 32
      %s3031 = smul.addr %s3030, 8
      %s3032 = scalar_lea.vmem %s10, %s3031
      // Predicated region
      $region61: #{model_forward.6} parent=59 // pred_check
        %p3033 = pneg %p254
      $region62: #{model_forward.6} parent=59 // pred_check_branch
        %3035 = sbr.rel (%p3033) target = $region64
      $region63: #{model_forward.6} parent=59 // pred_region
        _
      $region64: #{model_forward.6} parent=59 // pred_fallthru
        _
    $region60: #{model_forward.6} parent=5 // pred_fallthru
      _
    %p3036 = scmp.le.s32.totalorder 2, %s16
    // Predicated region
    $region65: #{model_forward.6} parent=5 // pred_check
      %p3037 = pneg %p3036
    $region66: #{model_forward.6} parent=5 // pred_check_branch
      %3039 = sbr.rel (%p3037) target = $region68
    $region67: #{model_forward.6} parent=5 // pred_region
      %s3040 = ssub.s32 %s16, 2
      // Predicated region
      $region69: #{model_forward.6} parent=67 // pred_check
        %p3041 = pneg %p260
      $region70: #{model_forward.6} parent=67 // pred_check_branch
        %3043 = sbr.rel (%p3041) target = $region72
      $region71: #{model_forward.6} parent=67 // pred_region
        %p3044 = scmp.lt.s32.totalorder %s22, 1
        %s3045 = scalar_select %p3044, %s22, 1
        %s3046 = smul.addr %s3045, 32
        %s3047 = smul.addr %s3046, 8
        %s3048 = scalar_lea.vmem %s10, %s3047
      $region72: #{model_forward.6} parent=67 // pred_fallthru
        _
    $region68: #{model_forward.6} parent=5 // pred_fallthru
      _
  $region6: #{model_forward.6} parent=0 // loop_footer
    %s20 = sadd.s32 1, %s16
  $region7: #{model_forward.6} parent=0 // loop_footer_branch
    %15 = sbr.rel target = $region3
  $region8: #{model_forward.6} parent=0 // loop_exit
    _

// kernel: model_forward.8
$region0: #{model_forward.8}
  #allocation0 [shape = 'u32[]', space=smem, size = 0x4, offset = 0x4, fixed_abs, tag = 'smem constant byte address 0x4 - core index']
  #allocation1 [shape = 'u32[144,128]{1,0:T(1,128)}', space=vmem, size = 0x12000, scoped, tag = 'internal scratch']
  %s0 = inlined_call_operand.vmem [shape: f32[2,9,9,96], index: 0, kind: input, shape index: {}]
  %s1 = inlined_call_operand.vmem [shape: f32[2,9,9,96], index: 1, kind: input, shape index: {}]
  %s2 = inlined_call_operand.vmem [shape: f32[2,9,9,96], index: 2, kind: input, shape index: {}]
  %s3 = inlined_call_operand.vmem [shape: f32[2,9,9,96], index: 3, kind: input, shape index: {}]
  %s4 = inlined_call_operand.vmem [shape: f32[9,96], index: 4, kind: input, shape index: {}]
  %s5 = inlined_call_operand.vmem [shape: f32[1,96], index: 5, kind: input, shape index: {}]
  %s6 = inlined_call_operand.vmem [shape: f32[1,96], index: 6, kind: input, shape index: {}]
  %s7 = inlined_call_operand.vmem [shape: f32[96,4], index: 7, kind: input, shape index: {}]
  %s8 = inlined_call_operand.vmem [shape: f32[1,4], index: 8, kind: input, shape index: {}]
  %s9 = inlined_call_operand.vmem [shape: f32[4,96], index: 9, kind: input, shape index: {}]
  %s10 = inlined_call_operand.vmem [shape: f32[1,96], index: 10, kind: input, shape index: {}]
  %s11 = inlined_call_operand.vmem [shape: f32[96,24], index: 11, kind: input, shape index: {}]
  %s12 = inlined_call_operand.vmem [shape: f32[1,24], index: 12, kind: input, shape index: {}]
  %s13 = inlined_call_operand.vmem [shape: f32[2,64,24], index: 13, kind: output, shape index: {}]
  %s14 = sld [smem:[#allocation0]]
  $region85: #{model_forward.8} parent=0
    _
  %s16 = ssub.s32 1, %s14
  %s17 = scalar_select 0, %s16, %s14
  loop: start=0, step=1, limit=4
  $region2: #{model_forward.8} parent=0 // loop_pre_header
    _
  $region3: #{model_forward.8} parent=0 // loop_header
    %s19 = sphi 0, %s23
    %p20 = scmp.ge.s32.totalorder %s19, 4
    %s29 = sphi 0, %s31
    %s32 = sphi 0, %s29
    %s33 = sphi 0, %s32
    %s49 = sphi 0, %s33
    %s55 = sphi 0, %s57
    %s58 = sphi 0, %s55
    %s59 = sphi 0, %s58
    %s75 = sphi 0, %s59
    %s81 = sphi 0, %s83
    %s84 = sphi 0, %s81
    %s85 = sphi 0, %s84
    %s101 = sphi 0, %s85
    %s107 = sphi 0, %s109
    %s110 = sphi 0, %s107
    %s111 = sphi 0, %s110
    %s127 = sphi 0, %s111
    %s131 = sphi 0, %s131
    %s133 = sphi 0, %s131
    %s134 = sphi 0, %s133
    %s148 = sphi 0, %s134
    %s152 = sphi 0, %s152
    %s154 = sphi 0, %s152
    %s155 = sphi 0, %s154
    %s169 = sphi 0, %s155
    %s173 = sphi 0, %s173
    %s175 = sphi 0, %s173
    %s176 = sphi 0, %s175
    %s190 = sphi 0, %s176
    %s194 = sphi 0, %s194
    %s196 = sphi 0, %s194
    %s197 = sphi 0, %s196
    %s211 = sphi 0, %s197
    %s215 = sphi 0, %s215
    %s217 = sphi 0, %s215
    %s218 = sphi 0, %s217
    %s232 = sphi 0, %s218
    %s236 = sphi 0, %s236
    %s238 = sphi 0, %s236
    %s239 = sphi 0, %s238
    %s253 = sphi 0, %s239
    %s257 = sphi 0, %s257
    %s259 = sphi 0, %s257
    %s260 = sphi 0, %s259
    %s274 = sphi 0, %s260
    %s278 = sphi 0, %s278
    %s280 = sphi 0, %s278
    %s281 = sphi 0, %s280
    %s295 = sphi 0, %s281
    %s299 = sphi 0, %s299
    %s301 = sphi 0, %s299
    %s302 = sphi 0, %s301
    %s316 = sphi 0, %s302
    %s322 = sphi 0, %s324
    %s325 = sphi 0, %s322
    %s326 = sphi 0, %s325
    %s342 = sphi 0, %s326
  $region4: #{model_forward.8} parent=0 // loop_header_branch
    %22 = sbr.rel (%p20) target = $region8
  $region5: #{model_forward.8} parent=0 // loop_body
    %s24 = ssub.s32 %s19, 1
    %s25 = ssub.s32 %s19, 2
    %s26 = sadd.s32 %s19, 1
    %s27 = ssub.s32 %s19, %s26
    %p28 = scmp.eq.s32.totalorder %s27, 0
    %s30 = sadd.s32 %s29, 1
    %s31 = scalar_select %p28, %s29, %s30
    %p34 = pneg %p28
    %p35 = scmp.eq.s32.totalorder %s19, 1
    %p36 = por %p34, %p35
    %p37 = scmp.ne.s32.totalorder %s29, %s32
    %p38 = scmp.eq.s32.totalorder %s19, 0
    %p39 = por %p37, %p38
    %p40 = scmp.ne.s32.totalorder %s29, %s32
    %p41 = scmp.eq.s32.totalorder %s24, 1
    %p42 = por %p40, %p41
    %p43 = scmp.ne.s32.totalorder %s32, %s33
    %p44 = scmp.eq.s32.totalorder %s24, 0
    %p45 = por %p43, %p44
    %p46 = scmp.ne.s32.totalorder %s32, %s33
    %p47 = scmp.eq.s32.totalorder %s25, 1
    %p48 = por %p46, %p47
    %p50 = scmp.ne.s32.totalorder %s33, %s49
    %p51 = scmp.eq.s32.totalorder %s25, 0
    %p52 = por %p50, %p51
    %s53 = ssub.s32 %s19, %s26
    %p54 = scmp.eq.s32.totalorder %s53, 0
    %s56 = sadd.s32 %s55, 1
    %s57 = scalar_select %p54, %s55, %s56
    %p60 = pneg %p54
    %p61 = scmp.eq.s32.totalorder %s19, 1
    %p62 = por %p60, %p61
    %p63 = scmp.ne.s32.totalorder %s55, %s58
    %p64 = scmp.eq.s32.totalorder %s19, 0
    %p65 = por %p63, %p64
    %p66 = scmp.ne.s32.totalorder %s55, %s58
    %p67 = scmp.eq.s32.totalorder %s24, 1
    %p68 = por %p66, %p67
    %p69 = scmp.ne.s32.totalorder %s58, %s59
    %p70 = scmp.eq.s32.totalorder %s24, 0
    %p71 = por %p69, %p70
    %p72 = scmp.ne.s32.totalorder %s58, %s59
    %p73 = scmp.eq.s32.totalorder %s25, 1
    %p74 = por %p72, %p73
    %p76 = scmp.ne.s32.totalorder %s59, %s75
    %p77 = scmp.eq.s32.totalorder %s25, 0
    %p78 = por %p76, %p77
    %s79 = ssub.s32 %s19, %s26
    %p80 = scmp.eq.s32.totalorder %s79, 0
    %s82 = sadd.s32 %s81, 1
    %s83 = scalar_select %p80, %s81, %s82
    %p86 = pneg %p80
    %p87 = scmp.eq.s32.totalorder %s19, 1
    %p88 = por %p86, %p87
    %p89 = scmp.ne.s32.totalorder %s81, %s84
    %p90 = scmp.eq.s32.totalorder %s19, 0
    %p91 = por %p89, %p90
    %p92 = scmp.ne.s32.totalorder %s81, %s84
    %p93 = scmp.eq.s32.totalorder %s24, 1
    %p94 = por %p92, %p93
    %p95 = scmp.ne.s32.totalorder %s84, %s85
    %p96 = scmp.eq.s32.totalorder %s24, 0
    %p97 = por %p95, %p96
    %p98 = scmp.ne.s32.totalorder %s84, %s85
    %p99 = scmp.eq.s32.totalorder %s25, 1
    %p100 = por %p98, %p99
    %p102 = scmp.ne.s32.totalorder %s85, %s101
    %p103 = scmp.eq.s32.totalorder %s25, 0
    %p104 = por %p102, %p103
    %s105 = ssub.s32 %s19, %s26
    %p106 = scmp.eq.s32.totalorder %s105, 0
    %s108 = sadd.s32 %s107, 1
    %s109 = scalar_select %p106, %s107, %s108
    %p112 = pneg %p106
    %p113 = scmp.eq.s32.totalorder %s19, 1
    %p114 = por %p112, %p113
    %p115 = scmp.ne.s32.totalorder %s107, %s110
    %p116 = scmp.eq.s32.totalorder %s19, 0
    %p117 = por %p115, %p116
    %p118 = scmp.ne.s32.totalorder %s107, %s110
    %p119 = scmp.eq.s32.totalorder %s24, 1
    %p120 = por %p118, %p119
    %p121 = scmp.ne.s32.totalorder %s110, %s111
    %p122 = scmp.eq.s32.totalorder %s24, 0
    %p123 = por %p121, %p122
    %p124 = scmp.ne.s32.totalorder %s110, %s111
    %p125 = scmp.eq.s32.totalorder %s25, 1
    %p126 = por %p124, %p125
    %p128 = scmp.ne.s32.totalorder %s111, %s127
    %p129 = scmp.eq.s32.totalorder %s25, 0
    %p130 = por %p128, %p129
    %s132 = sadd.s32 %s131, 1
    %p135 = scmp.eq.s32.totalorder %s19, 1
    %p136 = scmp.ne.s32.totalorder %s131, %s133
    %p137 = scmp.eq.s32.totalorder %s19, 0
    %p138 = por %p136, %p137
    %p139 = scmp.ne.s32.totalorder %s131, %s133
    %p140 = scmp.eq.s32.totalorder %s24, 1
    %p141 = por %p139, %p140
    %p142 = scmp.ne.s32.totalorder %s133, %s134
    %p143 = scmp.eq.s32.totalorder %s24, 0
    %p144 = por %p142, %p143
    %p145 = scmp.ne.s32.totalorder %s133, %s134
    %p146 = scmp.eq.s32.totalorder %s25, 1
    %p147 = por %p145, %p146
    %p149 = scmp.ne.s32.totalorder %s134, %s148
    %p150 = scmp.eq.s32.totalorder %s25, 0
    %p151 = por %p149, %p150
    %s153 = sadd.s32 %s152, 1
    %p156 = scmp.eq.s32.totalorder %s19, 1
    %p157 = scmp.ne.s32.totalorder %s152, %s154
    %p158 = scmp.eq.s32.totalorder %s19, 0
    %p159 = por %p157, %p158
    %p160 = scmp.ne.s32.totalorder %s152, %s154
    %p161 = scmp.eq.s32.totalorder %s24, 1
    %p162 = por %p160, %p161
    %p163 = scmp.ne.s32.totalorder %s154, %s155
    %p164 = scmp.eq.s32.totalorder %s24, 0
    %p165 = por %p163, %p164
    %p166 = scmp.ne.s32.totalorder %s154, %s155
    %p167 = scmp.eq.s32.totalorder %s25, 1
    %p168 = por %p166, %p167
    %p170 = scmp.ne.s32.totalorder %s155, %s169
    %p171 = scmp.eq.s32.totalorder %s25, 0
    %p172 = por %p170, %p171
    %s174 = sadd.s32 %s173, 1
    %p177 = scmp.eq.s32.totalorder %s19, 1
    %p178 = scmp.ne.s32.totalorder %s173, %s175
    %p179 = scmp.eq.s32.totalorder %s19, 0
    %p180 = por %p178, %p179
    %p181 = scmp.ne.s32.totalorder %s173, %s175
    %p182 = scmp.eq.s32.totalorder %s24, 1
    %p183 = por %p181, %p182
    %p184 = scmp.ne.s32.totalorder %s175, %s176
    %p185 = scmp.eq.s32.totalorder %s24, 0
    %p186 = por %p184, %p185
    %p187 = scmp.ne.s32.totalorder %s175, %s176
    %p188 = scmp.eq.s32.totalorder %s25, 1
    %p189 = por %p187, %p188
    %p191 = scmp.ne.s32.totalorder %s176, %s190
    %p192 = scmp.eq.s32.totalorder %s25, 0
    %p193 = por %p191, %p192
    %s195 = sadd.s32 %s194, 1
    %p198 = scmp.eq.s32.totalorder %s19, 1
    %p199 = scmp.ne.s32.totalorder %s194, %s196
    %p200 = scmp.eq.s32.totalorder %s19, 0
    %p201 = por %p199, %p200
    %p202 = scmp.ne.s32.totalorder %s194, %s196
    %p203 = scmp.eq.s32.totalorder %s24, 1
    %p204 = por %p202, %p203
    %p205 = scmp.ne.s32.totalorder %s196, %s197
    %p206 = scmp.eq.s32.totalorder %s24, 0
    %p207 = por %p205, %p206
    %p208 = scmp.ne.s32.totalorder %s196, %s197
    %p209 = scmp.eq.s32.totalorder %s25, 1
    %p210 = por %p208, %p209
    %p212 = scmp.ne.s32.totalorder %s197, %s211
    %p213 = scmp.eq.s32.totalorder %s25, 0
    %p214 = por %p212, %p213
    %s216 = sadd.s32 %s215, 1
    %p219 = scmp.eq.s32.totalorder %s19, 1
    %p220 = scmp.ne.s32.totalorder %s215, %s217
    %p221 = scmp.eq.s32.totalorder %s19, 0
    %p222 = por %p220, %p221
    %p223 = scmp.ne.s32.totalorder %s215, %s217
    %p224 = scmp.eq.s32.totalorder %s24, 1
    %p225 = por %p223, %p224
    %p226 = scmp.ne.s32.totalorder %s217, %s218
    %p227 = scmp.eq.s32.totalorder %s24, 0
    %p228 = por %p226, %p227
    %p229 = scmp.ne.s32.totalorder %s217, %s218
    %p230 = scmp.eq.s32.totalorder %s25, 1
    %p231 = por %p229, %p230
    %p233 = scmp.ne.s32.totalorder %s218, %s232
    %p234 = scmp.eq.s32.totalorder %s25, 0
    %p235 = por %p233, %p234
    %s237 = sadd.s32 %s236, 1
    %p240 = scmp.eq.s32.totalorder %s19, 1
    %p241 = scmp.ne.s32.totalorder %s236, %s238
    %p242 = scmp.eq.s32.totalorder %s19, 0
    %p243 = por %p241, %p242
    %p244 = scmp.ne.s32.totalorder %s236, %s238
    %p245 = scmp.eq.s32.totalorder %s24, 1
    %p246 = por %p244, %p245
    %p247 = scmp.ne.s32.totalorder %s238, %s239
    %p248 = scmp.eq.s32.totalorder %s24, 0
    %p249 = por %p247, %p248
    %p250 = scmp.ne.s32.totalorder %s238, %s239
    %p251 = scmp.eq.s32.totalorder %s25, 1
    %p252 = por %p250, %p251
    %p254 = scmp.ne.s32.totalorder %s239, %s253
    %p255 = scmp.eq.s32.totalorder %s25, 0
    %p256 = por %p254, %p255
    %s258 = sadd.s32 %s257, 1
    %p261 = scmp.eq.s32.totalorder %s19, 1
    %p262 = scmp.ne.s32.totalorder %s257, %s259
    %p263 = scmp.eq.s32.totalorder %s19, 0
    %p264 = por %p262, %p263
    %p265 = scmp.ne.s32.totalorder %s257, %s259
    %p266 = scmp.eq.s32.totalorder %s24, 1
    %p267 = por %p265, %p266
    %p268 = scmp.ne.s32.totalorder %s259, %s260
    %p269 = scmp.eq.s32.totalorder %s24, 0
    %p270 = por %p268, %p269
    %p271 = scmp.ne.s32.totalorder %s259, %s260
    %p272 = scmp.eq.s32.totalorder %s25, 1
    %p273 = por %p271, %p272
    %p275 = scmp.ne.s32.totalorder %s260, %s274
    %p276 = scmp.eq.s32.totalorder %s25, 0
    %p277 = por %p275, %p276
    %s279 = sadd.s32 %s278, 1
    %p282 = scmp.eq.s32.totalorder %s19, 1
    %p283 = scmp.ne.s32.totalorder %s278, %s280
    %p284 = scmp.eq.s32.totalorder %s19, 0
    %p285 = por %p283, %p284
    %p286 = scmp.ne.s32.totalorder %s278, %s280
    %p287 = scmp.eq.s32.totalorder %s24, 1
    %p288 = por %p286, %p287
    %p289 = scmp.ne.s32.totalorder %s280, %s281
    %p290 = scmp.eq.s32.totalorder %s24, 0
    %p291 = por %p289, %p290
    %p292 = scmp.ne.s32.totalorder %s280, %s281
    %p293 = scmp.eq.s32.totalorder %s25, 1
    %p294 = por %p292, %p293
    %p296 = scmp.ne.s32.totalorder %s281, %s295
    %p297 = scmp.eq.s32.totalorder %s25, 0
    %p298 = por %p296, %p297
    %s300 = sadd.s32 %s299, 1
    %p303 = scmp.eq.s32.totalorder %s19, 1
    %p304 = scmp.ne.s32.totalorder %s299, %s301
    %p305 = scmp.eq.s32.totalorder %s19, 0
    %p306 = por %p304, %p305
    %p307 = scmp.ne.s32.totalorder %s299, %s301
    %p308 = scmp.eq.s32.totalorder %s24, 1
    %p309 = por %p307, %p308
    %p310 = scmp.ne.s32.totalorder %s301, %s302
    %p311 = scmp.eq.s32.totalorder %s24, 0
    %p312 = por %p310, %p311
    %p313 = scmp.ne.s32.totalorder %s301, %s302
    %p314 = scmp.eq.s32.totalorder %s25, 1
    %p315 = por %p313, %p314
    %p317 = scmp.ne.s32.totalorder %s302, %s316
    %p318 = scmp.eq.s32.totalorder %s25, 0
    %p319 = por %p317, %p318
    %s320 = ssub.s32 %s19, %s26
    %p321 = scmp.eq.s32.totalorder %s320, 0
    %s323 = sadd.s32 %s322, 1
    %s324 = scalar_select %p321, %s322, %s323
    %p327 = pneg %p321
    %p328 = scmp.eq.s32.totalorder %s19, 1
    %p329 = por %p327, %p328
    %p330 = scmp.ne.s32.totalorder %s322, %s325
    %p331 = scmp.eq.s32.totalorder %s19, 0
    %p332 = por %p330, %p331
    %p333 = scmp.ne.s32.totalorder %s322, %s325
    %p334 = scmp.eq.s32.totalorder %s24, 1
    %p335 = por %p333, %p334
    %p336 = scmp.ne.s32.totalorder %s325, %s326
    %p337 = scmp.eq.s32.totalorder %s24, 0
    %p338 = por %p336, %p337
    %p339 = scmp.ne.s32.totalorder %s325, %s326
    %p340 = scmp.eq.s32.totalorder %s25, 1
    %p341 = por %p339, %p340
    %p343 = scmp.ne.s32.totalorder %s326, %s342
    %p344 = scmp.eq.s32.totalorder %s25, 0
    %p345 = por %p343, %p344
    %p346 = scmp.le.s32.totalorder 1, %s19
    %p347 = scmp.lt.s32.totalorder %s19, 3
    %p348 = pnand %p346, %p347
    %p349 = pneg %p348
    // Predicated region
    $region9: #{model_forward.8} parent=5 // pred_check
      _
    $region10: #{model_forward.8} parent=5 // pred_check_branch
      %351 = sbr.rel (%p348) target = $region12
    $region11: #{model_forward.8} parent=5 // pred_region
      %s352 = ssub.s32 %s19, 1
      // Predicated region
      $region13: #{model_forward.8} parent=11 // pred_check
        %p353 = pneg %p144
      $region14: #{model_forward.8} parent=11 // pred_check_branch
        %355 = sbr.rel (%p353) target = $region16
      $region15: #{model_forward.8} parent=11 // pred_region
        _
      $region16: #{model_forward.8} parent=11 // pred_fallthru
        _
      // Predicated region
      $region17: #{model_forward.8} parent=11 // pred_check
        %p356 = pneg %p165
      $region18: #{model_forward.8} parent=11 // pred_check_branch
        %358 = sbr.rel (%p356) target = $region20
      $region19: #{model_forward.8} parent=11 // pred_region
        _
      $region20: #{model_forward.8} parent=11 // pred_fallthru
        _
      // Predicated region
      $region21: #{model_forward.8} parent=11 // pred_check
        %p359 = pneg %p186
      $region22: #{model_forward.8} parent=11 // pred_check_branch
        %361 = sbr.rel (%p359) target = $region24
      $region23: #{model_forward.8} parent=11 // pred_region
        _
      $region24: #{model_forward.8} parent=11 // pred_fallthru
        _
      // Predicated region
      $region25: #{model_forward.8} parent=11 // pred_check
        %p362 = pneg %p207
      $region26: #{model_forward.8} parent=11 // pred_check_branch
        %364 = sbr.rel (%p362) target = $region28
      $region27: #{model_forward.8} parent=11 // pred_region
        _
      $region28: #{model_forward.8} parent=11 // pred_fallthru
        _
      // Predicated region
      $region29: #{model_forward.8} parent=11 // pred_check
        %p365 = pneg %p228
      $region30: #{model_forward.8} parent=11 // pred_check_branch
        %367 = sbr.rel (%p365) target = $region32
      $region31: #{model_forward.8} parent=11 // pred_region
        _
      $region32: #{model_forward.8} parent=11 // pred_fallthru
        _
      // Predicated region
      $region33: #{model_forward.8} parent=11 // pred_check
        %p368 = pneg %p249
      $region34: #{model_forward.8} parent=11 // pred_check_branch
        %370 = sbr.rel (%p368) target = $region36
      $region35: #{model_forward.8} parent=11 // pred_region
        _
      $region36: #{model_forward.8} parent=11 // pred_fallthru
        _
      // Predicated region
      $region37: #{model_forward.8} parent=11 // pred_check
        %p371 = pneg %p270
      $region38: #{model_forward.8} parent=11 // pred_check_branch
        %373 = sbr.rel (%p371) target = $region40
      $region39: #{model_forward.8} parent=11 // pred_region
        _
      $region40: #{model_forward.8} parent=11 // pred_fallthru
        _
      // Predicated region
      $region41: #{model_forward.8} parent=11 // pred_check
        %p374 = pneg %p291
      $region42: #{model_forward.8} parent=11 // pred_check_branch
        %376 = sbr.rel (%p374) target = $region44
      $region43: #{model_forward.8} parent=11 // pred_region
        _
      $region44: #{model_forward.8} parent=11 // pred_fallthru
        _
      // Predicated region
      $region45: #{model_forward.8} parent=11 // pred_check
        %p377 = pneg %p312
      $region46: #{model_forward.8} parent=11 // pred_check_branch
        %379 = sbr.rel (%p377) target = $region48
      $region47: #{model_forward.8} parent=11 // pred_region
        _
      $region48: #{model_forward.8} parent=11 // pred_fallthru
        _
    $region12: #{model_forward.8} parent=5 // pred_fallthru
      _
    %p380 = scmp.lt.s32.totalorder %s19, 2
    // Predicated region
    $region49: #{model_forward.8} parent=5 // pred_check
      %p381 = pneg %p380
    $region50: #{model_forward.8} parent=5 // pred_check_branch
      %383 = sbr.rel (%p381) target = $region52
    $region51: #{model_forward.8} parent=5 // pred_region
      // Predicated region
      $region53: #{model_forward.8} parent=51 // pred_check
        %p384 = pneg %p39
      $region54: #{model_forward.8} parent=51 // pred_check_branch
        %386 = sbr.rel (%p384) target = $region56
      $region55: #{model_forward.8} parent=51 // pred_region
        %p387 = scmp.lt.s32.totalorder %s19, 1
        %s388 = scalar_select %p387, %s19, 1
        %s389 = smul.addr %s388, 18
        %s390 = smul.addr %s389, 8
        %s391 = scalar_lea.vmem %s0, %s390
      $region56: #{model_forward.8} parent=51 // pred_fallthru
        _
      // Predicated region
      $region57: #{model_forward.8} parent=51 // pred_check
        %p392 = pneg %p65
      $region58: #{model_forward.8} parent=51 // pred_check_branch
        %394 = sbr.rel (%p392) target = $region60
      $region59: #{model_forward.8} parent=51 // pred_region
        %p395 = scmp.lt.s32.totalorder %s19, 1
        %s396 = scalar_select %p395, %s19, 1
        %s397 = smul.addr %s396, 18
        %s398 = smul.addr %s397, 8
        %s399 = scalar_lea.vmem %s1, %s398
      $region60: #{model_forward.8} parent=51 // pred_fallthru
        _
      // Predicated region
      $region61: #{model_forward.8} parent=51 // pred_check
        %p400 = pneg %p91
      $region62: #{model_forward.8} parent=51 // pred_check_branch
        %402 = sbr.rel (%p400) target = $region64
      $region63: #{model_forward.8} parent=51 // pred_region
        %p403 = scmp.lt.s32.totalorder %s19, 1
        %s404 = scalar_select %p403, %s19, 1
        %s405 = smul.addr %s404, 18
        %s406 = smul.addr %s405, 8
        %s407 = scalar_lea.vmem %s2, %s406
      $region64: #{model_forward.8} parent=51 // pred_fallthru
        _
      // Predicated region
      $region65: #{model_forward.8} parent=51 // pred_check
        %p408 = pneg %p117
      $region66: #{model_forward.8} parent=51 // pred_check_branch
        %410 = sbr.rel (%p408) target = $region68
      $region67: #{model_forward.8} parent=51 // pred_region
        %p411 = scmp.lt.s32.totalorder %s19, 1
        %s412 = scalar_select %p411, %s19, 1
        %s413 = smul.addr %s412, 18
        %s414 = smul.addr %s413, 8
        %s415 = scalar_lea.vmem %s3, %s414
      $region68: #{model_forward.8} parent=51 // pred_fallthru
        _
    $region52: #{model_forward.8} parent=5 // pred_fallthru
      _
    %p416 = scmp.le.s32.totalorder 1, %s19
    %p417 = scmp.lt.s32.totalorder %s19, 3
    %p418 = pnand %p416, %p417
    %p419 = pneg %p418
    // Predicated region
    $region69: #{model_forward.8} parent=5 // pred_check
      _
    $region70: #{model_forward.8} parent=5 // pred_check_branch
      %421 = sbr.rel (%p418) target = $region72
    $region71: #{model_forward.8} parent=5 // pred_region
      %s422 = ssub.s32 %s19, 1
      %p423 = scmp.lt.s32.totalorder %s24, 1
      %s424 = scalar_select %p423, %s24, 1
      %s425 = smul.addr %s424, 18
      %s426 = smul.addr %s425, 8
      %s427 = scalar_lea.vmem %s0, %s426
      %p428 = pneg %p45
      %p429 = pneg %p42
      %p430 = scmp.lt.s32.totalorder %s24, 1
      %s431 = scalar_select %p430, %s24, 1
      %s432 = smul.addr %s431, 18
      %s433 = smul.addr %s432, 8
      %s434 = scalar_lea.vmem %s1, %s433
      %p435 = pneg %p71
      %p436 = pneg %p68
      %p437 = scmp.lt.s32.totalorder %s24, 1
      %s438 = scalar_select %p437, %s24, 1
      %s439 = smul.addr %s438, 18
      %s440 = smul.addr %s439, 8
      %s441 = scalar_lea.vmem %s2, %s440
      %p442 = pneg %p97
      %p443 = pneg %p94
      %p444 = scmp.lt.s32.totalorder %s24, 1
      %s445 = scalar_select %p444, %s24, 1
      %s446 = smul.addr %s445, 18
      %s447 = smul.addr %s446, 8
      %s448 = scalar_lea.vmem %s3, %s447
      %p449 = pneg %p123
      %p450 = pneg %p120
      %p451 = pneg %p144
      %p452 = pneg %p141
      %p453 = pneg %p165
      %p454 = pneg %p162
      %p455 = pneg %p186
      %p456 = pneg %p183
      %p457 = pneg %p207
      %p458 = pneg %p204
      %p459 = pneg %p228
      %p460 = pneg %p225
      %p461 = pneg %p249
      %p462 = pneg %p246
      %p463 = pneg %p270
      %p464 = pneg %p267
      %p465 = pneg %p291
      %p466 = pneg %p288
      %p467 = pneg %p312
      %p468 = pneg %p309
      %p469 = pneg %p338
      %p470 = pneg %p335
      %p471 = scmp.lt.s32.totalorder %s24, 1
      %s472 = scalar_select %p471, %s24, 1
      %s473 = smul.addr %s472, 8
      %s474 = smul.addr %s473, 8
      %s475 = scalar_lea.vmem %s13, %s474
      %p476 = scmp.lt.s32.totalorder %s24, 1
      %s477 = scalar_select %p476, %s24, 1
      %s478 = smul.addr %s477, 18
      %s479 = smul.addr %s478, 8
      %s480 = scalar_lea.vmem %s0, %s479
      %p481 = scmp.lt.s32.totalorder %s24, 1
      %s482 = scalar_select %p481, %s24, 1
      %s483 = smul.addr %s482, 18
      %s484 = smul.addr %s483, 8
      %s485 = scalar_lea.vmem %s1, %s484
      %p486 = scmp.lt.s32.totalorder %s24, 1
      %s487 = scalar_select %p486, %s24, 1
      %s488 = smul.addr %s487, 18
      %s489 = smul.addr %s488, 8
      %s490 = scalar_lea.vmem %s2, %s489
      %p491 = scmp.lt.s32.totalorder %s24, 1
      %s492 = scalar_select %p491, %s24, 1
      %s493 = smul.addr %s492, 18
      %s494 = smul.addr %s493, 8
      %s495 = scalar_lea.vmem %s3, %s494
      %p496 = scmp.lt.s32.totalorder %s24, 1
      %s497 = scalar_select %p496, %s24, 1
      %s498 = smul.addr %s497, 8
      %s499 = smul.addr %s498, 8
      %s500 = scalar_lea.vmem %s13, %s499
      %v501 = vld [vmem:[%s480] sm:$0xff]
      %v502 = vld [vmem:[%s480 + $0x8] sm:$0x1]
      %v503 = vld [vmem:[%s480 + $0x10] sm:$0xff]
      %v504 = vld [vmem:[%s480 + $0x18] sm:$0x1]
      %v505 = vld [vmem:[%s480 + $0x20] sm:$0xff]
      %v506 = vld [vmem:[%s480 + $0x28] sm:$0x1]
      %v507 = vld [vmem:[%s480 + $0x30] sm:$0xff]
      %v508 = vld [vmem:[%s480 + $0x38] sm:$0x1]
      %v509 = vld [vmem:[%s480 + $0x40] sm:$0xff]
      %v510 = vld [vmem:[%s480 + $0x48] sm:$0x1]
      %v511 = vld [vmem:[%s480 + $0x50] sm:$0xff]
      %v512 = vld [vmem:[%s480 + $0x58] sm:$0x1]
      %v513 = vld [vmem:[%s480 + $0x60] sm:$0xff]
      %v514 = vld [vmem:[%s480 + $0x68] sm:$0x1]
      %v515 = vld [vmem:[%s480 + $0x70] sm:$0xff]
      %v516 = vld [vmem:[%s480 + $0x78] sm:$0x1]
      %v517 = vld [vmem:[%s480 + $0x80] sm:$0xff]
      %v518 = vld [vmem:[%s480 + $0x88] sm:$0x1]
      %v519 = vld [vmem:[%s485] sm:$0xff]
      %v520 = vld [vmem:[%s485 + $0x10] sm:$0xff]
      %v521 = vld [vmem:[%s485 + $0x20] sm:$0xff]
      %v522 = vld [vmem:[%s485 + $0x30] sm:$0xff]
      %v523 = vld [vmem:[%s485 + $0x40] sm:$0xff]
      %v524 = vld [vmem:[%s485 + $0x50] sm:$0xff]
      %v525 = vld [vmem:[%s485 + $0x60] sm:$0xff]
      %v526 = vld [vmem:[%s485 + $0x70] sm:$0xff]
      %v527 = vld [vmem:[%s485 + $0x80] sm:$0xff]
      %v528 = vld [vmem:[%s490] sm:$0xff]
      %v529 = vld [vmem:[%s490 + $0x8] sm:$0x1]
      %v530 = vld [vmem:[%s490 + $0x10] sm:$0xff]
      %v531 = vld [vmem:[%s490 + $0x18] sm:$0x1]
      %v532 = vld [vmem:[%s490 + $0x20] sm:$0xff]
      %v533 = vld [vmem:[%s490 + $0x28] sm:$0x1]
      %v534 = vld [vmem:[%s490 + $0x30] sm:$0xff]
      %v535 = vld [vmem:[%s490 + $0x38] sm:$0x1]
      %v536 = vld [vmem:[%s490 + $0x40] sm:$0xff]
      %v537 = vld [vmem:[%s490 + $0x48] sm:$0x1]
      %v538 = vld [vmem:[%s490 + $0x50] sm:$0xff]
      %v539 = vld [vmem:[%s490 + $0x58] sm:$0x1]
      %v540 = vld [vmem:[%s490 + $0x60] sm:$0xff]
      %v541 = vld [vmem:[%s490 + $0x68] sm:$0x1]
      %v542 = vld [vmem:[%s490 + $0x70] sm:$0xff]
      %v543 = vld [vmem:[%s490 + $0x78] sm:$0x1]
      %v544 = vld [vmem:[%s495] sm:$0xff]
      %v545 = vld [vmem:[%s495 + $0x10] sm:$0xff]
      %v546 = vld [vmem:[%s495 + $0x20] sm:$0xff]
      %v547 = vld [vmem:[%s495 + $0x30] sm:$0xff]
      %v548 = vld [vmem:[%s495 + $0x40] sm:$0xff]
      %v549 = vld [vmem:[%s495 + $0x50] sm:$0xff]
      %v550 = vld [vmem:[%s495 + $0x60] sm:$0xff]
      %v551 = vld [vmem:[%s495 + $0x70] sm:$0xff]
      %v552 = vld [vmem:[%s4] sm:$0xff]
      %v553 = vld [vmem:[%s4 + $0x8] sm:$0x1]
      %v554 = vlaneseq
      %v555 = vshrl.u32 %v554, 7
      %v556 = vsub.s32 0, %v555
      %v557 = vrot.slane %v552, %v556
      %v558 = vmul.f32 %v501, %v557
      %v559 = vmul.f32 %v503, %v557
      %v560 = vmul.f32 %v505, %v557
      %v561 = vmul.f32 %v507, %v557
      %v562 = vmul.f32 %v509, %v557
      %v563 = vmul.f32 %v511, %v557
      %v564 = vmul.f32 %v513, %v557
      %v565 = vmul.f32 %v515, %v557
      %v566 = vadd.f32 %v558, 0.0
      %v567 = vadd.f32 %v559, 0.0
      %v568 = vadd.f32 %v560, 0.0
      %v569 = vadd.f32 %v561, 0.0
      %v570 = vadd.f32 %v562, 0.0
      %v571 = vadd.f32 %v563, 0.0
      %v572 = vadd.f32 %v564, 0.0
      %v573 = vadd.f32 %v565, 0.0
      %v574 = vlaneseq
      %v575 = vshrl.u32 %v574, 7
      %v576 = vsub.s32 1, %v575
      %v577 = vrot.slane %v552, %v576
      %v578 = vmul.f32 %v519, %v577
      %v579 = vmul.f32 %v520, %v577
      %v580 = vmul.f32 %v521, %v577
      %v581 = vmul.f32 %v522, %v577
      %v582 = vmul.f32 %v523, %v577
      %v583 = vmul.f32 %v524, %v577
      %v584 = vmul.f32 %v525, %v577
      %v585 = vmul.f32 %v526, %v577
      %v586 = vadd.f32 %v566, %v578
      %v587 = vadd.f32 %v567, %v579
      %v588 = vadd.f32 %v568, %v580
      %v589 = vadd.f32 %v569, %v581
      %v590 = vadd.f32 %v570, %v582
      %v591 = vadd.f32 %v571, %v583
      %v592 = vadd.f32 %v572, %v584
      %v593 = vadd.f32 %v573, %v585
      %v594 = vlaneseq
      %v595 = vshrl.u32 %v594, 7
      %v596 = vsub.s32 2, %v595
      %v597 = vrot.slane %v552, %v596
      %v598 = vmul.f32 %v501, %v597
      %v599 = vmul.f32 %v502, %v597
      %v600 = vmul.f32 %v503, %v597
      %v601 = vmul.f32 %v504, %v597
      %v602 = vmul.f32 %v505, %v597
      %v603 = vmul.f32 %v506, %v597
      %v604 = vmul.f32 %v507, %v597
      %v605 = vmul.f32 %v508, %v597
      %v606 = vmul.f32 %v509, %v597
      %v607 = vmul.f32 %v510, %v597
      %v608 = vmul.f32 %v511, %v597
      %v609 = vmul.f32 %v512, %v597
      %v610 = vmul.f32 %v513, %v597
      %v611 = vmul.f32 %v514, %v597
      %v612 = vmul.f32 %v515, %v597
      %v613 = vmul.f32 %v516, %v597
      %vm630 = vcmask 1046528
      %v631 = vrot.slane %v598, 1
      %v632 = vrot.slane %v599, 1
      %v633 = vsel %vm630, %v631, %v632
      %v634 = vrot.slane %v600, 1
      %v635 = vrot.slane %v601, 1
      %v636 = vsel %vm630, %v634, %v635
      %v637 = vrot.slane %v602, 1
      %v638 = vrot.slane %v603, 1
      %v639 = vsel %vm630, %v637, %v638
      %v640 = vrot.slane %v604, 1
      %v641 = vrot.slane %v605, 1
      %v642 = vsel %vm630, %v640, %v641
      %v643 = vrot.slane %v606, 1
      %v644 = vrot.slane %v607, 1
      %v645 = vsel %vm630, %v643, %v644
      %v646 = vrot.slane %v608, 1
      %v647 = vrot.slane %v609, 1
      %v648 = vsel %vm630, %v646, %v647
      %v649 = vrot.slane %v610, 1
      %v650 = vrot.slane %v611, 1
      %v651 = vsel %vm630, %v649, %v650
      %v652 = vrot.slane %v612, 1
      %v653 = vrot.slane %v613, 1
      %v654 = vsel %vm630, %v652, %v653
      %v663 = vadd.f32 %v586, %v633
      %v664 = vadd.f32 %v587, %v636
      %v665 = vadd.f32 %v588, %v639
      %v666 = vadd.f32 %v589, %v642
      %v667 = vadd.f32 %v590, %v645
      %v668 = vadd.f32 %v591, %v648
      %v669 = vadd.f32 %v592, %v651
      %v670 = vadd.f32 %v593, %v654
      %v671 = vlaneseq
      %v672 = vshrl.u32 %v671, 7
      %v673 = vsub.s32 3, %v672
      %v674 = vrot.slane %v552, %v673
      %v675 = vmul.f32 %v528, %v674
      %v676 = vmul.f32 %v530, %v674
      %v677 = vmul.f32 %v532, %v674
      %v678 = vmul.f32 %v534, %v674
      %v679 = vmul.f32 %v536, %v674
      %v680 = vmul.f32 %v538, %v674
      %v681 = vmul.f32 %v540, %v674
      %v682 = vmul.f32 %v542, %v674
      %v683 = vadd.f32 %v663, %v675
      %v684 = vadd.f32 %v664, %v676
      %v685 = vadd.f32 %v665, %v677
      %v686 = vadd.f32 %v666, %v678
      %v687 = vadd.f32 %v667, %v679
      %v688 = vadd.f32 %v668, %v680
      %v689 = vadd.f32 %v669, %v681
      %v690 = vadd.f32 %v670, %v682
      %v691 = vlaneseq
      %v692 = vshrl.u32 %v691, 7
      %v693 = vsub.s32 4, %v692
      %v694 = vrot.slane %v552, %v693
      %v695 = vmul.f32 %v544, %v694
      %v696 = vmul.f32 %v545, %v694
      %v697 = vmul.f32 %v546, %v694
      %v698 = vmul.f32 %v547, %v694
      %v699 = vmul.f32 %v548, %v694
      %v700 = vmul.f32 %v549, %v694
      %v701 = vmul.f32 %v550, %v694
      %v702 = vmul.f32 %v551, %v694
      %v703 = vadd.f32 %v683, %v695
      %v704 = vadd.f32 %v684, %v696
      %v705 = vadd.f32 %v685, %v697
      %v706 = vadd.f32 %v686, %v698
      %v707 = vadd.f32 %v687, %v699
      %v708 = vadd.f32 %v688, %v700
      %v709 = vadd.f32 %v689, %v701
      %v710 = vadd.f32 %v690, %v702
      %v711 = vlaneseq
      %v712 = vshrl.u32 %v711, 7
      %v713 = vsub.s32 5, %v712
      %v714 = vrot.slane %v552, %v713
      %v715 = vmul.f32 %v528, %v714
      %v716 = vmul.f32 %v529, %v714
      %v717 = vmul.f32 %v530, %v714
      %v718 = vmul.f32 %v531, %v714
      %v719 = vmul.f32 %v532, %v714
      %v720 = vmul.f32 %v533, %v714
      %v721 = vmul.f32 %v534, %v714
      %v722 = vmul.f32 %v535, %v714
      %v723 = vmul.f32 %v536, %v714
      %v724 = vmul.f32 %v537, %v714
      %v725 = vmul.f32 %v538, %v714
      %v726 = vmul.f32 %v539, %v714
      %v727 = vmul.f32 %v540, %v714
      %v728 = vmul.f32 %v541, %v714
      %v729 = vmul.f32 %v542, %v714
      %v730 = vmul.f32 %v543, %v714
      %v747 = vrot.slane %v715, 1
      %v748 = vrot.slane %v716, 1
      %v749 = vsel %vm630, %v747, %v748
      %v750 = vrot.slane %v717, 1
      %v751 = vrot.slane %v718, 1
      %v752 = vsel %vm630, %v750, %v751
      %v753 = vrot.slane %v719, 1
      %v754 = vrot.slane %v720, 1
      %v755 = vsel %vm630, %v753, %v754
      %v756 = vrot.slane %v721, 1
      %v757 = vrot.slane %v722, 1
      %v758 = vsel %vm630, %v756, %v757
      %v759 = vrot.slane %v723, 1
      %v760 = vrot.slane %v724, 1
      %v761 = vsel %vm630, %v759, %v760
      %v762 = vrot.slane %v725, 1
      %v763 = vrot.slane %v726, 1
      %v764 = vsel %vm630, %v762, %v763
      %v765 = vrot.slane %v727, 1
      %v766 = vrot.slane %v728, 1
      %v767 = vsel %vm630, %v765, %v766
      %v768 = vrot.slane %v729, 1
      %v769 = vrot.slane %v730, 1
      %v770 = vsel %vm630, %v768, %v769
      %v779 = vadd.f32 %v703, %v749
      %v780 = vadd.f32 %v704, %v752
      %v781 = vadd.f32 %v705, %v755
      %v782 = vadd.f32 %v706, %v758
      %v783 = vadd.f32 %v707, %v761
      %v784 = vadd.f32 %v708, %v764
      %v785 = vadd.f32 %v709, %v767
      %v786 = vadd.f32 %v710, %v770
      %v787 = vlaneseq
      %v788 = vshrl.u32 %v787, 7
      %v789 = vsub.s32 6, %v788
      %v790 = vrot.slane %v552, %v789
      %v791 = vmul.f32 %v503, %v790
      %v792 = vmul.f32 %v505, %v790
      %v793 = vmul.f32 %v507, %v790
      %v794 = vmul.f32 %v509, %v790
      %v795 = vmul.f32 %v511, %v790
      %v796 = vmul.f32 %v513, %v790
      %v797 = vmul.f32 %v515, %v790
      %v798 = vmul.f32 %v517, %v790
      %v799 = vadd.f32 %v779, %v791
      %v800 = vadd.f32 %v780, %v792
      %v801 = vadd.f32 %v781, %v793
      %v802 = vadd.f32 %v782, %v794
      %v803 = vadd.f32 %v783, %v795
      %v804 = vadd.f32 %v784, %v796
      %v805 = vadd.f32 %v785, %v797
      %v806 = vadd.f32 %v786, %v798
      %v807 = vlaneseq
      %v808 = vshrl.u32 %v807, 7
      %v809 = vsub.s32 7, %v808
      %v810 = vrot.slane %v552, %v809
      %v811 = vmul.f32 %v520, %v810
      %v812 = vmul.f32 %v521, %v810
      %v813 = vmul.f32 %v522, %v810
      %v814 = vmul.f32 %v523, %v810
      %v815 = vmul.f32 %v524, %v810
      %v816 = vmul.f32 %v525, %v810
      %v817 = vmul.f32 %v526, %v810
      %v818 = vmul.f32 %v527, %v810
      %v819 = vadd.f32 %v799, %v811
      %v820 = vadd.f32 %v800, %v812
      %v821 = vadd.f32 %v801, %v813
      %v822 = vadd.f32 %v802, %v814
      %v823 = vadd.f32 %v803, %v815
      %v824 = vadd.f32 %v804, %v816
      %v825 = vadd.f32 %v805, %v817
      %v826 = vadd.f32 %v806, %v818
      %v827 = vlaneseq
      %v828 = vshrl.u32 %v827, 7
      %v829 = vsub.s32 0, %v828
      %v830 = vrot.slane %v553, %v829
      %v831 = vmul.f32 %v503, %v830
      %v832 = vmul.f32 %v504, %v830
      %v833 = vmul.f32 %v505, %v830
      %v834 = vmul.f32 %v506, %v830
      %v835 = vmul.f32 %v507, %v830
      %v836 = vmul.f32 %v508, %v830
      %v837 = vmul.f32 %v509, %v830
      %v838 = vmul.f32 %v510, %v830
      %v839 = vmul.f32 %v511, %v830
      %v840 = vmul.f32 %v512, %v830
      %v841 = vmul.f32 %v513, %v830
      %v842 = vmul.f32 %v514, %v830
      %v843 = vmul.f32 %v515, %v830
      %v844 = vmul.f32 %v516, %v830
      %v845 = vmul.f32 %v517, %v830
      %v846 = vmul.f32 %v518, %v830
      %v863 = vrot.slane %v831, 1
      %v864 = vrot.slane %v832, 1
      %v865 = vsel %vm630, %v863, %v864
      %v866 = vrot.slane %v833, 1
      %v867 = vrot.slane %v834, 1
      %v868 = vsel %vm630, %v866, %v867
      %v869 = vrot.slane %v835, 1
      %v870 = vrot.slane %v836, 1
      %v871 = vsel %vm630, %v869, %v870
      %v872 = vrot.slane %v837, 1
      %v873 = vrot.slane %v838, 1
      %v874 = vsel %vm630, %v872, %v873
      %v875 = vrot.slane %v839, 1
      %v876 = vrot.slane %v840, 1
      %v877 = vsel %vm630, %v875, %v876
      %v878 = vrot.slane %v841, 1
      %v879 = vrot.slane %v842, 1
      %v880 = vsel %vm630, %v878, %v879
      %v881 = vrot.slane %v843, 1
      %v882 = vrot.slane %v844, 1
      %v883 = vsel %vm630, %v881, %v882
      %v884 = vrot.slane %v845, 1
      %v885 = vrot.slane %v846, 1
      %v886 = vsel %vm630, %v884, %v885
      %v895 = vadd.f32 %v819, %v865
      %v896 = vadd.f32 %v820, %v868
      %v897 = vadd.f32 %v821, %v871
      %v898 = vadd.f32 %v822, %v874
      %v899 = vadd.f32 %v823, %v877
      %v900 = vadd.f32 %v824, %v880
      %v901 = vadd.f32 %v825, %v883
      %v902 = vadd.f32 %v826, %v886
      %v903 = vld [vmem:[%s5] sm:$0x1]
      %v905 = vlaneseq
      %v906 = vshrl.u32 %v905, 7
      %v907 = vsub.s32 0, %v906
      %v908 = vrot.slane %v903, %v907
      %v910 = vmul.f32 %v895, %v908
      %v911 = vmul.f32 %v896, %v908
      %v912 = vmul.f32 %v897, %v908
      %v913 = vmul.f32 %v898, %v908
      %v914 = vmul.f32 %v899, %v908
      %v915 = vmul.f32 %v900, %v908
      %v916 = vmul.f32 %v901, %v908
      %v917 = vmul.f32 %v902, %v908
      %v918 = vld [vmem:[%s6] sm:$0x1]
      %v920 = vlaneseq
      %v921 = vshrl.u32 %v920, 7
      %v922 = vsub.s32 0, %v921
      %v923 = vrot.slane %v918, %v922
      %v925 = vadd.f32 %v910, %v923
      %v926 = vadd.f32 %v911, %v923
      %v927 = vadd.f32 %v912, %v923
      %v928 = vadd.f32 %v913, %v923
      %v929 = vadd.f32 %v914, %v923
      %v930 = vadd.f32 %v915, %v923
      %v931 = vadd.f32 %v916, %v923
      %v932 = vadd.f32 %v917, %v923
      %v933 = vxor.u32 %v925, 2147483648
      %v934 = vxor.u32 %v926, 2147483648
      %v935 = vxor.u32 %v927, 2147483648
      %v936 = vxor.u32 %v928, 2147483648
      %v937 = vxor.u32 %v929, 2147483648
      %v938 = vxor.u32 %v930, 2147483648
      %v939 = vxor.u32 %v931, 2147483648
      %v940 = vxor.u32 %v932, 2147483648
      %v941 = vmul.f32 %v933, 1.442695
      %v942 = vpow.pop %v941
      %v943 = vmul.f32 %v934, 1.442695
      %v944 = vpow.pop %v943
      %v945 = vmul.f32 %v935, 1.442695
      %v946 = vpow.pop %v945
      %v947 = vmul.f32 %v936, 1.442695
      %v948 = vpow.pop %v947
      %v949 = vmul.f32 %v937, 1.442695
      %v950 = vpow.pop %v949
      %v951 = vmul.f32 %v938, 1.442695
      %v952 = vpow.pop %v951
      %v953 = vmul.f32 %v939, 1.442695
      %v954 = vpow.pop %v953
      %v955 = vmul.f32 %v940, 1.442695
      %v956 = vpow.pop %v955
      %v957 = vadd.f32 %v942, 1.0
      %v958 = vadd.f32 %v944, 1.0
      %v959 = vadd.f32 %v946, 1.0
      %v960 = vadd.f32 %v948, 1.0
      %v961 = vadd.f32 %v950, 1.0
      %v962 = vadd.f32 %v952, 1.0
      %v963 = vadd.f32 %v954, 1.0
      %v964 = vadd.f32 %v956, 1.0
      %v965 = vrcp.pop %v957
      %v966 = vmul.f32 1.0, %v965
      %v967 = vrcp.pop %v958
      %v968 = vmul.f32 1.0, %v967
      %v969 = vrcp.pop %v959
      %v970 = vmul.f32 1.0, %v969
      %v971 = vrcp.pop %v960
      %v972 = vmul.f32 1.0, %v971
      %v973 = vrcp.pop %v961
      %v974 = vmul.f32 1.0, %v973
      %v975 = vrcp.pop %v962
      %v976 = vmul.f32 1.0, %v975
      %v977 = vrcp.pop %v963
      %v978 = vmul.f32 1.0, %v977
      %v979 = vrcp.pop %v964
      %v980 = vmul.f32 1.0, %v979
      %v981 = vmul.f32 %v925, %v966
      %v982 = vmul.f32 %v926, %v968
      %v983 = vmul.f32 %v927, %v970
      %v984 = vmul.f32 %v928, %v972
      %v985 = vmul.f32 %v929, %v974
      %v986 = vmul.f32 %v930, %v976
      %v987 = vmul.f32 %v931, %v978
      %v988 = vmul.f32 %v932, %v980
      %vm989 = vcmask 785408
      %v990 = vsel %vm989, %v981, 0.0
      %v991 = vsel %vm989, %v982, 0.0
      %v992 = vadd.f32 %v990, %v991
      %v993 = vsel %vm989, %v983, 0.0
      %v994 = vadd.f32 %v992, %v993
      %v995 = vsel %vm989, %v984, 0.0
      %v996 = vadd.f32 %v994, %v995
      %v997 = vsel %vm989, %v985, 0.0
      %v998 = vadd.f32 %v996, %v997
      %v999 = vsel %vm989, %v986, 0.0
      %v1000 = vadd.f32 %v998, %v999
      %v1001 = vsel %vm989, %v987, 0.0
      %v1002 = vadd.f32 %v1000, %v1001
      %v1003 = vsel %vm989, %v988, 0.0
      %v1004 = vadd.f32 %v1002, %v1003
      %v1005 = vrot.slane %v1004, 4
      %v1006 = vadd.f32 %v1004, %v1005
      %v1007 = vrot.slane %v1006, 2
      %v1008 = vadd.f32 %v1006, %v1007
      %v1009 = vrot.slane %v1008, 1
      %v1010 = vadd.f32 %v1008, %v1009
      %v1011 = vrcp.pop 64.0
      %v1012 = vmul.f32 %v1010, %v1011
      %v1013 = vld [vmem:[%s7] sm:$0xff]
      %v1014 = vld [vmem:[%s7 + $0x8] sm:$0xff]
      %v1015 = vld [vmem:[%s7 + $0x10] sm:$0xff]
      %v1016 = vld [vmem:[%s7 + $0x18] sm:$0xff]
      %v1017 = vld [vmem:[%s7 + $0x20] sm:$0xff]
      %v1018 = vld [vmem:[%s7 + $0x28] sm:$0xff]
      %v1019 = vld [vmem:[%s7 + $0x30] sm:$0xff]
      %v1020 = vld [vmem:[%s7 + $0x38] sm:$0xff]
      %v1021 = vld [vmem:[%s7 + $0x40] sm:$0xff]
      %v1022 = vld [vmem:[%s7 + $0x48] sm:$0xff]
      %v1023 = vld [vmem:[%s7 + $0x50] sm:$0xff]
      %v1024 = vld [vmem:[%s7 + $0x58] sm:$0xff]
      %v1025 = vld [vmem:[%s8] sm:$0x1]
      %v1027 = vsel %vm989, %v1012, 0
      %1029 = vmatprep.subr.mxu0 0.0
      %1030 = vmatpush1.msra.mxu0 %v1013
      %1031 = vmatprep.subr.mxu0 0.0
      %1032 = vmatpush1.msra.mxu0 %v1014
      %1033 = vmatprep.subr.mxu0 0.0
      %1034 = vmatpush1.msra.mxu0 %v1015
      %1035 = vmatprep.subr.mxu0 0.0
      %1036 = vmatpush1.msra.mxu0 %v1016
      %1037 = vmatprep.subr.mxu0 0.0
      %1038 = vmatpush1.msra.mxu0 %v1017
      %1039 = vmatprep.subr.mxu0 0.0
      %1040 = vmatpush1.msra.mxu0 %v1018
      %1041 = vmatprep.subr.mxu0 0.0
      %1042 = vmatpush1.msra.mxu0 %v1019
      %1043 = vmatprep.subr.mxu0 0.0
      %1044 = vmatpush1.msra.mxu0 %v1020
      %1045 = vmatprep.subr.mxu0 0.0
      %1046 = vmatpush1.msra.mxu0 %v1021
      %1047 = vmatprep.subr.mxu0 0.0
      %1048 = vmatpush1.msra.mxu0 %v1022
      %1049 = vmatprep.subr.mxu0 0.0
      %1050 = vmatpush1.msra.mxu0 %v1023
      %1051 = vmatprep.subr.mxu0 0.0
      %1052 = vmatpush1.msra.mxu0 %v1024
      %1053 = vmatprep.subr.mxu0 0.0
      %1054 = vmatpush1.msra.mxu0 0.0
      %1055 = vmatprep.subr.mxu0 0.0
      %1056 = vmatpush1.msra.mxu0 0.0
      %1057 = vmatprep.subr.mxu0 0.0
      %1058 = vmatpush1.msra.mxu0 0.0
      %1059 = vmatprep.subr.mxu0 0.0
      %1060 = vmatpush1.msra.mxu0 0.0
      %1061 = vmatprep.subr.mxu0 0.0
      %1062 = vmatpush1.msra.mxu0 0.0
      %1063 = vmatprep.subr.mxu0 0.0
      %1064 = vmatpush1.msra.mxu0 0.0
      %1065 = vmatprep.subr.mxu0 0.0
      %1066 = vmatpush1.msra.mxu0 0.0
      %1067 = vmatprep.subr.mxu0 0.0
      %1068 = vmatpush1.msra.mxu0 0.0
      %1069 = vmatprep.subr.mxu0 0.0
      %1070 = vmatpush1.msra.mxu0 0.0
      %1071 = vmatprep.subr.mxu0 0.0
      %1072 = vmatpush1.msra.mxu0 0.0
      %1073 = vmatprep.subr.mxu0 0.0
      %1074 = vmatpush1.msra.mxu0 0.0
      %1075 = vmatprep.subr.mxu0 0.0
      %1076 = vmatpush1.msra.mxu0 0.0
      %1077 = vmatprep.subr.mxu0 0.0
      %1078 = vmatpush1.msra.mxu0 0.0
      %1079 = vmatprep.subr.mxu0 0.0
      %1080 = vmatpush1.msra.mxu0 0.0
      %1081 = vmatprep.subr.mxu0 0.0
      %1082 = vmatpush1.msra.mxu0 0.0
      %1083 = vmatprep.subr.mxu0 0.0
      %1084 = vmatpush1.msra.mxu0 0.0
      %1085 = vmatprep.subr.mxu0 0.0
      %1086 = vmatpush1.msra.mxu0 0.0
      %1087 = vmatprep.subr.mxu0 0.0
      %1088 = vmatpush1.msra.mxu0 0.0
      %1089 = vmatprep.subr.mxu0 0.0
      %1090 = vmatpush1.msra.mxu0 0.0
      %1091 = vmatprep.subr.mxu0 0.0
      %1092 = vmatpush1.msra.mxu0 0.0
      %1093 = vmatprep.mubr.f32.mxu0 0.0
      %1094 = vmatmul.mubr.f32.gmra.mrb[0].mxu0 %v1027
      %v1095 = vpop.f32.mrb[0].mxu0
      %v1096 = vadd.f32 %v1025, %v1095
      %v1097 = vpop.f32.mrb[0].mxu0
      %1098 = vdwg.mxu0
      %v1099 = vxor.u32 %v1096, 2147483648
      %v1100 = vmul.f32 %v1099, 1.442695
      %v1101 = vpow.pop %v1100
      %v1102 = vadd.f32 %v1101, 1.0
      %v1103 = vrcp.pop %v1102
      %v1104 = vmul.f32 1.0, %v1103
      %v1105 = vmul.f32 %v1096, %v1104
      %v1106 = vld [vmem:[%s9] sm:$0xf]
      %v1107 = vld [vmem:[%s10] sm:$0x1]
      %vm1108 = vcmask 31744
      %v1110 = vsel %vm1108, %v1105, 0
      %vm1112 = vcmask 1043456
      %v1114 = vsel %vm1112, %v1106, 0
      %1116 = vmatprep.subr.mxu0 0.0
      %1117 = vmatpush1.msra.mxu0 %v1114
      %1118 = vmatprep.subr.mxu0 0.0
      %1119 = vmatpush1.msra.mxu0 0.0
      %1120 = vmatprep.subr.mxu0 0.0
      %1121 = vmatpush1.msra.mxu0 0.0
      %1122 = vmatprep.subr.mxu0 0.0
      %1123 = vmatpush1.msra.mxu0 0.0
      %1124 = vmatprep.subr.mxu0 0.0
      %1125 = vmatpush1.msra.mxu0 0.0
      %1126 = vmatprep.subr.mxu0 0.0
      %1127 = vmatpush1.msra.mxu0 0.0
      %1128 = vmatprep.subr.mxu0 0.0
      %1129 = vmatpush1.msra.mxu0 0.0
      %1130 = vmatprep.subr.mxu0 0.0
      %1131 = vmatpush1.msra.mxu0 0.0
      %1132 = vmatprep.subr.mxu0 0.0
      %1133 = vmatpush1.msra.mxu0 0.0
      %1134 = vmatprep.subr.mxu0 0.0
      %1135 = vmatpush1.msra.mxu0 0.0
      %1136 = vmatprep.subr.mxu0 0.0
      %1137 = vmatpush1.msra.mxu0 0.0
      %1138 = vmatprep.subr.mxu0 0.0
      %1139 = vmatpush1.msra.mxu0 0.0
      %1140 = vmatprep.subr.mxu0 0.0
      %1141 = vmatpush1.msra.mxu0 0.0
      %1142 = vmatprep.subr.mxu0 0.0
      %1143 = vmatpush1.msra.mxu0 0.0
      %1144 = vmatprep.subr.mxu0 0.0
      %1145 = vmatpush1.msra.mxu0 0.0
      %1146 = vmatprep.subr.mxu0 0.0
      %1147 = vmatpush1.msra.mxu0 0.0
      %1148 = vmatprep.subr.mxu0 0.0
      %1149 = vmatpush1.msra.mxu0 0.0
      %1150 = vmatprep.subr.mxu0 0.0
      %1151 = vmatpush1.msra.mxu0 0.0
      %1152 = vmatprep.subr.mxu0 0.0
      %1153 = vmatpush1.msra.mxu0 0.0
      %1154 = vmatprep.subr.mxu0 0.0
      %1155 = vmatpush1.msra.mxu0 0.0
      %1156 = vmatprep.subr.mxu0 0.0
      %1157 = vmatpush1.msra.mxu0 0.0
      %1158 = vmatprep.subr.mxu0 0.0
      %1159 = vmatpush1.msra.mxu0 0.0
      %1160 = vmatprep.subr.mxu0 0.0
      %1161 = vmatpush1.msra.mxu0 0.0
      %1162 = vmatprep.subr.mxu0 0.0
      %1163 = vmatpush1.msra.mxu0 0.0
      %1164 = vmatprep.subr.mxu0 0.0
      %1165 = vmatpush1.msra.mxu0 0.0
      %1166 = vmatprep.subr.mxu0 0.0
      %1167 = vmatpush1.msra.mxu0 0.0
      %1168 = vmatprep.subr.mxu0 0.0
      %1169 = vmatpush1.msra.mxu0 0.0
      %1170 = vmatprep.subr.mxu0 0.0
      %1171 = vmatpush1.msra.mxu0 0.0
      %1172 = vmatprep.subr.mxu0 0.0
      %1173 = vmatpush1.msra.mxu0 0.0
      %1174 = vmatprep.subr.mxu0 0.0
      %1175 = vmatpush1.msra.mxu0 0.0
      %1176 = vmatprep.subr.mxu0 0.0
      %1177 = vmatpush1.msra.mxu0 0.0
      %1178 = vmatprep.subr.mxu0 0.0
      %1179 = vmatpush1.msra.mxu0 0.0
      %1180 = vmatprep.mubr.f32.mxu0 0.0
      %1181 = vmatmul.mubr.f32.gmra.mrb[0].mxu0 %v1110
      %v1182 = vpop.f32.mrb[0].mxu0
      %v1183 = vadd.f32 %v1107, %v1182
      %v1184 = vpop.f32.mrb[0].mxu0
      %1185 = vdwg.mxu0
      %v1186 = vxor.u32 %v1183, 2147483648
      %v1187 = vmul.f32 %v1186, 1.442695
      %v1188 = vpow.pop %v1187
      %v1189 = vadd.f32 %v1188, 1.0
      %v1190 = vrcp.pop %v1189
      %v1191 = vmul.f32 1.0, %v1190
      %v1192 = vlaneseq
      %v1193 = vshrl.u32 %v1192, 7
      %v1194 = vsub.s32 0, %v1193
      %v1195 = vrot.slane %v1191, %v1194
      %v1196 = vmul.f32 %v981, %v1195
      %v1197 = vmul.f32 %v982, %v1195
      %v1198 = vmul.f32 %v983, %v1195
      %v1199 = vmul.f32 %v984, %v1195
      %v1200 = vmul.f32 %v985, %v1195
      %v1201 = vmul.f32 %v986, %v1195
      %v1202 = vmul.f32 %v987, %v1195
      %v1203 = vmul.f32 %v988, %v1195
      %v1204 = vld [vmem:[%s11] sm:$0xff]
      %v1205 = vld [vmem:[%s11 + $0x8] sm:$0xff]
      %v1206 = vld [vmem:[%s11 + $0x10] sm:$0xff]
      %v1207 = vld [vmem:[%s11 + $0x18] sm:$0xff]
      %v1208 = vld [vmem:[%s11 + $0x20] sm:$0xff]
      %v1209 = vld [vmem:[%s11 + $0x28] sm:$0xff]
      %v1210 = vld [vmem:[%s11 + $0x30] sm:$0xff]
      %v1211 = vld [vmem:[%s11 + $0x38] sm:$0xff]
      %v1212 = vld [vmem:[%s11 + $0x40] sm:$0xff]
      %v1213 = vld [vmem:[%s11 + $0x48] sm:$0xff]
      %v1214 = vld [vmem:[%s11 + $0x50] sm:$0xff]
      %v1215 = vld [vmem:[%s11 + $0x58] sm:$0xff]
      %v1216 = vld [vmem:[%s12] sm:$0x1]
      %v1218 = vlaneseq
      %v1219 = vshrl.u32 %v1218, 7
      %v1220 = vsub.s32 0, %v1219
      %v1221 = vrot.slane %v1216, %v1220
      %v1224 = vsel %vm989, %v1196, 0
      %v1227 = vsel %vm989, %v1197, 0
      %v1230 = vsel %vm989, %v1198, 0
      %v1233 = vsel %vm989, %v1199, 0
      %v1236 = vsel %vm989, %v1200, 0
      %v1239 = vsel %vm989, %v1201, 0
      %v1242 = vsel %vm989, %v1202, 0
      %v1245 = vsel %vm989, %v1203, 0
      %1247 = vmatprep.subr.mxu0 0.0
      %1248 = vmatpush1.msra.mxu0 %v1204
      %1249 = vmatprep.subr.mxu0 0.0
      %1250 = vmatpush1.msra.mxu0 %v1205
      %1251 = vmatprep.subr.mxu0 0.0
      %1252 = vmatpush1.msra.mxu0 %v1206
      %1253 = vmatprep.subr.mxu0 0.0
      %1254 = vmatpush1.msra.mxu0 %v1207
      %1255 = vmatprep.subr.mxu0 0.0
      %1256 = vmatpush1.msra.mxu0 %v1208
      %1257 = vmatprep.subr.mxu0 0.0
      %1258 = vmatpush1.msra.mxu0 %v1209
      %1259 = vmatprep.subr.mxu0 0.0
      %1260 = vmatpush1.msra.mxu0 %v1210
      %1261 = vmatprep.subr.mxu0 0.0
      %1262 = vmatpush1.msra.mxu0 %v1211
      %1263 = vmatprep.subr.mxu0 0.0
      %1264 = vmatpush1.msra.mxu0 %v1212
      %1265 = vmatprep.subr.mxu0 0.0
      %1266 = vmatpush1.msra.mxu0 %v1213
      %1267 = vmatprep.subr.mxu0 0.0
      %1268 = vmatpush1.msra.mxu0 %v1214
      %1269 = vmatprep.subr.mxu0 0.0
      %1270 = vmatpush1.msra.mxu0 %v1215
      %1271 = vmatprep.subr.mxu0 0.0
      %1272 = vmatpush1.msra.mxu0 0.0
      %1273 = vmatprep.subr.mxu0 0.0
      %1274 = vmatpush1.msra.mxu0 0.0
      %1275 = vmatprep.subr.mxu0 0.0
      %1276 = vmatpush1.msra.mxu0 0.0
      %1277 = vmatprep.subr.mxu0 0.0
      %1278 = vmatpush1.msra.mxu0 0.0
      %1279 = vmatprep.subr.mxu0 0.0
      %1280 = vmatpush1.msra.mxu0 0.0
      %1281 = vmatprep.subr.mxu0 0.0
      %1282 = vmatpush1.msra.mxu0 0.0
      %1283 = vmatprep.subr.mxu0 0.0
      %1284 = vmatpush1.msra.mxu0 0.0
      %1285 = vmatprep.subr.mxu0 0.0
      %1286 = vmatpush1.msra.mxu0 0.0
      %1287 = vmatprep.subr.mxu0 0.0
      %1288 = vmatpush1.msra.mxu0 0.0
      %1289 = vmatprep.subr.mxu0 0.0
      %1290 = vmatpush1.msra.mxu0 0.0
      %1291 = vmatprep.subr.mxu0 0.0
      %1292 = vmatpush1.msra.mxu0 0.0
      %1293 = vmatprep.subr.mxu0 0.0
      %1294 = vmatpush1.msra.mxu0 0.0
      %1295 = vmatprep.subr.mxu0 0.0
      %1296 = vmatpush1.msra.mxu0 0.0
      %1297 = vmatprep.subr.mxu0 0.0
      %1298 = vmatpush1.msra.mxu0 0.0
      %1299 = vmatprep.subr.mxu0 0.0
      %1300 = vmatpush1.msra.mxu0 0.0
      %1301 = vmatprep.subr.mxu0 0.0
      %1302 = vmatpush1.msra.mxu0 0.0
      %1303 = vmatprep.subr.mxu0 0.0
      %1304 = vmatpush1.msra.mxu0 0.0
      %1305 = vmatprep.subr.mxu0 0.0
      %1306 = vmatpush1.msra.mxu0 0.0
      %1307 = vmatprep.subr.mxu0 0.0
      %1308 = vmatpush1.msra.mxu0 0.0
      %1309 = vmatprep.subr.mxu0 0.0
      %1310 = vmatpush1.msra.mxu0 0.0
      %1311 = vmatprep.mubr.f32.mxu0 0.0
      %1312 = vmatmul.mubr.f32.gmra.mrb[0].mxu0 %v1224
      %v1313 = vpop.f32.mrb[0].mxu0
      %v1314 = vadd.f32 %v1221, %v1313
      %v1315 = vpop.f32.mrb[0].mxu0
      %1316 = vmatprep.mubr.f32.mxu0 0.0
      %1317 = vmatmul.mubr.f32.gmra.mrb[0].mxu0 %v1227
      %v1318 = vpop.f32.mrb[0].mxu0
      %v1319 = vadd.f32 %v1221, %v1318
      %v1320 = vpop.f32.mrb[0].mxu0
      %1321 = vmatprep.mubr.f32.mxu0 0.0
      %1322 = vmatmul.mubr.f32.gmra.mrb[0].mxu0 %v1230
      %v1323 = vpop.f32.mrb[0].mxu0
      %v1324 = vadd.f32 %v1221, %v1323
      %v1325 = vpop.f32.mrb[0].mxu0
      %1326 = vmatprep.mubr.f32.mxu0 0.0
      %1327 = vmatmul.mubr.f32.gmra.mrb[0].mxu0 %v1233
      %v1328 = vpop.f32.mrb[0].mxu0
      %v1329 = vadd.f32 %v1221, %v1328
      %v1330 = vpop.f32.mrb[0].mxu0
      %1331 = vmatprep.mubr.f32.mxu0 0.0
      %1332 = vmatmul.mubr.f32.gmra.mrb[0].mxu0 %v1236
      %v1333 = vpop.f32.mrb[0].mxu0
      %v1334 = vadd.f32 %v1221, %v1333
      %v1335 = vpop.f32.mrb[0].mxu0
      %1336 = vmatprep.mubr.f32.mxu0 0.0
      %1337 = vmatmul.mubr.f32.gmra.mrb[0].mxu0 %v1239
      %v1338 = vpop.f32.mrb[0].mxu0
      %v1339 = vadd.f32 %v1221, %v1338
      %v1340 = vpop.f32.mrb[0].mxu0
      %1341 = vmatprep.mubr.f32.mxu0 0.0
      %1342 = vmatmul.mubr.f32.gmra.mrb[0].mxu0 %v1242
      %v1343 = vpop.f32.mrb[0].mxu0
      %v1344 = vadd.f32 %v1221, %v1343
      %v1345 = vpop.f32.mrb[0].mxu0
      %1346 = vmatprep.mubr.f32.mxu0 0.0
      %1347 = vmatmul.mubr.f32.gmra.mrb[0].mxu0 %v1245
      %v1348 = vpop.f32.mrb[0].mxu0
      %v1349 = vadd.f32 %v1221, %v1348
      %v1350 = vpop.f32.mrb[0].mxu0
      %1351 = vdwg.mxu0
      %vm1352 = vcmask 195584
      %1353 = vst.msk [vmem:[%s500] sm:$0xff] %vm1352, %v1314
      %1354 = vst.msk [vmem:[%s500 + $0x8] sm:$0xff] %vm1352, %v1319
      %1355 = vst.msk [vmem:[%s500 + $0x10] sm:$0xff] %vm1352, %v1324
      %1356 = vst.msk [vmem:[%s500 + $0x18] sm:$0xff] %vm1352, %v1329
      %1357 = vst.msk [vmem:[%s500 + $0x20] sm:$0xff] %vm1352, %v1334
      %1358 = vst.msk [vmem:[%s500 + $0x28] sm:$0xff] %vm1352, %v1339
      %1359 = vst.msk [vmem:[%s500 + $0x30] sm:$0xff] %vm1352, %v1344
      %1360 = vst.msk [vmem:[%s500 + $0x38] sm:$0xff] %vm1352, %v1349
      %p1361 = scmp.lt.s32.totalorder %s24, 1
      %s1362 = scalar_select %p1361, %s24, 1
      %s1363 = smul.addr %s1362, 8
      %s1364 = smul.addr %s1363, 8
      %s1365 = scalar_lea.vmem %s13, %s1364
      // Predicated region
      $region73: #{model_forward.8} parent=71 // pred_check
        %p1366 = pneg %p335
      $region74: #{model_forward.8} parent=71 // pred_check_branch
        %1368 = sbr.rel (%p1366) target = $region76
      $region75: #{model_forward.8} parent=71 // pred_region
        _
      $region76: #{model_forward.8} parent=71 // pred_fallthru
        _
    $region72: #{model_forward.8} parent=5 // pred_fallthru
      _
    %p1369 = scmp.le.s32.totalorder 2, %s19
    // Predicated region
    $region77: #{model_forward.8} parent=5 // pred_check
      %p1370 = pneg %p1369
    $region78: #{model_forward.8} parent=5 // pred_check_branch
      %1372 = sbr.rel (%p1370) target = $region80
    $region79: #{model_forward.8} parent=5 // pred_region
      %s1373 = ssub.s32 %s19, 2
      // Predicated region
      $region81: #{model_forward.8} parent=79 // pred_check
        %p1374 = pneg %p341
      $region82: #{model_forward.8} parent=79 // pred_check_branch
        %1376 = sbr.rel (%p1374) target = $region84
      $region83: #{model_forward.8} parent=79 // pred_region
        %p1377 = scmp.lt.s32.totalorder %s25, 1
        %s1378 = scalar_select %p1377, %s25, 1
        %s1379 = smul.addr %s1378, 8
        %s1380 = smul.addr %s1379, 8
        %s1381 = scalar_lea.vmem %s13, %s1380
      $region84: #{model_forward.8} parent=79 // pred_fallthru
        _
    $region80: #{model_forward.8} parent=5 // pred_fallthru
      _
  $region6: #{model_forward.8} parent=0 // loop_footer
    %s23 = sadd.s32 1, %s19
  $region7: #{model_forward.8} parent=0 // loop_footer_branch
    %18 = sbr.rel target = $region3
  $region8: #{model_forward.8} parent=0 // loop_exit
    _

// kernel: model_forward.9
$region0: #{model_forward.9}
  #allocation0 [shape = 'u32[]', space=smem, size = 0x4, offset = 0x4, fixed_abs, tag = 'smem constant byte address 0x4 - core index']
  #allocation1 [shape = 'u32[144,128]{1,0:T(1,128)}', space=vmem, size = 0x12000, scoped, tag = 'internal scratch']
  %s0 = inlined_call_operand.vmem [shape: f32[2,64,24], index: 0, kind: input, shape index: {}]
  %s1 = inlined_call_operand.vmem [shape: f32[24,1280], index: 1, kind: input, shape index: {}]
  %s2 = inlined_call_operand.vmem [shape: f32[1,1280], index: 2, kind: input, shape index: {}]
  %s3 = inlined_call_operand.vmem [shape: f32[1280,10], index: 3, kind: input, shape index: {}]
  %s4 = inlined_call_operand.vmem [shape: f32[1,10], index: 4, kind: input, shape index: {}]
  %s5 = inlined_call_operand.hbm [shape: f32[2,1,10], index: 5, kind: output, shape index: {}]
  %s6 = sld [smem:[#allocation0]]
  $region53: #{model_forward.9} parent=0
    _
  %s8 = ssub.s32 1, %s6
  %s9 = scalar_select 0, %s8, %s6
  $region1: #{model_forward.9} parent=0
    #allocation2 [shape = 'u8[1024]{0}', space=vmem, size = 0x400, scoped, tag = 'output window, operand 0']
    #allocation3 [shape = 's32[2]{0}', space=sflag, size = 0x8, scoped, tag = 'scoped memory for model_forward.9']
    %10 = vsyncpa [#allocation3], 0
    %s11 = scalar_lea.sflag [#allocation3], 1
    %12 = vsyncpa %s11, 0
    loop: start=0, step=1, limit=4
    $region2: #{model_forward.9} parent=1 // loop_pre_header
      _
    $region3: #{model_forward.9} parent=1 // loop_header
      %s14 = sphi 0, %s18
      %p15 = scmp.ge.s32.totalorder %s14, 4
      %s24 = sphi 0, %s26
      %s27 = sphi 0, %s24
      %s28 = sphi 0, %s27
      %s44 = sphi 0, %s28
      %s48 = sphi 0, %s48
      %s50 = sphi 0, %s48
      %s51 = sphi 0, %s50
      %s65 = sphi 0, %s51
      %s69 = sphi 0, %s69
      %s71 = sphi 0, %s69
      %s72 = sphi 0, %s71
      %s86 = sphi 0, %s72
      %s90 = sphi 0, %s90
      %s92 = sphi 0, %s90
      %s93 = sphi 0, %s92
      %s107 = sphi 0, %s93
      %s111 = sphi 0, %s111
      %s113 = sphi 0, %s111
      %s114 = sphi 0, %s113
      %s128 = sphi 0, %s114
      %s134 = sphi 0, %s136
      %s137 = sphi 0, %s134
      %s138 = sphi 0, %s137
      %s154 = sphi 0, %s138
    $region4: #{model_forward.9} parent=1 // loop_header_branch
      %17 = sbr.rel (%p15) target = $region8
    $region5: #{model_forward.9} parent=1 // loop_body
      %s19 = ssub.s32 %s14, 1
      %s20 = ssub.s32 %s14, 2
      %s21 = sadd.s32 %s14, 1
      %s22 = ssub.s32 %s14, %s21
      %p23 = scmp.eq.s32.totalorder %s22, 0
      %s25 = sadd.s32 %s24, 1
      %s26 = scalar_select %p23, %s24, %s25
      %p29 = pneg %p23
      %p30 = scmp.eq.s32.totalorder %s14, 1
      %p31 = por %p29, %p30
      %p32 = scmp.ne.s32.totalorder %s24, %s27
      %p33 = scmp.eq.s32.totalorder %s14, 0
      %p34 = por %p32, %p33
      %p35 = scmp.ne.s32.totalorder %s24, %s27
      %p36 = scmp.eq.s32.totalorder %s19, 1
      %p37 = por %p35, %p36
      %p38 = scmp.ne.s32.totalorder %s27, %s28
      %p39 = scmp.eq.s32.totalorder %s19, 0
      %p40 = por %p38, %p39
      %p41 = scmp.ne.s32.totalorder %s27, %s28
      %p42 = scmp.eq.s32.totalorder %s20, 1
      %p43 = por %p41, %p42
      %p45 = scmp.ne.s32.totalorder %s28, %s44
      %p46 = scmp.eq.s32.totalorder %s20, 0
      %p47 = por %p45, %p46
      %s49 = sadd.s32 %s48, 1
      %p52 = scmp.eq.s32.totalorder %s14, 1
      %p53 = scmp.ne.s32.totalorder %s48, %s50
      %p54 = scmp.eq.s32.totalorder %s14, 0
      %p55 = por %p53, %p54
      %p56 = scmp.ne.s32.totalorder %s48, %s50
      %p57 = scmp.eq.s32.totalorder %s19, 1
      %p58 = por %p56, %p57
      %p59 = scmp.ne.s32.totalorder %s50, %s51
      %p60 = scmp.eq.s32.totalorder %s19, 0
      %p61 = por %p59, %p60
      %p62 = scmp.ne.s32.totalorder %s50, %s51
      %p63 = scmp.eq.s32.totalorder %s20, 1
      %p64 = por %p62, %p63
      %p66 = scmp.ne.s32.totalorder %s51, %s65
      %p67 = scmp.eq.s32.totalorder %s20, 0
      %p68 = por %p66, %p67
      %s70 = sadd.s32 %s69, 1
      %p73 = scmp.eq.s32.totalorder %s14, 1
      %p74 = scmp.ne.s32.totalorder %s69, %s71
      %p75 = scmp.eq.s32.totalorder %s14, 0
      %p76 = por %p74, %p75
      %p77 = scmp.ne.s32.totalorder %s69, %s71
      %p78 = scmp.eq.s32.totalorder %s19, 1
      %p79 = por %p77, %p78
      %p80 = scmp.ne.s32.totalorder %s71, %s72
      %p81 = scmp.eq.s32.totalorder %s19, 0
      %p82 = por %p80, %p81
      %p83 = scmp.ne.s32.totalorder %s71, %s72
      %p84 = scmp.eq.s32.totalorder %s20, 1
      %p85 = por %p83, %p84
      %p87 = scmp.ne.s32.totalorder %s72, %s86
      %p88 = scmp.eq.s32.totalorder %s20, 0
      %p89 = por %p87, %p88
      %s91 = sadd.s32 %s90, 1
      %p94 = scmp.eq.s32.totalorder %s14, 1
      %p95 = scmp.ne.s32.totalorder %s90, %s92
      %p96 = scmp.eq.s32.totalorder %s14, 0
      %p97 = por %p95, %p96
      %p98 = scmp.ne.s32.totalorder %s90, %s92
      %p99 = scmp.eq.s32.totalorder %s19, 1
      %p100 = por %p98, %p99
      %p101 = scmp.ne.s32.totalorder %s92, %s93
      %p102 = scmp.eq.s32.totalorder %s19, 0
      %p103 = por %p101, %p102
      %p104 = scmp.ne.s32.totalorder %s92, %s93
      %p105 = scmp.eq.s32.totalorder %s20, 1
      %p106 = por %p104, %p105
      %p108 = scmp.ne.s32.totalorder %s93, %s107
      %p109 = scmp.eq.s32.totalorder %s20, 0
      %p110 = por %p108, %p109
      %s112 = sadd.s32 %s111, 1
      %p115 = scmp.eq.s32.totalorder %s14, 1
      %p116 = scmp.ne.s32.totalorder %s111, %s113
      %p117 = scmp.eq.s32.totalorder %s14, 0
      %p118 = por %p116, %p117
      %p119 = scmp.ne.s32.totalorder %s111, %s113
      %p120 = scmp.eq.s32.totalorder %s19, 1
      %p121 = por %p119, %p120
      %p122 = scmp.ne.s32.totalorder %s113, %s114
      %p123 = scmp.eq.s32.totalorder %s19, 0
      %p124 = por %p122, %p123
      %p125 = scmp.ne.s32.totalorder %s113, %s114
      %p126 = scmp.eq.s32.totalorder %s20, 1
      %p127 = por %p125, %p126
      %p129 = scmp.ne.s32.totalorder %s114, %s128
      %p130 = scmp.eq.s32.totalorder %s20, 0
      %p131 = por %p129, %p130
      %s132 = ssub.s32 %s14, %s21
      %p133 = scmp.eq.s32.totalorder %s132, 0
      %s135 = sadd.s32 %s134, 1
      %s136 = scalar_select %p133, %s134, %s135
      %p139 = pneg %p133
      %p140 = scmp.eq.s32.totalorder %s14, 1
      %p141 = por %p139, %p140
      %p142 = scmp.ne.s32.totalorder %s134, %s137
      %p143 = scmp.eq.s32.totalorder %s14, 0
      %p144 = por %p142, %p143
      %p145 = scmp.ne.s32.totalorder %s134, %s137
      %p146 = scmp.eq.s32.totalorder %s19, 1
      %p147 = por %p145, %p146
      %p148 = scmp.ne.s32.totalorder %s137, %s138
      %p149 = scmp.eq.s32.totalorder %s19, 0
      %p150 = por %p148, %p149
      %p151 = scmp.ne.s32.totalorder %s137, %s138
      %p152 = scmp.eq.s32.totalorder %s20, 1
      %p153 = por %p151, %p152
      %p155 = scmp.ne.s32.totalorder %s138, %s154
      %p156 = scmp.eq.s32.totalorder %s20, 0
      %p157 = por %p155, %p156
      %p158 = scmp.le.s32.totalorder 1, %s14
      %p159 = scmp.lt.s32.totalorder %s14, 3
      %p160 = pnand %p158, %p159
      %p161 = pneg %p160
      // Predicated region
      $region9: #{model_forward.9} parent=5 // pred_check
        _
      $region10: #{model_forward.9} parent=5 // pred_check_branch
        %163 = sbr.rel (%p160) target = $region12
      $region11: #{model_forward.9} parent=5 // pred_region
        %s164 = ssub.s32 %s14, 1
        // Predicated region
        $region13: #{model_forward.9} parent=11 // pred_check
          %p165 = pneg %p61
        $region14: #{model_forward.9} parent=11 // pred_check_branch
          %167 = sbr.rel (%p165) target = $region16
        $region15: #{model_forward.9} parent=11 // pred_region
          _
        $region16: #{model_forward.9} parent=11 // pred_fallthru
          _
        // Predicated region
        $region17: #{model_forward.9} parent=11 // pred_check
          %p168 = pneg %p82
        $region18: #{model_forward.9} parent=11 // pred_check_branch
          %170 = sbr.rel (%p168) target = $region20
        $region19: #{model_forward.9} parent=11 // pred_region
          _
        $region20: #{model_forward.9} parent=11 // pred_fallthru
          _
        // Predicated region
        $region21: #{model_forward.9} parent=11 // pred_check
          %p171 = pneg %p103
        $region22: #{model_forward.9} parent=11 // pred_check_branch
          %173 = sbr.rel (%p171) target = $region24
        $region23: #{model_forward.9} parent=11 // pred_region
          _
        $region24: #{model_forward.9} parent=11 // pred_fallthru
          _
        // Predicated region
        $region25: #{model_forward.9} parent=11 // pred_check
          %p174 = pneg %p124
        $region26: #{model_forward.9} parent=11 // pred_check_branch
          %176 = sbr.rel (%p174) target = $region28
        $region27: #{model_forward.9} parent=11 // pred_region
          _
        $region28: #{model_forward.9} parent=11 // pred_fallthru
          _
      $region12: #{model_forward.9} parent=5 // pred_fallthru
        _
      %p177 = scmp.lt.s32.totalorder %s14, 2
      // Predicated region
      $region29: #{model_forward.9} parent=5 // pred_check
        %p178 = pneg %p177
      $region30: #{model_forward.9} parent=5 // pred_check_branch
        %180 = sbr.rel (%p178) target = $region32
      $region31: #{model_forward.9} parent=5 // pred_region
        // Predicated region
        $region33: #{model_forward.9} parent=31 // pred_check
          %p181 = pneg %p34
        $region34: #{model_forward.9} parent=31 // pred_check_branch
          %183 = sbr.rel (%p181) target = $region36
        $region35: #{model_forward.9} parent=31 // pred_region
          %p184 = scmp.lt.s32.totalorder %s14, 1
          %s185 = scalar_select %p184, %s14, 1
          %s186 = smul.addr %s185, 8
          %s187 = smul.addr %s186, 8
          %s188 = scalar_lea.vmem %s0, %s187
        $region36: #{model_forward.9} parent=31 // pred_fallthru
          _
      $region32: #{model_forward.9} parent=5 // pred_fallthru
        _
      %p189 = scmp.le.s32.totalorder 1, %s14
      %p190 = scmp.lt.s32.totalorder %s14, 3
      %p191 = pnand %p189, %p190
      %p192 = pneg %p191
      // Predicated region
      $region37: #{model_forward.9} parent=5 // pred_check
        _
      $region38: #{model_forward.9} parent=5 // pred_check_branch
        %194 = sbr.rel (%p191) target = $region40
      $region39: #{model_forward.9} parent=5 // pred_region
        %s195 = ssub.s32 %s14, 1
        %p196 = scmp.lt.s32.totalorder %s19, 1
        %s197 = scalar_select %p196, %s19, 1
        %s198 = smul.addr %s197, 8
        %s199 = smul.addr %s198, 8
        %s200 = scalar_lea.vmem %s0, %s199
        %p201 = pneg %p40
        %p202 = pneg %p37
        %p203 = pneg %p61
        %p204 = pneg %p58
        %p205 = pneg %p82
        %p206 = pneg %p79
        %p207 = pneg %p103
        %p208 = pneg %p100
        %p209 = pneg %p124
        %p210 = pneg %p121
        %p211 = pneg %p150
        %p212 = pneg %p147
        %s213 = sand.u32 %s137, 1
        %s214 = scalar_lea.sflag [#allocation3], %s213
        %s215 = sand.u32 %s137, 1
        %s216 = scalar_lea.vmem [#allocation2], %s215
        %p217 = scmp.lt.s32.totalorder %s19, 1
        %s218 = scalar_select %p217, %s19, 1
        %s219 = smul.addr %s218, 8
        %s220 = smul.addr %s219, 8
        %s221 = scalar_lea.vmem %s0, %s220
        %v222 = vld [vmem:[%s221] sm:$0xff]
        %v223 = vld [vmem:[%s221 + $0x8] sm:$0xff]
        %v224 = vld [vmem:[%s221 + $0x10] sm:$0xff]
        %v225 = vld [vmem:[%s221 + $0x18] sm:$0xff]
        %v226 = vld [vmem:[%s221 + $0x20] sm:$0xff]
        %v227 = vld [vmem:[%s221 + $0x28] sm:$0xff]
        %v228 = vld [vmem:[%s221 + $0x30] sm:$0xff]
        %v229 = vld [vmem:[%s221 + $0x38] sm:$0xff]
        %v230 = vld [vmem:[%s1] sm:$0xff]
        %v231 = vld [vmem:[%s1 + $0x8] sm:$0xff]
        %v232 = vld [vmem:[%s1 + $0x10] sm:$0xff]
        %v233 = vld [vmem:[%s1 + $0x18] sm:$0xff]
        %v234 = vld [vmem:[%s1 + $0x20] sm:$0xff]
        %v235 = vld [vmem:[%s1 + $0x28] sm:$0xff]
        %v236 = vld [vmem:[%s1 + $0x30] sm:$0xff]
        %v237 = vld [vmem:[%s1 + $0x38] sm:$0xff]
        %v238 = vld [vmem:[%s1 + $0x40] sm:$0xff]
        %v239 = vld [vmem:[%s1 + $0x48] sm:$0xff]
        %v240 = vld [vmem:[%s1 + $0x50] sm:$0xff]
        %v241 = vld [vmem:[%s1 + $0x58] sm:$0xff]
        %v242 = vld [vmem:[%s1 + $0x60] sm:$0xff]
        %v243 = vld [vmem:[%s1 + $0x68] sm:$0xff]
        %v244 = vld [vmem:[%s1 + $0x70] sm:$0xff]
        %v245 = vld [vmem:[%s1 + $0x78] sm:$0xff]
        %v246 = vld [vmem:[%s1 + $0x80] sm:$0xff]
        %v247 = vld [vmem:[%s1 + $0x88] sm:$0xff]
        %v248 = vld [vmem:[%s1 + $0x90] sm:$0xff]
        %v249 = vld [vmem:[%s1 + $0x98] sm:$0xff]
        %v250 = vld [vmem:[%s1 + $0xa0] sm:$0xff]
        %v251 = vld [vmem:[%s1 + $0xa8] sm:$0xff]
        %v252 = vld [vmem:[%s1 + $0xb0] sm:$0xff]
        %v253 = vld [vmem:[%s1 + $0xb8] sm:$0xff]
        %v254 = vld [vmem:[%s1 + $0xc0] sm:$0xff]
        %v255 = vld [vmem:[%s1 + $0xc8] sm:$0xff]
        %v256 = vld [vmem:[%s1 + $0xd0] sm:$0xff]
        %v257 = vld [vmem:[%s1 + $0xd8] sm:$0xff]
        %v258 = vld [vmem:[%s1 + $0xe0] sm:$0xff]
        %v259 = vld [vmem:[%s1 + $0xe8] sm:$0xff]
        %v260 = vld [vmem:[%s2] sm:$0xff]
        %v261 = vld [vmem:[%s2 + $0x8] sm:$0x3]
        %v264 = vlaneseq
        %v265 = vshrl.u32 %v264, 7
        %v266 = vsub.s32 0, %v265
        %v267 = vrot.slane %v260, %v266
        %v268 = vlaneseq
        %v269 = vshrl.u32 %v268, 7
        %v270 = vsub.s32 1, %v269
        %v271 = vrot.slane %v260, %v270
        %v272 = vlaneseq
        %v273 = vshrl.u32 %v272, 7
        %v274 = vsub.s32 2, %v273
        %v275 = vrot.slane %v260, %v274
        %v276 = vlaneseq
        %v277 = vshrl.u32 %v276, 7
        %v278 = vsub.s32 3, %v277
        %v279 = vrot.slane %v260, %v278
        %v280 = vlaneseq
        %v281 = vshrl.u32 %v280, 7
        %v282 = vsub.s32 4, %v281
        %v283 = vrot.slane %v260, %v282
        %v284 = vlaneseq
        %v285 = vshrl.u32 %v284, 7
        %v286 = vsub.s32 5, %v285
        %v287 = vrot.slane %v260, %v286
        %v288 = vlaneseq
        %v289 = vshrl.u32 %v288, 7
        %v290 = vsub.s32 6, %v289
        %v291 = vrot.slane %v260, %v290
        %v292 = vlaneseq
        %v293 = vshrl.u32 %v292, 7
        %v294 = vsub.s32 7, %v293
        %v295 = vrot.slane %v260, %v294
        %v296 = vlaneseq
        %v297 = vshrl.u32 %v296, 7
        %v298 = vsub.s32 0, %v297
        %v299 = vrot.slane %v261, %v298
        %v300 = vlaneseq
        %v301 = vshrl.u32 %v300, 7
        %v302 = vsub.s32 1, %v301
        %v303 = vrot.slane %v261, %v302
        %vm314 = vcmask 195584
        %v316 = vsel %vm314, %v222, 0
        %v319 = vsel %vm314, %v223, 0
        %v322 = vsel %vm314, %v224, 0
        %v325 = vsel %vm314, %v225, 0
        %v328 = vsel %vm314, %v226, 0
        %v331 = vsel %vm314, %v227, 0
        %v334 = vsel %vm314, %v228, 0
        %v337 = vsel %vm314, %v229, 0
        %339 = vmatprep.subr.mxu0 %v231
        %340 = vmatpush1.msra.mxu0 %v230
        %341 = vmatprep.subr.mxu0 %v241
        %342 = vmatpush1.msra.mxu0 %v240
        %343 = vmatprep.subr.mxu0 %v251
        %344 = vmatpush1.msra.mxu0 %v250
        %345 = vmatprep.subr.mxu0 0.0
        %346 = vmatpush1.msra.mxu0 0.0
        %347 = vmatprep.subr.mxu0 0.0
        %348 = vmatpush1.msra.mxu0 0.0
        %349 = vmatprep.subr.mxu0 0.0
        %350 = vmatpush1.msra.mxu0 0.0
        %351 = vmatprep.subr.mxu0 0.0
        %352 = vmatpush1.msra.mxu0 0.0
        %353 = vmatprep.subr.mxu0 0.0
        %354 = vmatpush1.msra.mxu0 0.0
        %355 = vmatprep.subr.mxu0 0.0
        %356 = vmatpush1.msra.mxu0 0.0
        %357 = vmatprep.subr.mxu0 0.0
        %358 = vmatpush1.msra.mxu0 0.0
        %359 = vmatprep.subr.mxu0 0.0
        %360 = vmatpush1.msra.mxu0 0.0
        %361 = vmatprep.subr.mxu0 0.0
        %362 = vmatpush1.msra.mxu0 0.0
        %363 = vmatprep.subr.mxu0 0.0
        %364 = vmatpush1.msra.mxu0 0.0
        %365 = vmatprep.subr.mxu0 0.0
        %366 = vmatpush1.msra.mxu0 0.0
        %367 = vmatprep.subr.mxu0 0.0
        %368 = vmatpush1.msra.mxu0 0.0
        %369 = vmatprep.subr.mxu0 0.0
        %370 = vmatpush1.msra.mxu0 0.0
        %371 = vmatprep.subr.mxu0 0.0
        %372 = vmatpush1.msra.mxu0 0.0
        %373 = vmatprep.subr.mxu0 0.0
        %374 = vmatpush1.msra.mxu0 0.0
        %375 = vmatprep.subr.mxu0 0.0
        %376 = vmatpush1.msra.mxu0 0.0
        %377 = vmatprep.subr.mxu0 0.0
        %378 = vmatpush1.msra.mxu0 0.0
        %379 = vmatprep.subr.mxu0 0.0
        %380 = vmatpush1.msra.mxu0 0.0
        %381 = vmatprep.subr.mxu0 0.0
        %382 = vmatpush1.msra.mxu0 0.0
        %383 = vmatprep.subr.mxu0 0.0
        %384 = vmatpush1.msra.mxu0 0.0
        %385 = vmatprep.subr.mxu0 0.0
        %386 = vmatpush1.msra.mxu0 0.0
        %387 = vmatprep.subr.mxu0 0.0
        %388 = vmatpush1.msra.mxu0 0.0
        %389 = vmatprep.subr.mxu0 0.0
        %390 = vmatpush1.msra.mxu0 0.0
        %391 = vmatprep.subr.mxu0 0.0
        %392 = vmatpush1.msra.mxu0 0.0
        %393 = vmatprep.subr.mxu0 0.0
        %394 = vmatpush1.msra.mxu0 0.0
        %395 = vmatprep.subr.mxu0 0.0
        %396 = vmatpush1.msra.mxu0 0.0
        %397 = vmatprep.subr.mxu0 0.0
        %398 = vmatpush1.msra.mxu0 0.0
        %399 = vmatprep.subr.mxu0 0.0
        %400 = vmatpush1.msra.mxu0 0.0
        %401 = vmatprep.subr.mxu0 0.0
        %402 = vmatpush1.msra.mxu0 0.0
        %403 = vmatprep.mubr.f32.mxu0 0.0
        %404 = vmatmul.mubr.f32.gmra.mrb[0].mxu0 %v316
        %v405 = vpop.f32.mrb[0].mxu0
        %v406 = vadd.f32 %v267, %v405
        %v407 = vpop.f32.mrb[0].mxu0
        %v408 = vadd.f32 %v271, %v407
        %409 = vmatprep.mubr.f32.mxu0 0.0
        %410 = vmatmul.mubr.f32.gmra.mrb[0].mxu0 %v319
        %v411 = vpop.f32.mrb[0].mxu0
        %v412 = vadd.f32 %v267, %v411
        %v413 = vpop.f32.mrb[0].mxu0
        %v414 = vadd.f32 %v271, %v413
        %415 = vmatprep.mubr.f32.mxu0 0.0
        %416 = vmatmul.mubr.f32.gmra.mrb[0].mxu0 %v322
        %v417 = vpop.f32.mrb[0].mxu0
        %v418 = vadd.f32 %v267, %v417
        %v419 = vpop.f32.mrb[0].mxu0
        %v420 = vadd.f32 %v271, %v419
        %421 = vmatprep.mubr.f32.mxu0 0.0
        %422 = vmatmul.mubr.f32.gmra.mrb[0].mxu0 %v325
        %v423 = vpop.f32.mrb[0].mxu0
        %v424 = vadd.f32 %v267, %v423
        %v425 = vpop.f32.mrb[0].mxu0
        %v426 = vadd.f32 %v271, %v425
        %427 = vmatprep.mubr.f32.mxu0 0.0
        %428 = vmatmul.mubr.f32.gmra.mrb[0].mxu0 %v328
        %v429 = vpop.f32.mrb[0].mxu0
        %v430 = vadd.f32 %v267, %v429
        %v431 = vpop.f32.mrb[0].mxu0
        %v432 = vadd.f32 %v271, %v431
        %433 = vmatprep.mubr.f32.mxu0 0.0
        %434 = vmatmul.mubr.f32.gmra.mrb[0].mxu0 %v331
        %v435 = vpop.f32.mrb[0].mxu0
        %v436 = vadd.f32 %v267, %v435
        %v437 = vpop.f32.mrb[0].mxu0
        %v438 = vadd.f32 %v271, %v437
        %439 = vmatprep.mubr.f32.mxu0 0.0
        %440 = vmatmul.mubr.f32.gmra.mrb[0].mxu0 %v334
        %v441 = vpop.f32.mrb[0].mxu0
        %v442 = vadd.f32 %v267, %v441
        %v443 = vpop.f32.mrb[0].mxu0
        %v444 = vadd.f32 %v271, %v443
        %445 = vmatprep.mubr.f32.mxu0 0.0
        %446 = vmatmul.mubr.f32.gmra.mrb[0].mxu0 %v337
        %v447 = vpop.f32.mrb[0].mxu0
        %v448 = vadd.f32 %v267, %v447
        %v449 = vpop.f32.mrb[0].mxu0
        %v450 = vadd.f32 %v271, %v449
        %451 = vdwg.mxu0
        %452 = vmatprep.subr.mxu0 %v233
        %453 = vmatpush1.msra.mxu0 %v232
        %454 = vmatprep.subr.mxu0 %v243
        %455 = vmatpush1.msra.mxu0 %v242
        %456 = vmatprep.subr.mxu0 %v253
        %457 = vmatpush1.msra.mxu0 %v252
        %458 = vmatprep.subr.mxu0 0.0
        %459 = vmatpush1.msra.mxu0 0.0
        %460 = vmatprep.subr.mxu0 0.0
        %461 = vmatpush1.msra.mxu0 0.0
        %462 = vmatprep.subr.mxu0 0.0
        %463 = vmatpush1.msra.mxu0 0.0
        %464 = vmatprep.subr.mxu0 0.0
        %465 = vmatpush1.msra.mxu0 0.0
        %466 = vmatprep.subr.mxu0 0.0
        %467 = vmatpush1.msra.mxu0 0.0
        %468 = vmatprep.subr.mxu0 0.0
        %469 = vmatpush1.msra.mxu0 0.0
        %470 = vmatprep.subr.mxu0 0.0
        %471 = vmatpush1.msra.mxu0 0.0
        %472 = vmatprep.subr.mxu0 0.0
        %473 = vmatpush1.msra.mxu0 0.0
        %474 = vmatprep.subr.mxu0 0.0
        %475 = vmatpush1.msra.mxu0 0.0
        %476 = vmatprep.subr.mxu0 0.0
        %477 = vmatpush1.msra.mxu0 0.0
        %478 = vmatprep.subr.mxu0 0.0
        %479 = vmatpush1.msra.mxu0 0.0
        %480 = vmatprep.subr.mxu0 0.0
        %481 = vmatpush1.msra.mxu0 0.0
        %482 = vmatprep.subr.mxu0 0.0
        %483 = vmatpush1.msra.mxu0 0.0
        %484 = vmatprep.subr.mxu0 0.0
        %485 = vmatpush1.msra.mxu0 0.0
        %486 = vmatprep.subr.mxu0 0.0
        %487 = vmatpush1.msra.mxu0 0.0
        %488 = vmatprep.subr.mxu0 0.0
        %489 = vmatpush1.msra.mxu0 0.0
        %490 = vmatprep.subr.mxu0 0.0
        %491 = vmatpush1.msra.mxu0 0.0
        %492 = vmatprep.subr.mxu0 0.0
        %493 = vmatpush1.msra.mxu0 0.0
        %494 = vmatprep.subr.mxu0 0.0
        %495 = vmatpush1.msra.mxu0 0.0
        %496 = vmatprep.subr.mxu0 0.0
        %497 = vmatpush1.msra.mxu0 0.0
        %498 = vmatprep.subr.mxu0 0.0
        %499 = vmatpush1.msra.mxu0 0.0
        %500 = vmatprep.subr.mxu0 0.0
        %501 = vmatpush1.msra.mxu0 0.0
        %502 = vmatprep.subr.mxu0 0.0
        %503 = vmatpush1.msra.mxu0 0.0
        %504 = vmatprep.subr.mxu0 0.0
        %505 = vmatpush1.msra.mxu0 0.0
        %506 = vmatprep.subr.mxu0 0.0
        %507 = vmatpush1.msra.mxu0 0.0
        %508 = vmatprep.subr.mxu0 0.0
        %509 = vmatpush1.msra.mxu0 0.0
        %510 = vmatprep.subr.mxu0 0.0
        %511 = vmatpush1.msra.mxu0 0.0
        %512 = vmatprep.subr.mxu0 0.0
        %513 = vmatpush1.msra.mxu0 0.0
        %514 = vmatprep.subr.mxu0 0.0
        %515 = vmatpush1.msra.mxu0 0.0
        %516 = vmatprep.mubr.f32.mxu0 0.0
        %517 = vmatmul.mubr.f32.gmra.mrb[0].mxu0 %v316
        %v518 = vpop.f32.mrb[0].mxu0
        %v519 = vadd.f32 %v275, %v518
        %v520 = vpop.f32.mrb[0].mxu0
        %v521 = vadd.f32 %v279, %v520
        %522 = vmatprep.mubr.f32.mxu0 0.0
        %523 = vmatmul.mubr.f32.gmra.mrb[0].mxu0 %v319
        %v524 = vpop.f32.mrb[0].mxu0
        %v525 = vadd.f32 %v275, %v524
        %v526 = vpop.f32.mrb[0].mxu0
        %v527 = vadd.f32 %v279, %v526
        %528 = vmatprep.mubr.f32.mxu0 0.0
        %529 = vmatmul.mubr.f32.gmra.mrb[0].mxu0 %v322
        %v530 = vpop.f32.mrb[0].mxu0
        %v531 = vadd.f32 %v275, %v530
        %v532 = vpop.f32.mrb[0].mxu0
        %v533 = vadd.f32 %v279, %v532
        %534 = vmatprep.mubr.f32.mxu0 0.0
        %535 = vmatmul.mubr.f32.gmra.mrb[0].mxu0 %v325
        %v536 = vpop.f32.mrb[0].mxu0
        %v537 = vadd.f32 %v275, %v536
        %v538 = vpop.f32.mrb[0].mxu0
        %v539 = vadd.f32 %v279, %v538
        %540 = vmatprep.mubr.f32.mxu0 0.0
        %541 = vmatmul.mubr.f32.gmra.mrb[0].mxu0 %v328
        %v542 = vpop.f32.mrb[0].mxu0
        %v543 = vadd.f32 %v275, %v542
        %v544 = vpop.f32.mrb[0].mxu0
        %v545 = vadd.f32 %v279, %v544
        %546 = vmatprep.mubr.f32.mxu0 0.0
        %547 = vmatmul.mubr.f32.gmra.mrb[0].mxu0 %v331
        %v548 = vpop.f32.mrb[0].mxu0
        %v549 = vadd.f32 %v275, %v548
        %v550 = vpop.f32.mrb[0].mxu0
        %v551 = vadd.f32 %v279, %v550
        %552 = vmatprep.mubr.f32.mxu0 0.0
        %553 = vmatmul.mubr.f32.gmra.mrb[0].mxu0 %v334
        %v554 = vpop.f32.mrb[0].mxu0
        %v555 = vadd.f32 %v275, %v554
        %v556 = vpop.f32.mrb[0].mxu0
        %v557 = vadd.f32 %v279, %v556
        %558 = vmatprep.mubr.f32.mxu0 0.0
        %559 = vmatmul.mubr.f32.gmra.mrb[0].mxu0 %v337
        %v560 = vpop.f32.mrb[0].mxu0
        %v561 = vadd.f32 %v275, %v560
        %v562 = vpop.f32.mrb[0].mxu0
        %v563 = vadd.f32 %v279, %v562
        %564 = vdwg.mxu0
        %565 = vmatprep.subr.mxu0 %v235
        %566 = vmatpush1.msra.mxu0 %v234
        %567 = vmatprep.subr.mxu0 %v245
        %568 = vmatpush1.msra.mxu0 %v244
        %569 = vmatprep.subr.mxu0 %v255
        %570 = vmatpush1.msra.mxu0 %v254
        %571 = vmatprep.subr.mxu0 0.0
        %572 = vmatpush1.msra.mxu0 0.0
        %573 = vmatprep.subr.mxu0 0.0
        %574 = vmatpush1.msra.mxu0 0.0
        %575 = vmatprep.subr.mxu0 0.0
        %576 = vmatpush1.msra.mxu0 0.0
        %577 = vmatprep.subr.mxu0 0.0
        %578 = vmatpush1.msra.mxu0 0.0
        %579 = vmatprep.subr.mxu0 0.0
        %580 = vmatpush1.msra.mxu0 0.0
        %581 = vmatprep.subr.mxu0 0.0
        %582 = vmatpush1.msra.mxu0 0.0
        %583 = vmatprep.subr.mxu0 0.0
        %584 = vmatpush1.msra.mxu0 0.0
        %585 = vmatprep.subr.mxu0 0.0
        %586 = vmatpush1.msra.mxu0 0.0
        %587 = vmatprep.subr.mxu0 0.0
        %588 = vmatpush1.msra.mxu0 0.0
        %589 = vmatprep.subr.mxu0 0.0
        %590 = vmatpush1.msra.mxu0 0.0
        %591 = vmatprep.subr.mxu0 0.0
        %592 = vmatpush1.msra.mxu0 0.0
        %593 = vmatprep.subr.mxu0 0.0
        %594 = vmatpush1.msra.mxu0 0.0
        %595 = vmatprep.subr.mxu0 0.0
        %596 = vmatpush1.msra.mxu0 0.0
        %597 = vmatprep.subr.mxu0 0.0
        %598 = vmatpush1.msra.mxu0 0.0
        %599 = vmatprep.subr.mxu0 0.0
        %600 = vmatpush1.msra.mxu0 0.0
        %601 = vmatprep.subr.mxu0 0.0
        %602 = vmatpush1.msra.mxu0 0.0
        %603 = vmatprep.subr.mxu0 0.0
        %604 = vmatpush1.msra.mxu0 0.0
        %605 = vmatprep.subr.mxu0 0.0
        %606 = vmatpush1.msra.mxu0 0.0
        %607 = vmatprep.subr.mxu0 0.0
        %608 = vmatpush1.msra.mxu0 0.0
        %609 = vmatprep.subr.mxu0 0.0
        %610 = vmatpush1.msra.mxu0 0.0
        %611 = vmatprep.subr.mxu0 0.0
        %612 = vmatpush1.msra.mxu0 0.0
        %613 = vmatprep.subr.mxu0 0.0
        %614 = vmatpush1.msra.mxu0 0.0
        %615 = vmatprep.subr.mxu0 0.0
        %616 = vmatpush1.msra.mxu0 0.0
        %617 = vmatprep.subr.mxu0 0.0
        %618 = vmatpush1.msra.mxu0 0.0
        %619 = vmatprep.subr.mxu0 0.0
        %620 = vmatpush1.msra.mxu0 0.0
        %621 = vmatprep.subr.mxu0 0.0
        %622 = vmatpush1.msra.mxu0 0.0
        %623 = vmatprep.subr.mxu0 0.0
        %624 = vmatpush1.msra.mxu0 0.0
        %625 = vmatprep.subr.mxu0 0.0
        %626 = vmatpush1.msra.mxu0 0.0
        %627 = vmatprep.subr.mxu0 0.0
        %628 = vmatpush1.msra.mxu0 0.0
        %629 = vmatprep.mubr.f32.mxu0 0.0
        %630 = vmatmul.mubr.f32.gmra.mrb[0].mxu0 %v316
        %v631 = vpop.f32.mrb[0].mxu0
        %v632 = vadd.f32 %v283, %v631
        %v633 = vpop.f32.mrb[0].mxu0
        %v634 = vadd.f32 %v287, %v633
        %635 = vmatprep.mubr.f32.mxu0 0.0
        %636 = vmatmul.mubr.f32.gmra.mrb[0].mxu0 %v319
        %v637 = vpop.f32.mrb[0].mxu0
        %v638 = vadd.f32 %v283, %v637
        %v639 = vpop.f32.mrb[0].mxu0
        %v640 = vadd.f32 %v287, %v639
        %641 = vmatprep.mubr.f32.mxu0 0.0
        %642 = vmatmul.mubr.f32.gmra.mrb[0].mxu0 %v322
        %v643 = vpop.f32.mrb[0].mxu0
        %v644 = vadd.f32 %v283, %v643
        %v645 = vpop.f32.mrb[0].mxu0
        %v646 = vadd.f32 %v287, %v645
        %647 = vmatprep.mubr.f32.mxu0 0.0
        %648 = vmatmul.mubr.f32.gmra.mrb[0].mxu0 %v325
        %v649 = vpop.f32.mrb[0].mxu0
        %v650 = vadd.f32 %v283, %v649
        %v651 = vpop.f32.mrb[0].mxu0
        %v652 = vadd.f32 %v287, %v651
        %653 = vmatprep.mubr.f32.mxu0 0.0
        %654 = vmatmul.mubr.f32.gmra.mrb[0].mxu0 %v328
        %v655 = vpop.f32.mrb[0].mxu0
        %v656 = vadd.f32 %v283, %v655
        %v657 = vpop.f32.mrb[0].mxu0
        %v658 = vadd.f32 %v287, %v657
        %659 = vmatprep.mubr.f32.mxu0 0.0
        %660 = vmatmul.mubr.f32.gmra.mrb[0].mxu0 %v331
        %v661 = vpop.f32.mrb[0].mxu0
        %v662 = vadd.f32 %v283, %v661
        %v663 = vpop.f32.mrb[0].mxu0
        %v664 = vadd.f32 %v287, %v663
        %665 = vmatprep.mubr.f32.mxu0 0.0
        %666 = vmatmul.mubr.f32.gmra.mrb[0].mxu0 %v334
        %v667 = vpop.f32.mrb[0].mxu0
        %v668 = vadd.f32 %v283, %v667
        %v669 = vpop.f32.mrb[0].mxu0
        %v670 = vadd.f32 %v287, %v669
        %671 = vmatprep.mubr.f32.mxu0 0.0
        %672 = vmatmul.mubr.f32.gmra.mrb[0].mxu0 %v337
        %v673 = vpop.f32.mrb[0].mxu0
        %v674 = vadd.f32 %v283, %v673
        %v675 = vpop.f32.mrb[0].mxu0
        %v676 = vadd.f32 %v287, %v675
        %677 = vdwg.mxu0
        %678 = vmatprep.subr.mxu0 %v237
        %679 = vmatpush1.msra.mxu0 %v236
        %680 = vmatprep.subr.mxu0 %v247
        %681 = vmatpush1.msra.mxu0 %v246
        %682 = vmatprep.subr.mxu0 %v257
        %683 = vmatpush1.msra.mxu0 %v256
        %684 = vmatprep.subr.mxu0 0.0
        %685 = vmatpush1.msra.mxu0 0.0
        %686 = vmatprep.subr.mxu0 0.0
        %687 = vmatpush1.msra.mxu0 0.0
        %688 = vmatprep.subr.mxu0 0.0
        %689 = vmatpush1.msra.mxu0 0.0
        %690 = vmatprep.subr.mxu0 0.0
        %691 = vmatpush1.msra.mxu0 0.0
        %692 = vmatprep.subr.mxu0 0.0
        %693 = vmatpush1.msra.mxu0 0.0
        %694 = vmatprep.subr.mxu0 0.0
        %695 = vmatpush1.msra.mxu0 0.0
        %696 = vmatprep.subr.mxu0 0.0
        %697 = vmatpush1.msra.mxu0 0.0
        %698 = vmatprep.subr.mxu0 0.0
        %699 = vmatpush1.msra.mxu0 0.0
        %700 = vmatprep.subr.mxu0 0.0
        %701 = vmatpush1.msra.mxu0 0.0
        %702 = vmatprep.subr.mxu0 0.0
        %703 = vmatpush1.msra.mxu0 0.0
        %704 = vmatprep.subr.mxu0 0.0
        %705 = vmatpush1.msra.mxu0 0.0
        %706 = vmatprep.subr.mxu0 0.0
        %707 = vmatpush1.msra.mxu0 0.0
        %708 = vmatprep.subr.mxu0 0.0
        %709 = vmatpush1.msra.mxu0 0.0
        %710 = vmatprep.subr.mxu0 0.0
        %711 = vmatpush1.msra.mxu0 0.0
        %712 = vmatprep.subr.mxu0 0.0
        %713 = vmatpush1.msra.mxu0 0.0
        %714 = vmatprep.subr.mxu0 0.0
        %715 = vmatpush1.msra.mxu0 0.0
        %716 = vmatprep.subr.mxu0 0.0
        %717 = vmatpush1.msra.mxu0 0.0
        %718 = vmatprep.subr.mxu0 0.0
        %719 = vmatpush1.msra.mxu0 0.0
        %720 = vmatprep.subr.mxu0 0.0
        %721 = vmatpush1.msra.mxu0 0.0
        %722 = vmatprep.subr.mxu0 0.0
        %723 = vmatpush1.msra.mxu0 0.0
        %724 = vmatprep.subr.mxu0 0.0
        %725 = vmatpush1.msra.mxu0 0.0
        %726 = vmatprep.subr.mxu0 0.0
        %727 = vmatpush1.msra.mxu0 0.0
        %728 = vmatprep.subr.mxu0 0.0
        %729 = vmatpush1.msra.mxu0 0.0
        %730 = vmatprep.subr.mxu0 0.0
        %731 = vmatpush1.msra.mxu0 0.0
        %732 = vmatprep.subr.mxu0 0.0
        %733 = vmatpush1.msra.mxu0 0.0
        %734 = vmatprep.subr.mxu0 0.0
        %735 = vmatpush1.msra.mxu0 0.0
        %736 = vmatprep.subr.mxu0 0.0
        %737 = vmatpush1.msra.mxu0 0.0
        %738 = vmatprep.subr.mxu0 0.0
        %739 = vmatpush1.msra.mxu0 0.0
        %740 = vmatprep.subr.mxu0 0.0
        %741 = vmatpush1.msra.mxu0 0.0
        %742 = vmatprep.mubr.f32.mxu0 0.0
        %743 = vmatmul.mubr.f32.gmra.mrb[0].mxu0 %v316
        %v744 = vpop.f32.mrb[0].mxu0
        %v745 = vadd.f32 %v291, %v744
        %v746 = vpop.f32.mrb[0].mxu0
        %v747 = vadd.f32 %v295, %v746
        %748 = vmatprep.mubr.f32.mxu0 0.0
        %749 = vmatmul.mubr.f32.gmra.mrb[0].mxu0 %v319
        %v750 = vpop.f32.mrb[0].mxu0
        %v751 = vadd.f32 %v291, %v750
        %v752 = vpop.f32.mrb[0].mxu0
        %v753 = vadd.f32 %v295, %v752
        %754 = vmatprep.mubr.f32.mxu0 0.0
        %755 = vmatmul.mubr.f32.gmra.mrb[0].mxu0 %v322
        %v756 = vpop.f32.mrb[0].mxu0
        %v757 = vadd.f32 %v291, %v756
        %v758 = vpop.f32.mrb[0].mxu0
        %v759 = vadd.f32 %v295, %v758
        %760 = vmatprep.mubr.f32.mxu0 0.0
        %761 = vmatmul.mubr.f32.gmra.mrb[0].mxu0 %v325
        %v762 = vpop.f32.mrb[0].mxu0
        %v763 = vadd.f32 %v291, %v762
        %v764 = vpop.f32.mrb[0].mxu0
        %v765 = vadd.f32 %v295, %v764
        %766 = vmatprep.mubr.f32.mxu0 0.0
        %767 = vmatmul.mubr.f32.gmra.mrb[0].mxu0 %v328
        %v768 = vpop.f32.mrb[0].mxu0
        %v769 = vadd.f32 %v291, %v768
        %v770 = vpop.f32.mrb[0].mxu0
        %v771 = vadd.f32 %v295, %v770
        %772 = vmatprep.mubr.f32.mxu0 0.0
        %773 = vmatmul.mubr.f32.gmra.mrb[0].mxu0 %v331
        %v774 = vpop.f32.mrb[0].mxu0
        %v775 = vadd.f32 %v291, %v774
        %v776 = vpop.f32.mrb[0].mxu0
        %v777 = vadd.f32 %v295, %v776
        %778 = vmatprep.mubr.f32.mxu0 0.0
        %779 = vmatmul.mubr.f32.gmra.mrb[0].mxu0 %v334
        %v780 = vpop.f32.mrb[0].mxu0
        %v781 = vadd.f32 %v291, %v780
        %v782 = vpop.f32.mrb[0].mxu0
        %v783 = vadd.f32 %v295, %v782
        %784 = vmatprep.mubr.f32.mxu0 0.0
        %785 = vmatmul.mubr.f32.gmra.mrb[0].mxu0 %v337
        %v786 = vpop.f32.mrb[0].mxu0
        %v787 = vadd.f32 %v291, %v786
        %v788 = vpop.f32.mrb[0].mxu0
        %v789 = vadd.f32 %v295, %v788
        %790 = vdwg.mxu0
        %791 = vmatprep.subr.mxu0 %v239
        %792 = vmatpush1.msra.mxu0 %v238
        %793 = vmatprep.subr.mxu0 %v249
        %794 = vmatpush1.msra.mxu0 %v248
        %795 = vmatprep.subr.mxu0 %v259
        %796 = vmatpush1.msra.mxu0 %v258
        %797 = vmatprep.subr.mxu0 0.0
        %798 = vmatpush1.msra.mxu0 0.0
        %799 = vmatprep.subr.mxu0 0.0
        %800 = vmatpush1.msra.mxu0 0.0
        %801 = vmatprep.subr.mxu0 0.0
        %802 = vmatpush1.msra.mxu0 0.0
        %803 = vmatprep.subr.mxu0 0.0
        %804 = vmatpush1.msra.mxu0 0.0
        %805 = vmatprep.subr.mxu0 0.0
        %806 = vmatpush1.msra.mxu0 0.0
        %807 = vmatprep.subr.mxu0 0.0
        %808 = vmatpush1.msra.mxu0 0.0
        %809 = vmatprep.subr.mxu0 0.0
        %810 = vmatpush1.msra.mxu0 0.0
        %811 = vmatprep.subr.mxu0 0.0
        %812 = vmatpush1.msra.mxu0 0.0
        %813 = vmatprep.subr.mxu0 0.0
        %814 = vmatpush1.msra.mxu0 0.0
        %815 = vmatprep.subr.mxu0 0.0
        %816 = vmatpush1.msra.mxu0 0.0
        %817 = vmatprep.subr.mxu0 0.0
        %818 = vmatpush1.msra.mxu0 0.0
        %819 = vmatprep.subr.mxu0 0.0
        %820 = vmatpush1.msra.mxu0 0.0
        %821 = vmatprep.subr.mxu0 0.0
        %822 = vmatpush1.msra.mxu0 0.0
        %823 = vmatprep.subr.mxu0 0.0
        %824 = vmatpush1.msra.mxu0 0.0
        %825 = vmatprep.subr.mxu0 0.0
        %826 = vmatpush1.msra.mxu0 0.0
        %827 = vmatprep.subr.mxu0 0.0
        %828 = vmatpush1.msra.mxu0 0.0
        %829 = vmatprep.subr.mxu0 0.0
        %830 = vmatpush1.msra.mxu0 0.0
        %831 = vmatprep.subr.mxu0 0.0
        %832 = vmatpush1.msra.mxu0 0.0
        %833 = vmatprep.subr.mxu0 0.0
        %834 = vmatpush1.msra.mxu0 0.0
        %835 = vmatprep.subr.mxu0 0.0
        %836 = vmatpush1.msra.mxu0 0.0
        %837 = vmatprep.subr.mxu0 0.0
        %838 = vmatpush1.msra.mxu0 0.0
        %839 = vmatprep.subr.mxu0 0.0
        %840 = vmatpush1.msra.mxu0 0.0
        %841 = vmatprep.subr.mxu0 0.0
        %842 = vmatpush1.msra.mxu0 0.0
        %843 = vmatprep.subr.mxu0 0.0
        %844 = vmatpush1.msra.mxu0 0.0
        %845 = vmatprep.subr.mxu0 0.0
        %846 = vmatpush1.msra.mxu0 0.0
        %847 = vmatprep.subr.mxu0 0.0
        %848 = vmatpush1.msra.mxu0 0.0
        %849 = vmatprep.subr.mxu0 0.0
        %850 = vmatpush1.msra.mxu0 0.0
        %851 = vmatprep.subr.mxu0 0.0
        %852 = vmatpush1.msra.mxu0 0.0
        %853 = vmatprep.subr.mxu0 0.0
        %854 = vmatpush1.msra.mxu0 0.0
        %855 = vmatprep.mubr.f32.mxu0 0.0
        %856 = vmatmul.mubr.f32.gmra.mrb[0].mxu0 %v316
        %v857 = vpop.f32.mrb[0].mxu0
        %v858 = vadd.f32 %v299, %v857
        %v859 = vpop.f32.mrb[0].mxu0
        %v860 = vadd.f32 %v303, %v859
        %861 = vmatprep.mubr.f32.mxu0 0.0
        %862 = vmatmul.mubr.f32.gmra.mrb[0].mxu0 %v319
        %v863 = vpop.f32.mrb[0].mxu0
        %v864 = vadd.f32 %v299, %v863
        %v865 = vpop.f32.mrb[0].mxu0
        %v866 = vadd.f32 %v303, %v865
        %867 = vmatprep.mubr.f32.mxu0 0.0
        %868 = vmatmul.mubr.f32.gmra.mrb[0].mxu0 %v322
        %v869 = vpop.f32.mrb[0].mxu0
        %v870 = vadd.f32 %v299, %v869
        %v871 = vpop.f32.mrb[0].mxu0
        %v872 = vadd.f32 %v303, %v871
        %873 = vmatprep.mubr.f32.mxu0 0.0
        %874 = vmatmul.mubr.f32.gmra.mrb[0].mxu0 %v325
        %v875 = vpop.f32.mrb[0].mxu0
        %v876 = vadd.f32 %v299, %v875
        %v877 = vpop.f32.mrb[0].mxu0
        %v878 = vadd.f32 %v303, %v877
        %879 = vmatprep.mubr.f32.mxu0 0.0
        %880 = vmatmul.mubr.f32.gmra.mrb[0].mxu0 %v328
        %v881 = vpop.f32.mrb[0].mxu0
        %v882 = vadd.f32 %v299, %v881
        %v883 = vpop.f32.mrb[0].mxu0
        %v884 = vadd.f32 %v303, %v883
        %885 = vmatprep.mubr.f32.mxu0 0.0
        %886 = vmatmul.mubr.f32.gmra.mrb[0].mxu0 %v331
        %v887 = vpop.f32.mrb[0].mxu0
        %v888 = vadd.f32 %v299, %v887
        %v889 = vpop.f32.mrb[0].mxu0
        %v890 = vadd.f32 %v303, %v889
        %891 = vmatprep.mubr.f32.mxu0 0.0
        %892 = vmatmul.mubr.f32.gmra.mrb[0].mxu0 %v334
        %v893 = vpop.f32.mrb[0].mxu0
        %v894 = vadd.f32 %v299, %v893
        %v895 = vpop.f32.mrb[0].mxu0
        %v896 = vadd.f32 %v303, %v895
        %897 = vmatprep.mubr.f32.mxu0 0.0
        %898 = vmatmul.mubr.f32.gmra.mrb[0].mxu0 %v337
        %v899 = vpop.f32.mrb[0].mxu0
        %v900 = vadd.f32 %v299, %v899
        %v901 = vpop.f32.mrb[0].mxu0
        %v902 = vadd.f32 %v303, %v901
        %903 = vdwg.mxu0
        %v904 = vxor.u32 %v406, 2147483648
        %v905 = vxor.u32 %v408, 2147483648
        %v906 = vxor.u32 %v519, 2147483648
        %v907 = vxor.u32 %v521, 2147483648
        %v908 = vxor.u32 %v632, 2147483648
        %v909 = vxor.u32 %v634, 2147483648
        %v910 = vxor.u32 %v745, 2147483648
        %v911 = vxor.u32 %v747, 2147483648
        %v912 = vxor.u32 %v858, 2147483648
        %v913 = vxor.u32 %v860, 2147483648
        %v914 = vxor.u32 %v412, 2147483648
        %v915 = vxor.u32 %v414, 2147483648
        %v916 = vxor.u32 %v525, 2147483648
        %v917 = vxor.u32 %v527, 2147483648
        %v918 = vxor.u32 %v638, 2147483648
        %v919 = vxor.u32 %v640, 2147483648
        %v920 = vxor.u32 %v751, 2147483648
        %v921 = vxor.u32 %v753, 2147483648
        %v922 = vxor.u32 %v864, 2147483648
        %v923 = vxor.u32 %v866, 2147483648
        %v924 = vxor.u32 %v418, 2147483648
        %v925 = vxor.u32 %v420, 2147483648
        %v926 = vxor.u32 %v531, 2147483648
        %v927 = vxor.u32 %v533, 2147483648
        %v928 = vxor.u32 %v644, 2147483648
        %v929 = vxor.u32 %v646, 2147483648
        %v930 = vxor.u32 %v757, 2147483648
        %v931 = vxor.u32 %v759, 2147483648
        %v932 = vxor.u32 %v870, 2147483648
        %v933 = vxor.u32 %v872, 2147483648
        %v934 = vxor.u32 %v424, 2147483648
        %v935 = vxor.u32 %v426, 2147483648
        %v936 = vxor.u32 %v537, 2147483648
        %v937 = vxor.u32 %v539, 2147483648
        %v938 = vxor.u32 %v650, 2147483648
        %v939 = vxor.u32 %v652, 2147483648
        %v940 = vxor.u32 %v763, 2147483648
        %v941 = vxor.u32 %v765, 2147483648
        %v942 = vxor.u32 %v876, 2147483648
        %v943 = vxor.u32 %v878, 2147483648
        %v944 = vxor.u32 %v430, 2147483648
        %v945 = vxor.u32 %v432, 2147483648
        %v946 = vxor.u32 %v543, 2147483648
        %v947 = vxor.u32 %v545, 2147483648
        %v948 = vxor.u32 %v656, 2147483648
        %v949 = vxor.u32 %v658, 2147483648
        %v950 = vxor.u32 %v769, 2147483648
        %v951 = vxor.u32 %v771, 2147483648
        %v952 = vxor.u32 %v882, 2147483648
        %v953 = vxor.u32 %v884, 2147483648
        %v954 = vxor.u32 %v436, 2147483648
        %v955 = vxor.u32 %v438, 2147483648
        %v956 = vxor.u32 %v549, 2147483648
        %v957 = vxor.u32 %v551, 2147483648
        %v958 = vxor.u32 %v662, 2147483648
        %v959 = vxor.u32 %v664, 2147483648
        %v960 = vxor.u32 %v775, 2147483648
        %v961 = vxor.u32 %v777, 2147483648
        %v962 = vxor.u32 %v888, 2147483648
        %v963 = vxor.u32 %v890, 2147483648
        %v964 = vxor.u32 %v442, 2147483648
        %v965 = vxor.u32 %v444, 2147483648
        %v966 = vxor.u32 %v555, 2147483648
        %v967 = vxor.u32 %v557, 2147483648
        %v968 = vxor.u32 %v668, 2147483648
        %v969 = vxor.u32 %v670, 2147483648
        %v970 = vxor.u32 %v781, 2147483648
        %v971 = vxor.u32 %v783, 2147483648
        %v972 = vxor.u32 %v894, 2147483648
        %v973 = vxor.u32 %v896, 2147483648
        %v974 = vxor.u32 %v448, 2147483648
        %v975 = vxor.u32 %v450, 2147483648
        %v976 = vxor.u32 %v561, 2147483648
        %v977 = vxor.u32 %v563, 2147483648
        %v978 = vxor.u32 %v674, 2147483648
        %v979 = vxor.u32 %v676, 2147483648
        %v980 = vxor.u32 %v787, 2147483648
        %v981 = vxor.u32 %v789, 2147483648
        %v982 = vxor.u32 %v900, 2147483648
        %v983 = vxor.u32 %v902, 2147483648
        %v984 = vmul.f32 %v904, 1.442695
        %v985 = vpow.pop %v984
        %v986 = vmul.f32 %v905, 1.442695
        %v987 = vpow.pop %v986
        %v988 = vmul.f32 %v906, 1.442695
        %v989 = vpow.pop %v988
        %v990 = vmul.f32 %v907, 1.442695
        %v991 = vpow.pop %v990
        %v992 = vmul.f32 %v908, 1.442695
        %v993 = vpow.pop %v992
        %v994 = vmul.f32 %v909, 1.442695
        %v995 = vpow.pop %v994
        %v996 = vmul.f32 %v910, 1.442695
        %v997 = vpow.pop %v996
        %v998 = vmul.f32 %v911, 1.442695
        %v999 = vpow.pop %v998
        %v1000 = vmul.f32 %v912, 1.442695
        %v1001 = vpow.pop %v1000
        %v1002 = vmul.f32 %v913, 1.442695
        %v1003 = vpow.pop %v1002
        %v1004 = vmul.f32 %v914, 1.442695
        %v1005 = vpow.pop %v1004
        %v1006 = vmul.f32 %v915, 1.442695
        %v1007 = vpow.pop %v1006
        %v1008 = vmul.f32 %v916, 1.442695
        %v1009 = vpow.pop %v1008
        %v1010 = vmul.f32 %v917, 1.442695
        %v1011 = vpow.pop %v1010
        %v1012 = vmul.f32 %v918, 1.442695
        %v1013 = vpow.pop %v1012
        %v1014 = vmul.f32 %v919, 1.442695
        %v1015 = vpow.pop %v1014
        %v1016 = vmul.f32 %v920, 1.442695
        %v1017 = vpow.pop %v1016
        %v1018 = vmul.f32 %v921, 1.442695
        %v1019 = vpow.pop %v1018
        %v1020 = vmul.f32 %v922, 1.442695
        %v1021 = vpow.pop %v1020
        %v1022 = vmul.f32 %v923, 1.442695
        %v1023 = vpow.pop %v1022
        %v1024 = vmul.f32 %v924, 1.442695
        %v1025 = vpow.pop %v1024
        %v1026 = vmul.f32 %v925, 1.442695
        %v1027 = vpow.pop %v1026
        %v1028 = vmul.f32 %v926, 1.442695
        %v1029 = vpow.pop %v1028
        %v1030 = vmul.f32 %v927, 1.442695
        %v1031 = vpow.pop %v1030
        %v1032 = vmul.f32 %v928, 1.442695
        %v1033 = vpow.pop %v1032
        %v1034 = vmul.f32 %v929, 1.442695
        %v1035 = vpow.pop %v1034
        %v1036 = vmul.f32 %v930, 1.442695
        %v1037 = vpow.pop %v1036
        %v1038 = vmul.f32 %v931, 1.442695
        %v1039 = vpow.pop %v1038
        %v1040 = vmul.f32 %v932, 1.442695
        %v1041 = vpow.pop %v1040
        %v1042 = vmul.f32 %v933, 1.442695
        %v1043 = vpow.pop %v1042
        %v1044 = vmul.f32 %v934, 1.442695
        %v1045 = vpow.pop %v1044
        %v1046 = vmul.f32 %v935, 1.442695
        %v1047 = vpow.pop %v1046
        %v1048 = vmul.f32 %v936, 1.442695
        %v1049 = vpow.pop %v1048
        %v1050 = vmul.f32 %v937, 1.442695
        %v1051 = vpow.pop %v1050
        %v1052 = vmul.f32 %v938, 1.442695
        %v1053 = vpow.pop %v1052
        %v1054 = vmul.f32 %v939, 1.442695
        %v1055 = vpow.pop %v1054
        %v1056 = vmul.f32 %v940, 1.442695
        %v1057 = vpow.pop %v1056
        %v1058 = vmul.f32 %v941, 1.442695
        %v1059 = vpow.pop %v1058
        %v1060 = vmul.f32 %v942, 1.442695
        %v1061 = vpow.pop %v1060
        %v1062 = vmul.f32 %v943, 1.442695
        %v1063 = vpow.pop %v1062
        %v1064 = vmul.f32 %v944, 1.442695
        %v1065 = vpow.pop %v1064
        %v1066 = vmul.f32 %v945, 1.442695
        %v1067 = vpow.pop %v1066
        %v1068 = vmul.f32 %v946, 1.442695
        %v1069 = vpow.pop %v1068
        %v1070 = vmul.f32 %v947, 1.442695
        %v1071 = vpow.pop %v1070
        %v1072 = vmul.f32 %v948, 1.442695
        %v1073 = vpow.pop %v1072
        %v1074 = vmul.f32 %v949, 1.442695
        %v1075 = vpow.pop %v1074
        %v1076 = vmul.f32 %v950, 1.442695
        %v1077 = vpow.pop %v1076
        %v1078 = vmul.f32 %v951, 1.442695
        %v1079 = vpow.pop %v1078
        %v1080 = vmul.f32 %v952, 1.442695
        %v1081 = vpow.pop %v1080
        %v1082 = vmul.f32 %v953, 1.442695
        %v1083 = vpow.pop %v1082
        %v1084 = vmul.f32 %v954, 1.442695
        %v1085 = vpow.pop %v1084
        %v1086 = vmul.f32 %v955, 1.442695
        %v1087 = vpow.pop %v1086
        %v1088 = vmul.f32 %v956, 1.442695
        %v1089 = vpow.pop %v1088
        %v1090 = vmul.f32 %v957, 1.442695
        %v1091 = vpow.pop %v1090
        %v1092 = vmul.f32 %v958, 1.442695
        %v1093 = vpow.pop %v1092
        %v1094 = vmul.f32 %v959, 1.442695
        %v1095 = vpow.pop %v1094
        %v1096 = vmul.f32 %v960, 1.442695
        %v1097 = vpow.pop %v1096
        %v1098 = vmul.f32 %v961, 1.442695
        %v1099 = vpow.pop %v1098
        %v1100 = vmul.f32 %v962, 1.442695
        %v1101 = vpow.pop %v1100
        %v1102 = vmul.f32 %v963, 1.442695
        %v1103 = vpow.pop %v1102
        %v1104 = vmul.f32 %v964, 1.442695
        %v1105 = vpow.pop %v1104
        %v1106 = vmul.f32 %v965, 1.442695
        %v1107 = vpow.pop %v1106
        %v1108 = vmul.f32 %v966, 1.442695
        %v1109 = vpow.pop %v1108
        %v1110 = vmul.f32 %v967, 1.442695
        %v1111 = vpow.pop %v1110
        %v1112 = vmul.f32 %v968, 1.442695
        %v1113 = vpow.pop %v1112
        %v1114 = vmul.f32 %v969, 1.442695
        %v1115 = vpow.pop %v1114
        %v1116 = vmul.f32 %v970, 1.442695
        %v1117 = vpow.pop %v1116
        %v1118 = vmul.f32 %v971, 1.442695
        %v1119 = vpow.pop %v1118
        %v1120 = vmul.f32 %v972, 1.442695
        %v1121 = vpow.pop %v1120
        %v1122 = vmul.f32 %v973, 1.442695
        %v1123 = vpow.pop %v1122
        %v1124 = vmul.f32 %v974, 1.442695
        %v1125 = vpow.pop %v1124
        %v1126 = vmul.f32 %v975, 1.442695
        %v1127 = vpow.pop %v1126
        %v1128 = vmul.f32 %v976, 1.442695
        %v1129 = vpow.pop %v1128
        %v1130 = vmul.f32 %v977, 1.442695
        %v1131 = vpow.pop %v1130
        %v1132 = vmul.f32 %v978, 1.442695
        %v1133 = vpow.pop %v1132
        %v1134 = vmul.f32 %v979, 1.442695
        %v1135 = vpow.pop %v1134
        %v1136 = vmul.f32 %v980, 1.442695
        %v1137 = vpow.pop %v1136
        %v1138 = vmul.f32 %v981, 1.442695
        %v1139 = vpow.pop %v1138
        %v1140 = vmul.f32 %v982, 1.442695
        %v1141 = vpow.pop %v1140
        %v1142 = vmul.f32 %v983, 1.442695
        %v1143 = vpow.pop %v1142
        %v1144 = vadd.f32 %v985, 1.0
        %v1145 = vadd.f32 %v987, 1.0
        %v1146 = vadd.f32 %v989, 1.0
        %v1147 = vadd.f32 %v991, 1.0
        %v1148 = vadd.f32 %v993, 1.0
        %v1149 = vadd.f32 %v995, 1.0
        %v1150 = vadd.f32 %v997, 1.0
        %v1151 = vadd.f32 %v999, 1.0
        %v1152 = vadd.f32 %v1001, 1.0
        %v1153 = vadd.f32 %v1003, 1.0
        %v1154 = vadd.f32 %v1005, 1.0
        %v1155 = vadd.f32 %v1007, 1.0
        %v1156 = vadd.f32 %v1009, 1.0
        %v1157 = vadd.f32 %v1011, 1.0
        %v1158 = vadd.f32 %v1013, 1.0
        %v1159 = vadd.f32 %v1015, 1.0
        %v1160 = vadd.f32 %v1017, 1.0
        %v1161 = vadd.f32 %v1019, 1.0
        %v1162 = vadd.f32 %v1021, 1.0
        %v1163 = vadd.f32 %v1023, 1.0
        %v1164 = vadd.f32 %v1025, 1.0
        %v1165 = vadd.f32 %v1027, 1.0
        %v1166 = vadd.f32 %v1029, 1.0
        %v1167 = vadd.f32 %v1031, 1.0
        %v1168 = vadd.f32 %v1033, 1.0
        %v1169 = vadd.f32 %v1035, 1.0
        %v1170 = vadd.f32 %v1037, 1.0
        %v1171 = vadd.f32 %v1039, 1.0
        %v1172 = vadd.f32 %v1041, 1.0
        %v1173 = vadd.f32 %v1043, 1.0
        %v1174 = vadd.f32 %v1045, 1.0
        %v1175 = vadd.f32 %v1047, 1.0
        %v1176 = vadd.f32 %v1049, 1.0
        %v1177 = vadd.f32 %v1051, 1.0
        %v1178 = vadd.f32 %v1053, 1.0
        %v1179 = vadd.f32 %v1055, 1.0
        %v1180 = vadd.f32 %v1057, 1.0
        %v1181 = vadd.f32 %v1059, 1.0
        %v1182 = vadd.f32 %v1061, 1.0
        %v1183 = vadd.f32 %v1063, 1.0
        %v1184 = vadd.f32 %v1065, 1.0
        %v1185 = vadd.f32 %v1067, 1.0
        %v1186 = vadd.f32 %v1069, 1.0
        %v1187 = vadd.f32 %v1071, 1.0
        %v1188 = vadd.f32 %v1073, 1.0
        %v1189 = vadd.f32 %v1075, 1.0
        %v1190 = vadd.f32 %v1077, 1.0
        %v1191 = vadd.f32 %v1079, 1.0
        %v1192 = vadd.f32 %v1081, 1.0
        %v1193 = vadd.f32 %v1083, 1.0
        %v1194 = vadd.f32 %v1085, 1.0
        %v1195 = vadd.f32 %v1087, 1.0
        %v1196 = vadd.f32 %v1089, 1.0
        %v1197 = vadd.f32 %v1091, 1.0
        %v1198 = vadd.f32 %v1093, 1.0
        %v1199 = vadd.f32 %v1095, 1.0
        %v1200 = vadd.f32 %v1097, 1.0
        %v1201 = vadd.f32 %v1099, 1.0
        %v1202 = vadd.f32 %v1101, 1.0
        %v1203 = vadd.f32 %v1103, 1.0
        %v1204 = vadd.f32 %v1105, 1.0
        %v1205 = vadd.f32 %v1107, 1.0
        %v1206 = vadd.f32 %v1109, 1.0
        %v1207 = vadd.f32 %v1111, 1.0
        %v1208 = vadd.f32 %v1113, 1.0
        %v1209 = vadd.f32 %v1115, 1.0
        %v1210 = vadd.f32 %v1117, 1.0
        %v1211 = vadd.f32 %v1119, 1.0
        %v1212 = vadd.f32 %v1121, 1.0
        %v1213 = vadd.f32 %v1123, 1.0
        %v1214 = vadd.f32 %v1125, 1.0
        %v1215 = vadd.f32 %v1127, 1.0
        %v1216 = vadd.f32 %v1129, 1.0
        %v1217 = vadd.f32 %v1131, 1.0
        %v1218 = vadd.f32 %v1133, 1.0
        %v1219 = vadd.f32 %v1135, 1.0
        %v1220 = vadd.f32 %v1137, 1.0
        %v1221 = vadd.f32 %v1139, 1.0
        %v1222 = vadd.f32 %v1141, 1.0
        %v1223 = vadd.f32 %v1143, 1.0
        %v1224 = vrcp.pop %v1144
        %v1225 = vmul.f32 1.0, %v1224
        %v1226 = vrcp.pop %v1145
        %v1227 = vmul.f32 1.0, %v1226
        %v1228 = vrcp.pop %v1146
        %v1229 = vmul.f32 1.0, %v1228
        %v1230 = vrcp.pop %v1147
        %v1231 = vmul.f32 1.0, %v1230
        %v1232 = vrcp.pop %v1148
        %v1233 = vmul.f32 1.0, %v1232
        %v1234 = vrcp.pop %v1149
        %v1235 = vmul.f32 1.0, %v1234
        %v1236 = vrcp.pop %v1150
        %v1237 = vmul.f32 1.0, %v1236
        %v1238 = vrcp.pop %v1151
        %v1239 = vmul.f32 1.0, %v1238
        %v1240 = vrcp.pop %v1152
        %v1241 = vmul.f32 1.0, %v1240
        %v1242 = vrcp.pop %v1153
        %v1243 = vmul.f32 1.0, %v1242
        %v1244 = vrcp.pop %v1154
        %v1245 = vmul.f32 1.0, %v1244
        %v1246 = vrcp.pop %v1155
        %v1247 = vmul.f32 1.0, %v1246
        %v1248 = vrcp.pop %v1156
        %v1249 = vmul.f32 1.0, %v1248
        %v1250 = vrcp.pop %v1157
        %v1251 = vmul.f32 1.0, %v1250
        %v1252 = vrcp.pop %v1158
        %v1253 = vmul.f32 1.0, %v1252
        %v1254 = vrcp.pop %v1159
        %v1255 = vmul.f32 1.0, %v1254
        %v1256 = vrcp.pop %v1160
        %v1257 = vmul.f32 1.0, %v1256
        %v1258 = vrcp.pop %v1161
        %v1259 = vmul.f32 1.0, %v1258
        %v1260 = vrcp.pop %v1162
        %v1261 = vmul.f32 1.0, %v1260
        %v1262 = vrcp.pop %v1163
        %v1263 = vmul.f32 1.0, %v1262
        %v1264 = vrcp.pop %v1164
        %v1265 = vmul.f32 1.0, %v1264
        %v1266 = vrcp.pop %v1165
        %v1267 = vmul.f32 1.0, %v1266
        %v1268 = vrcp.pop %v1166
        %v1269 = vmul.f32 1.0, %v1268
        %v1270 = vrcp.pop %v1167
        %v1271 = vmul.f32 1.0, %v1270
        %v1272 = vrcp.pop %v1168
        %v1273 = vmul.f32 1.0, %v1272
        %v1274 = vrcp.pop %v1169
        %v1275 = vmul.f32 1.0, %v1274
        %v1276 = vrcp.pop %v1170
        %v1277 = vmul.f32 1.0, %v1276
        %v1278 = vrcp.pop %v1171
        %v1279 = vmul.f32 1.0, %v1278
        %v1280 = vrcp.pop %v1172
        %v1281 = vmul.f32 1.0, %v1280
        %v1282 = vrcp.pop %v1173
        %v1283 = vmul.f32 1.0, %v1282
        %v1284 = vrcp.pop %v1174
        %v1285 = vmul.f32 1.0, %v1284
        %v1286 = vrcp.pop %v1175
        %v1287 = vmul.f32 1.0, %v1286
        %v1288 = vrcp.pop %v1176
        %v1289 = vmul.f32 1.0, %v1288
        %v1290 = vrcp.pop %v1177
        %v1291 = vmul.f32 1.0, %v1290
        %v1292 = vrcp.pop %v1178
        %v1293 = vmul.f32 1.0, %v1292
        %v1294 = vrcp.pop %v1179
        %v1295 = vmul.f32 1.0, %v1294
        %v1296 = vrcp.pop %v1180
        %v1297 = vmul.f32 1.0, %v1296
        %v1298 = vrcp.pop %v1181
        %v1299 = vmul.f32 1.0, %v1298
        %v1300 = vrcp.pop %v1182
        %v1301 = vmul.f32 1.0, %v1300
        %v1302 = vrcp.pop %v1183
        %v1303 = vmul.f32 1.0, %v1302
        %v1304 = vrcp.pop %v1184
        %v1305 = vmul.f32 1.0, %v1304
        %v1306 = vrcp.pop %v1185
        %v1307 = vmul.f32 1.0, %v1306
        %v1308 = vrcp.pop %v1186
        %v1309 = vmul.f32 1.0, %v1308
        %v1310 = vrcp.pop %v1187
        %v1311 = vmul.f32 1.0, %v1310
        %v1312 = vrcp.pop %v1188
        %v1313 = vmul.f32 1.0, %v1312
        %v1314 = vrcp.pop %v1189
        %v1315 = vmul.f32 1.0, %v1314
        %v1316 = vrcp.pop %v1190
        %v1317 = vmul.f32 1.0, %v1316
        %v1318 = vrcp.pop %v1191
        %v1319 = vmul.f32 1.0, %v1318
        %v1320 = vrcp.pop %v1192
        %v1321 = vmul.f32 1.0, %v1320
        %v1322 = vrcp.pop %v1193
        %v1323 = vmul.f32 1.0, %v1322
        %v1324 = vrcp.pop %v1194
        %v1325 = vmul.f32 1.0, %v1324
        %v1326 = vrcp.pop %v1195
        %v1327 = vmul.f32 1.0, %v1326
        %v1328 = vrcp.pop %v1196
        %v1329 = vmul.f32 1.0, %v1328
        %v1330 = vrcp.pop %v1197
        %v1331 = vmul.f32 1.0, %v1330
        %v1332 = vrcp.pop %v1198
        %v1333 = vmul.f32 1.0, %v1332
        %v1334 = vrcp.pop %v1199
        %v1335 = vmul.f32 1.0, %v1334
        %v1336 = vrcp.pop %v1200
        %v1337 = vmul.f32 1.0, %v1336
        %v1338 = vrcp.pop %v1201
        %v1339 = vmul.f32 1.0, %v1338
        %v1340 = vrcp.pop %v1202
        %v1341 = vmul.f32 1.0, %v1340
        %v1342 = vrcp.pop %v1203
        %v1343 = vmul.f32 1.0, %v1342
        %v1344 = vrcp.pop %v1204
        %v1345 = vmul.f32 1.0, %v1344
        %v1346 = vrcp.pop %v1205
        %v1347 = vmul.f32 1.0, %v1346
        %v1348 = vrcp.pop %v1206
        %v1349 = vmul.f32 1.0, %v1348
        %v1350 = vrcp.pop %v1207
        %v1351 = vmul.f32 1.0, %v1350
        %v1352 = vrcp.pop %v1208
        %v1353 = vmul.f32 1.0, %v1352
        %v1354 = vrcp.pop %v1209
        %v1355 = vmul.f32 1.0, %v1354
        %v1356 = vrcp.pop %v1210
        %v1357 = vmul.f32 1.0, %v1356
        %v1358 = vrcp.pop %v1211
        %v1359 = vmul.f32 1.0, %v1358
        %v1360 = vrcp.pop %v1212
        %v1361 = vmul.f32 1.0, %v1360
        %v1362 = vrcp.pop %v1213
        %v1363 = vmul.f32 1.0, %v1362
        %v1364 = vrcp.pop %v1214
        %v1365 = vmul.f32 1.0, %v1364
        %v1366 = vrcp.pop %v1215
        %v1367 = vmul.f32 1.0, %v1366
        %v1368 = vrcp.pop %v1216
        %v1369 = vmul.f32 1.0, %v1368
        %v1370 = vrcp.pop %v1217
        %v1371 = vmul.f32 1.0, %v1370
        %v1372 = vrcp.pop %v1218
        %v1373 = vmul.f32 1.0, %v1372
        %v1374 = vrcp.pop %v1219
        %v1375 = vmul.f32 1.0, %v1374
        %v1376 = vrcp.pop %v1220
        %v1377 = vmul.f32 1.0, %v1376
        %v1378 = vrcp.pop %v1221
        %v1379 = vmul.f32 1.0, %v1378
        %v1380 = vrcp.pop %v1222
        %v1381 = vmul.f32 1.0, %v1380
        %v1382 = vrcp.pop %v1223
        %v1383 = vmul.f32 1.0, %v1382
        %v1384 = vmul.f32 %v406, %v1225
        %v1385 = vmul.f32 %v408, %v1227
        %v1386 = vmul.f32 %v519, %v1229
        %v1387 = vmul.f32 %v521, %v1231
        %v1388 = vmul.f32 %v632, %v1233
        %v1389 = vmul.f32 %v634, %v1235
        %v1390 = vmul.f32 %v745, %v1237
        %v1391 = vmul.f32 %v747, %v1239
        %v1392 = vmul.f32 %v858, %v1241
        %v1393 = vmul.f32 %v860, %v1243
        %v1394 = vmul.f32 %v412, %v1245
        %v1395 = vmul.f32 %v414, %v1247
        %v1396 = vmul.f32 %v525, %v1249
        %v1397 = vmul.f32 %v527, %v1251
        %v1398 = vmul.f32 %v638, %v1253
        %v1399 = vmul.f32 %v640, %v1255
        %v1400 = vmul.f32 %v751, %v1257
        %v1401 = vmul.f32 %v753, %v1259
        %v1402 = vmul.f32 %v864, %v1261
        %v1403 = vmul.f32 %v866, %v1263
        %v1404 = vmul.f32 %v418, %v1265
        %v1405 = vmul.f32 %v420, %v1267
        %v1406 = vmul.f32 %v531, %v1269
        %v1407 = vmul.f32 %v533, %v1271
        %v1408 = vmul.f32 %v644, %v1273
        %v1409 = vmul.f32 %v646, %v1275
        %v1410 = vmul.f32 %v757, %v1277
        %v1411 = vmul.f32 %v759, %v1279
        %v1412 = vmul.f32 %v870, %v1281
        %v1413 = vmul.f32 %v872, %v1283
        %v1414 = vmul.f32 %v424, %v1285
        %v1415 = vmul.f32 %v426, %v1287
        %v1416 = vmul.f32 %v537, %v1289
        %v1417 = vmul.f32 %v539, %v1291
        %v1418 = vmul.f32 %v650, %v1293
        %v1419 = vmul.f32 %v652, %v1295
        %v1420 = vmul.f32 %v763, %v1297
        %v1421 = vmul.f32 %v765, %v1299
        %v1422 = vmul.f32 %v876, %v1301
        %v1423 = vmul.f32 %v878, %v1303
        %v1424 = vmul.f32 %v430, %v1305
        %v1425 = vmul.f32 %v432, %v1307
        %v1426 = vmul.f32 %v543, %v1309
        %v1427 = vmul.f32 %v545, %v1311
        %v1428 = vmul.f32 %v656, %v1313
        %v1429 = vmul.f32 %v658, %v1315
        %v1430 = vmul.f32 %v769, %v1317
        %v1431 = vmul.f32 %v771, %v1319
        %v1432 = vmul.f32 %v882, %v1321
        %v1433 = vmul.f32 %v884, %v1323
        %v1434 = vmul.f32 %v436, %v1325
        %v1435 = vmul.f32 %v438, %v1327
        %v1436 = vmul.f32 %v549, %v1329
        %v1437 = vmul.f32 %v551, %v1331
        %v1438 = vmul.f32 %v662, %v1333
        %v1439 = vmul.f32 %v664, %v1335
        %v1440 = vmul.f32 %v775, %v1337
        %v1441 = vmul.f32 %v777, %v1339
        %v1442 = vmul.f32 %v888, %v1341
        %v1443 = vmul.f32 %v890, %v1343
        %v1444 = vmul.f32 %v442, %v1345
        %v1445 = vmul.f32 %v444, %v1347
        %v1446 = vmul.f32 %v555, %v1349
        %v1447 = vmul.f32 %v557, %v1351
        %v1448 = vmul.f32 %v668, %v1353
        %v1449 = vmul.f32 %v670, %v1355
        %v1450 = vmul.f32 %v781, %v1357
        %v1451 = vmul.f32 %v783, %v1359
        %v1452 = vmul.f32 %v894, %v1361
        %v1453 = vmul.f32 %v896, %v1363
        %v1454 = vmul.f32 %v448, %v1365
        %v1455 = vmul.f32 %v450, %v1367
        %v1456 = vmul.f32 %v561, %v1369
        %v1457 = vmul.f32 %v563, %v1371
        %v1458 = vmul.f32 %v674, %v1373
        %v1459 = vmul.f32 %v676, %v1375
        %v1460 = vmul.f32 %v787, %v1377
        %v1461 = vmul.f32 %v789, %v1379
        %v1462 = vmul.f32 %v900, %v1381
        %v1463 = vmul.f32 %v902, %v1383
        %v1464 = vadd.f32 %v1384, %v1394
        %v1465 = vadd.f32 %v1464, %v1404
        %v1466 = vadd.f32 %v1465, %v1414
        %v1467 = vadd.f32 %v1466, %v1424
        %v1468 = vadd.f32 %v1467, %v1434
        %v1469 = vadd.f32 %v1468, %v1444
        %v1470 = vadd.f32 %v1469, %v1454
        %v1471 = vrot.slane %v1470, 4
        %v1472 = vadd.f32 %v1470, %v1471
        %v1473 = vrot.slane %v1472, 2
        %v1474 = vadd.f32 %v1472, %v1473
        %v1475 = vrot.slane %v1474, 1
        %v1476 = vadd.f32 %v1474, %v1475
        %v1477 = vadd.f32 %v1385, %v1395
        %v1478 = vadd.f32 %v1477, %v1405
        %v1479 = vadd.f32 %v1478, %v1415
        %v1480 = vadd.f32 %v1479, %v1425
        %v1481 = vadd.f32 %v1480, %v1435
        %v1482 = vadd.f32 %v1481, %v1445
        %v1483 = vadd.f32 %v1482, %v1455
        %v1484 = vrot.slane %v1483, 4
        %v1485 = vadd.f32 %v1483, %v1484
        %v1486 = vrot.slane %v1485, 2
        %v1487 = vadd.f32 %v1485, %v1486
        %v1488 = vrot.slane %v1487, 1
        %v1489 = vadd.f32 %v1487, %v1488
        %v1490 = vadd.f32 %v1386, %v1396
        %v1491 = vadd.f32 %v1490, %v1406
        %v1492 = vadd.f32 %v1491, %v1416
        %v1493 = vadd.f32 %v1492, %v1426
        %v1494 = vadd.f32 %v1493, %v1436
        %v1495 = vadd.f32 %v1494, %v1446
        %v1496 = vadd.f32 %v1495, %v1456
        %v1497 = vrot.slane %v1496, 4
        %v1498 = vadd.f32 %v1496, %v1497
        %v1499 = vrot.slane %v1498, 2
        %v1500 = vadd.f32 %v1498, %v1499
        %v1501 = vrot.slane %v1500, 1
        %v1502 = vadd.f32 %v1500, %v1501
        %v1503 = vadd.f32 %v1387, %v1397
        %v1504 = vadd.f32 %v1503, %v1407
        %v1505 = vadd.f32 %v1504, %v1417
        %v1506 = vadd.f32 %v1505, %v1427
        %v1507 = vadd.f32 %v1506, %v1437
        %v1508 = vadd.f32 %v1507, %v1447
        %v1509 = vadd.f32 %v1508, %v1457
        %v1510 = vrot.slane %v1509, 4
        %v1511 = vadd.f32 %v1509, %v1510
        %v1512 = vrot.slane %v1511, 2
        %v1513 = vadd.f32 %v1511, %v1512
        %v1514 = vrot.slane %v1513, 1
        %v1515 = vadd.f32 %v1513, %v1514
        %v1516 = vadd.f32 %v1388, %v1398
        %v1517 = vadd.f32 %v1516, %v1408
        %v1518 = vadd.f32 %v1517, %v1418
        %v1519 = vadd.f32 %v1518, %v1428
        %v1520 = vadd.f32 %v1519, %v1438
        %v1521 = vadd.f32 %v1520, %v1448
        %v1522 = vadd.f32 %v1521, %v1458
        %v1523 = vrot.slane %v1522, 4
        %v1524 = vadd.f32 %v1522, %v1523
        %v1525 = vrot.slane %v1524, 2
        %v1526 = vadd.f32 %v1524, %v1525
        %v1527 = vrot.slane %v1526, 1
        %v1528 = vadd.f32 %v1526, %v1527
        %v1529 = vadd.f32 %v1389, %v1399
        %v1530 = vadd.f32 %v1529, %v1409
        %v1531 = vadd.f32 %v1530, %v1419
        %v1532 = vadd.f32 %v1531, %v1429
        %v1533 = vadd.f32 %v1532, %v1439
        %v1534 = vadd.f32 %v1533, %v1449
        %v1535 = vadd.f32 %v1534, %v1459
        %v1536 = vrot.slane %v1535, 4
        %v1537 = vadd.f32 %v1535, %v1536
        %v1538 = vrot.slane %v1537, 2
        %v1539 = vadd.f32 %v1537, %v1538
        %v1540 = vrot.slane %v1539, 1
        %v1541 = vadd.f32 %v1539, %v1540
        %v1542 = vadd.f32 %v1390, %v1400
        %v1543 = vadd.f32 %v1542, %v1410
        %v1544 = vadd.f32 %v1543, %v1420
        %v1545 = vadd.f32 %v1544, %v1430
        %v1546 = vadd.f32 %v1545, %v1440
        %v1547 = vadd.f32 %v1546, %v1450
        %v1548 = vadd.f32 %v1547, %v1460
        %v1549 = vrot.slane %v1548, 4
        %v1550 = vadd.f32 %v1548, %v1549
        %v1551 = vrot.slane %v1550, 2
        %v1552 = vadd.f32 %v1550, %v1551
        %v1553 = vrot.slane %v1552, 1
        %v1554 = vadd.f32 %v1552, %v1553
        %v1555 = vadd.f32 %v1391, %v1401
        %v1556 = vadd.f32 %v1555, %v1411
        %v1557 = vadd.f32 %v1556, %v1421
        %v1558 = vadd.f32 %v1557, %v1431
        %v1559 = vadd.f32 %v1558, %v1441
        %v1560 = vadd.f32 %v1559, %v1451
        %v1561 = vadd.f32 %v1560, %v1461
        %v1562 = vrot.slane %v1561, 4
        %v1563 = vadd.f32 %v1561, %v1562
        %v1564 = vrot.slane %v1563, 2
        %v1565 = vadd.f32 %v1563, %v1564
        %v1566 = vrot.slane %v1565, 1
        %v1567 = vadd.f32 %v1565, %v1566
        %v1568 = vadd.f32 %v1392, %v1402
        %v1569 = vadd.f32 %v1568, %v1412
        %v1570 = vadd.f32 %v1569, %v1422
        %v1571 = vadd.f32 %v1570, %v1432
        %v1572 = vadd.f32 %v1571, %v1442
        %v1573 = vadd.f32 %v1572, %v1452
        %v1574 = vadd.f32 %v1573, %v1462
        %v1575 = vrot.slane %v1574, 4
        %v1576 = vadd.f32 %v1574, %v1575
        %v1577 = vrot.slane %v1576, 2
        %v1578 = vadd.f32 %v1576, %v1577
        %v1579 = vrot.slane %v1578, 1
        %v1580 = vadd.f32 %v1578, %v1579
        %v1581 = vadd.f32 %v1393, %v1403
        %v1582 = vadd.f32 %v1581, %v1413
        %v1583 = vadd.f32 %v1582, %v1423
        %v1584 = vadd.f32 %v1583, %v1433
        %v1585 = vadd.f32 %v1584, %v1443
        %v1586 = vadd.f32 %v1585, %v1453
        %v1587 = vadd.f32 %v1586, %v1463
        %v1588 = vrot.slane %v1587, 4
        %v1589 = vadd.f32 %v1587, %v1588
        %v1590 = vrot.slane %v1589, 2
        %v1591 = vadd.f32 %v1589, %v1590
        %v1592 = vrot.slane %v1591, 1
        %v1593 = vadd.f32 %v1591, %v1592
        %v1594 = vrcp.pop 64.0
        %v1595 = vmul.f32 %v1476, %v1594
        %v1596 = vmul.f32 %v1489, %v1594
        %v1597 = vmul.f32 %v1502, %v1594
        %v1598 = vmul.f32 %v1515, %v1594
        %v1599 = vmul.f32 %v1528, %v1594
        %v1600 = vmul.f32 %v1541, %v1594
        %v1601 = vmul.f32 %v1554, %v1594
        %v1602 = vmul.f32 %v1567, %v1594
        %v1603 = vmul.f32 %v1580, %v1594
        %v1604 = vmul.f32 %v1593, %v1594
        %v1605 = vld [vmem:[%s3] sm:$0xff]
        %v1606 = vld [vmem:[%s3 + $0x8] sm:$0xff]
        %v1607 = vld [vmem:[%s3 + $0x10] sm:$0xff]
        %v1608 = vld [vmem:[%s3 + $0x18] sm:$0xff]
        %v1609 = vld [vmem:[%s3 + $0x20] sm:$0xff]
        %v1610 = vld [vmem:[%s3 + $0x28] sm:$0xff]
        %v1611 = vld [vmem:[%s3 + $0x30] sm:$0xff]
        %v1612 = vld [vmem:[%s3 + $0x38] sm:$0xff]
        %v1613 = vld [vmem:[%s3 + $0x40] sm:$0xff]
        %v1614 = vld [vmem:[%s3 + $0x48] sm:$0xff]
        %v1615 = vld [vmem:[%s3 + $0x50] sm:$0xff]
        %v1616 = vld [vmem:[%s3 + $0x58] sm:$0xff]
        %v1617 = vld [vmem:[%s3 + $0x60] sm:$0xff]
        %v1618 = vld [vmem:[%s3 + $0x68] sm:$0xff]
        %v1619 = vld [vmem:[%s3 + $0x70] sm:$0xff]
        %v1620 = vld [vmem:[%s3 + $0x78] sm:$0xff]
        %v1621 = vld [vmem:[%s3 + $0x80] sm:$0xff]
        %v1622 = vld [vmem:[%s3 + $0x88] sm:$0xff]
        %v1623 = vld [vmem:[%s3 + $0x90] sm:$0xff]
        %v1624 = vld [vmem:[%s3 + $0x98] sm:$0xff]
        %v1625 = vld [vmem:[%s3 + $0xa0] sm:$0xff]
        %v1626 = vld [vmem:[%s3 + $0xa8] sm:$0xff]
        %v1627 = vld [vmem:[%s3 + $0xb0] sm:$0xff]
        %v1628 = vld [vmem:[%s3 + $0xb8] sm:$0xff]
        %v1629 = vld [vmem:[%s3 + $0xc0] sm:$0xff]
        %v1630 = vld [vmem:[%s3 + $0xc8] sm:$0xff]
        %v1631 = vld [vmem:[%s3 + $0xd0] sm:$0xff]
        %v1632 = vld [vmem:[%s3 + $0xd8] sm:$0xff]
        %v1633 = vld [vmem:[%s3 + $0xe0] sm:$0xff]
        %v1634 = vld [vmem:[%s3 + $0xe8] sm:$0xff]
        %v1635 = vld [vmem:[%s3 + $0xf0] sm:$0xff]
        %v1636 = vld [vmem:[%s3 + $0xf8] sm:$0xff]
        %v1637 = vld [vmem:[%s3 + $0x100] sm:$0xff]
        %v1638 = vld [vmem:[%s3 + $0x108] sm:$0xff]
        %v1639 = vld [vmem:[%s3 + $0x110] sm:$0xff]
        %v1640 = vld [vmem:[%s3 + $0x118] sm:$0xff]
        %v1641 = vld [vmem:[%s3 + $0x120] sm:$0xff]
        %v1642 = vld [vmem:[%s3 + $0x128] sm:$0xff]
        %v1643 = vld [vmem:[%s3 + $0x130] sm:$0xff]
        %v1644 = vld [vmem:[%s3 + $0x138] sm:$0xff]
        %v1645 = vld [vmem:[%s3 + $0x140] sm:$0xff]
        %v1646 = vld [vmem:[%s3 + $0x148] sm:$0xff]
        %v1647 = vld [vmem:[%s3 + $0x150] sm:$0xff]
        %v1648 = vld [vmem:[%s3 + $0x158] sm:$0xff]
        %v1649 = vld [vmem:[%s3 + $0x160] sm:$0xff]
        %v1650 = vld [vmem:[%s3 + $0x168] sm:$0xff]
        %v1651 = vld [vmem:[%s3 + $0x170] sm:$0xff]
        %v1652 = vld [vmem:[%s3 + $0x178] sm:$0xff]
        %v1653 = vld [vmem:[%s3 + $0x180] sm:$0xff]
        %v1654 = vld [vmem:[%s3 + $0x188] sm:$0xff]
        %v1655 = vld [vmem:[%s3 + $0x190] sm:$0xff]
        %v1656 = vld [vmem:[%s3 + $0x198] sm:$0xff]
        %v1657 = vld [vmem:[%s3 + $0x1a0] sm:$0xff]
        %v1658 = vld [vmem:[%s3 + $0x1a8] sm:$0xff]
        %v1659 = vld [vmem:[%s3 + $0x1b0] sm:$0xff]
        %v1660 = vld [vmem:[%s3 + $0x1b8] sm:$0xff]
        %v1661 = vld [vmem:[%s3 + $0x1c0] sm:$0xff]
        %v1662 = vld [vmem:[%s3 + $0x1c8] sm:$0xff]
        %v1663 = vld [vmem:[%s3 + $0x1d0] sm:$0xff]
        %v1664 = vld [vmem:[%s3 + $0x1d8] sm:$0xff]
        %v1665 = vld [vmem:[%s3 + $0x1e0] sm:$0xff]
        %v1666 = vld [vmem:[%s3 + $0x1e8] sm:$0xff]
        %v1667 = vld [vmem:[%s3 + $0x1f0] sm:$0xff]
        %v1668 = vld [vmem:[%s3 + $0x1f8] sm:$0xff]
        %v1669 = vld [vmem:[%s3 + $0x200] sm:$0xff]
        %v1670 = vld [vmem:[%s3 + $0x208] sm:$0xff]
        %v1671 = vld [vmem:[%s3 + $0x210] sm:$0xff]
        %v1672 = vld [vmem:[%s3 + $0x218] sm:$0xff]
        %v1673 = vld [vmem:[%s3 + $0x220] sm:$0xff]
        %v1674 = vld [vmem:[%s3 + $0x228] sm:$0xff]
        %v1675 = vld [vmem:[%s3 + $0x230] sm:$0xff]
        %v1676 = vld [vmem:[%s3 + $0x238] sm:$0xff]
        %v1677 = vld [vmem:[%s3 + $0x240] sm:$0xff]
        %v1678 = vld [vmem:[%s3 + $0x248] sm:$0xff]
        %v1679 = vld [vmem:[%s3 + $0x250] sm:$0xff]
        %v1680 = vld [vmem:[%s3 + $0x258] sm:$0xff]
        %v1681 = vld [vmem:[%s3 + $0x260] sm:$0xff]
        %v1682 = vld [vmem:[%s3 + $0x268] sm:$0xff]
        %v1683 = vld [vmem:[%s3 + $0x270] sm:$0xff]
        %v1684 = vld [vmem:[%s3 + $0x278] sm:$0xff]
        %v1685 = vld [vmem:[%s3 + $0x280] sm:$0xff]
        %v1686 = vld [vmem:[%s3 + $0x288] sm:$0xff]
        %v1687 = vld [vmem:[%s3 + $0x290] sm:$0xff]
        %v1688 = vld [vmem:[%s3 + $0x298] sm:$0xff]
        %v1689 = vld [vmem:[%s3 + $0x2a0] sm:$0xff]
        %v1690 = vld [vmem:[%s3 + $0x2a8] sm:$0xff]
        %v1691 = vld [vmem:[%s3 + $0x2b0] sm:$0xff]
        %v1692 = vld [vmem:[%s3 + $0x2b8] sm:$0xff]
        %v1693 = vld [vmem:[%s3 + $0x2c0] sm:$0xff]
        %v1694 = vld [vmem:[%s3 + $0x2c8] sm:$0xff]
        %v1695 = vld [vmem:[%s3 + $0x2d0] sm:$0xff]
        %v1696 = vld [vmem:[%s3 + $0x2d8] sm:$0xff]
        %v1697 = vld [vmem:[%s3 + $0x2e0] sm:$0xff]
        %v1698 = vld [vmem:[%s3 + $0x2e8] sm:$0xff]
        %v1699 = vld [vmem:[%s3 + $0x2f0] sm:$0xff]
        %v1700 = vld [vmem:[%s3 + $0x2f8] sm:$0xff]
        %v1701 = vld [vmem:[%s3 + $0x300] sm:$0xff]
        %v1702 = vld [vmem:[%s3 + $0x308] sm:$0xff]
        %v1703 = vld [vmem:[%s3 + $0x310] sm:$0xff]
        %v1704 = vld [vmem:[%s3 + $0x318] sm:$0xff]
        %v1705 = vld [vmem:[%s3 + $0x320] sm:$0xff]
        %v1706 = vld [vmem:[%s3 + $0x328] sm:$0xff]
        %v1707 = vld [vmem:[%s3 + $0x330] sm:$0xff]
        %v1708 = vld [vmem:[%s3 + $0x338] sm:$0xff]
        %v1709 = vld [vmem:[%s3 + $0x340] sm:$0xff]
        %v1710 = vld [vmem:[%s3 + $0x348] sm:$0xff]
        %v1711 = vld [vmem:[%s3 + $0x350] sm:$0xff]
        %v1712 = vld [vmem:[%s3 + $0x358] sm:$0xff]
        %v1713 = vld [vmem:[%s3 + $0x360] sm:$0xff]
        %v1714 = vld [vmem:[%s3 + $0x368] sm:$0xff]
        %v1715 = vld [vmem:[%s3 + $0x370] sm:$0xff]
        %v1716 = vld [vmem:[%s3 + $0x378] sm:$0xff]
        %v1717 = vld [vmem:[%s3 + $0x380] sm:$0xff]
        %v1718 = vld [vmem:[%s3 + $0x388] sm:$0xff]
        %v1719 = vld [vmem:[%s3 + $0x390] sm:$0xff]
        %v1720 = vld [vmem:[%s3 + $0x398] sm:$0xff]
        %v1721 = vld [vmem:[%s3 + $0x3a0] sm:$0xff]
        %v1722 = vld [vmem:[%s3 + $0x3a8] sm:$0xff]
        %v1723 = vld [vmem:[%s3 + $0x3b0] sm:$0xff]
        %v1724 = vld [vmem:[%s3 + $0x3b8] sm:$0xff]
        %v1725 = vld [vmem:[%s3 + $0x3c0] sm:$0xff]
        %v1726 = vld [vmem:[%s3 + $0x3c8] sm:$0xff]
        %v1727 = vld [vmem:[%s3 + $0x3d0] sm:$0xff]
        %v1728 = vld [vmem:[%s3 + $0x3d8] sm:$0xff]
        %v1729 = vld [vmem:[%s3 + $0x3e0] sm:$0xff]
        %v1730 = vld [vmem:[%s3 + $0x3e8] sm:$0xff]
        %v1731 = vld [vmem:[%s3 + $0x3f0] sm:$0xff]
        %v1732 = vld [vmem:[%s3 + $0x3f8] sm:$0xff]
        %v1733 = vld [vmem:[%s3 + $0x400] sm:$0xff]
        %v1734 = vld [vmem:[%s3 + $0x408] sm:$0xff]
        %v1735 = vld [vmem:[%s3 + $0x410] sm:$0xff]
        %v1736 = vld [vmem:[%s3 + $0x418] sm:$0xff]
        %v1737 = vld [vmem:[%s3 + $0x420] sm:$0xff]
        %v1738 = vld [vmem:[%s3 + $0x428] sm:$0xff]
        %v1739 = vld [vmem:[%s3 + $0x430] sm:$0xff]
        %v1740 = vld [vmem:[%s3 + $0x438] sm:$0xff]
        %v1741 = vld [vmem:[%s3 + $0x440] sm:$0xff]
        %v1742 = vld [vmem:[%s3 + $0x448] sm:$0xff]
        %v1743 = vld [vmem:[%s3 + $0x450] sm:$0xff]
        %v1744 = vld [vmem:[%s3 + $0x458] sm:$0xff]
        %v1745 = vld [vmem:[%s3 + $0x460] sm:$0xff]
        %v1746 = vld [vmem:[%s3 + $0x468] sm:$0xff]
        %v1747 = vld [vmem:[%s3 + $0x470] sm:$0xff]
        %v1748 = vld [vmem:[%s3 + $0x478] sm:$0xff]
        %v1749 = vld [vmem:[%s3 + $0x480] sm:$0xff]
        %v1750 = vld [vmem:[%s3 + $0x488] sm:$0xff]
        %v1751 = vld [vmem:[%s3 + $0x490] sm:$0xff]
        %v1752 = vld [vmem:[%s3 + $0x498] sm:$0xff]
        %v1753 = vld [vmem:[%s3 + $0x4a0] sm:$0xff]
        %v1754 = vld [vmem:[%s3 + $0x4a8] sm:$0xff]
        %v1755 = vld [vmem:[%s3 + $0x4b0] sm:$0xff]
        %v1756 = vld [vmem:[%s3 + $0x4b8] sm:$0xff]
        %v1757 = vld [vmem:[%s3 + $0x4c0] sm:$0xff]
        %v1758 = vld [vmem:[%s3 + $0x4c8] sm:$0xff]
        %v1759 = vld [vmem:[%s3 + $0x4d0] sm:$0xff]
        %v1760 = vld [vmem:[%s3 + $0x4d8] sm:$0xff]
        %v1761 = vld [vmem:[%s3 + $0x4e0] sm:$0xff]
        %v1762 = vld [vmem:[%s3 + $0x4e8] sm:$0xff]
        %v1763 = vld [vmem:[%s3 + $0x4f0] sm:$0xff]
        %v1764 = vld [vmem:[%s3 + $0x4f8] sm:$0xff]
        %v1765 = vld [vmem:[%s4] sm:$0x1]
        %1766 = vmatprep.subr.mxu0 0.0
        %1767 = vmatpush1.msra.mxu0 %v1605
        %1768 = vmatprep.subr.mxu0 0.0
        %1769 = vmatpush1.msra.mxu0 %v1606
        %1770 = vmatprep.subr.mxu0 0.0
        %1771 = vmatpush1.msra.mxu0 %v1607
        %1772 = vmatprep.subr.mxu0 0.0
        %1773 = vmatpush1.msra.mxu0 %v1608
        %1774 = vmatprep.subr.mxu0 0.0
        %1775 = vmatpush1.msra.mxu0 %v1609
        %1776 = vmatprep.subr.mxu0 0.0
        %1777 = vmatpush1.msra.mxu0 %v1610
        %1778 = vmatprep.subr.mxu0 0.0
        %1779 = vmatpush1.msra.mxu0 %v1611
        %1780 = vmatprep.subr.mxu0 0.0
        %1781 = vmatpush1.msra.mxu0 %v1612
        %1782 = vmatprep.subr.mxu0 0.0
        %1783 = vmatpush1.msra.mxu0 %v1613
        %1784 = vmatprep.subr.mxu0 0.0
        %1785 = vmatpush1.msra.mxu0 %v1614
        %1786 = vmatprep.subr.mxu0 0.0
        %1787 = vmatpush1.msra.mxu0 %v1615
        %1788 = vmatprep.subr.mxu0 0.0
        %1789 = vmatpush1.msra.mxu0 %v1616
        %1790 = vmatprep.subr.mxu0 0.0
        %1791 = vmatpush1.msra.mxu0 %v1617
        %1792 = vmatprep.subr.mxu0 0.0
        %1793 = vmatpush1.msra.mxu0 %v1618
        %1794 = vmatprep.subr.mxu0 0.0
        %1795 = vmatpush1.msra.mxu0 %v1619
        %1796 = vmatprep.subr.mxu0 0.0
        %1797 = vmatpush1.msra.mxu0 %v1620
        %1798 = vmatprep.subr.mxu0 0.0
        %1799 = vmatpush1.msra.mxu0 %v1621
        %1800 = vmatprep.subr.mxu0 0.0
        %1801 = vmatpush1.msra.mxu0 %v1622
        %1802 = vmatprep.subr.mxu0 0.0
        %1803 = vmatpush1.msra.mxu0 %v1623
        %1804 = vmatprep.subr.mxu0 0.0
        %1805 = vmatpush1.msra.mxu0 %v1624
        %1806 = vmatprep.subr.mxu0 0.0
        %1807 = vmatpush1.msra.mxu0 %v1625
        %1808 = vmatprep.subr.mxu0 0.0
        %1809 = vmatpush1.msra.mxu0 %v1626
        %1810 = vmatprep.subr.mxu0 0.0
        %1811 = vmatpush1.msra.mxu0 %v1627
        %1812 = vmatprep.subr.mxu0 0.0
        %1813 = vmatpush1.msra.mxu0 %v1628
        %1814 = vmatprep.subr.mxu0 0.0
        %1815 = vmatpush1.msra.mxu0 %v1629
        %1816 = vmatprep.subr.mxu0 0.0
        %1817 = vmatpush1.msra.mxu0 %v1630
        %1818 = vmatprep.subr.mxu0 0.0
        %1819 = vmatpush1.msra.mxu0 %v1631
        %1820 = vmatprep.subr.mxu0 0.0
        %1821 = vmatpush1.msra.mxu0 %v1632
        %1822 = vmatprep.subr.mxu0 0.0
        %1823 = vmatpush1.msra.mxu0 %v1633
        %1824 = vmatprep.subr.mxu0 0.0
        %1825 = vmatpush1.msra.mxu0 %v1634
        %1826 = vmatprep.subr.mxu0 0.0
        %1827 = vmatpush1.msra.mxu0 %v1635
        %1828 = vmatprep.subr.mxu0 0.0
        %1829 = vmatpush1.msra.mxu0 %v1636
        %1830 = vmatprep.mubr.f32.mxu0 %v1596
        %1831 = vmatmul.mubr.f32.gmra.mrb[0].mxu0 %v1595
        %v1832 = vpop.f32.mrb[0].mxu0
        %v1833 = vadd.f32 %v1765, %v1832
        %v1834 = vpop.f32.mrb[0].mxu0
        %1835 = vdwg.mxu0
        %1836 = vmatprep.subr.mxu0 0.0
        %1837 = vmatpush1.msra.mxu0 %v1637
        %1838 = vmatprep.subr.mxu0 0.0
        %1839 = vmatpush1.msra.mxu0 %v1638
        %1840 = vmatprep.subr.mxu0 0.0
        %1841 = vmatpush1.msra.mxu0 %v1639
        %1842 = vmatprep.subr.mxu0 0.0
        %1843 = vmatpush1.msra.mxu0 %v1640
        %1844 = vmatprep.subr.mxu0 0.0
        %1845 = vmatpush1.msra.mxu0 %v1641
        %1846 = vmatprep.subr.mxu0 0.0
        %1847 = vmatpush1.msra.mxu0 %v1642
        %1848 = vmatprep.subr.mxu0 0.0
        %1849 = vmatpush1.msra.mxu0 %v1643
        %1850 = vmatprep.subr.mxu0 0.0
        %1851 = vmatpush1.msra.mxu0 %v1644
        %1852 = vmatprep.subr.mxu0 0.0
        %1853 = vmatpush1.msra.mxu0 %v1645
        %1854 = vmatprep.subr.mxu0 0.0
        %1855 = vmatpush1.msra.mxu0 %v1646
        %1856 = vmatprep.subr.mxu0 0.0
        %1857 = vmatpush1.msra.mxu0 %v1647
        %1858 = vmatprep.subr.mxu0 0.0
        %1859 = vmatpush1.msra.mxu0 %v1648
        %1860 = vmatprep.subr.mxu0 0.0
        %1861 = vmatpush1.msra.mxu0 %v1649
        %1862 = vmatprep.subr.mxu0 0.0
        %1863 = vmatpush1.msra.mxu0 %v1650
        %1864 = vmatprep.subr.mxu0 0.0
        %1865 = vmatpush1.msra.mxu0 %v1651
        %1866 = vmatprep.subr.mxu0 0.0
        %1867 = vmatpush1.msra.mxu0 %v1652
        %1868 = vmatprep.subr.mxu0 0.0
        %1869 = vmatpush1.msra.mxu0 %v1653
        %1870 = vmatprep.subr.mxu0 0.0
        %1871 = vmatpush1.msra.mxu0 %v1654
        %1872 = vmatprep.subr.mxu0 0.0
        %1873 = vmatpush1.msra.mxu0 %v1655
        %1874 = vmatprep.subr.mxu0 0.0
        %1875 = vmatpush1.msra.mxu0 %v1656
        %1876 = vmatprep.subr.mxu0 0.0
        %1877 = vmatpush1.msra.mxu0 %v1657
        %1878 = vmatprep.subr.mxu0 0.0
        %1879 = vmatpush1.msra.mxu0 %v1658
        %1880 = vmatprep.subr.mxu0 0.0
        %1881 = vmatpush1.msra.mxu0 %v1659
        %1882 = vmatprep.subr.mxu0 0.0
        %1883 = vmatpush1.msra.mxu0 %v1660
        %1884 = vmatprep.subr.mxu0 0.0
        %1885 = vmatpush1.msra.mxu0 %v1661
        %1886 = vmatprep.subr.mxu0 0.0
        %1887 = vmatpush1.msra.mxu0 %v1662
        %1888 = vmatprep.subr.mxu0 0.0
        %1889 = vmatpush1.msra.mxu0 %v1663
        %1890 = vmatprep.subr.mxu0 0.0
        %1891 = vmatpush1.msra.mxu0 %v1664
        %1892 = vmatprep.subr.mxu0 0.0
        %1893 = vmatpush1.msra.mxu0 %v1665
        %1894 = vmatprep.subr.mxu0 0.0
        %1895 = vmatpush1.msra.mxu0 %v1666
        %1896 = vmatprep.subr.mxu0 0.0
        %1897 = vmatpush1.msra.mxu0 %v1667
        %1898 = vmatprep.subr.mxu0 0.0
        %1899 = vmatpush1.msra.mxu0 %v1668
        %1900 = vmatprep.mubr.f32.mxu0 %v1598
        %1901 = vmatmul.mubr.f32.gmra.mrb[0].mxu0 %v1597
        %v1902 = vpop.f32.mrb[0].mxu0
        %v1903 = vadd.f32 %v1833, %v1902
        %v1904 = vpop.f32.mrb[0].mxu0
        %1905 = vdwg.mxu0
        %1906 = vmatprep.subr.mxu0 0.0
        %1907 = vmatpush1.msra.mxu0 %v1669
        %1908 = vmatprep.subr.mxu0 0.0
        %1909 = vmatpush1.msra.mxu0 %v1670
        %1910 = vmatprep.subr.mxu0 0.0
        %1911 = vmatpush1.msra.mxu0 %v1671
        %1912 = vmatprep.subr.mxu0 0.0
        %1913 = vmatpush1.msra.mxu0 %v1672
        %1914 = vmatprep.subr.mxu0 0.0
        %1915 = vmatpush1.msra.mxu0 %v1673
        %1916 = vmatprep.subr.mxu0 0.0
        %1917 = vmatpush1.msra.mxu0 %v1674
        %1918 = vmatprep.subr.mxu0 0.0
        %1919 = vmatpush1.msra.mxu0 %v1675
        %1920 = vmatprep.subr.mxu0 0.0
        %1921 = vmatpush1.msra.mxu0 %v1676
        %1922 = vmatprep.subr.mxu0 0.0
        %1923 = vmatpush1.msra.mxu0 %v1677
        %1924 = vmatprep.subr.mxu0 0.0
        %1925 = vmatpush1.msra.mxu0 %v1678
        %1926 = vmatprep.subr.mxu0 0.0
        %1927 = vmatpush1.msra.mxu0 %v1679
        %1928 = vmatprep.subr.mxu0 0.0
        %1929 = vmatpush1.msra.mxu0 %v1680
        %1930 = vmatprep.subr.mxu0 0.0
        %1931 = vmatpush1.msra.mxu0 %v1681
        %1932 = vmatprep.subr.mxu0 0.0
        %1933 = vmatpush1.msra.mxu0 %v1682
        %1934 = vmatprep.subr.mxu0 0.0
        %1935 = vmatpush1.msra.mxu0 %v1683
        %1936 = vmatprep.subr.mxu0 0.0
        %1937 = vmatpush1.msra.mxu0 %v1684
        %1938 = vmatprep.subr.mxu0 0.0
        %1939 = vmatpush1.msra.mxu0 %v1685
        %1940 = vmatprep.subr.mxu0 0.0
        %1941 = vmatpush1.msra.mxu0 %v1686
        %1942 = vmatprep.subr.mxu0 0.0
        %1943 = vmatpush1.msra.mxu0 %v1687
        %1944 = vmatprep.subr.mxu0 0.0
        %1945 = vmatpush1.msra.mxu0 %v1688
        %1946 = vmatprep.subr.mxu0 0.0
        %1947 = vmatpush1.msra.mxu0 %v1689
        %1948 = vmatprep.subr.mxu0 0.0
        %1949 = vmatpush1.msra.mxu0 %v1690
        %1950 = vmatprep.subr.mxu0 0.0
        %1951 = vmatpush1.msra.mxu0 %v1691
        %1952 = vmatprep.subr.mxu0 0.0
        %1953 = vmatpush1.msra.mxu0 %v1692
        %1954 = vmatprep.subr.mxu0 0.0
        %1955 = vmatpush1.msra.mxu0 %v1693
        %1956 = vmatprep.subr.mxu0 0.0
        %1957 = vmatpush1.msra.mxu0 %v1694
        %1958 = vmatprep.subr.mxu0 0.0
        %1959 = vmatpush1.msra.mxu0 %v1695
        %1960 = vmatprep.subr.mxu0 0.0
        %1961 = vmatpush1.msra.mxu0 %v1696
        %1962 = vmatprep.subr.mxu0 0.0
        %1963 = vmatpush1.msra.mxu0 %v1697
        %1964 = vmatprep.subr.mxu0 0.0
        %1965 = vmatpush1.msra.mxu0 %v1698
        %1966 = vmatprep.subr.mxu0 0.0
        %1967 = vmatpush1.msra.mxu0 %v1699
        %1968 = vmatprep.subr.mxu0 0.0
        %1969 = vmatpush1.msra.mxu0 %v1700
        %1970 = vmatprep.mubr.f32.mxu0 %v1600
        %1971 = vmatmul.mubr.f32.gmra.mrb[0].mxu0 %v1599
        %v1972 = vpop.f32.mrb[0].mxu0
        %v1973 = vadd.f32 %v1903, %v1972
        %v1974 = vpop.f32.mrb[0].mxu0
        %1975 = vdwg.mxu0
        %1976 = vmatprep.subr.mxu0 0.0
        %1977 = vmatpush1.msra.mxu0 %v1701
        %1978 = vmatprep.subr.mxu0 0.0
        %1979 = vmatpush1.msra.mxu0 %v1702
        %1980 = vmatprep.subr.mxu0 0.0
        %1981 = vmatpush1.msra.mxu0 %v1703
        %1982 = vmatprep.subr.mxu0 0.0
        %1983 = vmatpush1.msra.mxu0 %v1704
        %1984 = vmatprep.subr.mxu0 0.0
        %1985 = vmatpush1.msra.mxu0 %v1705
        %1986 = vmatprep.subr.mxu0 0.0
        %1987 = vmatpush1.msra.mxu0 %v1706
        %1988 = vmatprep.subr.mxu0 0.0
        %1989 = vmatpush1.msra.mxu0 %v1707
        %1990 = vmatprep.subr.mxu0 0.0
        %1991 = vmatpush1.msra.mxu0 %v1708
        %1992 = vmatprep.subr.mxu0 0.0
        %1993 = vmatpush1.msra.mxu0 %v1709
        %1994 = vmatprep.subr.mxu0 0.0
        %1995 = vmatpush1.msra.mxu0 %v1710
        %1996 = vmatprep.subr.mxu0 0.0
        %1997 = vmatpush1.msra.mxu0 %v1711
        %1998 = vmatprep.subr.mxu0 0.0
        %1999 = vmatpush1.msra.mxu0 %v1712
        %2000 = vmatprep.subr.mxu0 0.0
        %2001 = vmatpush1.msra.mxu0 %v1713
        %2002 = vmatprep.subr.mxu0 0.0
        %2003 = vmatpush1.msra.mxu0 %v1714
        %2004 = vmatprep.subr.mxu0 0.0
        %2005 = vmatpush1.msra.mxu0 %v1715
        %2006 = vmatprep.subr.mxu0 0.0
        %2007 = vmatpush1.msra.mxu0 %v1716
        %2008 = vmatprep.subr.mxu0 0.0
        %2009 = vmatpush1.msra.mxu0 %v1717
        %2010 = vmatprep.subr.mxu0 0.0
        %2011 = vmatpush1.msra.mxu0 %v1718
        %2012 = vmatprep.subr.mxu0 0.0
        %2013 = vmatpush1.msra.mxu0 %v1719
        %2014 = vmatprep.subr.mxu0 0.0
        %2015 = vmatpush1.msra.mxu0 %v1720
        %2016 = vmatprep.subr.mxu0 0.0
        %2017 = vmatpush1.msra.mxu0 %v1721
        %2018 = vmatprep.subr.mxu0 0.0
        %2019 = vmatpush1.msra.mxu0 %v1722
        %2020 = vmatprep.subr.mxu0 0.0
        %2021 = vmatpush1.msra.mxu0 %v1723
        %2022 = vmatprep.subr.mxu0 0.0
        %2023 = vmatpush1.msra.mxu0 %v1724
        %2024 = vmatprep.subr.mxu0 0.0
        %2025 = vmatpush1.msra.mxu0 %v1725
        %2026 = vmatprep.subr.mxu0 0.0
        %2027 = vmatpush1.msra.mxu0 %v1726
        %2028 = vmatprep.subr.mxu0 0.0
        %2029 = vmatpush1.msra.mxu0 %v1727
        %2030 = vmatprep.subr.mxu0 0.0
        %2031 = vmatpush1.msra.mxu0 %v1728
        %2032 = vmatprep.subr.mxu0 0.0
        %2033 = vmatpush1.msra.mxu0 %v1729
        %2034 = vmatprep.subr.mxu0 0.0
        %2035 = vmatpush1.msra.mxu0 %v1730
        %2036 = vmatprep.subr.mxu0 0.0
        %2037 = vmatpush1.msra.mxu0 %v1731
        %2038 = vmatprep.subr.mxu0 0.0
        %2039 = vmatpush1.msra.mxu0 %v1732
        %2040 = vmatprep.mubr.f32.mxu0 %v1602
        %2041 = vmatmul.mubr.f32.gmra.mrb[0].mxu0 %v1601
        %v2042 = vpop.f32.mrb[0].mxu0
        %v2043 = vadd.f32 %v1973, %v2042
        %v2044 = vpop.f32.mrb[0].mxu0
        %2045 = vdwg.mxu0
        %2046 = vmatprep.subr.mxu0 0.0
        %2047 = vmatpush1.msra.mxu0 %v1733
        %2048 = vmatprep.subr.mxu0 0.0
        %2049 = vmatpush1.msra.mxu0 %v1734
        %2050 = vmatprep.subr.mxu0 0.0
        %2051 = vmatpush1.msra.mxu0 %v1735
        %2052 = vmatprep.subr.mxu0 0.0
        %2053 = vmatpush1.msra.mxu0 %v1736
        %2054 = vmatprep.subr.mxu0 0.0
        %2055 = vmatpush1.msra.mxu0 %v1737
        %2056 = vmatprep.subr.mxu0 0.0
        %2057 = vmatpush1.msra.mxu0 %v1738
        %2058 = vmatprep.subr.mxu0 0.0
        %2059 = vmatpush1.msra.mxu0 %v1739
        %2060 = vmatprep.subr.mxu0 0.0
        %2061 = vmatpush1.msra.mxu0 %v1740
        %2062 = vmatprep.subr.mxu0 0.0
        %2063 = vmatpush1.msra.mxu0 %v1741
        %2064 = vmatprep.subr.mxu0 0.0
        %2065 = vmatpush1.msra.mxu0 %v1742
        %2066 = vmatprep.subr.mxu0 0.0
        %2067 = vmatpush1.msra.mxu0 %v1743
        %2068 = vmatprep.subr.mxu0 0.0
        %2069 = vmatpush1.msra.mxu0 %v1744
        %2070 = vmatprep.subr.mxu0 0.0
        %2071 = vmatpush1.msra.mxu0 %v1745
        %2072 = vmatprep.subr.mxu0 0.0
        %2073 = vmatpush1.msra.mxu0 %v1746
        %2074 = vmatprep.subr.mxu0 0.0
        %2075 = vmatpush1.msra.mxu0 %v1747
        %2076 = vmatprep.subr.mxu0 0.0
        %2077 = vmatpush1.msra.mxu0 %v1748
        %2078 = vmatprep.subr.mxu0 0.0
        %2079 = vmatpush1.msra.mxu0 %v1749
        %2080 = vmatprep.subr.mxu0 0.0
        %2081 = vmatpush1.msra.mxu0 %v1750
        %2082 = vmatprep.subr.mxu0 0.0
        %2083 = vmatpush1.msra.mxu0 %v1751
        %2084 = vmatprep.subr.mxu0 0.0
        %2085 = vmatpush1.msra.mxu0 %v1752
        %2086 = vmatprep.subr.mxu0 0.0
        %2087 = vmatpush1.msra.mxu0 %v1753
        %2088 = vmatprep.subr.mxu0 0.0
        %2089 = vmatpush1.msra.mxu0 %v1754
        %2090 = vmatprep.subr.mxu0 0.0
        %2091 = vmatpush1.msra.mxu0 %v1755
        %2092 = vmatprep.subr.mxu0 0.0
        %2093 = vmatpush1.msra.mxu0 %v1756
        %2094 = vmatprep.subr.mxu0 0.0
        %2095 = vmatpush1.msra.mxu0 %v1757
        %2096 = vmatprep.subr.mxu0 0.0
        %2097 = vmatpush1.msra.mxu0 %v1758
        %2098 = vmatprep.subr.mxu0 0.0
        %2099 = vmatpush1.msra.mxu0 %v1759
        %2100 = vmatprep.subr.mxu0 0.0
        %2101 = vmatpush1.msra.mxu0 %v1760
        %2102 = vmatprep.subr.mxu0 0.0
        %2103 = vmatpush1.msra.mxu0 %v1761
        %2104 = vmatprep.subr.mxu0 0.0
        %2105 = vmatpush1.msra.mxu0 %v1762
        %2106 = vmatprep.subr.mxu0 0.0
        %2107 = vmatpush1.msra.mxu0 %v1763
        %2108 = vmatprep.subr.mxu0 0.0
        %2109 = vmatpush1.msra.mxu0 %v1764
        %2110 = vmatprep.mubr.f32.mxu0 %v1604
        %2111 = vmatmul.mubr.f32.gmra.mrb[0].mxu0 %v1603
        %v2112 = vpop.f32.mrb[0].mxu0
        %v2113 = vadd.f32 %v2043, %v2112
        %v2114 = vpop.f32.mrb[0].mxu0
        %2115 = vdwg.mxu0
        %vm2116 = vcmask 73728
        %2117 = vst.msk [vmem:[%s216] sm:$0x1] %vm2116, %v2113
        %s2118 = sand.u32 %s137, 1
        %s2119 = scalar_lea.sflag [#allocation3], %s2118
        %s2120 = sand.u32 %s137, 1
        %s2121 = scalar_lea.vmem [#allocation2], %s2120
        // Predicated region
        $region41: #{model_forward.9} parent=39 // pred_check
          %p2122 = pneg %p147
        $region42: #{model_forward.9} parent=39 // pred_check_branch
          %2124 = sbr.rel (%p2122) target = $region44
        $region43: #{model_forward.9} parent=39 // pred_region
          %s2126 = ssub.s32 16, 16
          %2127 = vsyncadd %s2119, %s2126
          %s2128 = smul.addr %s19, 16
          %s2129 = scalar_lea.hbm %s5, %s2128
          %s2131 = sshll.u32 %s2121, 4
          %s2132 = int_to_ptr.vmem [resolvable:$true] %s2131
          %2134 = dma.vmem_to_hbm [thread:$0]  %s2132, 16, %s2129, %s2119
        $region44: #{model_forward.9} parent=39 // pred_fallthru
          _
      $region40: #{model_forward.9} parent=5 // pred_fallthru
        _
      %p2135 = scmp.le.s32.totalorder 2, %s14
      // Predicated region
      $region45: #{model_forward.9} parent=5 // pred_check
        %p2136 = pneg %p2135
      $region46: #{model_forward.9} parent=5 // pred_check_branch
        %2138 = sbr.rel (%p2136) target = $region48
      $region47: #{model_forward.9} parent=5 // pred_region
        %s2139 = ssub.s32 %s14, 2
        // Predicated region
        $region49: #{model_forward.9} parent=47 // pred_check
          %p2140 = pneg %p153
        $region50: #{model_forward.9} parent=47 // pred_check_branch
          %2142 = sbr.rel (%p2140) target = $region52
        $region51: #{model_forward.9} parent=47 // pred_region
          %s2143 = sand.u32 %s138, 1
          %s2144 = scalar_lea.sflag [#allocation3], %s2143
          %s2145 = sand.u32 %s138, 1
          %s2146 = scalar_lea.vmem [#allocation2], %s2145
          %2147 = dma.done %s2144, 16
        $region52: #{model_forward.9} parent=47 // pred_fallthru
          _
      $region48: #{model_forward.9} parent=5 // pred_fallthru
        _
    $region6: #{model_forward.9} parent=1 // loop_footer
      %s18 = sadd.s32 1, %s14
    $region7: #{model_forward.9} parent=1 // loop_footer_branch
      %13 = sbr.rel target = $region3
    $region8: #{model_forward.9} parent=1 // loop_exit
      _
    %2148 = vsyncpa [#allocation3], 1
    %s2149 = scalar_lea.sflag [#allocation3], 1
    %2150 = vsyncpa %s2149, 1

</llo_original>
